<compile_context>
chip_gen: v7x
topology: tpu7x:2x2x1
jax: 0.10.0
libtpu: 0.0.40
codegen_flags: <defaults>
</compile_context>

<pallas_src>
import functools

import jax
import jax.numpy as jnp
from jax.experimental import pallas as pl
from jax.experimental.pallas import tpu as pltpu


def _im2col_3x3(pad_ref, H, W):
    """Read the 9 shifted 3x3-tap windows from a padded (H+2, W+2, C) VMEM
    scratch and lay them out as one (H*W, 9*C) im2col matrix so the whole
    convolution is a single deep-K MXU matmul."""
    C = pad_ref.shape[-1]
    cols = []
    for dh in range(3):
        for dw in range(3):
            tap = pad_ref[dh:dh + H, dw:dw + W, :]       # (H, W, C)
            cols.append(tap.reshape(H * W, C))
    return jnp.concatenate(cols, axis=1)                 # (H*W, 9*C)


def _res_block_down_kernel(x_ref, w1_ref, b1_ref, w2_ref, b2_ref, o_ref,
                           xpad_ref, hpad_ref, res_ref, sh_ref,
                           *, H, W, Cin, Cout, connected, down):
    Ho, Wo = H // 2, W // 2

    # ---- halo padding of the input inside VMEM (no HBM pad roundtrip) ----
    xpad_ref[...] = jnp.zeros(xpad_ref.shape, xpad_ref.dtype)
    xpad_ref[1:H + 1, 1:W + 1, :] = x_ref[0].astype(xpad_ref.dtype)

    # ---- conv1: single im2col matmul (K = 9*Cin), bias + ReLU fused ----
    p1 = _im2col_3x3(xpad_ref, H, W)                      # (H*W, 9*Cin) bf16
    h = jnp.dot(p1, w1_ref[...], preferred_element_type=jnp.float32)
    h = jnp.maximum(h + b1_ref[...], 0.0)                 # f32 epilogue

    # ---- conv2: pad hidden in VMEM, single im2col matmul (K = 9*Cout) ----
    hpad_ref[...] = jnp.zeros(hpad_ref.shape, hpad_ref.dtype)
    hpad_ref[1:H + 1, 1:W + 1, :] = h.reshape(H, W, Cout).astype(hpad_ref.dtype)
    p2 = _im2col_3x3(hpad_ref, H, W)                      # (H*W, 9*Cout) bf16
    out = jnp.dot(p2, w2_ref[...], preferred_element_type=jnp.float32)
    out = out + b2_ref[...]

    # ---- fused residual add (f32) ----
    if connected:
        out = out + x_ref[0].reshape(H * W, Cin)

    if down:
        # ---- fused 2x2 average pool via stride-2 VMEM reads ----
        res_ref[...] = out.reshape(H, W, Cout)
        rows = (res_ref[pl.ds(0, Ho, 2), :, :] +
                res_ref[pl.ds(1, Ho, 2), :, :])           # (Ho, W, Cout)
        sh_ref[...] = rows
        pooled = (sh_ref[:, pl.ds(0, Wo, 2), :] +
                  sh_ref[:, pl.ds(1, Wo, 2), :]) * 0.25   # (Ho, Wo, Cout)
        o_ref[...] = pooled.reshape(o_ref.shape).astype(o_ref.dtype)
    else:
        o_ref[...] = out.reshape(o_ref.shape).astype(o_ref.dtype)


def residual_block_down(x, conv1_w, conv1_b, conv2_w, conv2_b,
                        *, connected=True, down=True):
    """Forward pass of the PyTorch `Residual_block_down` module.

    x       : (N, Cin, H, W) f32, NCHW (PyTorch layout)
    conv*_w : (Cout, Cin, 3, 3) f32, PyTorch OIHW layout
    conv*_b : (Cout,) f32
    """
    # TODO(synk): only kernel_size=3, stride=1, padding=1 is implemented (the
    # configuration the residual `out += x` requires); other kernel/stride/pad
    # configs would need a different im2col layout.
    N, Cin, H, W = x.shape
    Cout = conv1_w.shape[0]
    if connected:
        assert Cin == Cout, "residual connection requires Cin == Cout"
    if down:
        assert H % 2 == 0 and W % 2 == 0
    Ho, Wo = (H // 2, W // 2) if down else (H, W)

    # NHWC for the kernel (channels -> lanes).
    x_nhwc = jnp.transpose(x, (0, 2, 3, 1))
    # im2col weight layout: (kh, kw, Cin, Cout) -> (9*Cin, Cout); bf16 MXU
    # operands (f32 accumulation inside the kernel).
    w1m = jnp.transpose(conv1_w, (2, 3, 1, 0)).reshape(9 * Cin, Cout)
    w2m = jnp.transpose(conv2_w, (2, 3, 1, 0)).reshape(9 * Cout, Cout)
    w1m = w1m.astype(jnp.bfloat16)
    w2m = w2m.astype(jnp.bfloat16)
    b1m = conv1_b.reshape(1, Cout).astype(jnp.float32)
    b2m = conv2_b.reshape(1, Cout).astype(jnp.float32)

    kernel = functools.partial(_res_block_down_kernel, H=H, W=W, Cin=Cin,
                               Cout=Cout, connected=connected, down=down)
    out = pl.pallas_call(
        kernel,
        grid=(N,),
        in_specs=[
            pl.BlockSpec((1, H, W, Cin), lambda n: (n, 0, 0, 0)),
            pl.BlockSpec((9 * Cin, Cout), lambda n: (0, 0)),
            pl.BlockSpec((1, Cout), lambda n: (0, 0)),
            pl.BlockSpec((9 * Cout, Cout), lambda n: (0, 0)),
            pl.BlockSpec((1, Cout), lambda n: (0, 0)),
        ],
        out_specs=pl.BlockSpec((1, Ho, Wo, Cout), lambda n: (n, 0, 0, 0)),
        out_shape=jax.ShapeDtypeStruct((N, Ho, Wo, Cout), jnp.float32),
        scratch_shapes=[
            pltpu.VMEM((H + 2, W + 2, Cin), jnp.bfloat16),   # padded x
            pltpu.VMEM((H + 2, W + 2, Cout), jnp.bfloat16),  # padded relu(conv1)
            pltpu.VMEM((H, W, Cout), jnp.float32),           # pre-pool result
            pltpu.VMEM((Ho, W, Cout), jnp.float32),          # row-pooled result
        ],
        compiler_params=pltpu.CompilerParams(
            dimension_semantics=("parallel",)),
    )(x_nhwc, w1m, b1m, w2m, b2m)
    return jnp.transpose(out, (0, 3, 1, 2))                  # back to NCHW


if __name__ == "__main__":
    N, C, H, W = 2, 32, 16, 16

    key = jax.random.PRNGKey(0)
    kx, kw1, kb1, kw2, kb2 = jax.random.split(key, 5)
    bound = 1.0 / (C * 3 * 3) ** 0.5          # PyTorch default Conv2d init
    x = jax.random.normal(kx, (N, C, H, W), jnp.float32)
    conv1_w = jax.random.uniform(kw1, (C, C, 3, 3), jnp.float32, -bound, bound)
    conv1_b = jax.random.uniform(kb1, (C,), jnp.float32, -bound, bound)
    conv2_w = jax.random.uniform(kw2, (C, C, 3, 3), jnp.float32, -bound, bound)
    conv2_b = jax.random.uniform(kb2, (C,), jnp.float32, -bound, bound)

    fwd = jax.jit(functools.partial(residual_block_down,
                                    connected=True, down=True))
    out = jax.block_until_ready(fwd(x, conv1_w, conv1_b, conv2_w, conv2_b))
    assert out.shape == (N, C, H // 2, W // 2), out.shape
    assert bool(jnp.all(jnp.isfinite(out)))

    # Pure-JAX reference with the PyTorch forward semantics:
    # conv1 -> ReLU -> conv2 -> (+x) -> AvgPool2d(2)
    dn = ("NCHW", "OIHW", "NCHW")
    ref = jax.lax.conv_general_dilated(x, conv1_w, (1, 1), ((1, 1), (1, 1)),
                                       dimension_numbers=dn)
    ref = jnp.maximum(ref + conv1_b[None, :, None, None], 0.0)
    ref = jax.lax.conv_general_dilated(ref, conv2_w, (1, 1), ((1, 1), (1, 1)),
                                       dimension_numbers=dn)
    ref = ref + conv2_b[None, :, None, None] + x
    ref = ref.reshape(N, C, H // 2, 2, W // 2, 2).mean(axis=(3, 5))

    # Loose tolerance: the kernel feeds bf16 operands to the MXU (f32
    # accumulation); a layout/semantics bug would be O(1) off.
    assert bool(jnp.allclose(out, ref, rtol=5e-2, atol=5e-2)), \
        float(jnp.max(jnp.abs(out - ref)))
    print("KERNEL_OK")
</pallas_src>

<mosaic_0001>
module attributes {stable_mosaic.version = 11 : i64} {
  func.func @_res_block_down_kernel(%arg0: i32, %arg1: memref<1x16x16x32xf32, #tpu.memory_space<vmem>>, %arg2: memref<288x32xbf16, #tpu.memory_space<vmem>>, %arg3: memref<1x32xf32, #tpu.memory_space<vmem>>, %arg4: memref<288x32xbf16, #tpu.memory_space<vmem>>, %arg5: memref<1x32xf32, #tpu.memory_space<vmem>>, %arg6: memref<1x8x8x32xf32, #tpu.memory_space<vmem>>, %arg7: memref<18x18x32xbf16, #tpu.memory_space<vmem>>, %arg8: memref<18x18x32xbf16, #tpu.memory_space<vmem>>, %arg9: memref<16x16x32xf32, #tpu.memory_space<vmem>>, %arg10: memref<8x16x32xf32, #tpu.memory_space<vmem>>) attributes {dimension_semantics = [#tpu.dimension_semantics<parallel>], iteration_bounds = array<i64: 2>, scalar_prefetch = 0 : i64, scratch_operands = 4 : i64, tpu.core_type = #tpu.core_type<tc>, window_params = [{transform_indices = @transform_0, window_bounds = array<i64: 1, 16, 16, 32>}, {pipeline_mode = #tpu.pipeline_mode<synchronous>, transform_indices = @transform_1, window_bounds = array<i64: 288, 32>}, {pipeline_mode = #tpu.pipeline_mode<synchronous>, transform_indices = @transform_2, window_bounds = array<i64: 1, 32>}, {pipeline_mode = #tpu.pipeline_mode<synchronous>, transform_indices = @transform_3, window_bounds = array<i64: 288, 32>}, {pipeline_mode = #tpu.pipeline_mode<synchronous>, transform_indices = @transform_4, window_bounds = array<i64: 1, 32>}, {transform_indices = @transform_5, window_bounds = array<i64: 1, 8, 8, 32>}]} {
    %cst = arith.constant 0.000000e+00 : bf16
    %0 = vector.broadcast %cst : bf16 to vector<18x18x32xbf16>
    %c0 = arith.constant 0 : index
    %c0_0 = arith.constant 0 : index
    %c0_1 = arith.constant 0 : index
    %1 = vector.load %arg7[%c0, %c0_0, %c0_1] : memref<18x18x32xbf16, #tpu.memory_space<vmem>>, vector<18x18x32xbf16>
    tpu.vector_store %arg7[%c0, %c0_0, %c0_1], %0 {strides = array<i32>} : memref<18x18x32xbf16, #tpu.memory_space<vmem>>, vector<18x18x32xbf16>,
    %c0_2 = arith.constant 0 : index
    %c0_3 = arith.constant 0 : index
    %c0_4 = arith.constant 0 : index
    %c0_5 = arith.constant 0 : index
    %2 = vector.load %arg1[%c0_2, %c0_3, %c0_4, %c0_5] : memref<1x16x16x32xf32, #tpu.memory_space<vmem>>, vector<1x16x16x32xf32>
    %3 = vector.shape_cast %2 : vector<1x16x16x32xf32> to vector<16x16x32xf32>
    %4 = arith.truncf %3 : vector<16x16x32xf32> to vector<16x16x32xbf16>
    %c1 = arith.constant 1 : index
    %c1_6 = arith.constant 1 : index
    %c0_7 = arith.constant 0 : index
    %5 = vector.load %arg7[%c1, %c1_6, %c0_7] : memref<18x18x32xbf16, #tpu.memory_space<vmem>>, vector<16x16x32xbf16>
    tpu.vector_store %arg7[%c1, %c1_6, %c0_7], %4 {strides = array<i32>} : memref<18x18x32xbf16, #tpu.memory_space<vmem>>, vector<16x16x32xbf16>,
    %c0_8 = arith.constant 0 : index
    %c0_9 = arith.constant 0 : index
    %c0_10 = arith.constant 0 : index
    %6 = vector.load %arg7[%c0_8, %c0_9, %c0_10] : memref<18x18x32xbf16, #tpu.memory_space<vmem>>, vector<16x16x32xbf16>
    %7 = vector.shape_cast %6 : vector<16x16x32xbf16> to vector<256x32xbf16>
    %c0_11 = arith.constant 0 : index
    %c1_12 = arith.constant 1 : index
    %c0_13 = arith.constant 0 : index
    %8 = vector.load %arg7[%c0_11, %c1_12, %c0_13] : memref<18x18x32xbf16, #tpu.memory_space<vmem>>, vector<16x16x32xbf16>
    %9 = vector.shape_cast %8 : vector<16x16x32xbf16> to vector<256x32xbf16>
    %c0_14 = arith.constant 0 : index
    %c2 = arith.constant 2 : index
    %c0_15 = arith.constant 0 : index
    %10 = vector.load %arg7[%c0_14, %c2, %c0_15] : memref<18x18x32xbf16, #tpu.memory_space<vmem>>, vector<16x16x32xbf16>
    %11 = vector.shape_cast %10 : vector<16x16x32xbf16> to vector<256x32xbf16>
    %c1_16 = arith.constant 1 : index
    %c0_17 = arith.constant 0 : index
    %c0_18 = arith.constant 0 : index
    %12 = vector.load %arg7[%c1_16, %c0_17, %c0_18] : memref<18x18x32xbf16, #tpu.memory_space<vmem>>, vector<16x16x32xbf16>
    %13 = vector.shape_cast %12 : vector<16x16x32xbf16> to vector<256x32xbf16>
    %c1_19 = arith.constant 1 : index
    %c1_20 = arith.constant 1 : index
    %c0_21 = arith.constant 0 : index
    %14 = vector.load %arg7[%c1_19, %c1_20, %c0_21] : memref<18x18x32xbf16, #tpu.memory_space<vmem>>, vector<16x16x32xbf16>
    %15 = vector.shape_cast %14 : vector<16x16x32xbf16> to vector<256x32xbf16>
    %c1_22 = arith.constant 1 : index
    %c2_23 = arith.constant 2 : index
    %c0_24 = arith.constant 0 : index
    %16 = vector.load %arg7[%c1_22, %c2_23, %c0_24] : memref<18x18x32xbf16, #tpu.memory_space<vmem>>, vector<16x16x32xbf16>
    %17 = vector.shape_cast %16 : vector<16x16x32xbf16> to vector<256x32xbf16>
    %c2_25 = arith.constant 2 : index
    %c0_26 = arith.constant 0 : index
    %c0_27 = arith.constant 0 : index
    %18 = vector.load %arg7[%c2_25, %c0_26, %c0_27] : memref<18x18x32xbf16, #tpu.memory_space<vmem>>, vector<16x16x32xbf16>
    %19 = vector.shape_cast %18 : vector<16x16x32xbf16> to vector<256x32xbf16>
    %c2_28 = arith.constant 2 : index
    %c1_29 = arith.constant 1 : index
    %c0_30 = arith.constant 0 : index
    %20 = vector.load %arg7[%c2_28, %c1_29, %c0_30] : memref<18x18x32xbf16, #tpu.memory_space<vmem>>, vector<16x16x32xbf16>
    %21 = vector.shape_cast %20 : vector<16x16x32xbf16> to vector<256x32xbf16>
    %c2_31 = arith.constant 2 : index
    %c2_32 = arith.constant 2 : index
    %c0_33 = arith.constant 0 : index
    %22 = vector.load %arg7[%c2_31, %c2_32, %c0_33] : memref<18x18x32xbf16, #tpu.memory_space<vmem>>, vector<16x16x32xbf16>
    %23 = vector.shape_cast %22 : vector<16x16x32xbf16> to vector<256x32xbf16>
    %24 = tpu.concatenate %7, %9, %11, %13, %15, %17, %19, %21, %23 in 1 : vector<256x32xbf16>, vector<256x32xbf16>, vector<256x32xbf16>, vector<256x32xbf16>, vector<256x32xbf16>, vector<256x32xbf16>, vector<256x32xbf16>, vector<256x32xbf16>, vector<256x32xbf16> -> vector<256x288xbf16>
    %c0_34 = arith.constant 0 : index
    %c0_35 = arith.constant 0 : index
    %25 = vector.load %arg2[%c0_34, %c0_35] : memref<288x32xbf16, #tpu.memory_space<vmem>>, vector<288x32xbf16>
    %cst_36 = arith.constant dense<0.000000e+00> : vector<256x32xf32>
    %26 = tpu.matmul %24, %25, %cst_36 {dimension_numbers = #tpu.dot_dimension_numbers<[1], [0], [0], [1], [0, 0, 1, 1], [], []>} : vector<256x288xbf16>, vector<288x32xbf16>, vector<256x32xf32> -> vector<256x32xf32>
    %c0_37 = arith.constant 0 : index
    %c0_38 = arith.constant 0 : index
    %27 = vector.load %arg3[%c0_37, %c0_38] : memref<1x32xf32, #tpu.memory_space<vmem>>, vector<1x32xf32>
    %28 = vector.broadcast %27 : vector<1x32xf32> to vector<256x32xf32>
    %29 = arith.addf %26, %28 : vector<256x32xf32>
    %cst_39 = arith.constant 0.000000e+00 : f32
    %30 = vector.broadcast %cst_39 : f32 to vector<256x32xf32>
    %31 = arith.maximumf %29, %30 : vector<256x32xf32>
    %cst_40 = arith.constant 0.000000e+00 : bf16
    %32 = vector.broadcast %cst_40 : bf16 to vector<18x18x32xbf16>
    %c0_41 = arith.constant 0 : index
    %c0_42 = arith.constant 0 : index
    %c0_43 = arith.constant 0 : index
    %33 = vector.load %arg8[%c0_41, %c0_42, %c0_43] : memref<18x18x32xbf16, #tpu.memory_space<vmem>>, vector<18x18x32xbf16>
    tpu.vector_store %arg8[%c0_41, %c0_42, %c0_43], %32 {strides = array<i32>} : memref<18x18x32xbf16, #tpu.memory_space<vmem>>, vector<18x18x32xbf16>,
    %34 = vector.shape_cast %31 : vector<256x32xf32> to vector<16x16x32xf32>
    %35 = arith.truncf %34 : vector<16x16x32xf32> to vector<16x16x32xbf16>
    %c1_44 = arith.constant 1 : index
    %c1_45 = arith.constant 1 : index
    %c0_46 = arith.constant 0 : index
    %36 = vector.load %arg8[%c1_44, %c1_45, %c0_46] : memref<18x18x32xbf16, #tpu.memory_space<vmem>>, vector<16x16x32xbf16>
    tpu.vector_store %arg8[%c1_44, %c1_45, %c0_46], %35 {strides = array<i32>} : memref<18x18x32xbf16, #tpu.memory_space<vmem>>, vector<16x16x32xbf16>,
    %c0_47 = arith.constant 0 : index
    %c0_48 = arith.constant 0 : index
    %c0_49 = arith.constant 0 : index
    %37 = vector.load %arg8[%c0_47, %c0_48, %c0_49] : memref<18x18x32xbf16, #tpu.memory_space<vmem>>, vector<16x16x32xbf16>
    %38 = vector.shape_cast %37 : vector<16x16x32xbf16> to vector<256x32xbf16>
    %c0_50 = arith.constant 0 : index
    %c1_51 = arith.constant 1 : index
    %c0_52 = arith.constant 0 : index
    %39 = vector.load %arg8[%c0_50, %c1_51, %c0_52] : memref<18x18x32xbf16, #tpu.memory_space<vmem>>, vector<16x16x32xbf16>
    %40 = vector.shape_cast %39 : vector<16x16x32xbf16> to vector<256x32xbf16>
    %c0_53 = arith.constant 0 : index
    %c2_54 = arith.constant 2 : index
    %c0_55 = arith.constant 0 : index
    %41 = vector.load %arg8[%c0_53, %c2_54, %c0_55] : memref<18x18x32xbf16, #tpu.memory_space<vmem>>, vector<16x16x32xbf16>
    %42 = vector.shape_cast %41 : vector<16x16x32xbf16> to vector<256x32xbf16>
    %c1_56 = arith.constant 1 : index
    %c0_57 = arith.constant 0 : index
    %c0_58 = arith.constant 0 : index
    %43 = vector.load %arg8[%c1_56, %c0_57, %c0_58] : memref<18x18x32xbf16, #tpu.memory_space<vmem>>, vector<16x16x32xbf16>
    %44 = vector.shape_cast %43 : vector<16x16x32xbf16> to vector<256x32xbf16>
    %c1_59 = arith.constant 1 : index
    %c1_60 = arith.constant 1 : index
    %c0_61 = arith.constant 0 : index
    %45 = vector.load %arg8[%c1_59, %c1_60, %c0_61] : memref<18x18x32xbf16, #tpu.memory_space<vmem>>, vector<16x16x32xbf16>
    %46 = vector.shape_cast %45 : vector<16x16x32xbf16> to vector<256x32xbf16>
    %c1_62 = arith.constant 1 : index
    %c2_63 = arith.constant 2 : index
    %c0_64 = arith.constant 0 : index
    %47 = vector.load %arg8[%c1_62, %c2_63, %c0_64] : memref<18x18x32xbf16, #tpu.memory_space<vmem>>, vector<16x16x32xbf16>
    %48 = vector.shape_cast %47 : vector<16x16x32xbf16> to vector<256x32xbf16>
    %c2_65 = arith.constant 2 : index
    %c0_66 = arith.constant 0 : index
    %c0_67 = arith.constant 0 : index
    %49 = vector.load %arg8[%c2_65, %c0_66, %c0_67] : memref<18x18x32xbf16, #tpu.memory_space<vmem>>, vector<16x16x32xbf16>
    %50 = vector.shape_cast %49 : vector<16x16x32xbf16> to vector<256x32xbf16>
    %c2_68 = arith.constant 2 : index
    %c1_69 = arith.constant 1 : index
    %c0_70 = arith.constant 0 : index
    %51 = vector.load %arg8[%c2_68, %c1_69, %c0_70] : memref<18x18x32xbf16, #tpu.memory_space<vmem>>, vector<16x16x32xbf16>
    %52 = vector.shape_cast %51 : vector<16x16x32xbf16> to vector<256x32xbf16>
    %c2_71 = arith.constant 2 : index
    %c2_72 = arith.constant 2 : index
    %c0_73 = arith.constant 0 : index
    %53 = vector.load %arg8[%c2_71, %c2_72, %c0_73] : memref<18x18x32xbf16, #tpu.memory_space<vmem>>, vector<16x16x32xbf16>
    %54 = vector.shape_cast %53 : vector<16x16x32xbf16> to vector<256x32xbf16>
    %55 = tpu.concatenate %38, %40, %42, %44, %46, %48, %50, %52, %54 in 1 : vector<256x32xbf16>, vector<256x32xbf16>, vector<256x32xbf16>, vector<256x32xbf16>, vector<256x32xbf16>, vector<256x32xbf16>, vector<256x32xbf16>, vector<256x32xbf16>, vector<256x32xbf16> -> vector<256x288xbf16>
    %c0_74 = arith.constant 0 : index
    %c0_75 = arith.constant 0 : index
    %56 = vector.load %arg4[%c0_74, %c0_75] : memref<288x32xbf16, #tpu.memory_space<vmem>>, vector<288x32xbf16>
    %cst_76 = arith.constant dense<0.000000e+00> : vector<256x32xf32>
    %57 = tpu.matmul %55, %56, %cst_76 {dimension_numbers = #tpu.dot_dimension_numbers<[1], [0], [0], [1], [0, 0, 1, 1], [], []>} : vector<256x288xbf16>, vector<288x32xbf16>, vector<256x32xf32> -> vector<256x32xf32>
    %c0_77 = arith.constant 0 : index
    %c0_78 = arith.constant 0 : index
    %58 = vector.load %arg5[%c0_77, %c0_78] : memref<1x32xf32, #tpu.memory_space<vmem>>, vector<1x32xf32>
    %59 = vector.broadcast %58 : vector<1x32xf32> to vector<256x32xf32>
    %60 = arith.addf %57, %59 : vector<256x32xf32>
    %c0_79 = arith.constant 0 : index
    %c0_80 = arith.constant 0 : index
    %c0_81 = arith.constant 0 : index
    %c0_82 = arith.constant 0 : index
    %61 = vector.load %arg1[%c0_79, %c0_80, %c0_81, %c0_82] : memref<1x16x16x32xf32, #tpu.memory_space<vmem>>, vector<1x16x16x32xf32>
    %62 = vector.shape_cast %61 : vector<1x16x16x32xf32> to vector<16x16x32xf32>
    %63 = vector.shape_cast %62 : vector<16x16x32xf32> to vector<256x32xf32>
    %64 = arith.addf %60, %63 : vector<256x32xf32>
    %65 = vector.shape_cast %64 : vector<256x32xf32> to vector<16x16x32xf32>
    %c0_83 = arith.constant 0 : index
    %c0_84 = arith.constant 0 : index
    %c0_85 = arith.constant 0 : index
    %66 = vector.load %arg9[%c0_83, %c0_84, %c0_85] : memref<16x16x32xf32, #tpu.memory_space<vmem>>, vector<16x16x32xf32>
    tpu.vector_store %arg9[%c0_83, %c0_84, %c0_85], %65 {strides = array<i32>} : memref<16x16x32xf32, #tpu.memory_space<vmem>>, vector<16x16x32xf32>,
    %c0_86 = arith.constant 0 : index
    %c0_87 = arith.constant 0 : index
    %c0_88 = arith.constant 0 : index
    %67 = tpu.strided_load %arg9[%c0_86, %c0_87, %c0_88] {strides = array<i32: 2, 1, 1>} : memref<16x16x32xf32, #tpu.memory_space<vmem>>, vector<8x16x32xf32>
    %c1_89 = arith.constant 1 : index
    %c0_90 = arith.constant 0 : index
    %c0_91 = arith.constant 0 : index
    %68 = tpu.strided_load %arg9[%c1_89, %c0_90, %c0_91] {strides = array<i32: 2, 1, 1>} : memref<16x16x32xf32, #tpu.memory_space<vmem>>, vector<8x16x32xf32>
    %69 = arith.addf %67, %68 : vector<8x16x32xf32>
    %c0_92 = arith.constant 0 : index
    %c0_93 = arith.constant 0 : index
    %c0_94 = arith.constant 0 : index
    %70 = vector.load %arg10[%c0_92, %c0_93, %c0_94] : memref<8x16x32xf32, #tpu.memory_space<vmem>>, vector<8x16x32xf32>
    tpu.vector_store %arg10[%c0_92, %c0_93, %c0_94], %69 {strides = array<i32>} : memref<8x16x32xf32, #tpu.memory_space<vmem>>, vector<8x16x32xf32>,
    %c0_95 = arith.constant 0 : index
    %c0_96 = arith.constant 0 : index
    %c0_97 = arith.constant 0 : index
    %71 = tpu.strided_load %arg10[%c0_95, %c0_96, %c0_97] {strides = array<i32: 1, 2, 1>} : memref<8x16x32xf32, #tpu.memory_space<vmem>>, vector<8x8x32xf32>
    %c0_98 = arith.constant 0 : index
    %c1_99 = arith.constant 1 : index
    %c0_100 = arith.constant 0 : index
    %72 = tpu.strided_load %arg10[%c0_98, %c1_99, %c0_100] {strides = array<i32: 1, 2, 1>} : memref<8x16x32xf32, #tpu.memory_space<vmem>>, vector<8x8x32xf32>
    %73 = arith.addf %71, %72 : vector<8x8x32xf32>
    %cst_101 = arith.constant 2.500000e-01 : f32
    %74 = vector.broadcast %cst_101 : f32 to vector<8x8x32xf32>
    %75 = arith.mulf %73, %74 : vector<8x8x32xf32>
    %76 = vector.shape_cast %75 : vector<8x8x32xf32> to vector<1x8x8x32xf32>
    %c0_102 = arith.constant 0 : index
    %c0_103 = arith.constant 0 : index
    %c0_104 = arith.constant 0 : index
    %c0_105 = arith.constant 0 : index
    %77 = vector.load %arg6[%c0_102, %c0_103, %c0_104, %c0_105] : memref<1x8x8x32xf32, #tpu.memory_space<vmem>>, vector<1x8x8x32xf32>
    tpu.vector_store %arg6[%c0_102, %c0_103, %c0_104, %c0_105], %76 {strides = array<i32>} : memref<1x8x8x32xf32, #tpu.memory_space<vmem>>, vector<1x8x8x32xf32>,
    return
  }
  func.func @transform_0(%arg0: i32) -> (i32, i32, i32, i32) {
    %c0_i32 = arith.constant 0 : i32
    %c0_i32_0 = arith.constant 0 : i32
    %c0_i32_1 = arith.constant 0 : i32
    %c0_i32_2 = arith.constant 0 : i32
    return %arg0, %c0_i32, %c0_i32_0, %c0_i32_1 : i32, i32, i32, i32
  }
  func.func @transform_1(%arg0: i32) -> (i32, i32) {
    %c0_i32 = arith.constant 0 : i32
    %c0_i32_0 = arith.constant 0 : i32
    %c0_i32_1 = arith.constant 0 : i32
    return %c0_i32, %c0_i32_0 : i32, i32
  }
  func.func @transform_2(%arg0: i32) -> (i32, i32) {
    %c0_i32 = arith.constant 0 : i32
    %c0_i32_0 = arith.constant 0 : i32
    %c0_i32_1 = arith.constant 0 : i32
    return %c0_i32, %c0_i32_0 : i32, i32
  }
  func.func @transform_3(%arg0: i32) -> (i32, i32) {
    %c0_i32 = arith.constant 0 : i32
    %c0_i32_0 = arith.constant 0 : i32
    %c0_i32_1 = arith.constant 0 : i32
    return %c0_i32, %c0_i32_0 : i32, i32
  }
  func.func @transform_4(%arg0: i32) -> (i32, i32) {
    %c0_i32 = arith.constant 0 : i32
    %c0_i32_0 = arith.constant 0 : i32
    %c0_i32_1 = arith.constant 0 : i32
    return %c0_i32, %c0_i32_0 : i32, i32
  }
  func.func @transform_5(%arg0: i32) -> (i32, i32, i32, i32) {
    %c0_i32 = arith.constant 0 : i32
    %c0_i32_0 = arith.constant 0 : i32
    %c0_i32_1 = arith.constant 0 : i32
    %c0_i32_2 = arith.constant 0 : i32
    return %arg0, %c0_i32, %c0_i32_0, %c0_i32_1 : i32, i32, i32, i32
  }
}

</mosaic_0001>

<llo_original>
// kernel: residual_block_down.1
$region0: #{residual_block_down.1}
  #allocation0 [shape = 'u32[]', space=smem, size = 0x4, offset = 0x4, fixed_abs, tag = 'smem constant byte address 0x4 - core index']
  #allocation1 [shape = 'u32[144,128]{1,0:T(1,128)}', space=vmem, size = 0x12000, scoped, tag = 'internal scratch']
  #allocation2 [shape = 'bf16[18,18,32]{2,1,0:T(8,128)(2,1)}', space=vmem, size = 0x1b000, scoped, tag = 'scratch operand']
  #allocation3 [shape = 'bf16[18,18,32]{2,1,0:T(8,128)(2,1)}', space=vmem, size = 0x1b000, scoped, tag = 'scratch operand']
  #allocation4 [shape = 'f32[16,16,32]{2,1,0:T(8,128)}', space=vmem, size = 0x20000, scoped, tag = 'scratch operand']
  #allocation5 [shape = 'f32[8,16,32]{2,1,0:T(8,128)}', space=vmem, size = 0x10000, scoped, tag = 'scratch operand']
  %s0 = inlined_call_operand.vmem [shape: f32[2,16,16,32], index: 0, kind: input, shape index: {}]
  %s1 = inlined_call_operand.vmem [shape: bf16[288,32], index: 1, kind: input, shape index: {}]
  %s2 = inlined_call_operand.vmem [shape: f32[1,32], index: 2, kind: input, shape index: {}]
  %s3 = inlined_call_operand.vmem [shape: bf16[288,32], index: 3, kind: input, shape index: {}]
  %s4 = inlined_call_operand.vmem [shape: f32[1,32], index: 4, kind: input, shape index: {}]
  %s5 = inlined_call_operand.hbm [shape: f32[2,8,8,32], index: 5, kind: output, shape index: {}]
  %s6 = sld [smem:[#allocation0]]
  $region53: #{residual_block_down.1} parent=0
    _
  %s8 = ssub.s32 1, %s6
  %s9 = scalar_select 0, %s8, %s6
  $region1: #{residual_block_down.1} parent=0
    #allocation6 [shape = 'u8[65536]{0}', space=vmem, size = 0x10000, scoped, tag = 'output window, operand 0']
    #allocation7 [shape = 's32[2]{0}', space=sflag, size = 0x8, scoped, tag = 'scoped memory for residual_block_down.1']
    %10 = vsyncpa [#allocation7], 0
    %s11 = scalar_lea.sflag [#allocation7], 1
    %12 = vsyncpa %s11, 0
    loop: start=0, step=1, limit=4
    $region2: #{residual_block_down.1} parent=1 // loop_pre_header
      _
    $region3: #{residual_block_down.1} parent=1 // loop_header
      %s14 = sphi 0, %s18
      %p15 = scmp.ge.s32.totalorder %s14, 4
      %s24 = sphi 0, %s26
      %s27 = sphi 0, %s24
      %s28 = sphi 0, %s27
      %s44 = sphi 0, %s28
      %s48 = sphi 0, %s48
      %s50 = sphi 0, %s48
      %s51 = sphi 0, %s50
      %s65 = sphi 0, %s51
      %s69 = sphi 0, %s69
      %s71 = sphi 0, %s69
      %s72 = sphi 0, %s71
      %s86 = sphi 0, %s72
      %s90 = sphi 0, %s90
      %s92 = sphi 0, %s90
      %s93 = sphi 0, %s92
      %s107 = sphi 0, %s93
      %s111 = sphi 0, %s111
      %s113 = sphi 0, %s111
      %s114 = sphi 0, %s113
      %s128 = sphi 0, %s114
      %s134 = sphi 0, %s136
      %s137 = sphi 0, %s134
      %s138 = sphi 0, %s137
      %s154 = sphi 0, %s138
    $region4: #{residual_block_down.1} parent=1 // loop_header_branch
      %17 = sbr.rel (%p15) target = $region8
    $region5: #{residual_block_down.1} parent=1 // loop_body
      %s19 = ssub.s32 %s14, 1
      %s20 = ssub.s32 %s14, 2
      %s21 = sadd.s32 %s14, 1
      %s22 = ssub.s32 %s14, %s21
      %p23 = scmp.eq.s32.totalorder %s22, 0
      %s25 = sadd.s32 %s24, 1
      %s26 = scalar_select %p23, %s24, %s25
      %p29 = pneg %p23
      %p30 = scmp.eq.s32.totalorder %s14, 1
      %p31 = por %p29, %p30
      %p32 = scmp.ne.s32.totalorder %s24, %s27
      %p33 = scmp.eq.s32.totalorder %s14, 0
      %p34 = por %p32, %p33
      %p35 = scmp.ne.s32.totalorder %s24, %s27
      %p36 = scmp.eq.s32.totalorder %s19, 1
      %p37 = por %p35, %p36
      %p38 = scmp.ne.s32.totalorder %s27, %s28
      %p39 = scmp.eq.s32.totalorder %s19, 0
      %p40 = por %p38, %p39
      %p41 = scmp.ne.s32.totalorder %s27, %s28
      %p42 = scmp.eq.s32.totalorder %s20, 1
      %p43 = por %p41, %p42
      %p45 = scmp.ne.s32.totalorder %s28, %s44
      %p46 = scmp.eq.s32.totalorder %s20, 0
      %p47 = por %p45, %p46
      %s49 = sadd.s32 %s48, 1
      %p52 = scmp.eq.s32.totalorder %s14, 1
      %p53 = scmp.ne.s32.totalorder %s48, %s50
      %p54 = scmp.eq.s32.totalorder %s14, 0
      %p55 = por %p53, %p54
      %p56 = scmp.ne.s32.totalorder %s48, %s50
      %p57 = scmp.eq.s32.totalorder %s19, 1
      %p58 = por %p56, %p57
      %p59 = scmp.ne.s32.totalorder %s50, %s51
      %p60 = scmp.eq.s32.totalorder %s19, 0
      %p61 = por %p59, %p60
      %p62 = scmp.ne.s32.totalorder %s50, %s51
      %p63 = scmp.eq.s32.totalorder %s20, 1
      %p64 = por %p62, %p63
      %p66 = scmp.ne.s32.totalorder %s51, %s65
      %p67 = scmp.eq.s32.totalorder %s20, 0
      %p68 = por %p66, %p67
      %s70 = sadd.s32 %s69, 1
      %p73 = scmp.eq.s32.totalorder %s14, 1
      %p74 = scmp.ne.s32.totalorder %s69, %s71
      %p75 = scmp.eq.s32.totalorder %s14, 0
      %p76 = por %p74, %p75
      %p77 = scmp.ne.s32.totalorder %s69, %s71
      %p78 = scmp.eq.s32.totalorder %s19, 1
      %p79 = por %p77, %p78
      %p80 = scmp.ne.s32.totalorder %s71, %s72
      %p81 = scmp.eq.s32.totalorder %s19, 0
      %p82 = por %p80, %p81
      %p83 = scmp.ne.s32.totalorder %s71, %s72
      %p84 = scmp.eq.s32.totalorder %s20, 1
      %p85 = por %p83, %p84
      %p87 = scmp.ne.s32.totalorder %s72, %s86
      %p88 = scmp.eq.s32.totalorder %s20, 0
      %p89 = por %p87, %p88
      %s91 = sadd.s32 %s90, 1
      %p94 = scmp.eq.s32.totalorder %s14, 1
      %p95 = scmp.ne.s32.totalorder %s90, %s92
      %p96 = scmp.eq.s32.totalorder %s14, 0
      %p97 = por %p95, %p96
      %p98 = scmp.ne.s32.totalorder %s90, %s92
      %p99 = scmp.eq.s32.totalorder %s19, 1
      %p100 = por %p98, %p99
      %p101 = scmp.ne.s32.totalorder %s92, %s93
      %p102 = scmp.eq.s32.totalorder %s19, 0
      %p103 = por %p101, %p102
      %p104 = scmp.ne.s32.totalorder %s92, %s93
      %p105 = scmp.eq.s32.totalorder %s20, 1
      %p106 = por %p104, %p105
      %p108 = scmp.ne.s32.totalorder %s93, %s107
      %p109 = scmp.eq.s32.totalorder %s20, 0
      %p110 = por %p108, %p109
      %s112 = sadd.s32 %s111, 1
      %p115 = scmp.eq.s32.totalorder %s14, 1
      %p116 = scmp.ne.s32.totalorder %s111, %s113
      %p117 = scmp.eq.s32.totalorder %s14, 0
      %p118 = por %p116, %p117
      %p119 = scmp.ne.s32.totalorder %s111, %s113
      %p120 = scmp.eq.s32.totalorder %s19, 1
      %p121 = por %p119, %p120
      %p122 = scmp.ne.s32.totalorder %s113, %s114
      %p123 = scmp.eq.s32.totalorder %s19, 0
      %p124 = por %p122, %p123
      %p125 = scmp.ne.s32.totalorder %s113, %s114
      %p126 = scmp.eq.s32.totalorder %s20, 1
      %p127 = por %p125, %p126
      %p129 = scmp.ne.s32.totalorder %s114, %s128
      %p130 = scmp.eq.s32.totalorder %s20, 0
      %p131 = por %p129, %p130
      %s132 = ssub.s32 %s14, %s21
      %p133 = scmp.eq.s32.totalorder %s132, 0
      %s135 = sadd.s32 %s134, 1
      %s136 = scalar_select %p133, %s134, %s135
      %p139 = pneg %p133
      %p140 = scmp.eq.s32.totalorder %s14, 1
      %p141 = por %p139, %p140
      %p142 = scmp.ne.s32.totalorder %s134, %s137
      %p143 = scmp.eq.s32.totalorder %s14, 0
      %p144 = por %p142, %p143
      %p145 = scmp.ne.s32.totalorder %s134, %s137
      %p146 = scmp.eq.s32.totalorder %s19, 1
      %p147 = por %p145, %p146
      %p148 = scmp.ne.s32.totalorder %s137, %s138
      %p149 = scmp.eq.s32.totalorder %s19, 0
      %p150 = por %p148, %p149
      %p151 = scmp.ne.s32.totalorder %s137, %s138
      %p152 = scmp.eq.s32.totalorder %s20, 1
      %p153 = por %p151, %p152
      %p155 = scmp.ne.s32.totalorder %s138, %s154
      %p156 = scmp.eq.s32.totalorder %s20, 0
      %p157 = por %p155, %p156
      %p158 = scmp.le.s32.totalorder 1, %s14
      %p159 = scmp.lt.s32.totalorder %s14, 3
      %p160 = pnand %p158, %p159
      %p161 = pneg %p160
      // Predicated region
      $region9: #{residual_block_down.1} parent=5 // pred_check
        _
      $region10: #{residual_block_down.1} parent=5 // pred_check_branch
        %163 = sbr.rel (%p160) target = $region12
      $region11: #{residual_block_down.1} parent=5 // pred_region
        %s164 = ssub.s32 %s14, 1
        // Predicated region
        $region13: #{residual_block_down.1} parent=11 // pred_check
          %p165 = pneg %p61
        $region14: #{residual_block_down.1} parent=11 // pred_check_branch
          %167 = sbr.rel (%p165) target = $region16
        $region15: #{residual_block_down.1} parent=11 // pred_region
          _
        $region16: #{residual_block_down.1} parent=11 // pred_fallthru
          _
        // Predicated region
        $region17: #{residual_block_down.1} parent=11 // pred_check
          %p168 = pneg %p82
        $region18: #{residual_block_down.1} parent=11 // pred_check_branch
          %170 = sbr.rel (%p168) target = $region20
        $region19: #{residual_block_down.1} parent=11 // pred_region
          _
        $region20: #{residual_block_down.1} parent=11 // pred_fallthru
          _
        // Predicated region
        $region21: #{residual_block_down.1} parent=11 // pred_check
          %p171 = pneg %p103
        $region22: #{residual_block_down.1} parent=11 // pred_check_branch
          %173 = sbr.rel (%p171) target = $region24
        $region23: #{residual_block_down.1} parent=11 // pred_region
          _
        $region24: #{residual_block_down.1} parent=11 // pred_fallthru
          _
        // Predicated region
        $region25: #{residual_block_down.1} parent=11 // pred_check
          %p174 = pneg %p124
        $region26: #{residual_block_down.1} parent=11 // pred_check_branch
          %176 = sbr.rel (%p174) target = $region28
        $region27: #{residual_block_down.1} parent=11 // pred_region
          _
        $region28: #{residual_block_down.1} parent=11 // pred_fallthru
          _
      $region12: #{residual_block_down.1} parent=5 // pred_fallthru
        _
      %p177 = scmp.lt.s32.totalorder %s14, 2
      // Predicated region
      $region29: #{residual_block_down.1} parent=5 // pred_check
        %p178 = pneg %p177
      $region30: #{residual_block_down.1} parent=5 // pred_check_branch
        %180 = sbr.rel (%p178) target = $region32
      $region31: #{residual_block_down.1} parent=5 // pred_region
        // Predicated region
        $region33: #{residual_block_down.1} parent=31 // pred_check
          %p181 = pneg %p34
        $region34: #{residual_block_down.1} parent=31 // pred_check_branch
          %183 = sbr.rel (%p181) target = $region36
        $region35: #{residual_block_down.1} parent=31 // pred_region
          %p184 = scmp.lt.s32.totalorder %s14, 1
          %s185 = scalar_select %p184, %s14, 1
          %s186 = smul.addr %s185, 32
          %s187 = smul.addr %s186, 8
          %s188 = scalar_lea.vmem %s0, %s187
        $region36: #{residual_block_down.1} parent=31 // pred_fallthru
          _
      $region32: #{residual_block_down.1} parent=5 // pred_fallthru
        _
      %p189 = scmp.le.s32.totalorder 1, %s14
      %p190 = scmp.lt.s32.totalorder %s14, 3
      %p191 = pnand %p189, %p190
      %p192 = pneg %p191
      // Predicated region
      $region37: #{residual_block_down.1} parent=5 // pred_check
        _
      $region38: #{residual_block_down.1} parent=5 // pred_check_branch
        %194 = sbr.rel (%p191) target = $region40
      $region39: #{residual_block_down.1} parent=5 // pred_region
        %s195 = ssub.s32 %s14, 1
        %p196 = scmp.lt.s32.totalorder %s19, 1
        %s197 = scalar_select %p196, %s19, 1
        %s198 = smul.addr %s197, 32
        %s199 = smul.addr %s198, 8
        %s200 = scalar_lea.vmem %s0, %s199
        %p201 = pneg %p40
        %p202 = pneg %p37
        %p203 = pneg %p61
        %p204 = pneg %p58
        %p205 = pneg %p82
        %p206 = pneg %p79
        %p207 = pneg %p103
        %p208 = pneg %p100
        %p209 = pneg %p124
        %p210 = pneg %p121
        %p211 = pneg %p150
        %p212 = pneg %p147
        %s213 = sand.u32 %s137, 1
        %s214 = scalar_lea.sflag [#allocation7], %s213
        %s215 = sand.u32 %s137, 1
        %s216 = smul.addr %s215, 64
        %s217 = scalar_lea.vmem [#allocation6], %s216
        %p218 = scmp.lt.s32.totalorder %s19, 1
        %s219 = scalar_select %p218, %s19, 1
        %s220 = smul.addr %s219, 32
        %s221 = smul.addr %s220, 8
        %s222 = scalar_lea.vmem %s0, %s221
        %vm224 = vcmask 257024
        %225 = vst.msk [vmem:[#allocation2] sm:$0xf] %vm224, 0
        %226 = vst.msk [vmem:[#allocation2 + $0x4] sm:$0xf] %vm224, 0
        %vm227 = vcmask 253952
        %228 = vst.msk [vmem:[#allocation2 + $0x8] sm:$0x1] %vm227, 0
        %229 = vst.msk [vmem:[#allocation2 + $0xc] sm:$0xf] %vm224, 0
        %230 = vst.msk [vmem:[#allocation2 + $0x10] sm:$0xf] %vm224, 0
        %231 = vst.msk [vmem:[#allocation2 + $0x14] sm:$0x1] %vm227, 0
        %232 = vst.msk [vmem:[#allocation2 + $0x18] sm:$0xf] %vm224, 0
        %233 = vst.msk [vmem:[#allocation2 + $0x1c] sm:$0xf] %vm224, 0
        %234 = vst.msk [vmem:[#allocation2 + $0x20] sm:$0x1] %vm227, 0
        %235 = vst.msk [vmem:[#allocation2 + $0x24] sm:$0xf] %vm224, 0
        %236 = vst.msk [vmem:[#allocation2 + $0x28] sm:$0xf] %vm224, 0
        %237 = vst.msk [vmem:[#allocation2 + $0x2c] sm:$0x1] %vm227, 0
        %238 = vst.msk [vmem:[#allocation2 + $0x30] sm:$0xf] %vm224, 0
        %239 = vst.msk [vmem:[#allocation2 + $0x34] sm:$0xf] %vm224, 0
        %240 = vst.msk [vmem:[#allocation2 + $0x38] sm:$0x1] %vm227, 0
        %241 = vst.msk [vmem:[#allocation2 + $0x3c] sm:$0xf] %vm224, 0
        %242 = vst.msk [vmem:[#allocation2 + $0x40] sm:$0xf] %vm224, 0
        %243 = vst.msk [vmem:[#allocation2 + $0x44] sm:$0x1] %vm227, 0
        %244 = vst.msk [vmem:[#allocation2 + $0x48] sm:$0xf] %vm224, 0
        %245 = vst.msk [vmem:[#allocation2 + $0x4c] sm:$0xf] %vm224, 0
        %246 = vst.msk [vmem:[#allocation2 + $0x50] sm:$0x1] %vm227, 0
        %247 = vst.msk [vmem:[#allocation2 + $0x54] sm:$0xf] %vm224, 0
        %248 = vst.msk [vmem:[#allocation2 + $0x58] sm:$0xf] %vm224, 0
        %249 = vst.msk [vmem:[#allocation2 + $0x5c] sm:$0x1] %vm227, 0
        %250 = vst.msk [vmem:[#allocation2 + $0x60] sm:$0xf] %vm224, 0
        %251 = vst.msk [vmem:[#allocation2 + $0x64] sm:$0xf] %vm224, 0
        %252 = vst.msk [vmem:[#allocation2 + $0x68] sm:$0x1] %vm227, 0
        %253 = vst.msk [vmem:[#allocation2 + $0x6c] sm:$0xf] %vm224, 0
        %254 = vst.msk [vmem:[#allocation2 + $0x70] sm:$0xf] %vm224, 0
        %255 = vst.msk [vmem:[#allocation2 + $0x74] sm:$0x1] %vm227, 0
        %256 = vst.msk [vmem:[#allocation2 + $0x78] sm:$0xf] %vm224, 0
        %257 = vst.msk [vmem:[#allocation2 + $0x7c] sm:$0xf] %vm224, 0
        %258 = vst.msk [vmem:[#allocation2 + $0x80] sm:$0x1] %vm227, 0
        %259 = vst.msk [vmem:[#allocation2 + $0x84] sm:$0xf] %vm224, 0
        %260 = vst.msk [vmem:[#allocation2 + $0x88] sm:$0xf] %vm224, 0
        %261 = vst.msk [vmem:[#allocation2 + $0x8c] sm:$0x1] %vm227, 0
        %262 = vst.msk [vmem:[#allocation2 + $0x90] sm:$0xf] %vm224, 0
        %263 = vst.msk [vmem:[#allocation2 + $0x94] sm:$0xf] %vm224, 0
        %264 = vst.msk [vmem:[#allocation2 + $0x98] sm:$0x1] %vm227, 0
        %265 = vst.msk [vmem:[#allocation2 + $0x9c] sm:$0xf] %vm224, 0
        %266 = vst.msk [vmem:[#allocation2 + $0xa0] sm:$0xf] %vm224, 0
        %267 = vst.msk [vmem:[#allocation2 + $0xa4] sm:$0x1] %vm227, 0
        %268 = vst.msk [vmem:[#allocation2 + $0xa8] sm:$0xf] %vm224, 0
        %269 = vst.msk [vmem:[#allocation2 + $0xac] sm:$0xf] %vm224, 0
        %270 = vst.msk [vmem:[#allocation2 + $0xb0] sm:$0x1] %vm227, 0
        %271 = vst.msk [vmem:[#allocation2 + $0xb4] sm:$0xf] %vm224, 0
        %272 = vst.msk [vmem:[#allocation2 + $0xb8] sm:$0xf] %vm224, 0
        %273 = vst.msk [vmem:[#allocation2 + $0xbc] sm:$0x1] %vm227, 0
        %274 = vst.msk [vmem:[#allocation2 + $0xc0] sm:$0xf] %vm224, 0
        %275 = vst.msk [vmem:[#allocation2 + $0xc4] sm:$0xf] %vm224, 0
        %276 = vst.msk [vmem:[#allocation2 + $0xc8] sm:$0x1] %vm227, 0
        %277 = vst.msk [vmem:[#allocation2 + $0xcc] sm:$0xf] %vm224, 0
        %278 = vst.msk [vmem:[#allocation2 + $0xd0] sm:$0xf] %vm224, 0
        %279 = vst.msk [vmem:[#allocation2 + $0xd4] sm:$0x1] %vm227, 0
        %v280 = vld [vmem:[%s222] sm:$0xff]
        %v281 = vld [vmem:[%s222 + $0x8] sm:$0xff]
        %v282 = vld [vmem:[%s222 + $0x10] sm:$0xff]
        %v283 = vld [vmem:[%s222 + $0x18] sm:$0xff]
        %v284 = vld [vmem:[%s222 + $0x20] sm:$0xff]
        %v285 = vld [vmem:[%s222 + $0x28] sm:$0xff]
        %v286 = vld [vmem:[%s222 + $0x30] sm:$0xff]
        %v287 = vld [vmem:[%s222 + $0x38] sm:$0xff]
        %v288 = vld [vmem:[%s222 + $0x40] sm:$0xff]
        %v289 = vld [vmem:[%s222 + $0x48] sm:$0xff]
        %v290 = vld [vmem:[%s222 + $0x50] sm:$0xff]
        %v291 = vld [vmem:[%s222 + $0x58] sm:$0xff]
        %v292 = vld [vmem:[%s222 + $0x60] sm:$0xff]
        %v293 = vld [vmem:[%s222 + $0x68] sm:$0xff]
        %v294 = vld [vmem:[%s222 + $0x70] sm:$0xff]
        %v295 = vld [vmem:[%s222 + $0x78] sm:$0xff]
        %v296 = vld [vmem:[%s222 + $0x80] sm:$0xff]
        %v297 = vld [vmem:[%s222 + $0x88] sm:$0xff]
        %v298 = vld [vmem:[%s222 + $0x90] sm:$0xff]
        %v299 = vld [vmem:[%s222 + $0x98] sm:$0xff]
        %v300 = vld [vmem:[%s222 + $0xa0] sm:$0xff]
        %v301 = vld [vmem:[%s222 + $0xa8] sm:$0xff]
        %v302 = vld [vmem:[%s222 + $0xb0] sm:$0xff]
        %v303 = vld [vmem:[%s222 + $0xb8] sm:$0xff]
        %v304 = vld [vmem:[%s222 + $0xc0] sm:$0xff]
        %v305 = vld [vmem:[%s222 + $0xc8] sm:$0xff]
        %v306 = vld [vmem:[%s222 + $0xd0] sm:$0xff]
        %v307 = vld [vmem:[%s222 + $0xd8] sm:$0xff]
        %v308 = vld [vmem:[%s222 + $0xe0] sm:$0xff]
        %v309 = vld [vmem:[%s222 + $0xe8] sm:$0xff]
        %v310 = vld [vmem:[%s222 + $0xf0] sm:$0xff]
        %v311 = vld [vmem:[%s222 + $0xf8] sm:$0xff]
        %v312 = vpack.c.bf16 %v281, %v280
        %v313 = vpack.c.bf16 %v283, %v282
        %v314 = vpack.c.bf16 %v285, %v284
        %v315 = vpack.c.bf16 %v287, %v286
        %v316 = vpack.c.bf16 %v289, %v288
        %v317 = vpack.c.bf16 %v291, %v290
        %v318 = vpack.c.bf16 %v293, %v292
        %v319 = vpack.c.bf16 %v295, %v294
        %v320 = vpack.c.bf16 %v297, %v296
        %v321 = vpack.c.bf16 %v299, %v298
        %v322 = vpack.c.bf16 %v301, %v300
        %v323 = vpack.c.bf16 %v303, %v302
        %v324 = vpack.c.bf16 %v305, %v304
        %v325 = vpack.c.bf16 %v307, %v306
        %v326 = vpack.c.bf16 %v309, %v308
        %v327 = vpack.c.bf16 %v311, %v310
        %v344 = vunpack.c.l.b16 %v312
        %v345 = vunpack.c.h.b16 %v312
        %v346 = vunpack.c.l.b16 %v313
        %v347 = vunpack.c.h.b16 %v313
        %v348 = vunpack.c.l.b16 %v314
        %v349 = vunpack.c.h.b16 %v314
        %v350 = vunpack.c.l.b16 %v315
        %v351 = vunpack.c.h.b16 %v315
        %v352 = vunpack.c.l.b16 %v316
        %v353 = vunpack.c.h.b16 %v316
        %v354 = vunpack.c.l.b16 %v317
        %v355 = vunpack.c.h.b16 %v317
        %v356 = vunpack.c.l.b16 %v318
        %v357 = vunpack.c.h.b16 %v318
        %v358 = vunpack.c.l.b16 %v319
        %v359 = vunpack.c.h.b16 %v319
        %v360 = vunpack.c.l.b16 %v320
        %v361 = vunpack.c.h.b16 %v320
        %v362 = vunpack.c.l.b16 %v321
        %v363 = vunpack.c.h.b16 %v321
        %v364 = vunpack.c.l.b16 %v322
        %v365 = vunpack.c.h.b16 %v322
        %v366 = vunpack.c.l.b16 %v323
        %v367 = vunpack.c.h.b16 %v323
        %v368 = vunpack.c.l.b16 %v324
        %v369 = vunpack.c.h.b16 %v324
        %v370 = vunpack.c.l.b16 %v325
        %v371 = vunpack.c.h.b16 %v325
        %v372 = vunpack.c.l.b16 %v326
        %v373 = vunpack.c.h.b16 %v326
        %v374 = vunpack.c.l.b16 %v327
        %v375 = vunpack.c.h.b16 %v327
        %v376 = vpack.c.b16 %v344, %v344
        %v377 = vpack.c.b16 %v345, %v345
        %v378 = vpack.c.b16 %v346, %v346
        %v379 = vpack.c.b16 %v347, %v347
        %v380 = vpack.c.b16 %v348, %v348
        %v381 = vpack.c.b16 %v349, %v349
        %v382 = vpack.c.b16 %v350, %v350
        %v383 = vpack.c.b16 %v351, %v351
        %v384 = vpack.c.b16 %v352, %v352
        %v385 = vpack.c.b16 %v353, %v353
        %v386 = vpack.c.b16 %v354, %v354
        %v387 = vpack.c.b16 %v355, %v355
        %v388 = vpack.c.b16 %v356, %v356
        %v389 = vpack.c.b16 %v357, %v357
        %v390 = vpack.c.b16 %v358, %v358
        %v391 = vpack.c.b16 %v359, %v359
        %v392 = vpack.c.b16 %v360, %v360
        %v393 = vpack.c.b16 %v361, %v361
        %v394 = vpack.c.b16 %v362, %v362
        %v395 = vpack.c.b16 %v363, %v363
        %v396 = vpack.c.b16 %v364, %v364
        %v397 = vpack.c.b16 %v365, %v365
        %v398 = vpack.c.b16 %v366, %v366
        %v399 = vpack.c.b16 %v367, %v367
        %v400 = vpack.c.b16 %v368, %v368
        %v401 = vpack.c.b16 %v369, %v369
        %v402 = vpack.c.b16 %v370, %v370
        %v403 = vpack.c.b16 %v371, %v371
        %v404 = vpack.c.b16 %v372, %v372
        %v405 = vpack.c.b16 %v373, %v373
        %v406 = vpack.c.b16 %v374, %v374
        %v407 = vpack.c.b16 %v375, %v375
        %vm408 = vsmask.f32 256
        %vm409 = vsmask.f32 4368
        %vm410 = vmor %vm408, %vm409
        %v412 = vshrl.u32 %v376, 16
        %v414 = vrot.slane %v412, 7
        %v415 = vshll.u32 %v376, 16
        %v417 = vor.u32 %v414, %v415
        %v418 = vrot.slane %v414, 4
        %v420 = vshrl.u32 %v377, 16
        %v422 = vrot.slane %v420, 7
        %v423 = vshll.u32 %v377, 16
        %v425 = vor.u32 %v422, %v423
        %v426 = vsel %vm410, %v418, %v425
        %v427 = vrot.slane %v422, 4
        %v429 = vshrl.u32 %v378, 16
        %v431 = vrot.slane %v429, 7
        %v432 = vshll.u32 %v378, 16
        %v434 = vor.u32 %v431, %v432
        %v435 = vrot.slane %v431, 4
        %v437 = vshrl.u32 %v379, 16
        %v439 = vrot.slane %v437, 7
        %v440 = vshll.u32 %v379, 16
        %v442 = vor.u32 %v439, %v440
        %v443 = vsel %vm410, %v435, %v442
        %v444 = vrot.slane %v439, 4
        %v446 = vshrl.u32 %v380, 16
        %v448 = vrot.slane %v446, 7
        %v449 = vshll.u32 %v380, 16
        %v451 = vor.u32 %v448, %v449
        %v452 = vrot.slane %v448, 4
        %v454 = vshrl.u32 %v381, 16
        %v456 = vrot.slane %v454, 7
        %v457 = vshll.u32 %v381, 16
        %v459 = vor.u32 %v456, %v457
        %v460 = vsel %vm410, %v452, %v459
        %v461 = vrot.slane %v456, 4
        %v463 = vshrl.u32 %v382, 16
        %v465 = vrot.slane %v463, 7
        %v466 = vshll.u32 %v382, 16
        %v468 = vor.u32 %v465, %v466
        %v469 = vrot.slane %v465, 4
        %v471 = vshrl.u32 %v383, 16
        %v473 = vrot.slane %v471, 7
        %v474 = vshll.u32 %v383, 16
        %v476 = vor.u32 %v473, %v474
        %v477 = vsel %vm410, %v469, %v476
        %v478 = vrot.slane %v473, 4
        %v480 = vshrl.u32 %v384, 16
        %v482 = vrot.slane %v480, 7
        %v483 = vshll.u32 %v384, 16
        %v485 = vor.u32 %v482, %v483
        %v486 = vrot.slane %v482, 4
        %v488 = vshrl.u32 %v385, 16
        %v490 = vrot.slane %v488, 7
        %v491 = vshll.u32 %v385, 16
        %v493 = vor.u32 %v490, %v491
        %v494 = vsel %vm410, %v486, %v493
        %v495 = vrot.slane %v490, 4
        %v497 = vshrl.u32 %v386, 16
        %v499 = vrot.slane %v497, 7
        %v500 = vshll.u32 %v386, 16
        %v502 = vor.u32 %v499, %v500
        %v503 = vrot.slane %v499, 4
        %v505 = vshrl.u32 %v387, 16
        %v507 = vrot.slane %v505, 7
        %v508 = vshll.u32 %v387, 16
        %v510 = vor.u32 %v507, %v508
        %v511 = vsel %vm410, %v503, %v510
        %v512 = vrot.slane %v507, 4
        %v514 = vshrl.u32 %v388, 16
        %v516 = vrot.slane %v514, 7
        %v517 = vshll.u32 %v388, 16
        %v519 = vor.u32 %v516, %v517
        %v520 = vrot.slane %v516, 4
        %v522 = vshrl.u32 %v389, 16
        %v524 = vrot.slane %v522, 7
        %v525 = vshll.u32 %v389, 16
        %v527 = vor.u32 %v524, %v525
        %v528 = vsel %vm410, %v520, %v527
        %v529 = vrot.slane %v524, 4
        %v531 = vshrl.u32 %v390, 16
        %v533 = vrot.slane %v531, 7
        %v534 = vshll.u32 %v390, 16
        %v536 = vor.u32 %v533, %v534
        %v537 = vrot.slane %v533, 4
        %v539 = vshrl.u32 %v391, 16
        %v541 = vrot.slane %v539, 7
        %v542 = vshll.u32 %v391, 16
        %v544 = vor.u32 %v541, %v542
        %v545 = vsel %vm410, %v537, %v544
        %v546 = vrot.slane %v541, 4
        %v548 = vshrl.u32 %v392, 16
        %v550 = vrot.slane %v548, 7
        %v551 = vshll.u32 %v392, 16
        %v553 = vor.u32 %v550, %v551
        %v554 = vrot.slane %v550, 4
        %v556 = vshrl.u32 %v393, 16
        %v558 = vrot.slane %v556, 7
        %v559 = vshll.u32 %v393, 16
        %v561 = vor.u32 %v558, %v559
        %v562 = vsel %vm410, %v554, %v561
        %v563 = vrot.slane %v558, 4
        %v565 = vshrl.u32 %v394, 16
        %v567 = vrot.slane %v565, 7
        %v568 = vshll.u32 %v394, 16
        %v570 = vor.u32 %v567, %v568
        %v571 = vrot.slane %v567, 4
        %v573 = vshrl.u32 %v395, 16
        %v575 = vrot.slane %v573, 7
        %v576 = vshll.u32 %v395, 16
        %v578 = vor.u32 %v575, %v576
        %v579 = vsel %vm410, %v571, %v578
        %v580 = vrot.slane %v575, 4
        %v582 = vshrl.u32 %v396, 16
        %v584 = vrot.slane %v582, 7
        %v585 = vshll.u32 %v396, 16
        %v587 = vor.u32 %v584, %v585
        %v588 = vrot.slane %v584, 4
        %v590 = vshrl.u32 %v397, 16
        %v592 = vrot.slane %v590, 7
        %v593 = vshll.u32 %v397, 16
        %v595 = vor.u32 %v592, %v593
        %v596 = vsel %vm410, %v588, %v595
        %v597 = vrot.slane %v592, 4
        %v599 = vshrl.u32 %v398, 16
        %v601 = vrot.slane %v599, 7
        %v602 = vshll.u32 %v398, 16
        %v604 = vor.u32 %v601, %v602
        %v605 = vrot.slane %v601, 4
        %v607 = vshrl.u32 %v399, 16
        %v609 = vrot.slane %v607, 7
        %v610 = vshll.u32 %v399, 16
        %v612 = vor.u32 %v609, %v610
        %v613 = vsel %vm410, %v605, %v612
        %v614 = vrot.slane %v609, 4
        %v616 = vshrl.u32 %v400, 16
        %v618 = vrot.slane %v616, 7
        %v619 = vshll.u32 %v400, 16
        %v621 = vor.u32 %v618, %v619
        %v622 = vrot.slane %v618, 4
        %v624 = vshrl.u32 %v401, 16
        %v626 = vrot.slane %v624, 7
        %v627 = vshll.u32 %v401, 16
        %v629 = vor.u32 %v626, %v627
        %v630 = vsel %vm410, %v622, %v629
        %v631 = vrot.slane %v626, 4
        %v633 = vshrl.u32 %v402, 16
        %v635 = vrot.slane %v633, 7
        %v636 = vshll.u32 %v402, 16
        %v638 = vor.u32 %v635, %v636
        %v639 = vrot.slane %v635, 4
        %v641 = vshrl.u32 %v403, 16
        %v643 = vrot.slane %v641, 7
        %v644 = vshll.u32 %v403, 16
        %v646 = vor.u32 %v643, %v644
        %v647 = vsel %vm410, %v639, %v646
        %v648 = vrot.slane %v643, 4
        %v650 = vshrl.u32 %v404, 16
        %v652 = vrot.slane %v650, 7
        %v653 = vshll.u32 %v404, 16
        %v655 = vor.u32 %v652, %v653
        %v656 = vrot.slane %v652, 4
        %v658 = vshrl.u32 %v405, 16
        %v660 = vrot.slane %v658, 7
        %v661 = vshll.u32 %v405, 16
        %v663 = vor.u32 %v660, %v661
        %v664 = vsel %vm410, %v656, %v663
        %v665 = vrot.slane %v660, 4
        %v667 = vshrl.u32 %v406, 16
        %v669 = vrot.slane %v667, 7
        %v670 = vshll.u32 %v406, 16
        %v672 = vor.u32 %v669, %v670
        %v673 = vrot.slane %v669, 4
        %v675 = vshrl.u32 %v407, 16
        %v677 = vrot.slane %v675, 7
        %v678 = vshll.u32 %v407, 16
        %v680 = vor.u32 %v677, %v678
        %v681 = vsel %vm410, %v673, %v680
        %v682 = vrot.slane %v677, 4
        %s731 = scalar_lea.vmem [#allocation2], 12
        %vm732 = vcmask 257024
        %vm733 = vsmask.f32 7938
        %vm734 = vmand %vm732, %vm733
        %v735 = vld [vmem:[%s731] sm:$0xf]
        %v736 = vsel %vm734, %v417, %v735
        %737 = vst [vmem:[%s731] sm:$0xf] %v736
        %738 = vst.msk [vmem:[%s731 + $0x4] sm:$0xf] %vm224, %v426
        %vm739 = vcmask 253952
        %vm740 = vmand %vm739, %vm408
        %v741 = vld [vmem:[%s731 + $0x8] sm:$0x1]
        %v742 = vsel %vm740, %v427, %v741
        %743 = vst [vmem:[%s731 + $0x8] sm:$0x1] %v742
        %v744 = vld [vmem:[%s731 + $0xc] sm:$0xf]
        %v745 = vsel %vm734, %v434, %v744
        %746 = vst [vmem:[%s731 + $0xc] sm:$0xf] %v745
        %747 = vst.msk [vmem:[%s731 + $0x10] sm:$0xf] %vm224, %v443
        %v748 = vld [vmem:[%s731 + $0x14] sm:$0x1]
        %v749 = vsel %vm740, %v444, %v748
        %750 = vst [vmem:[%s731 + $0x14] sm:$0x1] %v749
        %v751 = vld [vmem:[%s731 + $0x18] sm:$0xf]
        %v752 = vsel %vm734, %v451, %v751
        %753 = vst [vmem:[%s731 + $0x18] sm:$0xf] %v752
        %754 = vst.msk [vmem:[%s731 + $0x1c] sm:$0xf] %vm224, %v460
        %v755 = vld [vmem:[%s731 + $0x20] sm:$0x1]
        %v756 = vsel %vm740, %v461, %v755
        %757 = vst [vmem:[%s731 + $0x20] sm:$0x1] %v756
        %v758 = vld [vmem:[%s731 + $0x24] sm:$0xf]
        %v759 = vsel %vm734, %v468, %v758
        %760 = vst [vmem:[%s731 + $0x24] sm:$0xf] %v759
        %761 = vst.msk [vmem:[%s731 + $0x28] sm:$0xf] %vm224, %v477
        %v762 = vld [vmem:[%s731 + $0x2c] sm:$0x1]
        %v763 = vsel %vm740, %v478, %v762
        %764 = vst [vmem:[%s731 + $0x2c] sm:$0x1] %v763
        %v765 = vld [vmem:[%s731 + $0x30] sm:$0xf]
        %v766 = vsel %vm734, %v485, %v765
        %767 = vst [vmem:[%s731 + $0x30] sm:$0xf] %v766
        %768 = vst.msk [vmem:[%s731 + $0x34] sm:$0xf] %vm224, %v494
        %v769 = vld [vmem:[%s731 + $0x38] sm:$0x1]
        %v770 = vsel %vm740, %v495, %v769
        %771 = vst [vmem:[%s731 + $0x38] sm:$0x1] %v770
        %v772 = vld [vmem:[%s731 + $0x3c] sm:$0xf]
        %v773 = vsel %vm734, %v502, %v772
        %774 = vst [vmem:[%s731 + $0x3c] sm:$0xf] %v773
        %775 = vst.msk [vmem:[%s731 + $0x40] sm:$0xf] %vm224, %v511
        %v776 = vld [vmem:[%s731 + $0x44] sm:$0x1]
        %v777 = vsel %vm740, %v512, %v776
        %778 = vst [vmem:[%s731 + $0x44] sm:$0x1] %v777
        %v779 = vld [vmem:[%s731 + $0x48] sm:$0xf]
        %v780 = vsel %vm734, %v519, %v779
        %781 = vst [vmem:[%s731 + $0x48] sm:$0xf] %v780
        %782 = vst.msk [vmem:[%s731 + $0x4c] sm:$0xf] %vm224, %v528
        %v783 = vld [vmem:[%s731 + $0x50] sm:$0x1]
        %v784 = vsel %vm740, %v529, %v783
        %785 = vst [vmem:[%s731 + $0x50] sm:$0x1] %v784
        %v786 = vld [vmem:[%s731 + $0x54] sm:$0xf]
        %v787 = vsel %vm734, %v536, %v786
        %788 = vst [vmem:[%s731 + $0x54] sm:$0xf] %v787
        %789 = vst.msk [vmem:[%s731 + $0x58] sm:$0xf] %vm224, %v545
        %v790 = vld [vmem:[%s731 + $0x5c] sm:$0x1]
        %v791 = vsel %vm740, %v546, %v790
        %792 = vst [vmem:[%s731 + $0x5c] sm:$0x1] %v791
        %v793 = vld [vmem:[%s731 + $0x60] sm:$0xf]
        %v794 = vsel %vm734, %v553, %v793
        %795 = vst [vmem:[%s731 + $0x60] sm:$0xf] %v794
        %796 = vst.msk [vmem:[%s731 + $0x64] sm:$0xf] %vm224, %v562
        %v797 = vld [vmem:[%s731 + $0x68] sm:$0x1]
        %v798 = vsel %vm740, %v563, %v797
        %799 = vst [vmem:[%s731 + $0x68] sm:$0x1] %v798
        %v800 = vld [vmem:[%s731 + $0x6c] sm:$0xf]
        %v801 = vsel %vm734, %v570, %v800
        %802 = vst [vmem:[%s731 + $0x6c] sm:$0xf] %v801
        %803 = vst.msk [vmem:[%s731 + $0x70] sm:$0xf] %vm224, %v579
        %v804 = vld [vmem:[%s731 + $0x74] sm:$0x1]
        %v805 = vsel %vm740, %v580, %v804
        %806 = vst [vmem:[%s731 + $0x74] sm:$0x1] %v805
        %v807 = vld [vmem:[%s731 + $0x78] sm:$0xf]
        %v808 = vsel %vm734, %v587, %v807
        %809 = vst [vmem:[%s731 + $0x78] sm:$0xf] %v808
        %810 = vst.msk [vmem:[%s731 + $0x7c] sm:$0xf] %vm224, %v596
        %v811 = vld [vmem:[%s731 + $0x80] sm:$0x1]
        %v812 = vsel %vm740, %v597, %v811
        %813 = vst [vmem:[%s731 + $0x80] sm:$0x1] %v812
        %v814 = vld [vmem:[%s731 + $0x84] sm:$0xf]
        %v815 = vsel %vm734, %v604, %v814
        %816 = vst [vmem:[%s731 + $0x84] sm:$0xf] %v815
        %817 = vst.msk [vmem:[%s731 + $0x88] sm:$0xf] %vm224, %v613
        %v818 = vld [vmem:[%s731 + $0x8c] sm:$0x1]
        %v819 = vsel %vm740, %v614, %v818
        %820 = vst [vmem:[%s731 + $0x8c] sm:$0x1] %v819
        %v821 = vld [vmem:[%s731 + $0x90] sm:$0xf]
        %v822 = vsel %vm734, %v621, %v821
        %823 = vst [vmem:[%s731 + $0x90] sm:$0xf] %v822
        %824 = vst.msk [vmem:[%s731 + $0x94] sm:$0xf] %vm224, %v630
        %v825 = vld [vmem:[%s731 + $0x98] sm:$0x1]
        %v826 = vsel %vm740, %v631, %v825
        %827 = vst [vmem:[%s731 + $0x98] sm:$0x1] %v826
        %v828 = vld [vmem:[%s731 + $0x9c] sm:$0xf]
        %v829 = vsel %vm734, %v638, %v828
        %830 = vst [vmem:[%s731 + $0x9c] sm:$0xf] %v829
        %831 = vst.msk [vmem:[%s731 + $0xa0] sm:$0xf] %vm224, %v647
        %v832 = vld [vmem:[%s731 + $0xa4] sm:$0x1]
        %v833 = vsel %vm740, %v648, %v832
        %834 = vst [vmem:[%s731 + $0xa4] sm:$0x1] %v833
        %v835 = vld [vmem:[%s731 + $0xa8] sm:$0xf]
        %v836 = vsel %vm734, %v655, %v835
        %837 = vst [vmem:[%s731 + $0xa8] sm:$0xf] %v836
        %838 = vst.msk [vmem:[%s731 + $0xac] sm:$0xf] %vm224, %v664
        %v839 = vld [vmem:[%s731 + $0xb0] sm:$0x1]
        %v840 = vsel %vm740, %v665, %v839
        %841 = vst [vmem:[%s731 + $0xb0] sm:$0x1] %v840
        %v842 = vld [vmem:[%s731 + $0xb4] sm:$0xf]
        %v843 = vsel %vm734, %v672, %v842
        %844 = vst [vmem:[%s731 + $0xb4] sm:$0xf] %v843
        %845 = vst.msk [vmem:[%s731 + $0xb8] sm:$0xf] %vm224, %v681
        %v846 = vld [vmem:[%s731 + $0xbc] sm:$0x1]
        %v847 = vsel %vm740, %v682, %v846
        %848 = vst [vmem:[%s731 + $0xbc] sm:$0x1] %v847
        %v849 = vld [vmem:[#allocation2] sm:$0xf]
        %v850 = vld [vmem:[#allocation2 + $0x4] sm:$0xf]
        %v851 = vld [vmem:[#allocation2 + $0xc] sm:$0xf]
        %v852 = vld [vmem:[#allocation2 + $0x10] sm:$0xf]
        %v853 = vld [vmem:[#allocation2 + $0x18] sm:$0xf]
        %v854 = vld [vmem:[#allocation2 + $0x1c] sm:$0xf]
        %v855 = vld [vmem:[#allocation2 + $0x24] sm:$0xf]
        %v856 = vld [vmem:[#allocation2 + $0x28] sm:$0xf]
        %v857 = vld [vmem:[#allocation2 + $0x30] sm:$0xf]
        %v858 = vld [vmem:[#allocation2 + $0x34] sm:$0xf]
        %v859 = vld [vmem:[#allocation2 + $0x3c] sm:$0xf]
        %v860 = vld [vmem:[#allocation2 + $0x40] sm:$0xf]
        %v861 = vld [vmem:[#allocation2 + $0x48] sm:$0xf]
        %v862 = vld [vmem:[#allocation2 + $0x4c] sm:$0xf]
        %v863 = vld [vmem:[#allocation2 + $0x54] sm:$0xf]
        %v864 = vld [vmem:[#allocation2 + $0x58] sm:$0xf]
        %v865 = vld [vmem:[#allocation2 + $0x60] sm:$0xf]
        %v866 = vld [vmem:[#allocation2 + $0x64] sm:$0xf]
        %v867 = vld [vmem:[#allocation2 + $0x6c] sm:$0xf]
        %v868 = vld [vmem:[#allocation2 + $0x70] sm:$0xf]
        %v869 = vld [vmem:[#allocation2 + $0x78] sm:$0xf]
        %v870 = vld [vmem:[#allocation2 + $0x7c] sm:$0xf]
        %v871 = vld [vmem:[#allocation2 + $0x84] sm:$0xf]
        %v872 = vld [vmem:[#allocation2 + $0x88] sm:$0xf]
        %v873 = vld [vmem:[#allocation2 + $0x90] sm:$0xf]
        %v874 = vld [vmem:[#allocation2 + $0x94] sm:$0xf]
        %v875 = vld [vmem:[#allocation2 + $0x9c] sm:$0xf]
        %v876 = vld [vmem:[#allocation2 + $0xa0] sm:$0xf]
        %v877 = vld [vmem:[#allocation2 + $0xa8] sm:$0xf]
        %v878 = vld [vmem:[#allocation2 + $0xac] sm:$0xf]
        %v879 = vld [vmem:[#allocation2 + $0xb4] sm:$0xf]
        %v880 = vld [vmem:[#allocation2 + $0xb8] sm:$0xf]
        %v881 = vld [vmem:[#allocation2 + $0x8] sm:$0x1]
        %v882 = vld [vmem:[#allocation2 + $0x14] sm:$0x1]
        %v883 = vld [vmem:[#allocation2 + $0x20] sm:$0x1]
        %v884 = vld [vmem:[#allocation2 + $0x2c] sm:$0x1]
        %v885 = vld [vmem:[#allocation2 + $0x38] sm:$0x1]
        %v886 = vld [vmem:[#allocation2 + $0x44] sm:$0x1]
        %v887 = vld [vmem:[#allocation2 + $0x50] sm:$0x1]
        %v888 = vld [vmem:[#allocation2 + $0x5c] sm:$0x1]
        %v889 = vld [vmem:[#allocation2 + $0x68] sm:$0x1]
        %v890 = vld [vmem:[#allocation2 + $0x74] sm:$0x1]
        %v891 = vld [vmem:[#allocation2 + $0x80] sm:$0x1]
        %v892 = vld [vmem:[#allocation2 + $0x8c] sm:$0x1]
        %v893 = vld [vmem:[#allocation2 + $0x98] sm:$0x1]
        %v894 = vld [vmem:[#allocation2 + $0xa4] sm:$0x1]
        %v895 = vld [vmem:[#allocation2 + $0xb0] sm:$0x1]
        %v896 = vld [vmem:[#allocation2 + $0xbc] sm:$0x1]
        %vm897 = vsmask.f32 3328
        %vm898 = vsmask.f32 7440
        %vm899 = vmor %vm897, %vm898
        %v901 = vshrl.u32 %v849, 16
        %v903 = vrot.slane %v901, 4
        %v904 = vshll.u32 %v849, 16
        %v906 = vrot.slane %v904, 5
        %v907 = vor.u32 %v903, %v906
        %v908 = vrot.slane %v907, 4
        %v910 = vshll.u32 %v850, 16
        %v912 = vrot.slane %v910, 5
        %v913 = vsel %vm899, %v908, %v912
        %v914 = vshrl.u32 %v850, 16
        %v916 = vrot.slane %v914, 4
        %v917 = vor.u32 %v916, %v912
        %v918 = vrot.slane %v917, 4
        %v920 = vshll.u32 %v881, 16
        %v922 = vrot.slane %v920, 5
        %v923 = vsel %vm899, %v918, %v922
        %v925 = vshrl.u32 %v851, 16
        %v927 = vrot.slane %v925, 4
        %v928 = vshll.u32 %v851, 16
        %v930 = vrot.slane %v928, 5
        %v931 = vor.u32 %v927, %v930
        %v932 = vrot.slane %v931, 4
        %v934 = vshll.u32 %v852, 16
        %v936 = vrot.slane %v934, 5
        %v937 = vsel %vm899, %v932, %v936
        %v938 = vshrl.u32 %v852, 16
        %v940 = vrot.slane %v938, 4
        %v941 = vor.u32 %v940, %v936
        %v942 = vrot.slane %v941, 4
        %v944 = vshll.u32 %v882, 16
        %v946 = vrot.slane %v944, 5
        %v947 = vsel %vm899, %v942, %v946
        %v949 = vshrl.u32 %v853, 16
        %v951 = vrot.slane %v949, 4
        %v952 = vshll.u32 %v853, 16
        %v954 = vrot.slane %v952, 5
        %v955 = vor.u32 %v951, %v954
        %v956 = vrot.slane %v955, 4
        %v958 = vshll.u32 %v854, 16
        %v960 = vrot.slane %v958, 5
        %v961 = vsel %vm899, %v956, %v960
        %v962 = vshrl.u32 %v854, 16
        %v964 = vrot.slane %v962, 4
        %v965 = vor.u32 %v964, %v960
        %v966 = vrot.slane %v965, 4
        %v968 = vshll.u32 %v883, 16
        %v970 = vrot.slane %v968, 5
        %v971 = vsel %vm899, %v966, %v970
        %v973 = vshrl.u32 %v855, 16
        %v975 = vrot.slane %v973, 4
        %v976 = vshll.u32 %v855, 16
        %v978 = vrot.slane %v976, 5
        %v979 = vor.u32 %v975, %v978
        %v980 = vrot.slane %v979, 4
        %v982 = vshll.u32 %v856, 16
        %v984 = vrot.slane %v982, 5
        %v985 = vsel %vm899, %v980, %v984
        %v986 = vshrl.u32 %v856, 16
        %v988 = vrot.slane %v986, 4
        %v989 = vor.u32 %v988, %v984
        %v990 = vrot.slane %v989, 4
        %v992 = vshll.u32 %v884, 16
        %v994 = vrot.slane %v992, 5
        %v995 = vsel %vm899, %v990, %v994
        %v997 = vshrl.u32 %v857, 16
        %v999 = vrot.slane %v997, 4
        %v1000 = vshll.u32 %v857, 16
        %v1002 = vrot.slane %v1000, 5
        %v1003 = vor.u32 %v999, %v1002
        %v1004 = vrot.slane %v1003, 4
        %v1006 = vshll.u32 %v858, 16
        %v1008 = vrot.slane %v1006, 5
        %v1009 = vsel %vm899, %v1004, %v1008
        %v1010 = vshrl.u32 %v858, 16
        %v1012 = vrot.slane %v1010, 4
        %v1013 = vor.u32 %v1012, %v1008
        %v1014 = vrot.slane %v1013, 4
        %v1016 = vshll.u32 %v885, 16
        %v1018 = vrot.slane %v1016, 5
        %v1019 = vsel %vm899, %v1014, %v1018
        %v1021 = vshrl.u32 %v859, 16
        %v1023 = vrot.slane %v1021, 4
        %v1024 = vshll.u32 %v859, 16
        %v1026 = vrot.slane %v1024, 5
        %v1027 = vor.u32 %v1023, %v1026
        %v1028 = vrot.slane %v1027, 4
        %v1030 = vshll.u32 %v860, 16
        %v1032 = vrot.slane %v1030, 5
        %v1033 = vsel %vm899, %v1028, %v1032
        %v1034 = vshrl.u32 %v860, 16
        %v1036 = vrot.slane %v1034, 4
        %v1037 = vor.u32 %v1036, %v1032
        %v1038 = vrot.slane %v1037, 4
        %v1040 = vshll.u32 %v886, 16
        %v1042 = vrot.slane %v1040, 5
        %v1043 = vsel %vm899, %v1038, %v1042
        %v1045 = vshrl.u32 %v861, 16
        %v1047 = vrot.slane %v1045, 4
        %v1048 = vshll.u32 %v861, 16
        %v1050 = vrot.slane %v1048, 5
        %v1051 = vor.u32 %v1047, %v1050
        %v1052 = vrot.slane %v1051, 4
        %v1054 = vshll.u32 %v862, 16
        %v1056 = vrot.slane %v1054, 5
        %v1057 = vsel %vm899, %v1052, %v1056
        %v1058 = vshrl.u32 %v862, 16
        %v1060 = vrot.slane %v1058, 4
        %v1061 = vor.u32 %v1060, %v1056
        %v1062 = vrot.slane %v1061, 4
        %v1064 = vshll.u32 %v887, 16
        %v1066 = vrot.slane %v1064, 5
        %v1067 = vsel %vm899, %v1062, %v1066
        %v1069 = vshrl.u32 %v863, 16
        %v1071 = vrot.slane %v1069, 4
        %v1072 = vshll.u32 %v863, 16
        %v1074 = vrot.slane %v1072, 5
        %v1075 = vor.u32 %v1071, %v1074
        %v1076 = vrot.slane %v1075, 4
        %v1078 = vshll.u32 %v864, 16
        %v1080 = vrot.slane %v1078, 5
        %v1081 = vsel %vm899, %v1076, %v1080
        %v1082 = vshrl.u32 %v864, 16
        %v1084 = vrot.slane %v1082, 4
        %v1085 = vor.u32 %v1084, %v1080
        %v1086 = vrot.slane %v1085, 4
        %v1088 = vshll.u32 %v888, 16
        %v1090 = vrot.slane %v1088, 5
        %v1091 = vsel %vm899, %v1086, %v1090
        %v1093 = vshrl.u32 %v865, 16
        %v1095 = vrot.slane %v1093, 4
        %v1096 = vshll.u32 %v865, 16
        %v1098 = vrot.slane %v1096, 5
        %v1099 = vor.u32 %v1095, %v1098
        %v1100 = vrot.slane %v1099, 4
        %v1102 = vshll.u32 %v866, 16
        %v1104 = vrot.slane %v1102, 5
        %v1105 = vsel %vm899, %v1100, %v1104
        %v1106 = vshrl.u32 %v866, 16
        %v1108 = vrot.slane %v1106, 4
        %v1109 = vor.u32 %v1108, %v1104
        %v1110 = vrot.slane %v1109, 4
        %v1112 = vshll.u32 %v889, 16
        %v1114 = vrot.slane %v1112, 5
        %v1115 = vsel %vm899, %v1110, %v1114
        %v1117 = vshrl.u32 %v867, 16
        %v1119 = vrot.slane %v1117, 4
        %v1120 = vshll.u32 %v867, 16
        %v1122 = vrot.slane %v1120, 5
        %v1123 = vor.u32 %v1119, %v1122
        %v1124 = vrot.slane %v1123, 4
        %v1126 = vshll.u32 %v868, 16
        %v1128 = vrot.slane %v1126, 5
        %v1129 = vsel %vm899, %v1124, %v1128
        %v1130 = vshrl.u32 %v868, 16
        %v1132 = vrot.slane %v1130, 4
        %v1133 = vor.u32 %v1132, %v1128
        %v1134 = vrot.slane %v1133, 4
        %v1136 = vshll.u32 %v890, 16
        %v1138 = vrot.slane %v1136, 5
        %v1139 = vsel %vm899, %v1134, %v1138
        %v1141 = vshrl.u32 %v869, 16
        %v1143 = vrot.slane %v1141, 4
        %v1144 = vshll.u32 %v869, 16
        %v1146 = vrot.slane %v1144, 5
        %v1147 = vor.u32 %v1143, %v1146
        %v1148 = vrot.slane %v1147, 4
        %v1150 = vshll.u32 %v870, 16
        %v1152 = vrot.slane %v1150, 5
        %v1153 = vsel %vm899, %v1148, %v1152
        %v1154 = vshrl.u32 %v870, 16
        %v1156 = vrot.slane %v1154, 4
        %v1157 = vor.u32 %v1156, %v1152
        %v1158 = vrot.slane %v1157, 4
        %v1160 = vshll.u32 %v891, 16
        %v1162 = vrot.slane %v1160, 5
        %v1163 = vsel %vm899, %v1158, %v1162
        %v1165 = vshrl.u32 %v871, 16
        %v1167 = vrot.slane %v1165, 4
        %v1168 = vshll.u32 %v871, 16
        %v1170 = vrot.slane %v1168, 5
        %v1171 = vor.u32 %v1167, %v1170
        %v1172 = vrot.slane %v1171, 4
        %v1174 = vshll.u32 %v872, 16
        %v1176 = vrot.slane %v1174, 5
        %v1177 = vsel %vm899, %v1172, %v1176
        %v1178 = vshrl.u32 %v872, 16
        %v1180 = vrot.slane %v1178, 4
        %v1181 = vor.u32 %v1180, %v1176
        %v1182 = vrot.slane %v1181, 4
        %v1184 = vshll.u32 %v892, 16
        %v1186 = vrot.slane %v1184, 5
        %v1187 = vsel %vm899, %v1182, %v1186
        %v1189 = vshrl.u32 %v873, 16
        %v1191 = vrot.slane %v1189, 4
        %v1192 = vshll.u32 %v873, 16
        %v1194 = vrot.slane %v1192, 5
        %v1195 = vor.u32 %v1191, %v1194
        %v1196 = vrot.slane %v1195, 4
        %v1198 = vshll.u32 %v874, 16
        %v1200 = vrot.slane %v1198, 5
        %v1201 = vsel %vm899, %v1196, %v1200
        %v1202 = vshrl.u32 %v874, 16
        %v1204 = vrot.slane %v1202, 4
        %v1205 = vor.u32 %v1204, %v1200
        %v1206 = vrot.slane %v1205, 4
        %v1208 = vshll.u32 %v893, 16
        %v1210 = vrot.slane %v1208, 5
        %v1211 = vsel %vm899, %v1206, %v1210
        %v1213 = vshrl.u32 %v875, 16
        %v1215 = vrot.slane %v1213, 4
        %v1216 = vshll.u32 %v875, 16
        %v1218 = vrot.slane %v1216, 5
        %v1219 = vor.u32 %v1215, %v1218
        %v1220 = vrot.slane %v1219, 4
        %v1222 = vshll.u32 %v876, 16
        %v1224 = vrot.slane %v1222, 5
        %v1225 = vsel %vm899, %v1220, %v1224
        %v1226 = vshrl.u32 %v876, 16
        %v1228 = vrot.slane %v1226, 4
        %v1229 = vor.u32 %v1228, %v1224
        %v1230 = vrot.slane %v1229, 4
        %v1232 = vshll.u32 %v894, 16
        %v1234 = vrot.slane %v1232, 5
        %v1235 = vsel %vm899, %v1230, %v1234
        %v1237 = vshrl.u32 %v877, 16
        %v1239 = vrot.slane %v1237, 4
        %v1240 = vshll.u32 %v877, 16
        %v1242 = vrot.slane %v1240, 5
        %v1243 = vor.u32 %v1239, %v1242
        %v1244 = vrot.slane %v1243, 4
        %v1246 = vshll.u32 %v878, 16
        %v1248 = vrot.slane %v1246, 5
        %v1249 = vsel %vm899, %v1244, %v1248
        %v1250 = vshrl.u32 %v878, 16
        %v1252 = vrot.slane %v1250, 4
        %v1253 = vor.u32 %v1252, %v1248
        %v1254 = vrot.slane %v1253, 4
        %v1256 = vshll.u32 %v895, 16
        %v1258 = vrot.slane %v1256, 5
        %v1259 = vsel %vm899, %v1254, %v1258
        %v1261 = vshrl.u32 %v879, 16
        %v1263 = vrot.slane %v1261, 4
        %v1264 = vshll.u32 %v879, 16
        %v1266 = vrot.slane %v1264, 5
        %v1267 = vor.u32 %v1263, %v1266
        %v1268 = vrot.slane %v1267, 4
        %v1270 = vshll.u32 %v880, 16
        %v1272 = vrot.slane %v1270, 5
        %v1273 = vsel %vm899, %v1268, %v1272
        %v1274 = vshrl.u32 %v880, 16
        %v1276 = vrot.slane %v1274, 4
        %v1277 = vor.u32 %v1276, %v1272
        %v1278 = vrot.slane %v1277, 4
        %v1280 = vshll.u32 %v896, 16
        %v1282 = vrot.slane %v1280, 5
        %v1283 = vsel %vm899, %v1278, %v1282
        %v1284 = vld [vmem:[#allocation2] sm:$0xe]
        %v1285 = vld [vmem:[#allocation2 + $0xc] sm:$0xe]
        %v1286 = vld [vmem:[#allocation2 + $0x18] sm:$0xe]
        %v1287 = vld [vmem:[#allocation2 + $0x24] sm:$0xe]
        %v1288 = vld [vmem:[#allocation2 + $0x30] sm:$0xe]
        %v1289 = vld [vmem:[#allocation2 + $0x3c] sm:$0xe]
        %v1290 = vld [vmem:[#allocation2 + $0x48] sm:$0xe]
        %v1291 = vld [vmem:[#allocation2 + $0x54] sm:$0xe]
        %v1292 = vld [vmem:[#allocation2 + $0x60] sm:$0xe]
        %v1293 = vld [vmem:[#allocation2 + $0x6c] sm:$0xe]
        %v1294 = vld [vmem:[#allocation2 + $0x78] sm:$0xe]
        %v1295 = vld [vmem:[#allocation2 + $0x84] sm:$0xe]
        %v1296 = vld [vmem:[#allocation2 + $0x90] sm:$0xe]
        %v1297 = vld [vmem:[#allocation2 + $0x9c] sm:$0xe]
        %v1298 = vld [vmem:[#allocation2 + $0xa8] sm:$0xe]
        %v1299 = vld [vmem:[#allocation2 + $0xb4] sm:$0xe]
        %vm1348 = vcmask 1042432
        %vm1349 = vcmask 1046532
        %vm1350 = vmor %vm1348, %vm1349
        %v1351 = vrot.slane %v1284, 5
        %v1352 = vrot.slane %v1351, 4
        %v1353 = vrot.slane %v850, 5
        %v1354 = vsel %vm1350, %v1352, %v1353
        %v1355 = vrot.slane %v1353, 4
        %v1356 = vrot.slane %v881, 5
        %v1357 = vsel %vm1350, %v1355, %v1356
        %v1358 = vrot.slane %v1285, 5
        %v1359 = vrot.slane %v1358, 4
        %v1360 = vrot.slane %v852, 5
        %v1361 = vsel %vm1350, %v1359, %v1360
        %v1362 = vrot.slane %v1360, 4
        %v1363 = vrot.slane %v882, 5
        %v1364 = vsel %vm1350, %v1362, %v1363
        %v1365 = vrot.slane %v1286, 5
        %v1366 = vrot.slane %v1365, 4
        %v1367 = vrot.slane %v854, 5
        %v1368 = vsel %vm1350, %v1366, %v1367
        %v1369 = vrot.slane %v1367, 4
        %v1370 = vrot.slane %v883, 5
        %v1371 = vsel %vm1350, %v1369, %v1370
        %v1372 = vrot.slane %v1287, 5
        %v1373 = vrot.slane %v1372, 4
        %v1374 = vrot.slane %v856, 5
        %v1375 = vsel %vm1350, %v1373, %v1374
        %v1376 = vrot.slane %v1374, 4
        %v1377 = vrot.slane %v884, 5
        %v1378 = vsel %vm1350, %v1376, %v1377
        %v1379 = vrot.slane %v1288, 5
        %v1380 = vrot.slane %v1379, 4
        %v1381 = vrot.slane %v858, 5
        %v1382 = vsel %vm1350, %v1380, %v1381
        %v1383 = vrot.slane %v1381, 4
        %v1384 = vrot.slane %v885, 5
        %v1385 = vsel %vm1350, %v1383, %v1384
        %v1386 = vrot.slane %v1289, 5
        %v1387 = vrot.slane %v1386, 4
        %v1388 = vrot.slane %v860, 5
        %v1389 = vsel %vm1350, %v1387, %v1388
        %v1390 = vrot.slane %v1388, 4
        %v1391 = vrot.slane %v886, 5
        %v1392 = vsel %vm1350, %v1390, %v1391
        %v1393 = vrot.slane %v1290, 5
        %v1394 = vrot.slane %v1393, 4
        %v1395 = vrot.slane %v862, 5
        %v1396 = vsel %vm1350, %v1394, %v1395
        %v1397 = vrot.slane %v1395, 4
        %v1398 = vrot.slane %v887, 5
        %v1399 = vsel %vm1350, %v1397, %v1398
        %v1400 = vrot.slane %v1291, 5
        %v1401 = vrot.slane %v1400, 4
        %v1402 = vrot.slane %v864, 5
        %v1403 = vsel %vm1350, %v1401, %v1402
        %v1404 = vrot.slane %v1402, 4
        %v1405 = vrot.slane %v888, 5
        %v1406 = vsel %vm1350, %v1404, %v1405
        %v1407 = vrot.slane %v1292, 5
        %v1408 = vrot.slane %v1407, 4
        %v1409 = vrot.slane %v866, 5
        %v1410 = vsel %vm1350, %v1408, %v1409
        %v1411 = vrot.slane %v1409, 4
        %v1412 = vrot.slane %v889, 5
        %v1413 = vsel %vm1350, %v1411, %v1412
        %v1414 = vrot.slane %v1293, 5
        %v1415 = vrot.slane %v1414, 4
        %v1416 = vrot.slane %v868, 5
        %v1417 = vsel %vm1350, %v1415, %v1416
        %v1418 = vrot.slane %v1416, 4
        %v1419 = vrot.slane %v890, 5
        %v1420 = vsel %vm1350, %v1418, %v1419
        %v1421 = vrot.slane %v1294, 5
        %v1422 = vrot.slane %v1421, 4
        %v1423 = vrot.slane %v870, 5
        %v1424 = vsel %vm1350, %v1422, %v1423
        %v1425 = vrot.slane %v1423, 4
        %v1426 = vrot.slane %v891, 5
        %v1427 = vsel %vm1350, %v1425, %v1426
        %v1428 = vrot.slane %v1295, 5
        %v1429 = vrot.slane %v1428, 4
        %v1430 = vrot.slane %v872, 5
        %v1431 = vsel %vm1350, %v1429, %v1430
        %v1432 = vrot.slane %v1430, 4
        %v1433 = vrot.slane %v892, 5
        %v1434 = vsel %vm1350, %v1432, %v1433
        %v1435 = vrot.slane %v1296, 5
        %v1436 = vrot.slane %v1435, 4
        %v1437 = vrot.slane %v874, 5
        %v1438 = vsel %vm1350, %v1436, %v1437
        %v1439 = vrot.slane %v1437, 4
        %v1440 = vrot.slane %v893, 5
        %v1441 = vsel %vm1350, %v1439, %v1440
        %v1442 = vrot.slane %v1297, 5
        %v1443 = vrot.slane %v1442, 4
        %v1444 = vrot.slane %v876, 5
        %v1445 = vsel %vm1350, %v1443, %v1444
        %v1446 = vrot.slane %v1444, 4
        %v1447 = vrot.slane %v894, 5
        %v1448 = vsel %vm1350, %v1446, %v1447
        %v1449 = vrot.slane %v1298, 5
        %v1450 = vrot.slane %v1449, 4
        %v1451 = vrot.slane %v878, 5
        %v1452 = vsel %vm1350, %v1450, %v1451
        %v1453 = vrot.slane %v1451, 4
        %v1454 = vrot.slane %v895, 5
        %v1455 = vsel %vm1350, %v1453, %v1454
        %v1456 = vrot.slane %v1299, 5
        %v1457 = vrot.slane %v1456, 4
        %v1458 = vrot.slane %v880, 5
        %v1459 = vsel %vm1350, %v1457, %v1458
        %v1460 = vrot.slane %v1458, 4
        %v1461 = vrot.slane %v896, 5
        %v1462 = vsel %vm1350, %v1460, %v1461
        %v1463 = vld [vmem:[%s731] sm:$0xf]
        %v1464 = vld [vmem:[%s731 + $0x4] sm:$0xf]
        %v1465 = vld [vmem:[%s731 + $0xc] sm:$0xf]
        %v1466 = vld [vmem:[%s731 + $0x10] sm:$0xf]
        %v1467 = vld [vmem:[%s731 + $0x18] sm:$0xf]
        %v1468 = vld [vmem:[%s731 + $0x1c] sm:$0xf]
        %v1469 = vld [vmem:[%s731 + $0x24] sm:$0xf]
        %v1470 = vld [vmem:[%s731 + $0x28] sm:$0xf]
        %v1471 = vld [vmem:[%s731 + $0x30] sm:$0xf]
        %v1472 = vld [vmem:[%s731 + $0x34] sm:$0xf]
        %v1473 = vld [vmem:[%s731 + $0x3c] sm:$0xf]
        %v1474 = vld [vmem:[%s731 + $0x40] sm:$0xf]
        %v1475 = vld [vmem:[%s731 + $0x48] sm:$0xf]
        %v1476 = vld [vmem:[%s731 + $0x4c] sm:$0xf]
        %v1477 = vld [vmem:[%s731 + $0x54] sm:$0xf]
        %v1478 = vld [vmem:[%s731 + $0x58] sm:$0xf]
        %v1479 = vld [vmem:[%s731 + $0x60] sm:$0xf]
        %v1480 = vld [vmem:[%s731 + $0x64] sm:$0xf]
        %v1481 = vld [vmem:[%s731 + $0x6c] sm:$0xf]
        %v1482 = vld [vmem:[%s731 + $0x70] sm:$0xf]
        %v1483 = vld [vmem:[%s731 + $0x78] sm:$0xf]
        %v1484 = vld [vmem:[%s731 + $0x7c] sm:$0xf]
        %v1485 = vld [vmem:[%s731 + $0x84] sm:$0xf]
        %v1486 = vld [vmem:[%s731 + $0x88] sm:$0xf]
        %v1487 = vld [vmem:[%s731 + $0x90] sm:$0xf]
        %v1488 = vld [vmem:[%s731 + $0x94] sm:$0xf]
        %v1489 = vld [vmem:[%s731 + $0x9c] sm:$0xf]
        %v1490 = vld [vmem:[%s731 + $0xa0] sm:$0xf]
        %v1491 = vld [vmem:[%s731 + $0xa8] sm:$0xf]
        %v1492 = vld [vmem:[%s731 + $0xac] sm:$0xf]
        %v1493 = vld [vmem:[%s731 + $0xb4] sm:$0xf]
        %v1494 = vld [vmem:[%s731 + $0xb8] sm:$0xf]
        %v1495 = vld [vmem:[%s731 + $0x8] sm:$0x1]
        %v1496 = vld [vmem:[%s731 + $0x14] sm:$0x1]
        %v1497 = vld [vmem:[%s731 + $0x20] sm:$0x1]
        %v1498 = vld [vmem:[%s731 + $0x2c] sm:$0x1]
        %v1499 = vld [vmem:[%s731 + $0x38] sm:$0x1]
        %v1500 = vld [vmem:[%s731 + $0x44] sm:$0x1]
        %v1501 = vld [vmem:[%s731 + $0x50] sm:$0x1]
        %v1502 = vld [vmem:[%s731 + $0x5c] sm:$0x1]
        %v1503 = vld [vmem:[%s731 + $0x68] sm:$0x1]
        %v1504 = vld [vmem:[%s731 + $0x74] sm:$0x1]
        %v1505 = vld [vmem:[%s731 + $0x80] sm:$0x1]
        %v1506 = vld [vmem:[%s731 + $0x8c] sm:$0x1]
        %v1507 = vld [vmem:[%s731 + $0x98] sm:$0x1]
        %v1508 = vld [vmem:[%s731 + $0xa4] sm:$0x1]
        %v1509 = vld [vmem:[%s731 + $0xb0] sm:$0x1]
        %v1510 = vld [vmem:[%s731 + $0xbc] sm:$0x1]
        %v1512 = vshrl.u32 %v1463, 16
        %v1514 = vrot.slane %v1512, 4
        %v1515 = vshll.u32 %v1463, 16
        %v1517 = vrot.slane %v1515, 5
        %v1518 = vor.u32 %v1514, %v1517
        %v1519 = vrot.slane %v1518, 4
        %v1521 = vshll.u32 %v1464, 16
        %v1523 = vrot.slane %v1521, 5
        %v1524 = vsel %vm899, %v1519, %v1523
        %v1525 = vshrl.u32 %v1464, 16
        %v1527 = vrot.slane %v1525, 4
        %v1528 = vor.u32 %v1527, %v1523
        %v1529 = vrot.slane %v1528, 4
        %v1531 = vshll.u32 %v1495, 16
        %v1533 = vrot.slane %v1531, 5
        %v1534 = vsel %vm899, %v1529, %v1533
        %v1536 = vshrl.u32 %v1465, 16
        %v1538 = vrot.slane %v1536, 4
        %v1539 = vshll.u32 %v1465, 16
        %v1541 = vrot.slane %v1539, 5
        %v1542 = vor.u32 %v1538, %v1541
        %v1543 = vrot.slane %v1542, 4
        %v1545 = vshll.u32 %v1466, 16
        %v1547 = vrot.slane %v1545, 5
        %v1548 = vsel %vm899, %v1543, %v1547
        %v1549 = vshrl.u32 %v1466, 16
        %v1551 = vrot.slane %v1549, 4
        %v1552 = vor.u32 %v1551, %v1547
        %v1553 = vrot.slane %v1552, 4
        %v1555 = vshll.u32 %v1496, 16
        %v1557 = vrot.slane %v1555, 5
        %v1558 = vsel %vm899, %v1553, %v1557
        %v1560 = vshrl.u32 %v1467, 16
        %v1562 = vrot.slane %v1560, 4
        %v1563 = vshll.u32 %v1467, 16
        %v1565 = vrot.slane %v1563, 5
        %v1566 = vor.u32 %v1562, %v1565
        %v1567 = vrot.slane %v1566, 4
        %v1569 = vshll.u32 %v1468, 16
        %v1571 = vrot.slane %v1569, 5
        %v1572 = vsel %vm899, %v1567, %v1571
        %v1573 = vshrl.u32 %v1468, 16
        %v1575 = vrot.slane %v1573, 4
        %v1576 = vor.u32 %v1575, %v1571
        %v1577 = vrot.slane %v1576, 4
        %v1579 = vshll.u32 %v1497, 16
        %v1581 = vrot.slane %v1579, 5
        %v1582 = vsel %vm899, %v1577, %v1581
        %v1584 = vshrl.u32 %v1469, 16
        %v1586 = vrot.slane %v1584, 4
        %v1587 = vshll.u32 %v1469, 16
        %v1589 = vrot.slane %v1587, 5
        %v1590 = vor.u32 %v1586, %v1589
        %v1591 = vrot.slane %v1590, 4
        %v1593 = vshll.u32 %v1470, 16
        %v1595 = vrot.slane %v1593, 5
        %v1596 = vsel %vm899, %v1591, %v1595
        %v1597 = vshrl.u32 %v1470, 16
        %v1599 = vrot.slane %v1597, 4
        %v1600 = vor.u32 %v1599, %v1595
        %v1601 = vrot.slane %v1600, 4
        %v1603 = vshll.u32 %v1498, 16
        %v1605 = vrot.slane %v1603, 5
        %v1606 = vsel %vm899, %v1601, %v1605
        %v1608 = vshrl.u32 %v1471, 16
        %v1610 = vrot.slane %v1608, 4
        %v1611 = vshll.u32 %v1471, 16
        %v1613 = vrot.slane %v1611, 5
        %v1614 = vor.u32 %v1610, %v1613
        %v1615 = vrot.slane %v1614, 4
        %v1617 = vshll.u32 %v1472, 16
        %v1619 = vrot.slane %v1617, 5
        %v1620 = vsel %vm899, %v1615, %v1619
        %v1621 = vshrl.u32 %v1472, 16
        %v1623 = vrot.slane %v1621, 4
        %v1624 = vor.u32 %v1623, %v1619
        %v1625 = vrot.slane %v1624, 4
        %v1627 = vshll.u32 %v1499, 16
        %v1629 = vrot.slane %v1627, 5
        %v1630 = vsel %vm899, %v1625, %v1629
        %v1632 = vshrl.u32 %v1473, 16
        %v1634 = vrot.slane %v1632, 4
        %v1635 = vshll.u32 %v1473, 16
        %v1637 = vrot.slane %v1635, 5
        %v1638 = vor.u32 %v1634, %v1637
        %v1639 = vrot.slane %v1638, 4
        %v1641 = vshll.u32 %v1474, 16
        %v1643 = vrot.slane %v1641, 5
        %v1644 = vsel %vm899, %v1639, %v1643
        %v1645 = vshrl.u32 %v1474, 16
        %v1647 = vrot.slane %v1645, 4
        %v1648 = vor.u32 %v1647, %v1643
        %v1649 = vrot.slane %v1648, 4
        %v1651 = vshll.u32 %v1500, 16
        %v1653 = vrot.slane %v1651, 5
        %v1654 = vsel %vm899, %v1649, %v1653
        %v1656 = vshrl.u32 %v1475, 16
        %v1658 = vrot.slane %v1656, 4
        %v1659 = vshll.u32 %v1475, 16
        %v1661 = vrot.slane %v1659, 5
        %v1662 = vor.u32 %v1658, %v1661
        %v1663 = vrot.slane %v1662, 4
        %v1665 = vshll.u32 %v1476, 16
        %v1667 = vrot.slane %v1665, 5
        %v1668 = vsel %vm899, %v1663, %v1667
        %v1669 = vshrl.u32 %v1476, 16
        %v1671 = vrot.slane %v1669, 4
        %v1672 = vor.u32 %v1671, %v1667
        %v1673 = vrot.slane %v1672, 4
        %v1675 = vshll.u32 %v1501, 16
        %v1677 = vrot.slane %v1675, 5
        %v1678 = vsel %vm899, %v1673, %v1677
        %v1680 = vshrl.u32 %v1477, 16
        %v1682 = vrot.slane %v1680, 4
        %v1683 = vshll.u32 %v1477, 16
        %v1685 = vrot.slane %v1683, 5
        %v1686 = vor.u32 %v1682, %v1685
        %v1687 = vrot.slane %v1686, 4
        %v1689 = vshll.u32 %v1478, 16
        %v1691 = vrot.slane %v1689, 5
        %v1692 = vsel %vm899, %v1687, %v1691
        %v1693 = vshrl.u32 %v1478, 16
        %v1695 = vrot.slane %v1693, 4
        %v1696 = vor.u32 %v1695, %v1691
        %v1697 = vrot.slane %v1696, 4
        %v1699 = vshll.u32 %v1502, 16
        %v1701 = vrot.slane %v1699, 5
        %v1702 = vsel %vm899, %v1697, %v1701
        %v1704 = vshrl.u32 %v1479, 16
        %v1706 = vrot.slane %v1704, 4
        %v1707 = vshll.u32 %v1479, 16
        %v1709 = vrot.slane %v1707, 5
        %v1710 = vor.u32 %v1706, %v1709
        %v1711 = vrot.slane %v1710, 4
        %v1713 = vshll.u32 %v1480, 16
        %v1715 = vrot.slane %v1713, 5
        %v1716 = vsel %vm899, %v1711, %v1715
        %v1717 = vshrl.u32 %v1480, 16
        %v1719 = vrot.slane %v1717, 4
        %v1720 = vor.u32 %v1719, %v1715
        %v1721 = vrot.slane %v1720, 4
        %v1723 = vshll.u32 %v1503, 16
        %v1725 = vrot.slane %v1723, 5
        %v1726 = vsel %vm899, %v1721, %v1725
        %v1728 = vshrl.u32 %v1481, 16
        %v1730 = vrot.slane %v1728, 4
        %v1731 = vshll.u32 %v1481, 16
        %v1733 = vrot.slane %v1731, 5
        %v1734 = vor.u32 %v1730, %v1733
        %v1735 = vrot.slane %v1734, 4
        %v1737 = vshll.u32 %v1482, 16
        %v1739 = vrot.slane %v1737, 5
        %v1740 = vsel %vm899, %v1735, %v1739
        %v1741 = vshrl.u32 %v1482, 16
        %v1743 = vrot.slane %v1741, 4
        %v1744 = vor.u32 %v1743, %v1739
        %v1745 = vrot.slane %v1744, 4
        %v1747 = vshll.u32 %v1504, 16
        %v1749 = vrot.slane %v1747, 5
        %v1750 = vsel %vm899, %v1745, %v1749
        %v1752 = vshrl.u32 %v1483, 16
        %v1754 = vrot.slane %v1752, 4
        %v1755 = vshll.u32 %v1483, 16
        %v1757 = vrot.slane %v1755, 5
        %v1758 = vor.u32 %v1754, %v1757
        %v1759 = vrot.slane %v1758, 4
        %v1761 = vshll.u32 %v1484, 16
        %v1763 = vrot.slane %v1761, 5
        %v1764 = vsel %vm899, %v1759, %v1763
        %v1765 = vshrl.u32 %v1484, 16
        %v1767 = vrot.slane %v1765, 4
        %v1768 = vor.u32 %v1767, %v1763
        %v1769 = vrot.slane %v1768, 4
        %v1771 = vshll.u32 %v1505, 16
        %v1773 = vrot.slane %v1771, 5
        %v1774 = vsel %vm899, %v1769, %v1773
        %v1776 = vshrl.u32 %v1485, 16
        %v1778 = vrot.slane %v1776, 4
        %v1779 = vshll.u32 %v1485, 16
        %v1781 = vrot.slane %v1779, 5
        %v1782 = vor.u32 %v1778, %v1781
        %v1783 = vrot.slane %v1782, 4
        %v1785 = vshll.u32 %v1486, 16
        %v1787 = vrot.slane %v1785, 5
        %v1788 = vsel %vm899, %v1783, %v1787
        %v1789 = vshrl.u32 %v1486, 16
        %v1791 = vrot.slane %v1789, 4
        %v1792 = vor.u32 %v1791, %v1787
        %v1793 = vrot.slane %v1792, 4
        %v1795 = vshll.u32 %v1506, 16
        %v1797 = vrot.slane %v1795, 5
        %v1798 = vsel %vm899, %v1793, %v1797
        %v1800 = vshrl.u32 %v1487, 16
        %v1802 = vrot.slane %v1800, 4
        %v1803 = vshll.u32 %v1487, 16
        %v1805 = vrot.slane %v1803, 5
        %v1806 = vor.u32 %v1802, %v1805
        %v1807 = vrot.slane %v1806, 4
        %v1809 = vshll.u32 %v1488, 16
        %v1811 = vrot.slane %v1809, 5
        %v1812 = vsel %vm899, %v1807, %v1811
        %v1813 = vshrl.u32 %v1488, 16
        %v1815 = vrot.slane %v1813, 4
        %v1816 = vor.u32 %v1815, %v1811
        %v1817 = vrot.slane %v1816, 4
        %v1819 = vshll.u32 %v1507, 16
        %v1821 = vrot.slane %v1819, 5
        %v1822 = vsel %vm899, %v1817, %v1821
        %v1824 = vshrl.u32 %v1489, 16
        %v1826 = vrot.slane %v1824, 4
        %v1827 = vshll.u32 %v1489, 16
        %v1829 = vrot.slane %v1827, 5
        %v1830 = vor.u32 %v1826, %v1829
        %v1831 = vrot.slane %v1830, 4
        %v1833 = vshll.u32 %v1490, 16
        %v1835 = vrot.slane %v1833, 5
        %v1836 = vsel %vm899, %v1831, %v1835
        %v1837 = vshrl.u32 %v1490, 16
        %v1839 = vrot.slane %v1837, 4
        %v1840 = vor.u32 %v1839, %v1835
        %v1841 = vrot.slane %v1840, 4
        %v1843 = vshll.u32 %v1508, 16
        %v1845 = vrot.slane %v1843, 5
        %v1846 = vsel %vm899, %v1841, %v1845
        %v1848 = vshrl.u32 %v1491, 16
        %v1850 = vrot.slane %v1848, 4
        %v1851 = vshll.u32 %v1491, 16
        %v1853 = vrot.slane %v1851, 5
        %v1854 = vor.u32 %v1850, %v1853
        %v1855 = vrot.slane %v1854, 4
        %v1857 = vshll.u32 %v1492, 16
        %v1859 = vrot.slane %v1857, 5
        %v1860 = vsel %vm899, %v1855, %v1859
        %v1861 = vshrl.u32 %v1492, 16
        %v1863 = vrot.slane %v1861, 4
        %v1864 = vor.u32 %v1863, %v1859
        %v1865 = vrot.slane %v1864, 4
        %v1867 = vshll.u32 %v1509, 16
        %v1869 = vrot.slane %v1867, 5
        %v1870 = vsel %vm899, %v1865, %v1869
        %v1872 = vshrl.u32 %v1493, 16
        %v1874 = vrot.slane %v1872, 4
        %v1875 = vshll.u32 %v1493, 16
        %v1877 = vrot.slane %v1875, 5
        %v1878 = vor.u32 %v1874, %v1877
        %v1879 = vrot.slane %v1878, 4
        %v1881 = vshll.u32 %v1494, 16
        %v1883 = vrot.slane %v1881, 5
        %v1884 = vsel %vm899, %v1879, %v1883
        %v1885 = vshrl.u32 %v1494, 16
        %v1887 = vrot.slane %v1885, 4
        %v1888 = vor.u32 %v1887, %v1883
        %v1889 = vrot.slane %v1888, 4
        %v1891 = vshll.u32 %v1510, 16
        %v1893 = vrot.slane %v1891, 5
        %v1894 = vsel %vm899, %v1889, %v1893
        %v1895 = vld [vmem:[%s731] sm:$0xe]
        %v1896 = vld [vmem:[%s731 + $0xc] sm:$0xe]
        %v1897 = vld [vmem:[%s731 + $0x18] sm:$0xe]
        %v1898 = vld [vmem:[%s731 + $0x24] sm:$0xe]
        %v1899 = vld [vmem:[%s731 + $0x30] sm:$0xe]
        %v1900 = vld [vmem:[%s731 + $0x3c] sm:$0xe]
        %v1901 = vld [vmem:[%s731 + $0x48] sm:$0xe]
        %v1902 = vld [vmem:[%s731 + $0x54] sm:$0xe]
        %v1903 = vld [vmem:[%s731 + $0x60] sm:$0xe]
        %v1904 = vld [vmem:[%s731 + $0x6c] sm:$0xe]
        %v1905 = vld [vmem:[%s731 + $0x78] sm:$0xe]
        %v1906 = vld [vmem:[%s731 + $0x84] sm:$0xe]
        %v1907 = vld [vmem:[%s731 + $0x90] sm:$0xe]
        %v1908 = vld [vmem:[%s731 + $0x9c] sm:$0xe]
        %v1909 = vld [vmem:[%s731 + $0xa8] sm:$0xe]
        %v1910 = vld [vmem:[%s731 + $0xb4] sm:$0xe]
        %v1959 = vrot.slane %v1895, 5
        %v1960 = vrot.slane %v1959, 4
        %v1961 = vrot.slane %v1464, 5
        %v1962 = vsel %vm1350, %v1960, %v1961
        %v1963 = vrot.slane %v1961, 4
        %v1964 = vrot.slane %v1495, 5
        %v1965 = vsel %vm1350, %v1963, %v1964
        %v1966 = vrot.slane %v1896, 5
        %v1967 = vrot.slane %v1966, 4
        %v1968 = vrot.slane %v1466, 5
        %v1969 = vsel %vm1350, %v1967, %v1968
        %v1970 = vrot.slane %v1968, 4
        %v1971 = vrot.slane %v1496, 5
        %v1972 = vsel %vm1350, %v1970, %v1971
        %v1973 = vrot.slane %v1897, 5
        %v1974 = vrot.slane %v1973, 4
        %v1975 = vrot.slane %v1468, 5
        %v1976 = vsel %vm1350, %v1974, %v1975
        %v1977 = vrot.slane %v1975, 4
        %v1978 = vrot.slane %v1497, 5
        %v1979 = vsel %vm1350, %v1977, %v1978
        %v1980 = vrot.slane %v1898, 5
        %v1981 = vrot.slane %v1980, 4
        %v1982 = vrot.slane %v1470, 5
        %v1983 = vsel %vm1350, %v1981, %v1982
        %v1984 = vrot.slane %v1982, 4
        %v1985 = vrot.slane %v1498, 5
        %v1986 = vsel %vm1350, %v1984, %v1985
        %v1987 = vrot.slane %v1899, 5
        %v1988 = vrot.slane %v1987, 4
        %v1989 = vrot.slane %v1472, 5
        %v1990 = vsel %vm1350, %v1988, %v1989
        %v1991 = vrot.slane %v1989, 4
        %v1992 = vrot.slane %v1499, 5
        %v1993 = vsel %vm1350, %v1991, %v1992
        %v1994 = vrot.slane %v1900, 5
        %v1995 = vrot.slane %v1994, 4
        %v1996 = vrot.slane %v1474, 5
        %v1997 = vsel %vm1350, %v1995, %v1996
        %v1998 = vrot.slane %v1996, 4
        %v1999 = vrot.slane %v1500, 5
        %v2000 = vsel %vm1350, %v1998, %v1999
        %v2001 = vrot.slane %v1901, 5
        %v2002 = vrot.slane %v2001, 4
        %v2003 = vrot.slane %v1476, 5
        %v2004 = vsel %vm1350, %v2002, %v2003
        %v2005 = vrot.slane %v2003, 4
        %v2006 = vrot.slane %v1501, 5
        %v2007 = vsel %vm1350, %v2005, %v2006
        %v2008 = vrot.slane %v1902, 5
        %v2009 = vrot.slane %v2008, 4
        %v2010 = vrot.slane %v1478, 5
        %v2011 = vsel %vm1350, %v2009, %v2010
        %v2012 = vrot.slane %v2010, 4
        %v2013 = vrot.slane %v1502, 5
        %v2014 = vsel %vm1350, %v2012, %v2013
        %v2015 = vrot.slane %v1903, 5
        %v2016 = vrot.slane %v2015, 4
        %v2017 = vrot.slane %v1480, 5
        %v2018 = vsel %vm1350, %v2016, %v2017
        %v2019 = vrot.slane %v2017, 4
        %v2020 = vrot.slane %v1503, 5
        %v2021 = vsel %vm1350, %v2019, %v2020
        %v2022 = vrot.slane %v1904, 5
        %v2023 = vrot.slane %v2022, 4
        %v2024 = vrot.slane %v1482, 5
        %v2025 = vsel %vm1350, %v2023, %v2024
        %v2026 = vrot.slane %v2024, 4
        %v2027 = vrot.slane %v1504, 5
        %v2028 = vsel %vm1350, %v2026, %v2027
        %v2029 = vrot.slane %v1905, 5
        %v2030 = vrot.slane %v2029, 4
        %v2031 = vrot.slane %v1484, 5
        %v2032 = vsel %vm1350, %v2030, %v2031
        %v2033 = vrot.slane %v2031, 4
        %v2034 = vrot.slane %v1505, 5
        %v2035 = vsel %vm1350, %v2033, %v2034
        %v2036 = vrot.slane %v1906, 5
        %v2037 = vrot.slane %v2036, 4
        %v2038 = vrot.slane %v1486, 5
        %v2039 = vsel %vm1350, %v2037, %v2038
        %v2040 = vrot.slane %v2038, 4
        %v2041 = vrot.slane %v1506, 5
        %v2042 = vsel %vm1350, %v2040, %v2041
        %v2043 = vrot.slane %v1907, 5
        %v2044 = vrot.slane %v2043, 4
        %v2045 = vrot.slane %v1488, 5
        %v2046 = vsel %vm1350, %v2044, %v2045
        %v2047 = vrot.slane %v2045, 4
        %v2048 = vrot.slane %v1507, 5
        %v2049 = vsel %vm1350, %v2047, %v2048
        %v2050 = vrot.slane %v1908, 5
        %v2051 = vrot.slane %v2050, 4
        %v2052 = vrot.slane %v1490, 5
        %v2053 = vsel %vm1350, %v2051, %v2052
        %v2054 = vrot.slane %v2052, 4
        %v2055 = vrot.slane %v1508, 5
        %v2056 = vsel %vm1350, %v2054, %v2055
        %v2057 = vrot.slane %v1909, 5
        %v2058 = vrot.slane %v2057, 4
        %v2059 = vrot.slane %v1492, 5
        %v2060 = vsel %vm1350, %v2058, %v2059
        %v2061 = vrot.slane %v2059, 4
        %v2062 = vrot.slane %v1509, 5
        %v2063 = vsel %vm1350, %v2061, %v2062
        %v2064 = vrot.slane %v1910, 5
        %v2065 = vrot.slane %v2064, 4
        %v2066 = vrot.slane %v1494, 5
        %v2067 = vsel %vm1350, %v2065, %v2066
        %v2068 = vrot.slane %v2066, 4
        %v2069 = vrot.slane %v1510, 5
        %v2070 = vsel %vm1350, %v2068, %v2069
        %s2071 = scalar_lea.vmem [#allocation2], 24
        %v2072 = vld [vmem:[%s2071] sm:$0xf]
        %v2073 = vld [vmem:[%s2071 + $0x4] sm:$0xf]
        %v2074 = vld [vmem:[%s2071 + $0xc] sm:$0xf]
        %v2075 = vld [vmem:[%s2071 + $0x10] sm:$0xf]
        %v2076 = vld [vmem:[%s2071 + $0x18] sm:$0xf]
        %v2077 = vld [vmem:[%s2071 + $0x1c] sm:$0xf]
        %v2078 = vld [vmem:[%s2071 + $0x24] sm:$0xf]
        %v2079 = vld [vmem:[%s2071 + $0x28] sm:$0xf]
        %v2080 = vld [vmem:[%s2071 + $0x30] sm:$0xf]
        %v2081 = vld [vmem:[%s2071 + $0x34] sm:$0xf]
        %v2082 = vld [vmem:[%s2071 + $0x3c] sm:$0xf]
        %v2083 = vld [vmem:[%s2071 + $0x40] sm:$0xf]
        %v2084 = vld [vmem:[%s2071 + $0x48] sm:$0xf]
        %v2085 = vld [vmem:[%s2071 + $0x4c] sm:$0xf]
        %v2086 = vld [vmem:[%s2071 + $0x54] sm:$0xf]
        %v2087 = vld [vmem:[%s2071 + $0x58] sm:$0xf]
        %v2088 = vld [vmem:[%s2071 + $0x60] sm:$0xf]
        %v2089 = vld [vmem:[%s2071 + $0x64] sm:$0xf]
        %v2090 = vld [vmem:[%s2071 + $0x6c] sm:$0xf]
        %v2091 = vld [vmem:[%s2071 + $0x70] sm:$0xf]
        %v2092 = vld [vmem:[%s2071 + $0x78] sm:$0xf]
        %v2093 = vld [vmem:[%s2071 + $0x7c] sm:$0xf]
        %v2094 = vld [vmem:[%s2071 + $0x84] sm:$0xf]
        %v2095 = vld [vmem:[%s2071 + $0x88] sm:$0xf]
        %v2096 = vld [vmem:[%s2071 + $0x90] sm:$0xf]
        %v2097 = vld [vmem:[%s2071 + $0x94] sm:$0xf]
        %v2098 = vld [vmem:[%s2071 + $0x9c] sm:$0xf]
        %v2099 = vld [vmem:[%s2071 + $0xa0] sm:$0xf]
        %v2100 = vld [vmem:[%s2071 + $0xa8] sm:$0xf]
        %v2101 = vld [vmem:[%s2071 + $0xac] sm:$0xf]
        %v2102 = vld [vmem:[%s2071 + $0xb4] sm:$0xf]
        %v2103 = vld [vmem:[%s2071 + $0xb8] sm:$0xf]
        %v2104 = vld [vmem:[%s2071 + $0x8] sm:$0x1]
        %v2105 = vld [vmem:[%s2071 + $0x14] sm:$0x1]
        %v2106 = vld [vmem:[%s2071 + $0x20] sm:$0x1]
        %v2107 = vld [vmem:[%s2071 + $0x2c] sm:$0x1]
        %v2108 = vld [vmem:[%s2071 + $0x38] sm:$0x1]
        %v2109 = vld [vmem:[%s2071 + $0x44] sm:$0x1]
        %v2110 = vld [vmem:[%s2071 + $0x50] sm:$0x1]
        %v2111 = vld [vmem:[%s2071 + $0x5c] sm:$0x1]
        %v2112 = vld [vmem:[%s2071 + $0x68] sm:$0x1]
        %v2113 = vld [vmem:[%s2071 + $0x74] sm:$0x1]
        %v2114 = vld [vmem:[%s2071 + $0x80] sm:$0x1]
        %v2115 = vld [vmem:[%s2071 + $0x8c] sm:$0x1]
        %v2116 = vld [vmem:[%s2071 + $0x98] sm:$0x1]
        %v2117 = vld [vmem:[%s2071 + $0xa4] sm:$0x1]
        %v2118 = vld [vmem:[%s2071 + $0xb0] sm:$0x1]
        %v2119 = vld [vmem:[%s2071 + $0xbc] sm:$0x1]
        %v2121 = vshrl.u32 %v2072, 16
        %v2123 = vrot.slane %v2121, 4
        %v2124 = vshll.u32 %v2072, 16
        %v2126 = vrot.slane %v2124, 5
        %v2127 = vor.u32 %v2123, %v2126
        %v2128 = vrot.slane %v2127, 4
        %v2130 = vshll.u32 %v2073, 16
        %v2132 = vrot.slane %v2130, 5
        %v2133 = vsel %vm899, %v2128, %v2132
        %v2134 = vshrl.u32 %v2073, 16
        %v2136 = vrot.slane %v2134, 4
        %v2137 = vor.u32 %v2136, %v2132
        %v2138 = vrot.slane %v2137, 4
        %v2140 = vshll.u32 %v2104, 16
        %v2142 = vrot.slane %v2140, 5
        %v2143 = vsel %vm899, %v2138, %v2142
        %v2145 = vshrl.u32 %v2074, 16
        %v2147 = vrot.slane %v2145, 4
        %v2148 = vshll.u32 %v2074, 16
        %v2150 = vrot.slane %v2148, 5
        %v2151 = vor.u32 %v2147, %v2150
        %v2152 = vrot.slane %v2151, 4
        %v2154 = vshll.u32 %v2075, 16
        %v2156 = vrot.slane %v2154, 5
        %v2157 = vsel %vm899, %v2152, %v2156
        %v2158 = vshrl.u32 %v2075, 16
        %v2160 = vrot.slane %v2158, 4
        %v2161 = vor.u32 %v2160, %v2156
        %v2162 = vrot.slane %v2161, 4
        %v2164 = vshll.u32 %v2105, 16
        %v2166 = vrot.slane %v2164, 5
        %v2167 = vsel %vm899, %v2162, %v2166
        %v2169 = vshrl.u32 %v2076, 16
        %v2171 = vrot.slane %v2169, 4
        %v2172 = vshll.u32 %v2076, 16
        %v2174 = vrot.slane %v2172, 5
        %v2175 = vor.u32 %v2171, %v2174
        %v2176 = vrot.slane %v2175, 4
        %v2178 = vshll.u32 %v2077, 16
        %v2180 = vrot.slane %v2178, 5
        %v2181 = vsel %vm899, %v2176, %v2180
        %v2182 = vshrl.u32 %v2077, 16
        %v2184 = vrot.slane %v2182, 4
        %v2185 = vor.u32 %v2184, %v2180
        %v2186 = vrot.slane %v2185, 4
        %v2188 = vshll.u32 %v2106, 16
        %v2190 = vrot.slane %v2188, 5
        %v2191 = vsel %vm899, %v2186, %v2190
        %v2193 = vshrl.u32 %v2078, 16
        %v2195 = vrot.slane %v2193, 4
        %v2196 = vshll.u32 %v2078, 16
        %v2198 = vrot.slane %v2196, 5
        %v2199 = vor.u32 %v2195, %v2198
        %v2200 = vrot.slane %v2199, 4
        %v2202 = vshll.u32 %v2079, 16
        %v2204 = vrot.slane %v2202, 5
        %v2205 = vsel %vm899, %v2200, %v2204
        %v2206 = vshrl.u32 %v2079, 16
        %v2208 = vrot.slane %v2206, 4
        %v2209 = vor.u32 %v2208, %v2204
        %v2210 = vrot.slane %v2209, 4
        %v2212 = vshll.u32 %v2107, 16
        %v2214 = vrot.slane %v2212, 5
        %v2215 = vsel %vm899, %v2210, %v2214
        %v2217 = vshrl.u32 %v2080, 16
        %v2219 = vrot.slane %v2217, 4
        %v2220 = vshll.u32 %v2080, 16
        %v2222 = vrot.slane %v2220, 5
        %v2223 = vor.u32 %v2219, %v2222
        %v2224 = vrot.slane %v2223, 4
        %v2226 = vshll.u32 %v2081, 16
        %v2228 = vrot.slane %v2226, 5
        %v2229 = vsel %vm899, %v2224, %v2228
        %v2230 = vshrl.u32 %v2081, 16
        %v2232 = vrot.slane %v2230, 4
        %v2233 = vor.u32 %v2232, %v2228
        %v2234 = vrot.slane %v2233, 4
        %v2236 = vshll.u32 %v2108, 16
        %v2238 = vrot.slane %v2236, 5
        %v2239 = vsel %vm899, %v2234, %v2238
        %v2241 = vshrl.u32 %v2082, 16
        %v2243 = vrot.slane %v2241, 4
        %v2244 = vshll.u32 %v2082, 16
        %v2246 = vrot.slane %v2244, 5
        %v2247 = vor.u32 %v2243, %v2246
        %v2248 = vrot.slane %v2247, 4
        %v2250 = vshll.u32 %v2083, 16
        %v2252 = vrot.slane %v2250, 5
        %v2253 = vsel %vm899, %v2248, %v2252
        %v2254 = vshrl.u32 %v2083, 16
        %v2256 = vrot.slane %v2254, 4
        %v2257 = vor.u32 %v2256, %v2252
        %v2258 = vrot.slane %v2257, 4
        %v2260 = vshll.u32 %v2109, 16
        %v2262 = vrot.slane %v2260, 5
        %v2263 = vsel %vm899, %v2258, %v2262
        %v2265 = vshrl.u32 %v2084, 16
        %v2267 = vrot.slane %v2265, 4
        %v2268 = vshll.u32 %v2084, 16
        %v2270 = vrot.slane %v2268, 5
        %v2271 = vor.u32 %v2267, %v2270
        %v2272 = vrot.slane %v2271, 4
        %v2274 = vshll.u32 %v2085, 16
        %v2276 = vrot.slane %v2274, 5
        %v2277 = vsel %vm899, %v2272, %v2276
        %v2278 = vshrl.u32 %v2085, 16
        %v2280 = vrot.slane %v2278, 4
        %v2281 = vor.u32 %v2280, %v2276
        %v2282 = vrot.slane %v2281, 4
        %v2284 = vshll.u32 %v2110, 16
        %v2286 = vrot.slane %v2284, 5
        %v2287 = vsel %vm899, %v2282, %v2286
        %v2289 = vshrl.u32 %v2086, 16
        %v2291 = vrot.slane %v2289, 4
        %v2292 = vshll.u32 %v2086, 16
        %v2294 = vrot.slane %v2292, 5
        %v2295 = vor.u32 %v2291, %v2294
        %v2296 = vrot.slane %v2295, 4
        %v2298 = vshll.u32 %v2087, 16
        %v2300 = vrot.slane %v2298, 5
        %v2301 = vsel %vm899, %v2296, %v2300
        %v2302 = vshrl.u32 %v2087, 16
        %v2304 = vrot.slane %v2302, 4
        %v2305 = vor.u32 %v2304, %v2300
        %v2306 = vrot.slane %v2305, 4
        %v2308 = vshll.u32 %v2111, 16
        %v2310 = vrot.slane %v2308, 5
        %v2311 = vsel %vm899, %v2306, %v2310
        %v2313 = vshrl.u32 %v2088, 16
        %v2315 = vrot.slane %v2313, 4
        %v2316 = vshll.u32 %v2088, 16
        %v2318 = vrot.slane %v2316, 5
        %v2319 = vor.u32 %v2315, %v2318
        %v2320 = vrot.slane %v2319, 4
        %v2322 = vshll.u32 %v2089, 16
        %v2324 = vrot.slane %v2322, 5
        %v2325 = vsel %vm899, %v2320, %v2324
        %v2326 = vshrl.u32 %v2089, 16
        %v2328 = vrot.slane %v2326, 4
        %v2329 = vor.u32 %v2328, %v2324
        %v2330 = vrot.slane %v2329, 4
        %v2332 = vshll.u32 %v2112, 16
        %v2334 = vrot.slane %v2332, 5
        %v2335 = vsel %vm899, %v2330, %v2334
        %v2337 = vshrl.u32 %v2090, 16
        %v2339 = vrot.slane %v2337, 4
        %v2340 = vshll.u32 %v2090, 16
        %v2342 = vrot.slane %v2340, 5
        %v2343 = vor.u32 %v2339, %v2342
        %v2344 = vrot.slane %v2343, 4
        %v2346 = vshll.u32 %v2091, 16
        %v2348 = vrot.slane %v2346, 5
        %v2349 = vsel %vm899, %v2344, %v2348
        %v2350 = vshrl.u32 %v2091, 16
        %v2352 = vrot.slane %v2350, 4
        %v2353 = vor.u32 %v2352, %v2348
        %v2354 = vrot.slane %v2353, 4
        %v2356 = vshll.u32 %v2113, 16
        %v2358 = vrot.slane %v2356, 5
        %v2359 = vsel %vm899, %v2354, %v2358
        %v2361 = vshrl.u32 %v2092, 16
        %v2363 = vrot.slane %v2361, 4
        %v2364 = vshll.u32 %v2092, 16
        %v2366 = vrot.slane %v2364, 5
        %v2367 = vor.u32 %v2363, %v2366
        %v2368 = vrot.slane %v2367, 4
        %v2370 = vshll.u32 %v2093, 16
        %v2372 = vrot.slane %v2370, 5
        %v2373 = vsel %vm899, %v2368, %v2372
        %v2374 = vshrl.u32 %v2093, 16
        %v2376 = vrot.slane %v2374, 4
        %v2377 = vor.u32 %v2376, %v2372
        %v2378 = vrot.slane %v2377, 4
        %v2380 = vshll.u32 %v2114, 16
        %v2382 = vrot.slane %v2380, 5
        %v2383 = vsel %vm899, %v2378, %v2382
        %v2385 = vshrl.u32 %v2094, 16
        %v2387 = vrot.slane %v2385, 4
        %v2388 = vshll.u32 %v2094, 16
        %v2390 = vrot.slane %v2388, 5
        %v2391 = vor.u32 %v2387, %v2390
        %v2392 = vrot.slane %v2391, 4
        %v2394 = vshll.u32 %v2095, 16
        %v2396 = vrot.slane %v2394, 5
        %v2397 = vsel %vm899, %v2392, %v2396
        %v2398 = vshrl.u32 %v2095, 16
        %v2400 = vrot.slane %v2398, 4
        %v2401 = vor.u32 %v2400, %v2396
        %v2402 = vrot.slane %v2401, 4
        %v2404 = vshll.u32 %v2115, 16
        %v2406 = vrot.slane %v2404, 5
        %v2407 = vsel %vm899, %v2402, %v2406
        %v2409 = vshrl.u32 %v2096, 16
        %v2411 = vrot.slane %v2409, 4
        %v2412 = vshll.u32 %v2096, 16
        %v2414 = vrot.slane %v2412, 5
        %v2415 = vor.u32 %v2411, %v2414
        %v2416 = vrot.slane %v2415, 4
        %v2418 = vshll.u32 %v2097, 16
        %v2420 = vrot.slane %v2418, 5
        %v2421 = vsel %vm899, %v2416, %v2420
        %v2422 = vshrl.u32 %v2097, 16
        %v2424 = vrot.slane %v2422, 4
        %v2425 = vor.u32 %v2424, %v2420
        %v2426 = vrot.slane %v2425, 4
        %v2428 = vshll.u32 %v2116, 16
        %v2430 = vrot.slane %v2428, 5
        %v2431 = vsel %vm899, %v2426, %v2430
        %v2433 = vshrl.u32 %v2098, 16
        %v2435 = vrot.slane %v2433, 4
        %v2436 = vshll.u32 %v2098, 16
        %v2438 = vrot.slane %v2436, 5
        %v2439 = vor.u32 %v2435, %v2438
        %v2440 = vrot.slane %v2439, 4
        %v2442 = vshll.u32 %v2099, 16
        %v2444 = vrot.slane %v2442, 5
        %v2445 = vsel %vm899, %v2440, %v2444
        %v2446 = vshrl.u32 %v2099, 16
        %v2448 = vrot.slane %v2446, 4
        %v2449 = vor.u32 %v2448, %v2444
        %v2450 = vrot.slane %v2449, 4
        %v2452 = vshll.u32 %v2117, 16
        %v2454 = vrot.slane %v2452, 5
        %v2455 = vsel %vm899, %v2450, %v2454
        %v2457 = vshrl.u32 %v2100, 16
        %v2459 = vrot.slane %v2457, 4
        %v2460 = vshll.u32 %v2100, 16
        %v2462 = vrot.slane %v2460, 5
        %v2463 = vor.u32 %v2459, %v2462
        %v2464 = vrot.slane %v2463, 4
        %v2466 = vshll.u32 %v2101, 16
        %v2468 = vrot.slane %v2466, 5
        %v2469 = vsel %vm899, %v2464, %v2468
        %v2470 = vshrl.u32 %v2101, 16
        %v2472 = vrot.slane %v2470, 4
        %v2473 = vor.u32 %v2472, %v2468
        %v2474 = vrot.slane %v2473, 4
        %v2476 = vshll.u32 %v2118, 16
        %v2478 = vrot.slane %v2476, 5
        %v2479 = vsel %vm899, %v2474, %v2478
        %v2481 = vshrl.u32 %v2102, 16
        %v2483 = vrot.slane %v2481, 4
        %v2484 = vshll.u32 %v2102, 16
        %v2486 = vrot.slane %v2484, 5
        %v2487 = vor.u32 %v2483, %v2486
        %v2488 = vrot.slane %v2487, 4
        %v2490 = vshll.u32 %v2103, 16
        %v2492 = vrot.slane %v2490, 5
        %v2493 = vsel %vm899, %v2488, %v2492
        %v2494 = vshrl.u32 %v2103, 16
        %v2496 = vrot.slane %v2494, 4
        %v2497 = vor.u32 %v2496, %v2492
        %v2498 = vrot.slane %v2497, 4
        %v2500 = vshll.u32 %v2119, 16
        %v2502 = vrot.slane %v2500, 5
        %v2503 = vsel %vm899, %v2498, %v2502
        %v2504 = vld [vmem:[%s2071] sm:$0xe]
        %v2505 = vld [vmem:[%s2071 + $0xc] sm:$0xe]
        %v2506 = vld [vmem:[%s2071 + $0x18] sm:$0xe]
        %v2507 = vld [vmem:[%s2071 + $0x24] sm:$0xe]
        %v2508 = vld [vmem:[%s2071 + $0x30] sm:$0xe]
        %v2509 = vld [vmem:[%s2071 + $0x3c] sm:$0xe]
        %v2510 = vld [vmem:[%s2071 + $0x48] sm:$0xe]
        %v2511 = vld [vmem:[%s2071 + $0x54] sm:$0xe]
        %v2512 = vld [vmem:[%s2071 + $0x60] sm:$0xe]
        %v2513 = vld [vmem:[%s2071 + $0x6c] sm:$0xe]
        %v2514 = vld [vmem:[%s2071 + $0x78] sm:$0xe]
        %v2515 = vld [vmem:[%s2071 + $0x84] sm:$0xe]
        %v2516 = vld [vmem:[%s2071 + $0x90] sm:$0xe]
        %v2517 = vld [vmem:[%s2071 + $0x9c] sm:$0xe]
        %v2518 = vld [vmem:[%s2071 + $0xa8] sm:$0xe]
        %v2519 = vld [vmem:[%s2071 + $0xb4] sm:$0xe]
        %v2568 = vrot.slane %v2504, 5
        %v2569 = vrot.slane %v2568, 4
        %v2570 = vrot.slane %v2073, 5
        %v2571 = vsel %vm1350, %v2569, %v2570
        %v2572 = vrot.slane %v2570, 4
        %v2573 = vrot.slane %v2104, 5
        %v2574 = vsel %vm1350, %v2572, %v2573
        %v2575 = vrot.slane %v2505, 5
        %v2576 = vrot.slane %v2575, 4
        %v2577 = vrot.slane %v2075, 5
        %v2578 = vsel %vm1350, %v2576, %v2577
        %v2579 = vrot.slane %v2577, 4
        %v2580 = vrot.slane %v2105, 5
        %v2581 = vsel %vm1350, %v2579, %v2580
        %v2582 = vrot.slane %v2506, 5
        %v2583 = vrot.slane %v2582, 4
        %v2584 = vrot.slane %v2077, 5
        %v2585 = vsel %vm1350, %v2583, %v2584
        %v2586 = vrot.slane %v2584, 4
        %v2587 = vrot.slane %v2106, 5
        %v2588 = vsel %vm1350, %v2586, %v2587
        %v2589 = vrot.slane %v2507, 5
        %v2590 = vrot.slane %v2589, 4
        %v2591 = vrot.slane %v2079, 5
        %v2592 = vsel %vm1350, %v2590, %v2591
        %v2593 = vrot.slane %v2591, 4
        %v2594 = vrot.slane %v2107, 5
        %v2595 = vsel %vm1350, %v2593, %v2594
        %v2596 = vrot.slane %v2508, 5
        %v2597 = vrot.slane %v2596, 4
        %v2598 = vrot.slane %v2081, 5
        %v2599 = vsel %vm1350, %v2597, %v2598
        %v2600 = vrot.slane %v2598, 4
        %v2601 = vrot.slane %v2108, 5
        %v2602 = vsel %vm1350, %v2600, %v2601
        %v2603 = vrot.slane %v2509, 5
        %v2604 = vrot.slane %v2603, 4
        %v2605 = vrot.slane %v2083, 5
        %v2606 = vsel %vm1350, %v2604, %v2605
        %v2607 = vrot.slane %v2605, 4
        %v2608 = vrot.slane %v2109, 5
        %v2609 = vsel %vm1350, %v2607, %v2608
        %v2610 = vrot.slane %v2510, 5
        %v2611 = vrot.slane %v2610, 4
        %v2612 = vrot.slane %v2085, 5
        %v2613 = vsel %vm1350, %v2611, %v2612
        %v2614 = vrot.slane %v2612, 4
        %v2615 = vrot.slane %v2110, 5
        %v2616 = vsel %vm1350, %v2614, %v2615
        %v2617 = vrot.slane %v2511, 5
        %v2618 = vrot.slane %v2617, 4
        %v2619 = vrot.slane %v2087, 5
        %v2620 = vsel %vm1350, %v2618, %v2619
        %v2621 = vrot.slane %v2619, 4
        %v2622 = vrot.slane %v2111, 5
        %v2623 = vsel %vm1350, %v2621, %v2622
        %v2624 = vrot.slane %v2512, 5
        %v2625 = vrot.slane %v2624, 4
        %v2626 = vrot.slane %v2089, 5
        %v2627 = vsel %vm1350, %v2625, %v2626
        %v2628 = vrot.slane %v2626, 4
        %v2629 = vrot.slane %v2112, 5
        %v2630 = vsel %vm1350, %v2628, %v2629
        %v2631 = vrot.slane %v2513, 5
        %v2632 = vrot.slane %v2631, 4
        %v2633 = vrot.slane %v2091, 5
        %v2634 = vsel %vm1350, %v2632, %v2633
        %v2635 = vrot.slane %v2633, 4
        %v2636 = vrot.slane %v2113, 5
        %v2637 = vsel %vm1350, %v2635, %v2636
        %v2638 = vrot.slane %v2514, 5
        %v2639 = vrot.slane %v2638, 4
        %v2640 = vrot.slane %v2093, 5
        %v2641 = vsel %vm1350, %v2639, %v2640
        %v2642 = vrot.slane %v2640, 4
        %v2643 = vrot.slane %v2114, 5
        %v2644 = vsel %vm1350, %v2642, %v2643
        %v2645 = vrot.slane %v2515, 5
        %v2646 = vrot.slane %v2645, 4
        %v2647 = vrot.slane %v2095, 5
        %v2648 = vsel %vm1350, %v2646, %v2647
        %v2649 = vrot.slane %v2647, 4
        %v2650 = vrot.slane %v2115, 5
        %v2651 = vsel %vm1350, %v2649, %v2650
        %v2652 = vrot.slane %v2516, 5
        %v2653 = vrot.slane %v2652, 4
        %v2654 = vrot.slane %v2097, 5
        %v2655 = vsel %vm1350, %v2653, %v2654
        %v2656 = vrot.slane %v2654, 4
        %v2657 = vrot.slane %v2116, 5
        %v2658 = vsel %vm1350, %v2656, %v2657
        %v2659 = vrot.slane %v2517, 5
        %v2660 = vrot.slane %v2659, 4
        %v2661 = vrot.slane %v2099, 5
        %v2662 = vsel %vm1350, %v2660, %v2661
        %v2663 = vrot.slane %v2661, 4
        %v2664 = vrot.slane %v2117, 5
        %v2665 = vsel %vm1350, %v2663, %v2664
        %v2666 = vrot.slane %v2518, 5
        %v2667 = vrot.slane %v2666, 4
        %v2668 = vrot.slane %v2101, 5
        %v2669 = vsel %vm1350, %v2667, %v2668
        %v2670 = vrot.slane %v2668, 4
        %v2671 = vrot.slane %v2118, 5
        %v2672 = vsel %vm1350, %v2670, %v2671
        %v2673 = vrot.slane %v2519, 5
        %v2674 = vrot.slane %v2673, 4
        %v2675 = vrot.slane %v2103, 5
        %v2676 = vsel %vm1350, %v2674, %v2675
        %v2677 = vrot.slane %v2675, 4
        %v2678 = vrot.slane %v2119, 5
        %v2679 = vsel %vm1350, %v2677, %v2678
        %v2696 = vunpack.c.l.b16 %v849
        %v2697 = vunpack.c.l.b16 %v850
        %v2698 = vunpack.c.l.b16 %v851
        %v2699 = vunpack.c.l.b16 %v852
        %v2700 = vunpack.c.l.b16 %v853
        %v2701 = vunpack.c.l.b16 %v854
        %v2702 = vunpack.c.l.b16 %v855
        %v2703 = vunpack.c.l.b16 %v856
        %v2704 = vunpack.c.l.b16 %v857
        %v2705 = vunpack.c.l.b16 %v858
        %v2706 = vunpack.c.l.b16 %v859
        %v2707 = vunpack.c.l.b16 %v860
        %v2708 = vunpack.c.l.b16 %v861
        %v2709 = vunpack.c.l.b16 %v862
        %v2710 = vunpack.c.l.b16 %v863
        %v2711 = vunpack.c.l.b16 %v864
        %v2712 = vunpack.c.l.b16 %v865
        %v2713 = vunpack.c.l.b16 %v866
        %v2714 = vunpack.c.l.b16 %v867
        %v2715 = vunpack.c.l.b16 %v868
        %v2716 = vunpack.c.l.b16 %v869
        %v2717 = vunpack.c.l.b16 %v870
        %v2718 = vunpack.c.l.b16 %v871
        %v2719 = vunpack.c.l.b16 %v872
        %v2720 = vunpack.c.l.b16 %v873
        %v2721 = vunpack.c.l.b16 %v874
        %v2722 = vunpack.c.l.b16 %v875
        %v2723 = vunpack.c.l.b16 %v876
        %v2724 = vunpack.c.l.b16 %v877
        %v2725 = vunpack.c.l.b16 %v878
        %v2726 = vunpack.c.l.b16 %v879
        %v2727 = vunpack.c.l.b16 %v880
        %v2728 = vpack.c.b16 %v2697, %v2696
        %v2729 = vpack.c.b16 %v2699, %v2698
        %v2730 = vpack.c.b16 %v2701, %v2700
        %v2731 = vpack.c.b16 %v2703, %v2702
        %v2732 = vpack.c.b16 %v2705, %v2704
        %v2733 = vpack.c.b16 %v2707, %v2706
        %v2734 = vpack.c.b16 %v2709, %v2708
        %v2735 = vpack.c.b16 %v2711, %v2710
        %v2736 = vpack.c.b16 %v2713, %v2712
        %v2737 = vpack.c.b16 %v2715, %v2714
        %v2738 = vpack.c.b16 %v2717, %v2716
        %v2739 = vpack.c.b16 %v2719, %v2718
        %v2740 = vpack.c.b16 %v2721, %v2720
        %v2741 = vpack.c.b16 %v2723, %v2722
        %v2742 = vpack.c.b16 %v2725, %v2724
        %v2743 = vpack.c.b16 %v2727, %v2726
        %v2744 = vunpack.c.l.b16 %v913
        %v2745 = vunpack.c.l.b16 %v923
        %v2746 = vunpack.c.l.b16 %v937
        %v2747 = vunpack.c.l.b16 %v947
        %v2748 = vunpack.c.l.b16 %v961
        %v2749 = vunpack.c.l.b16 %v971
        %v2750 = vunpack.c.l.b16 %v985
        %v2751 = vunpack.c.l.b16 %v995
        %v2752 = vunpack.c.l.b16 %v1009
        %v2753 = vunpack.c.l.b16 %v1019
        %v2754 = vunpack.c.l.b16 %v1033
        %v2755 = vunpack.c.l.b16 %v1043
        %v2756 = vunpack.c.l.b16 %v1057
        %v2757 = vunpack.c.l.b16 %v1067
        %v2758 = vunpack.c.l.b16 %v1081
        %v2759 = vunpack.c.l.b16 %v1091
        %v2760 = vunpack.c.l.b16 %v1105
        %v2761 = vunpack.c.l.b16 %v1115
        %v2762 = vunpack.c.l.b16 %v1129
        %v2763 = vunpack.c.l.b16 %v1139
        %v2764 = vunpack.c.l.b16 %v1153
        %v2765 = vunpack.c.l.b16 %v1163
        %v2766 = vunpack.c.l.b16 %v1177
        %v2767 = vunpack.c.l.b16 %v1187
        %v2768 = vunpack.c.l.b16 %v1201
        %v2769 = vunpack.c.l.b16 %v1211
        %v2770 = vunpack.c.l.b16 %v1225
        %v2771 = vunpack.c.l.b16 %v1235
        %v2772 = vunpack.c.l.b16 %v1249
        %v2773 = vunpack.c.l.b16 %v1259
        %v2774 = vunpack.c.l.b16 %v1273
        %v2775 = vunpack.c.l.b16 %v1283
        %v2776 = vpack.c.b16 %v2745, %v2744
        %v2777 = vpack.c.b16 %v2747, %v2746
        %v2778 = vpack.c.b16 %v2749, %v2748
        %v2779 = vpack.c.b16 %v2751, %v2750
        %v2780 = vpack.c.b16 %v2753, %v2752
        %v2781 = vpack.c.b16 %v2755, %v2754
        %v2782 = vpack.c.b16 %v2757, %v2756
        %v2783 = vpack.c.b16 %v2759, %v2758
        %v2784 = vpack.c.b16 %v2761, %v2760
        %v2785 = vpack.c.b16 %v2763, %v2762
        %v2786 = vpack.c.b16 %v2765, %v2764
        %v2787 = vpack.c.b16 %v2767, %v2766
        %v2788 = vpack.c.b16 %v2769, %v2768
        %v2789 = vpack.c.b16 %v2771, %v2770
        %v2790 = vpack.c.b16 %v2773, %v2772
        %v2791 = vpack.c.b16 %v2775, %v2774
        %2792 = vrot.lane.b32.xlu0 %v2776, 32
        %v2793 = vpop.permute.xlu0 %2792
        %2794 = vrot.lane.b32.xlu0 %v2777, 32
        %v2795 = vpop.permute.xlu0 %2794
        %2796 = vrot.lane.b32.xlu0 %v2778, 32
        %v2797 = vpop.permute.xlu0 %2796
        %2798 = vrot.lane.b32.xlu0 %v2779, 32
        %v2799 = vpop.permute.xlu0 %2798
        %2800 = vrot.lane.b32.xlu0 %v2780, 32
        %v2801 = vpop.permute.xlu0 %2800
        %2802 = vrot.lane.b32.xlu0 %v2781, 32
        %v2803 = vpop.permute.xlu0 %2802
        %2804 = vrot.lane.b32.xlu0 %v2782, 32
        %v2805 = vpop.permute.xlu0 %2804
        %2806 = vrot.lane.b32.xlu0 %v2783, 32
        %v2807 = vpop.permute.xlu0 %2806
        %2808 = vrot.lane.b32.xlu0 %v2784, 32
        %v2809 = vpop.permute.xlu0 %2808
        %2810 = vrot.lane.b32.xlu0 %v2785, 32
        %v2811 = vpop.permute.xlu0 %2810
        %2812 = vrot.lane.b32.xlu0 %v2786, 32
        %v2813 = vpop.permute.xlu0 %2812
        %2814 = vrot.lane.b32.xlu0 %v2787, 32
        %v2815 = vpop.permute.xlu0 %2814
        %2816 = vrot.lane.b32.xlu0 %v2788, 32
        %v2817 = vpop.permute.xlu0 %2816
        %2818 = vrot.lane.b32.xlu0 %v2789, 32
        %v2819 = vpop.permute.xlu0 %2818
        %2820 = vrot.lane.b32.xlu0 %v2790, 32
        %v2821 = vpop.permute.xlu0 %2820
        %2822 = vrot.lane.b32.xlu0 %v2791, 32
        %v2823 = vpop.permute.xlu0 %2822
        %v2824 = vunpack.c.l.b16 %v1354
        %v2825 = vunpack.c.l.b16 %v1357
        %v2826 = vunpack.c.l.b16 %v1361
        %v2827 = vunpack.c.l.b16 %v1364
        %v2828 = vunpack.c.l.b16 %v1368
        %v2829 = vunpack.c.l.b16 %v1371
        %v2830 = vunpack.c.l.b16 %v1375
        %v2831 = vunpack.c.l.b16 %v1378
        %v2832 = vunpack.c.l.b16 %v1382
        %v2833 = vunpack.c.l.b16 %v1385
        %v2834 = vunpack.c.l.b16 %v1389
        %v2835 = vunpack.c.l.b16 %v1392
        %v2836 = vunpack.c.l.b16 %v1396
        %v2837 = vunpack.c.l.b16 %v1399
        %v2838 = vunpack.c.l.b16 %v1403
        %v2839 = vunpack.c.l.b16 %v1406
        %v2840 = vunpack.c.l.b16 %v1410
        %v2841 = vunpack.c.l.b16 %v1413
        %v2842 = vunpack.c.l.b16 %v1417
        %v2843 = vunpack.c.l.b16 %v1420
        %v2844 = vunpack.c.l.b16 %v1424
        %v2845 = vunpack.c.l.b16 %v1427
        %v2846 = vunpack.c.l.b16 %v1431
        %v2847 = vunpack.c.l.b16 %v1434
        %v2848 = vunpack.c.l.b16 %v1438
        %v2849 = vunpack.c.l.b16 %v1441
        %v2850 = vunpack.c.l.b16 %v1445
        %v2851 = vunpack.c.l.b16 %v1448
        %v2852 = vunpack.c.l.b16 %v1452
        %v2853 = vunpack.c.l.b16 %v1455
        %v2854 = vunpack.c.l.b16 %v1459
        %v2855 = vunpack.c.l.b16 %v1462
        %v2856 = vpack.c.b16 %v2825, %v2824
        %v2857 = vpack.c.b16 %v2827, %v2826
        %v2858 = vpack.c.b16 %v2829, %v2828
        %v2859 = vpack.c.b16 %v2831, %v2830
        %v2860 = vpack.c.b16 %v2833, %v2832
        %v2861 = vpack.c.b16 %v2835, %v2834
        %v2862 = vpack.c.b16 %v2837, %v2836
        %v2863 = vpack.c.b16 %v2839, %v2838
        %v2864 = vpack.c.b16 %v2841, %v2840
        %v2865 = vpack.c.b16 %v2843, %v2842
        %v2866 = vpack.c.b16 %v2845, %v2844
        %v2867 = vpack.c.b16 %v2847, %v2846
        %v2868 = vpack.c.b16 %v2849, %v2848
        %v2869 = vpack.c.b16 %v2851, %v2850
        %v2870 = vpack.c.b16 %v2853, %v2852
        %v2871 = vpack.c.b16 %v2855, %v2854
        %2872 = vrot.lane.b32.xlu0 %v2856, 64
        %v2873 = vpop.permute.xlu0 %2872
        %2874 = vrot.lane.b32.xlu0 %v2857, 64
        %v2875 = vpop.permute.xlu0 %2874
        %2876 = vrot.lane.b32.xlu0 %v2858, 64
        %v2877 = vpop.permute.xlu0 %2876
        %2878 = vrot.lane.b32.xlu0 %v2859, 64
        %v2879 = vpop.permute.xlu0 %2878
        %2880 = vrot.lane.b32.xlu0 %v2860, 64
        %v2881 = vpop.permute.xlu0 %2880
        %2882 = vrot.lane.b32.xlu0 %v2861, 64
        %v2883 = vpop.permute.xlu0 %2882
        %2884 = vrot.lane.b32.xlu0 %v2862, 64
        %v2885 = vpop.permute.xlu0 %2884
        %2886 = vrot.lane.b32.xlu0 %v2863, 64
        %v2887 = vpop.permute.xlu0 %2886
        %2888 = vrot.lane.b32.xlu0 %v2864, 64
        %v2889 = vpop.permute.xlu0 %2888
        %2890 = vrot.lane.b32.xlu0 %v2865, 64
        %v2891 = vpop.permute.xlu0 %2890
        %2892 = vrot.lane.b32.xlu0 %v2866, 64
        %v2893 = vpop.permute.xlu0 %2892
        %2894 = vrot.lane.b32.xlu0 %v2867, 64
        %v2895 = vpop.permute.xlu0 %2894
        %2896 = vrot.lane.b32.xlu0 %v2868, 64
        %v2897 = vpop.permute.xlu0 %2896
        %2898 = vrot.lane.b32.xlu0 %v2869, 64
        %v2899 = vpop.permute.xlu0 %2898
        %2900 = vrot.lane.b32.xlu0 %v2870, 64
        %v2901 = vpop.permute.xlu0 %2900
        %2902 = vrot.lane.b32.xlu0 %v2871, 64
        %v2903 = vpop.permute.xlu0 %2902
        %v2920 = vunpack.c.l.b16 %v1463
        %v2921 = vunpack.c.l.b16 %v1464
        %v2922 = vunpack.c.l.b16 %v1465
        %v2923 = vunpack.c.l.b16 %v1466
        %v2924 = vunpack.c.l.b16 %v1467
        %v2925 = vunpack.c.l.b16 %v1468
        %v2926 = vunpack.c.l.b16 %v1469
        %v2927 = vunpack.c.l.b16 %v1470
        %v2928 = vunpack.c.l.b16 %v1471
        %v2929 = vunpack.c.l.b16 %v1472
        %v2930 = vunpack.c.l.b16 %v1473
        %v2931 = vunpack.c.l.b16 %v1474
        %v2932 = vunpack.c.l.b16 %v1475
        %v2933 = vunpack.c.l.b16 %v1476
        %v2934 = vunpack.c.l.b16 %v1477
        %v2935 = vunpack.c.l.b16 %v1478
        %v2936 = vunpack.c.l.b16 %v1479
        %v2937 = vunpack.c.l.b16 %v1480
        %v2938 = vunpack.c.l.b16 %v1481
        %v2939 = vunpack.c.l.b16 %v1482
        %v2940 = vunpack.c.l.b16 %v1483
        %v2941 = vunpack.c.l.b16 %v1484
        %v2942 = vunpack.c.l.b16 %v1485
        %v2943 = vunpack.c.l.b16 %v1486
        %v2944 = vunpack.c.l.b16 %v1487
        %v2945 = vunpack.c.l.b16 %v1488
        %v2946 = vunpack.c.l.b16 %v1489
        %v2947 = vunpack.c.l.b16 %v1490
        %v2948 = vunpack.c.l.b16 %v1491
        %v2949 = vunpack.c.l.b16 %v1492
        %v2950 = vunpack.c.l.b16 %v1493
        %v2951 = vunpack.c.l.b16 %v1494
        %v2952 = vpack.c.b16 %v2921, %v2920
        %v2953 = vpack.c.b16 %v2923, %v2922
        %v2954 = vpack.c.b16 %v2925, %v2924
        %v2955 = vpack.c.b16 %v2927, %v2926
        %v2956 = vpack.c.b16 %v2929, %v2928
        %v2957 = vpack.c.b16 %v2931, %v2930
        %v2958 = vpack.c.b16 %v2933, %v2932
        %v2959 = vpack.c.b16 %v2935, %v2934
        %v2960 = vpack.c.b16 %v2937, %v2936
        %v2961 = vpack.c.b16 %v2939, %v2938
        %v2962 = vpack.c.b16 %v2941, %v2940
        %v2963 = vpack.c.b16 %v2943, %v2942
        %v2964 = vpack.c.b16 %v2945, %v2944
        %v2965 = vpack.c.b16 %v2947, %v2946
        %v2966 = vpack.c.b16 %v2949, %v2948
        %v2967 = vpack.c.b16 %v2951, %v2950
        %2968 = vrot.lane.b32.xlu0 %v2952, 96
        %v2969 = vpop.permute.xlu0 %2968
        %2970 = vrot.lane.b32.xlu0 %v2953, 96
        %v2971 = vpop.permute.xlu0 %2970
        %2972 = vrot.lane.b32.xlu0 %v2954, 96
        %v2973 = vpop.permute.xlu0 %2972
        %2974 = vrot.lane.b32.xlu0 %v2955, 96
        %v2975 = vpop.permute.xlu0 %2974
        %2976 = vrot.lane.b32.xlu0 %v2956, 96
        %v2977 = vpop.permute.xlu0 %2976
        %2978 = vrot.lane.b32.xlu0 %v2957, 96
        %v2979 = vpop.permute.xlu0 %2978
        %2980 = vrot.lane.b32.xlu0 %v2958, 96
        %v2981 = vpop.permute.xlu0 %2980
        %2982 = vrot.lane.b32.xlu0 %v2959, 96
        %v2983 = vpop.permute.xlu0 %2982
        %2984 = vrot.lane.b32.xlu0 %v2960, 96
        %v2985 = vpop.permute.xlu0 %2984
        %2986 = vrot.lane.b32.xlu0 %v2961, 96
        %v2987 = vpop.permute.xlu0 %2986
        %2988 = vrot.lane.b32.xlu0 %v2962, 96
        %v2989 = vpop.permute.xlu0 %2988
        %2990 = vrot.lane.b32.xlu0 %v2963, 96
        %v2991 = vpop.permute.xlu0 %2990
        %2992 = vrot.lane.b32.xlu0 %v2964, 96
        %v2993 = vpop.permute.xlu0 %2992
        %2994 = vrot.lane.b32.xlu0 %v2965, 96
        %v2995 = vpop.permute.xlu0 %2994
        %2996 = vrot.lane.b32.xlu0 %v2966, 96
        %v2997 = vpop.permute.xlu0 %2996
        %2998 = vrot.lane.b32.xlu0 %v2967, 96
        %v2999 = vpop.permute.xlu0 %2998
        %v3000 = vunpack.c.l.b16 %v1524
        %v3001 = vunpack.c.l.b16 %v1534
        %v3002 = vunpack.c.l.b16 %v1548
        %v3003 = vunpack.c.l.b16 %v1558
        %v3004 = vunpack.c.l.b16 %v1572
        %v3005 = vunpack.c.l.b16 %v1582
        %v3006 = vunpack.c.l.b16 %v1596
        %v3007 = vunpack.c.l.b16 %v1606
        %v3008 = vunpack.c.l.b16 %v1620
        %v3009 = vunpack.c.l.b16 %v1630
        %v3010 = vunpack.c.l.b16 %v1644
        %v3011 = vunpack.c.l.b16 %v1654
        %v3012 = vunpack.c.l.b16 %v1668
        %v3013 = vunpack.c.l.b16 %v1678
        %v3014 = vunpack.c.l.b16 %v1692
        %v3015 = vunpack.c.l.b16 %v1702
        %v3016 = vunpack.c.l.b16 %v1716
        %v3017 = vunpack.c.l.b16 %v1726
        %v3018 = vunpack.c.l.b16 %v1740
        %v3019 = vunpack.c.l.b16 %v1750
        %v3020 = vunpack.c.l.b16 %v1764
        %v3021 = vunpack.c.l.b16 %v1774
        %v3022 = vunpack.c.l.b16 %v1788
        %v3023 = vunpack.c.l.b16 %v1798
        %v3024 = vunpack.c.l.b16 %v1812
        %v3025 = vunpack.c.l.b16 %v1822
        %v3026 = vunpack.c.l.b16 %v1836
        %v3027 = vunpack.c.l.b16 %v1846
        %v3028 = vunpack.c.l.b16 %v1860
        %v3029 = vunpack.c.l.b16 %v1870
        %v3030 = vunpack.c.l.b16 %v1884
        %v3031 = vunpack.c.l.b16 %v1894
        %v3032 = vpack.c.b16 %v3001, %v3000
        %v3033 = vpack.c.b16 %v3003, %v3002
        %v3034 = vpack.c.b16 %v3005, %v3004
        %v3035 = vpack.c.b16 %v3007, %v3006
        %v3036 = vpack.c.b16 %v3009, %v3008
        %v3037 = vpack.c.b16 %v3011, %v3010
        %v3038 = vpack.c.b16 %v3013, %v3012
        %v3039 = vpack.c.b16 %v3015, %v3014
        %v3040 = vpack.c.b16 %v3017, %v3016
        %v3041 = vpack.c.b16 %v3019, %v3018
        %v3042 = vpack.c.b16 %v3021, %v3020
        %v3043 = vpack.c.b16 %v3023, %v3022
        %v3044 = vpack.c.b16 %v3025, %v3024
        %v3045 = vpack.c.b16 %v3027, %v3026
        %v3046 = vpack.c.b16 %v3029, %v3028
        %v3047 = vpack.c.b16 %v3031, %v3030
        %v3048 = vunpack.c.l.b16 %v1962
        %v3049 = vunpack.c.l.b16 %v1965
        %v3050 = vunpack.c.l.b16 %v1969
        %v3051 = vunpack.c.l.b16 %v1972
        %v3052 = vunpack.c.l.b16 %v1976
        %v3053 = vunpack.c.l.b16 %v1979
        %v3054 = vunpack.c.l.b16 %v1983
        %v3055 = vunpack.c.l.b16 %v1986
        %v3056 = vunpack.c.l.b16 %v1990
        %v3057 = vunpack.c.l.b16 %v1993
        %v3058 = vunpack.c.l.b16 %v1997
        %v3059 = vunpack.c.l.b16 %v2000
        %v3060 = vunpack.c.l.b16 %v2004
        %v3061 = vunpack.c.l.b16 %v2007
        %v3062 = vunpack.c.l.b16 %v2011
        %v3063 = vunpack.c.l.b16 %v2014
        %v3064 = vunpack.c.l.b16 %v2018
        %v3065 = vunpack.c.l.b16 %v2021
        %v3066 = vunpack.c.l.b16 %v2025
        %v3067 = vunpack.c.l.b16 %v2028
        %v3068 = vunpack.c.l.b16 %v2032
        %v3069 = vunpack.c.l.b16 %v2035
        %v3070 = vunpack.c.l.b16 %v2039
        %v3071 = vunpack.c.l.b16 %v2042
        %v3072 = vunpack.c.l.b16 %v2046
        %v3073 = vunpack.c.l.b16 %v2049
        %v3074 = vunpack.c.l.b16 %v2053
        %v3075 = vunpack.c.l.b16 %v2056
        %v3076 = vunpack.c.l.b16 %v2060
        %v3077 = vunpack.c.l.b16 %v2063
        %v3078 = vunpack.c.l.b16 %v2067
        %v3079 = vunpack.c.l.b16 %v2070
        %v3080 = vpack.c.b16 %v3049, %v3048
        %v3081 = vpack.c.b16 %v3051, %v3050
        %v3082 = vpack.c.b16 %v3053, %v3052
        %v3083 = vpack.c.b16 %v3055, %v3054
        %v3084 = vpack.c.b16 %v3057, %v3056
        %v3085 = vpack.c.b16 %v3059, %v3058
        %v3086 = vpack.c.b16 %v3061, %v3060
        %v3087 = vpack.c.b16 %v3063, %v3062
        %v3088 = vpack.c.b16 %v3065, %v3064
        %v3089 = vpack.c.b16 %v3067, %v3066
        %v3090 = vpack.c.b16 %v3069, %v3068
        %v3091 = vpack.c.b16 %v3071, %v3070
        %v3092 = vpack.c.b16 %v3073, %v3072
        %v3093 = vpack.c.b16 %v3075, %v3074
        %v3094 = vpack.c.b16 %v3077, %v3076
        %v3095 = vpack.c.b16 %v3079, %v3078
        %3096 = vrot.lane.b32.xlu0 %v3080, 32
        %v3097 = vpop.permute.xlu0 %3096
        %3098 = vrot.lane.b32.xlu0 %v3081, 32
        %v3099 = vpop.permute.xlu0 %3098
        %3100 = vrot.lane.b32.xlu0 %v3082, 32
        %v3101 = vpop.permute.xlu0 %3100
        %3102 = vrot.lane.b32.xlu0 %v3083, 32
        %v3103 = vpop.permute.xlu0 %3102
        %3104 = vrot.lane.b32.xlu0 %v3084, 32
        %v3105 = vpop.permute.xlu0 %3104
        %3106 = vrot.lane.b32.xlu0 %v3085, 32
        %v3107 = vpop.permute.xlu0 %3106
        %3108 = vrot.lane.b32.xlu0 %v3086, 32
        %v3109 = vpop.permute.xlu0 %3108
        %3110 = vrot.lane.b32.xlu0 %v3087, 32
        %v3111 = vpop.permute.xlu0 %3110
        %3112 = vrot.lane.b32.xlu0 %v3088, 32
        %v3113 = vpop.permute.xlu0 %3112
        %3114 = vrot.lane.b32.xlu0 %v3089, 32
        %v3115 = vpop.permute.xlu0 %3114
        %3116 = vrot.lane.b32.xlu0 %v3090, 32
        %v3117 = vpop.permute.xlu0 %3116
        %3118 = vrot.lane.b32.xlu0 %v3091, 32
        %v3119 = vpop.permute.xlu0 %3118
        %3120 = vrot.lane.b32.xlu0 %v3092, 32
        %v3121 = vpop.permute.xlu0 %3120
        %3122 = vrot.lane.b32.xlu0 %v3093, 32
        %v3123 = vpop.permute.xlu0 %3122
        %3124 = vrot.lane.b32.xlu0 %v3094, 32
        %v3125 = vpop.permute.xlu0 %3124
        %3126 = vrot.lane.b32.xlu0 %v3095, 32
        %v3127 = vpop.permute.xlu0 %3126
        %v3144 = vunpack.c.l.b16 %v2072
        %v3145 = vunpack.c.l.b16 %v2073
        %v3146 = vunpack.c.l.b16 %v2074
        %v3147 = vunpack.c.l.b16 %v2075
        %v3148 = vunpack.c.l.b16 %v2076
        %v3149 = vunpack.c.l.b16 %v2077
        %v3150 = vunpack.c.l.b16 %v2078
        %v3151 = vunpack.c.l.b16 %v2079
        %v3152 = vunpack.c.l.b16 %v2080
        %v3153 = vunpack.c.l.b16 %v2081
        %v3154 = vunpack.c.l.b16 %v2082
        %v3155 = vunpack.c.l.b16 %v2083
        %v3156 = vunpack.c.l.b16 %v2084
        %v3157 = vunpack.c.l.b16 %v2085
        %v3158 = vunpack.c.l.b16 %v2086
        %v3159 = vunpack.c.l.b16 %v2087
        %v3160 = vunpack.c.l.b16 %v2088
        %v3161 = vunpack.c.l.b16 %v2089
        %v3162 = vunpack.c.l.b16 %v2090
        %v3163 = vunpack.c.l.b16 %v2091
        %v3164 = vunpack.c.l.b16 %v2092
        %v3165 = vunpack.c.l.b16 %v2093
        %v3166 = vunpack.c.l.b16 %v2094
        %v3167 = vunpack.c.l.b16 %v2095
        %v3168 = vunpack.c.l.b16 %v2096
        %v3169 = vunpack.c.l.b16 %v2097
        %v3170 = vunpack.c.l.b16 %v2098
        %v3171 = vunpack.c.l.b16 %v2099
        %v3172 = vunpack.c.l.b16 %v2100
        %v3173 = vunpack.c.l.b16 %v2101
        %v3174 = vunpack.c.l.b16 %v2102
        %v3175 = vunpack.c.l.b16 %v2103
        %v3176 = vpack.c.b16 %v3145, %v3144
        %v3177 = vpack.c.b16 %v3147, %v3146
        %v3178 = vpack.c.b16 %v3149, %v3148
        %v3179 = vpack.c.b16 %v3151, %v3150
        %v3180 = vpack.c.b16 %v3153, %v3152
        %v3181 = vpack.c.b16 %v3155, %v3154
        %v3182 = vpack.c.b16 %v3157, %v3156
        %v3183 = vpack.c.b16 %v3159, %v3158
        %v3184 = vpack.c.b16 %v3161, %v3160
        %v3185 = vpack.c.b16 %v3163, %v3162
        %v3186 = vpack.c.b16 %v3165, %v3164
        %v3187 = vpack.c.b16 %v3167, %v3166
        %v3188 = vpack.c.b16 %v3169, %v3168
        %v3189 = vpack.c.b16 %v3171, %v3170
        %v3190 = vpack.c.b16 %v3173, %v3172
        %v3191 = vpack.c.b16 %v3175, %v3174
        %3192 = vrot.lane.b32.xlu0 %v3176, 64
        %v3193 = vpop.permute.xlu0 %3192
        %3194 = vrot.lane.b32.xlu0 %v3177, 64
        %v3195 = vpop.permute.xlu0 %3194
        %3196 = vrot.lane.b32.xlu0 %v3178, 64
        %v3197 = vpop.permute.xlu0 %3196
        %3198 = vrot.lane.b32.xlu0 %v3179, 64
        %v3199 = vpop.permute.xlu0 %3198
        %3200 = vrot.lane.b32.xlu0 %v3180, 64
        %v3201 = vpop.permute.xlu0 %3200
        %3202 = vrot.lane.b32.xlu0 %v3181, 64
        %v3203 = vpop.permute.xlu0 %3202
        %3204 = vrot.lane.b32.xlu0 %v3182, 64
        %v3205 = vpop.permute.xlu0 %3204
        %3206 = vrot.lane.b32.xlu0 %v3183, 64
        %v3207 = vpop.permute.xlu0 %3206
        %3208 = vrot.lane.b32.xlu0 %v3184, 64
        %v3209 = vpop.permute.xlu0 %3208
        %3210 = vrot.lane.b32.xlu0 %v3185, 64
        %v3211 = vpop.permute.xlu0 %3210
        %3212 = vrot.lane.b32.xlu0 %v3186, 64
        %v3213 = vpop.permute.xlu0 %3212
        %3214 = vrot.lane.b32.xlu0 %v3187, 64
        %v3215 = vpop.permute.xlu0 %3214
        %3216 = vrot.lane.b32.xlu0 %v3188, 64
        %v3217 = vpop.permute.xlu0 %3216
        %3218 = vrot.lane.b32.xlu0 %v3189, 64
        %v3219 = vpop.permute.xlu0 %3218
        %3220 = vrot.lane.b32.xlu0 %v3190, 64
        %v3221 = vpop.permute.xlu0 %3220
        %3222 = vrot.lane.b32.xlu0 %v3191, 64
        %v3223 = vpop.permute.xlu0 %3222
        %v3224 = vunpack.c.l.b16 %v2133
        %v3225 = vunpack.c.l.b16 %v2143
        %v3226 = vunpack.c.l.b16 %v2157
        %v3227 = vunpack.c.l.b16 %v2167
        %v3228 = vunpack.c.l.b16 %v2181
        %v3229 = vunpack.c.l.b16 %v2191
        %v3230 = vunpack.c.l.b16 %v2205
        %v3231 = vunpack.c.l.b16 %v2215
        %v3232 = vunpack.c.l.b16 %v2229
        %v3233 = vunpack.c.l.b16 %v2239
        %v3234 = vunpack.c.l.b16 %v2253
        %v3235 = vunpack.c.l.b16 %v2263
        %v3236 = vunpack.c.l.b16 %v2277
        %v3237 = vunpack.c.l.b16 %v2287
        %v3238 = vunpack.c.l.b16 %v2301
        %v3239 = vunpack.c.l.b16 %v2311
        %v3240 = vunpack.c.l.b16 %v2325
        %v3241 = vunpack.c.l.b16 %v2335
        %v3242 = vunpack.c.l.b16 %v2349
        %v3243 = vunpack.c.l.b16 %v2359
        %v3244 = vunpack.c.l.b16 %v2373
        %v3245 = vunpack.c.l.b16 %v2383
        %v3246 = vunpack.c.l.b16 %v2397
        %v3247 = vunpack.c.l.b16 %v2407
        %v3248 = vunpack.c.l.b16 %v2421
        %v3249 = vunpack.c.l.b16 %v2431
        %v3250 = vunpack.c.l.b16 %v2445
        %v3251 = vunpack.c.l.b16 %v2455
        %v3252 = vunpack.c.l.b16 %v2469
        %v3253 = vunpack.c.l.b16 %v2479
        %v3254 = vunpack.c.l.b16 %v2493
        %v3255 = vunpack.c.l.b16 %v2503
        %v3256 = vpack.c.b16 %v3225, %v3224
        %v3257 = vpack.c.b16 %v3227, %v3226
        %v3258 = vpack.c.b16 %v3229, %v3228
        %v3259 = vpack.c.b16 %v3231, %v3230
        %v3260 = vpack.c.b16 %v3233, %v3232
        %v3261 = vpack.c.b16 %v3235, %v3234
        %v3262 = vpack.c.b16 %v3237, %v3236
        %v3263 = vpack.c.b16 %v3239, %v3238
        %v3264 = vpack.c.b16 %v3241, %v3240
        %v3265 = vpack.c.b16 %v3243, %v3242
        %v3266 = vpack.c.b16 %v3245, %v3244
        %v3267 = vpack.c.b16 %v3247, %v3246
        %v3268 = vpack.c.b16 %v3249, %v3248
        %v3269 = vpack.c.b16 %v3251, %v3250
        %v3270 = vpack.c.b16 %v3253, %v3252
        %v3271 = vpack.c.b16 %v3255, %v3254
        %3272 = vrot.lane.b32.xlu0 %v3256, 96
        %v3273 = vpop.permute.xlu0 %3272
        %3274 = vrot.lane.b32.xlu0 %v3257, 96
        %v3275 = vpop.permute.xlu0 %3274
        %3276 = vrot.lane.b32.xlu0 %v3258, 96
        %v3277 = vpop.permute.xlu0 %3276
        %3278 = vrot.lane.b32.xlu0 %v3259, 96
        %v3279 = vpop.permute.xlu0 %3278
        %3280 = vrot.lane.b32.xlu0 %v3260, 96
        %v3281 = vpop.permute.xlu0 %3280
        %3282 = vrot.lane.b32.xlu0 %v3261, 96
        %v3283 = vpop.permute.xlu0 %3282
        %3284 = vrot.lane.b32.xlu0 %v3262, 96
        %v3285 = vpop.permute.xlu0 %3284
        %3286 = vrot.lane.b32.xlu0 %v3263, 96
        %v3287 = vpop.permute.xlu0 %3286
        %3288 = vrot.lane.b32.xlu0 %v3264, 96
        %v3289 = vpop.permute.xlu0 %3288
        %3290 = vrot.lane.b32.xlu0 %v3265, 96
        %v3291 = vpop.permute.xlu0 %3290
        %3292 = vrot.lane.b32.xlu0 %v3266, 96
        %v3293 = vpop.permute.xlu0 %3292
        %3294 = vrot.lane.b32.xlu0 %v3267, 96
        %v3295 = vpop.permute.xlu0 %3294
        %3296 = vrot.lane.b32.xlu0 %v3268, 96
        %v3297 = vpop.permute.xlu0 %3296
        %3298 = vrot.lane.b32.xlu0 %v3269, 96
        %v3299 = vpop.permute.xlu0 %3298
        %3300 = vrot.lane.b32.xlu0 %v3270, 96
        %v3301 = vpop.permute.xlu0 %3300
        %3302 = vrot.lane.b32.xlu0 %v3271, 96
        %v3303 = vpop.permute.xlu0 %3302
        %v3304 = vunpack.c.l.b16 %v2571
        %v3305 = vunpack.c.l.b16 %v2574
        %v3306 = vunpack.c.l.b16 %v2578
        %v3307 = vunpack.c.l.b16 %v2581
        %v3308 = vunpack.c.l.b16 %v2585
        %v3309 = vunpack.c.l.b16 %v2588
        %v3310 = vunpack.c.l.b16 %v2592
        %v3311 = vunpack.c.l.b16 %v2595
        %v3312 = vunpack.c.l.b16 %v2599
        %v3313 = vunpack.c.l.b16 %v2602
        %v3314 = vunpack.c.l.b16 %v2606
        %v3315 = vunpack.c.l.b16 %v2609
        %v3316 = vunpack.c.l.b16 %v2613
        %v3317 = vunpack.c.l.b16 %v2616
        %v3318 = vunpack.c.l.b16 %v2620
        %v3319 = vunpack.c.l.b16 %v2623
        %v3320 = vunpack.c.l.b16 %v2627
        %v3321 = vunpack.c.l.b16 %v2630
        %v3322 = vunpack.c.l.b16 %v2634
        %v3323 = vunpack.c.l.b16 %v2637
        %v3324 = vunpack.c.l.b16 %v2641
        %v3325 = vunpack.c.l.b16 %v2644
        %v3326 = vunpack.c.l.b16 %v2648
        %v3327 = vunpack.c.l.b16 %v2651
        %v3328 = vunpack.c.l.b16 %v2655
        %v3329 = vunpack.c.l.b16 %v2658
        %v3330 = vunpack.c.l.b16 %v2662
        %v3331 = vunpack.c.l.b16 %v2665
        %v3332 = vunpack.c.l.b16 %v2669
        %v3333 = vunpack.c.l.b16 %v2672
        %v3334 = vunpack.c.l.b16 %v2676
        %v3335 = vunpack.c.l.b16 %v2679
        %v3336 = vpack.c.b16 %v3305, %v3304
        %v3337 = vpack.c.b16 %v3307, %v3306
        %v3338 = vpack.c.b16 %v3309, %v3308
        %v3339 = vpack.c.b16 %v3311, %v3310
        %v3340 = vpack.c.b16 %v3313, %v3312
        %v3341 = vpack.c.b16 %v3315, %v3314
        %v3342 = vpack.c.b16 %v3317, %v3316
        %v3343 = vpack.c.b16 %v3319, %v3318
        %v3344 = vpack.c.b16 %v3321, %v3320
        %v3345 = vpack.c.b16 %v3323, %v3322
        %v3346 = vpack.c.b16 %v3325, %v3324
        %v3347 = vpack.c.b16 %v3327, %v3326
        %v3348 = vpack.c.b16 %v3329, %v3328
        %v3349 = vpack.c.b16 %v3331, %v3330
        %v3350 = vpack.c.b16 %v3333, %v3332
        %v3351 = vpack.c.b16 %v3335, %v3334
        %vm3352 = vcmask 261120
        %v3355 = vsel %vm3352, %v2728, %v2793
        %v3358 = vsel %vm3352, %v2729, %v2795
        %v3361 = vsel %vm3352, %v2730, %v2797
        %v3364 = vsel %vm3352, %v2731, %v2799
        %v3367 = vsel %vm3352, %v2732, %v2801
        %v3370 = vsel %vm3352, %v2733, %v2803
        %v3373 = vsel %vm3352, %v2734, %v2805
        %v3376 = vsel %vm3352, %v2735, %v2807
        %v3379 = vsel %vm3352, %v2736, %v2809
        %v3382 = vsel %vm3352, %v2737, %v2811
        %v3385 = vsel %vm3352, %v2738, %v2813
        %v3388 = vsel %vm3352, %v2739, %v2815
        %v3391 = vsel %vm3352, %v2740, %v2817
        %v3394 = vsel %vm3352, %v2741, %v2819
        %v3397 = vsel %vm3352, %v2742, %v2821
        %v3400 = vsel %vm3352, %v2743, %v2823
        %vm3401 = vcmask 523264
        %v3403 = vsel %vm3401, %v3355, %v2873
        %v3405 = vsel %vm3401, %v3358, %v2875
        %v3407 = vsel %vm3401, %v3361, %v2877
        %v3409 = vsel %vm3401, %v3364, %v2879
        %v3411 = vsel %vm3401, %v3367, %v2881
        %v3413 = vsel %vm3401, %v3370, %v2883
        %v3415 = vsel %vm3401, %v3373, %v2885
        %v3417 = vsel %vm3401, %v3376, %v2887
        %v3419 = vsel %vm3401, %v3379, %v2889
        %v3421 = vsel %vm3401, %v3382, %v2891
        %v3423 = vsel %vm3401, %v3385, %v2893
        %v3425 = vsel %vm3401, %v3388, %v2895
        %v3427 = vsel %vm3401, %v3391, %v2897
        %v3429 = vsel %vm3401, %v3394, %v2899
        %v3431 = vsel %vm3401, %v3397, %v2901
        %v3433 = vsel %vm3401, %v3400, %v2903
        %vm3434 = vcmask 785408
        %v3436 = vsel %vm3434, %v3403, %v2969
        %v3439 = vsel %vm3434, %v3405, %v2971
        %v3442 = vsel %vm3434, %v3407, %v2973
        %v3445 = vsel %vm3434, %v3409, %v2975
        %v3448 = vsel %vm3434, %v3411, %v2977
        %v3451 = vsel %vm3434, %v3413, %v2979
        %v3454 = vsel %vm3434, %v3415, %v2981
        %v3457 = vsel %vm3434, %v3417, %v2983
        %v3460 = vsel %vm3434, %v3419, %v2985
        %v3463 = vsel %vm3434, %v3421, %v2987
        %v3466 = vsel %vm3434, %v3423, %v2989
        %v3469 = vsel %vm3434, %v3425, %v2991
        %v3472 = vsel %vm3434, %v3427, %v2993
        %v3475 = vsel %vm3434, %v3429, %v2995
        %v3478 = vsel %vm3434, %v3431, %v2997
        %v3481 = vsel %vm3434, %v3433, %v2999
        %v3485 = vsel %vm3352, %v3032, %v3097
        %v3488 = vsel %vm3352, %v3033, %v3099
        %v3491 = vsel %vm3352, %v3034, %v3101
        %v3494 = vsel %vm3352, %v3035, %v3103
        %v3497 = vsel %vm3352, %v3036, %v3105
        %v3500 = vsel %vm3352, %v3037, %v3107
        %v3503 = vsel %vm3352, %v3038, %v3109
        %v3506 = vsel %vm3352, %v3039, %v3111
        %v3509 = vsel %vm3352, %v3040, %v3113
        %v3512 = vsel %vm3352, %v3041, %v3115
        %v3515 = vsel %vm3352, %v3042, %v3117
        %v3518 = vsel %vm3352, %v3043, %v3119
        %v3521 = vsel %vm3352, %v3044, %v3121
        %v3524 = vsel %vm3352, %v3045, %v3123
        %v3527 = vsel %vm3352, %v3046, %v3125
        %v3530 = vsel %vm3352, %v3047, %v3127
        %v3532 = vsel %vm3401, %v3485, %v3193
        %v3534 = vsel %vm3401, %v3488, %v3195
        %v3536 = vsel %vm3401, %v3491, %v3197
        %v3538 = vsel %vm3401, %v3494, %v3199
        %v3540 = vsel %vm3401, %v3497, %v3201
        %v3542 = vsel %vm3401, %v3500, %v3203
        %v3544 = vsel %vm3401, %v3503, %v3205
        %v3546 = vsel %vm3401, %v3506, %v3207
        %v3548 = vsel %vm3401, %v3509, %v3209
        %v3550 = vsel %vm3401, %v3512, %v3211
        %v3552 = vsel %vm3401, %v3515, %v3213
        %v3554 = vsel %vm3401, %v3518, %v3215
        %v3556 = vsel %vm3401, %v3521, %v3217
        %v3558 = vsel %vm3401, %v3524, %v3219
        %v3560 = vsel %vm3401, %v3527, %v3221
        %v3562 = vsel %vm3401, %v3530, %v3223
        %v3564 = vsel %vm3434, %v3532, %v3273
        %v3567 = vsel %vm3434, %v3534, %v3275
        %v3570 = vsel %vm3434, %v3536, %v3277
        %v3573 = vsel %vm3434, %v3538, %v3279
        %v3576 = vsel %vm3434, %v3540, %v3281
        %v3579 = vsel %vm3434, %v3542, %v3283
        %v3582 = vsel %vm3434, %v3544, %v3285
        %v3585 = vsel %vm3434, %v3546, %v3287
        %v3588 = vsel %vm3434, %v3548, %v3289
        %v3591 = vsel %vm3434, %v3550, %v3291
        %v3594 = vsel %vm3434, %v3552, %v3293
        %v3597 = vsel %vm3434, %v3554, %v3295
        %v3600 = vsel %vm3434, %v3556, %v3297
        %v3603 = vsel %vm3434, %v3558, %v3299
        %v3606 = vsel %vm3434, %v3560, %v3301
        %v3609 = vsel %vm3434, %v3562, %v3303
        %v3611 = vld [vmem:[%s1] sm:$0xf]
        %v3612 = vld [vmem:[%s1 + $0x4] sm:$0xf]
        %v3613 = vld [vmem:[%s1 + $0x8] sm:$0xf]
        %v3614 = vld [vmem:[%s1 + $0xc] sm:$0xf]
        %v3615 = vld [vmem:[%s1 + $0x10] sm:$0xf]
        %v3616 = vld [vmem:[%s1 + $0x14] sm:$0xf]
        %v3617 = vld [vmem:[%s1 + $0x18] sm:$0xf]
        %v3618 = vld [vmem:[%s1 + $0x1c] sm:$0xf]
        %v3619 = vld [vmem:[%s1 + $0x20] sm:$0xf]
        %v3620 = vld [vmem:[%s1 + $0x24] sm:$0xf]
        %v3621 = vld [vmem:[%s1 + $0x28] sm:$0xf]
        %v3622 = vld [vmem:[%s1 + $0x2c] sm:$0xf]
        %v3623 = vld [vmem:[%s1 + $0x30] sm:$0xf]
        %v3624 = vld [vmem:[%s1 + $0x34] sm:$0xf]
        %v3625 = vld [vmem:[%s1 + $0x38] sm:$0xf]
        %v3626 = vld [vmem:[%s1 + $0x3c] sm:$0xf]
        %v3627 = vld [vmem:[%s1 + $0x40] sm:$0xf]
        %v3628 = vld [vmem:[%s1 + $0x44] sm:$0xf]
        %v3629 = vld [vmem:[%s1 + $0x48] sm:$0xf]
        %v3630 = vld [vmem:[%s1 + $0x4c] sm:$0xf]
        %v3631 = vld [vmem:[%s1 + $0x50] sm:$0xf]
        %v3632 = vld [vmem:[%s1 + $0x54] sm:$0xf]
        %v3633 = vld [vmem:[%s1 + $0x58] sm:$0xf]
        %v3634 = vld [vmem:[%s1 + $0x5c] sm:$0xf]
        %v3635 = vld [vmem:[%s1 + $0x60] sm:$0xf]
        %v3636 = vld [vmem:[%s1 + $0x64] sm:$0xf]
        %v3637 = vld [vmem:[%s1 + $0x68] sm:$0xf]
        %v3638 = vld [vmem:[%s1 + $0x6c] sm:$0xf]
        %v3639 = vld [vmem:[%s1 + $0x70] sm:$0xf]
        %v3640 = vld [vmem:[%s1 + $0x74] sm:$0xf]
        %v3641 = vld [vmem:[%s1 + $0x78] sm:$0xf]
        %v3642 = vld [vmem:[%s1 + $0x7c] sm:$0xf]
        %v3643 = vld [vmem:[%s1 + $0x80] sm:$0xf]
        %v3644 = vld [vmem:[%s1 + $0x84] sm:$0xf]
        %v3645 = vld [vmem:[%s1 + $0x88] sm:$0xf]
        %v3646 = vld [vmem:[%s1 + $0x8c] sm:$0xf]
        %v3647 = vld [vmem:[%s2] sm:$0x1]
        %v3649 = vlaneseq
        %v3650 = vshrl.u32 %v3649, 7
        %v3651 = vsub.s32 0, %v3650
        %v3652 = vrot.slane %v3647, %v3651
        %v3690 = vunpack.c.l.b16 %v3611
        %v3691 = vunpack.c.l.b16 %v3612
        %v3692 = vunpack.c.l.b16 %v3613
        %v3693 = vunpack.c.l.b16 %v3614
        %v3694 = vunpack.c.l.b16 %v3615
        %v3695 = vunpack.c.l.b16 %v3616
        %v3696 = vunpack.c.l.b16 %v3617
        %v3697 = vunpack.c.l.b16 %v3618
        %v3698 = vunpack.c.l.b16 %v3619
        %v3699 = vunpack.c.l.b16 %v3620
        %v3700 = vunpack.c.l.b16 %v3621
        %v3701 = vunpack.c.l.b16 %v3622
        %v3702 = vunpack.c.l.b16 %v3623
        %v3703 = vunpack.c.l.b16 %v3624
        %v3704 = vunpack.c.l.b16 %v3625
        %v3705 = vunpack.c.l.b16 %v3626
        %v3706 = vunpack.c.l.b16 %v3627
        %v3707 = vunpack.c.l.b16 %v3628
        %v3708 = vunpack.c.l.b16 %v3629
        %v3709 = vunpack.c.l.b16 %v3630
        %v3710 = vunpack.c.l.b16 %v3631
        %v3711 = vunpack.c.l.b16 %v3632
        %v3712 = vunpack.c.l.b16 %v3633
        %v3713 = vunpack.c.l.b16 %v3634
        %v3714 = vunpack.c.l.b16 %v3635
        %v3715 = vunpack.c.l.b16 %v3636
        %v3716 = vunpack.c.l.b16 %v3637
        %v3717 = vunpack.c.l.b16 %v3638
        %v3718 = vunpack.c.l.b16 %v3639
        %v3719 = vunpack.c.l.b16 %v3640
        %v3720 = vunpack.c.l.b16 %v3641
        %v3721 = vunpack.c.l.b16 %v3642
        %v3722 = vunpack.c.l.b16 %v3643
        %v3723 = vunpack.c.l.b16 %v3644
        %v3724 = vunpack.c.l.b16 %v3645
        %v3725 = vunpack.c.l.b16 %v3646
        %v3726 = vpack.c.b16 %v3691, %v3690
        %v3727 = vpack.c.b16 %v3693, %v3692
        %v3728 = vpack.c.b16 %v3695, %v3694
        %v3729 = vpack.c.b16 %v3697, %v3696
        %v3730 = vpack.c.b16 %v3699, %v3698
        %v3731 = vpack.c.b16 %v3701, %v3700
        %v3732 = vpack.c.b16 %v3703, %v3702
        %v3733 = vpack.c.b16 %v3705, %v3704
        %v3734 = vpack.c.b16 %v3707, %v3706
        %v3735 = vpack.c.b16 %v3709, %v3708
        %v3736 = vpack.c.b16 %v3711, %v3710
        %v3737 = vpack.c.b16 %v3713, %v3712
        %v3738 = vpack.c.b16 %v3715, %v3714
        %v3739 = vpack.c.b16 %v3717, %v3716
        %v3740 = vpack.c.b16 %v3719, %v3718
        %v3741 = vpack.c.b16 %v3721, %v3720
        %v3742 = vpack.c.b16 %v3723, %v3722
        %v3743 = vpack.c.b16 %v3725, %v3724
        %v3763 = vsel %vm3352, %v3336, 0
        %v3766 = vsel %vm3352, %v3337, 0
        %v3769 = vsel %vm3352, %v3338, 0
        %v3772 = vsel %vm3352, %v3339, 0
        %v3775 = vsel %vm3352, %v3340, 0
        %v3778 = vsel %vm3352, %v3341, 0
        %v3781 = vsel %vm3352, %v3342, 0
        %v3784 = vsel %vm3352, %v3343, 0
        %v3787 = vsel %vm3352, %v3344, 0
        %v3790 = vsel %vm3352, %v3345, 0
        %v3793 = vsel %vm3352, %v3346, 0
        %v3796 = vsel %vm3352, %v3347, 0
        %v3799 = vsel %vm3352, %v3348, 0
        %v3802 = vsel %vm3352, %v3349, 0
        %v3805 = vsel %vm3352, %v3350, 0
        %v3808 = vsel %vm3352, %v3351, 0
        %3810 = vmatprep.subr.bf16.mxu0 0
        %3811 = vmatpush1.bf16.msra.mxu0 %v3726
        %3812 = vmatprep.subr.bf16.mxu0 0
        %3813 = vmatpush1.bf16.msra.mxu0 %v3727
        %3814 = vmatprep.subr.bf16.mxu0 0
        %3815 = vmatpush1.bf16.msra.mxu0 %v3728
        %3816 = vmatprep.subr.bf16.mxu0 0
        %3817 = vmatpush1.bf16.msra.mxu0 %v3729
        %3818 = vmatprep.subr.bf16.mxu0 0
        %3819 = vmatpush1.bf16.msra.mxu0 %v3730
        %3820 = vmatprep.subr.bf16.mxu0 0
        %3821 = vmatpush1.bf16.msra.mxu0 %v3731
        %3822 = vmatprep.subr.bf16.mxu0 0
        %3823 = vmatpush1.bf16.msra.mxu0 %v3732
        %3824 = vmatprep.subr.bf16.mxu0 0
        %3825 = vmatpush1.bf16.msra.mxu0 %v3733
        %3826 = vmatprep.subr.bf16.mxu0 0
        %3827 = vmatpush1.bf16.msra.mxu0 %v3734
        %3828 = vmatprep.subr.bf16.mxu0 0
        %3829 = vmatpush1.bf16.msra.mxu0 %v3735
        %3830 = vmatprep.subr.bf16.mxu0 0
        %3831 = vmatpush1.bf16.msra.mxu0 %v3736
        %3832 = vmatprep.subr.bf16.mxu0 0
        %3833 = vmatpush1.bf16.msra.mxu0 %v3737
        %3834 = vmatprep.subr.bf16.mxu0 0
        %3835 = vmatpush1.bf16.msra.mxu0 %v3738
        %3836 = vmatprep.subr.bf16.mxu0 0
        %3837 = vmatpush1.bf16.msra.mxu0 %v3739
        %3838 = vmatprep.subr.bf16.mxu0 0
        %3839 = vmatpush1.bf16.msra.mxu0 %v3740
        %3840 = vmatprep.subr.bf16.mxu0 0
        %3841 = vmatpush1.bf16.msra.mxu0 %v3741
        %3842 = vmatprep.mubr.bf16.mxu0 %v3564
        %3843 = vmatmul.mubr.bf16.gmra.mrb[0].mxu0 %v3436
        %v3844 = vpop.f32.mrb[0].mxu0
        %v3845 = vadd.f32 %v3652, %v3844
        %v3846 = vpop.f32.mrb[0].mxu0
        %v3847 = vpop.f32.mrb[0].mxu0
        %v3848 = vadd.f32 %v3652, %v3847
        %v3849 = vpop.f32.mrb[0].mxu0
        %3850 = vmatprep.mubr.bf16.mxu0 %v3567
        %3851 = vmatmul.mubr.bf16.gmra.mrb[0].mxu0 %v3439
        %v3852 = vpop.f32.mrb[0].mxu0
        %v3853 = vadd.f32 %v3652, %v3852
        %v3854 = vpop.f32.mrb[0].mxu0
        %v3855 = vpop.f32.mrb[0].mxu0
        %v3856 = vadd.f32 %v3652, %v3855
        %v3857 = vpop.f32.mrb[0].mxu0
        %3858 = vmatprep.mubr.bf16.mxu0 %v3570
        %3859 = vmatmul.mubr.bf16.gmra.mrb[0].mxu0 %v3442
        %v3860 = vpop.f32.mrb[0].mxu0
        %v3861 = vadd.f32 %v3652, %v3860
        %v3862 = vpop.f32.mrb[0].mxu0
        %v3863 = vpop.f32.mrb[0].mxu0
        %v3864 = vadd.f32 %v3652, %v3863
        %v3865 = vpop.f32.mrb[0].mxu0
        %3866 = vmatprep.mubr.bf16.mxu0 %v3573
        %3867 = vmatmul.mubr.bf16.gmra.mrb[0].mxu0 %v3445
        %v3868 = vpop.f32.mrb[0].mxu0
        %v3869 = vadd.f32 %v3652, %v3868
        %v3870 = vpop.f32.mrb[0].mxu0
        %v3871 = vpop.f32.mrb[0].mxu0
        %v3872 = vadd.f32 %v3652, %v3871
        %v3873 = vpop.f32.mrb[0].mxu0
        %3874 = vmatprep.mubr.bf16.mxu0 %v3576
        %3875 = vmatmul.mubr.bf16.gmra.mrb[0].mxu0 %v3448
        %v3876 = vpop.f32.mrb[0].mxu0
        %v3877 = vadd.f32 %v3652, %v3876
        %v3878 = vpop.f32.mrb[0].mxu0
        %v3879 = vpop.f32.mrb[0].mxu0
        %v3880 = vadd.f32 %v3652, %v3879
        %v3881 = vpop.f32.mrb[0].mxu0
        %3882 = vmatprep.mubr.bf16.mxu0 %v3579
        %3883 = vmatmul.mubr.bf16.gmra.mrb[0].mxu0 %v3451
        %v3884 = vpop.f32.mrb[0].mxu0
        %v3885 = vadd.f32 %v3652, %v3884
        %v3886 = vpop.f32.mrb[0].mxu0
        %v3887 = vpop.f32.mrb[0].mxu0
        %v3888 = vadd.f32 %v3652, %v3887
        %v3889 = vpop.f32.mrb[0].mxu0
        %3890 = vmatprep.mubr.bf16.mxu0 %v3582
        %3891 = vmatmul.mubr.bf16.gmra.mrb[0].mxu0 %v3454
        %v3892 = vpop.f32.mrb[0].mxu0
        %v3893 = vadd.f32 %v3652, %v3892
        %v3894 = vpop.f32.mrb[0].mxu0
        %v3895 = vpop.f32.mrb[0].mxu0
        %v3896 = vadd.f32 %v3652, %v3895
        %v3897 = vpop.f32.mrb[0].mxu0
        %3898 = vmatprep.mubr.bf16.mxu0 %v3585
        %3899 = vmatmul.mubr.bf16.gmra.mrb[0].mxu0 %v3457
        %v3900 = vpop.f32.mrb[0].mxu0
        %v3901 = vadd.f32 %v3652, %v3900
        %v3902 = vpop.f32.mrb[0].mxu0
        %v3903 = vpop.f32.mrb[0].mxu0
        %v3904 = vadd.f32 %v3652, %v3903
        %v3905 = vpop.f32.mrb[0].mxu0
        %3906 = vmatprep.mubr.bf16.mxu0 %v3588
        %3907 = vmatmul.mubr.bf16.gmra.mrb[0].mxu0 %v3460
        %v3908 = vpop.f32.mrb[0].mxu0
        %v3909 = vadd.f32 %v3652, %v3908
        %v3910 = vpop.f32.mrb[0].mxu0
        %v3911 = vpop.f32.mrb[0].mxu0
        %v3912 = vadd.f32 %v3652, %v3911
        %v3913 = vpop.f32.mrb[0].mxu0
        %3914 = vmatprep.mubr.bf16.mxu0 %v3591
        %3915 = vmatmul.mubr.bf16.gmra.mrb[0].mxu0 %v3463
        %v3916 = vpop.f32.mrb[0].mxu0
        %v3917 = vadd.f32 %v3652, %v3916
        %v3918 = vpop.f32.mrb[0].mxu0
        %v3919 = vpop.f32.mrb[0].mxu0
        %v3920 = vadd.f32 %v3652, %v3919
        %v3921 = vpop.f32.mrb[0].mxu0
        %3922 = vmatprep.mubr.bf16.mxu0 %v3594
        %3923 = vmatmul.mubr.bf16.gmra.mrb[0].mxu0 %v3466
        %v3924 = vpop.f32.mrb[0].mxu0
        %v3925 = vadd.f32 %v3652, %v3924
        %v3926 = vpop.f32.mrb[0].mxu0
        %v3927 = vpop.f32.mrb[0].mxu0
        %v3928 = vadd.f32 %v3652, %v3927
        %v3929 = vpop.f32.mrb[0].mxu0
        %3930 = vmatprep.mubr.bf16.mxu0 %v3597
        %3931 = vmatmul.mubr.bf16.gmra.mrb[0].mxu0 %v3469
        %v3932 = vpop.f32.mrb[0].mxu0
        %v3933 = vadd.f32 %v3652, %v3932
        %v3934 = vpop.f32.mrb[0].mxu0
        %v3935 = vpop.f32.mrb[0].mxu0
        %v3936 = vadd.f32 %v3652, %v3935
        %v3937 = vpop.f32.mrb[0].mxu0
        %3938 = vmatprep.mubr.bf16.mxu0 %v3600
        %3939 = vmatmul.mubr.bf16.gmra.mrb[0].mxu0 %v3472
        %v3940 = vpop.f32.mrb[0].mxu0
        %v3941 = vadd.f32 %v3652, %v3940
        %v3942 = vpop.f32.mrb[0].mxu0
        %v3943 = vpop.f32.mrb[0].mxu0
        %v3944 = vadd.f32 %v3652, %v3943
        %v3945 = vpop.f32.mrb[0].mxu0
        %3946 = vmatprep.mubr.bf16.mxu0 %v3603
        %3947 = vmatmul.mubr.bf16.gmra.mrb[0].mxu0 %v3475
        %v3948 = vpop.f32.mrb[0].mxu0
        %v3949 = vadd.f32 %v3652, %v3948
        %v3950 = vpop.f32.mrb[0].mxu0
        %v3951 = vpop.f32.mrb[0].mxu0
        %v3952 = vadd.f32 %v3652, %v3951
        %v3953 = vpop.f32.mrb[0].mxu0
        %3954 = vmatprep.mubr.bf16.mxu0 %v3606
        %3955 = vmatmul.mubr.bf16.gmra.mrb[0].mxu0 %v3478
        %v3956 = vpop.f32.mrb[0].mxu0
        %v3957 = vadd.f32 %v3652, %v3956
        %v3958 = vpop.f32.mrb[0].mxu0
        %v3959 = vpop.f32.mrb[0].mxu0
        %v3960 = vadd.f32 %v3652, %v3959
        %v3961 = vpop.f32.mrb[0].mxu0
        %3962 = vmatprep.mubr.bf16.mxu0 %v3609
        %3963 = vmatmul.mubr.bf16.gmra.mrb[0].mxu0 %v3481
        %v3964 = vpop.f32.mrb[0].mxu0
        %v3965 = vadd.f32 %v3652, %v3964
        %v3966 = vpop.f32.mrb[0].mxu0
        %v3967 = vpop.f32.mrb[0].mxu0
        %v3968 = vadd.f32 %v3652, %v3967
        %v3969 = vpop.f32.mrb[0].mxu0
        %3970 = vdwg.mxu0
        %3971 = vmatprep.subr.bf16.mxu0 0
        %3972 = vmatpush1.bf16.msra.mxu0 %v3742
        %3973 = vmatprep.subr.bf16.mxu0 0
        %3974 = vmatpush1.bf16.msra.mxu0 %v3743
        %3975 = vmatprep.subr.bf16.mxu0 0
        %3976 = vmatpush1.bf16.msra.mxu0 0
        %3977 = vmatprep.subr.bf16.mxu0 0
        %3978 = vmatpush1.bf16.msra.mxu0 0
        %3979 = vmatprep.subr.bf16.mxu0 0
        %3980 = vmatpush1.bf16.msra.mxu0 0
        %3981 = vmatprep.subr.bf16.mxu0 0
        %3982 = vmatpush1.bf16.msra.mxu0 0
        %3983 = vmatprep.subr.bf16.mxu0 0
        %3984 = vmatpush1.bf16.msra.mxu0 0
        %3985 = vmatprep.subr.bf16.mxu0 0
        %3986 = vmatpush1.bf16.msra.mxu0 0
        %3987 = vmatprep.subr.bf16.mxu0 0
        %3988 = vmatpush1.bf16.msra.mxu0 0
        %3989 = vmatprep.subr.bf16.mxu0 0
        %3990 = vmatpush1.bf16.msra.mxu0 0
        %3991 = vmatprep.subr.bf16.mxu0 0
        %3992 = vmatpush1.bf16.msra.mxu0 0
        %3993 = vmatprep.subr.bf16.mxu0 0
        %3994 = vmatpush1.bf16.msra.mxu0 0
        %3995 = vmatprep.subr.bf16.mxu0 0
        %3996 = vmatpush1.bf16.msra.mxu0 0
        %3997 = vmatprep.subr.bf16.mxu0 0
        %3998 = vmatpush1.bf16.msra.mxu0 0
        %3999 = vmatprep.subr.bf16.mxu0 0
        %4000 = vmatpush1.bf16.msra.mxu0 0
        %4001 = vmatprep.subr.bf16.mxu0 0
        %4002 = vmatpush1.bf16.msra.mxu0 0
        %4003 = vmatprep.mubr.bf16.mxu0 0
        %4004 = vmatmul.mubr.bf16.gmra.mrb[0].mxu0 %v3763
        %v4005 = vpop.f32.mrb[0].mxu0
        %v4006 = vadd.f32 %v3845, %v4005
        %v4007 = vpop.f32.mrb[0].mxu0
        %v4008 = vpop.f32.mrb[0].mxu0
        %v4009 = vadd.f32 %v3848, %v4008
        %v4010 = vpop.f32.mrb[0].mxu0
        %4011 = vmatprep.mubr.bf16.mxu0 0
        %4012 = vmatmul.mubr.bf16.gmra.mrb[0].mxu0 %v3766
        %v4013 = vpop.f32.mrb[0].mxu0
        %v4014 = vadd.f32 %v3853, %v4013
        %v4015 = vpop.f32.mrb[0].mxu0
        %v4016 = vpop.f32.mrb[0].mxu0
        %v4017 = vadd.f32 %v3856, %v4016
        %v4018 = vpop.f32.mrb[0].mxu0
        %4019 = vmatprep.mubr.bf16.mxu0 0
        %4020 = vmatmul.mubr.bf16.gmra.mrb[0].mxu0 %v3769
        %v4021 = vpop.f32.mrb[0].mxu0
        %v4022 = vadd.f32 %v3861, %v4021
        %v4023 = vpop.f32.mrb[0].mxu0
        %v4024 = vpop.f32.mrb[0].mxu0
        %v4025 = vadd.f32 %v3864, %v4024
        %v4026 = vpop.f32.mrb[0].mxu0
        %4027 = vmatprep.mubr.bf16.mxu0 0
        %4028 = vmatmul.mubr.bf16.gmra.mrb[0].mxu0 %v3772
        %v4029 = vpop.f32.mrb[0].mxu0
        %v4030 = vadd.f32 %v3869, %v4029
        %v4031 = vpop.f32.mrb[0].mxu0
        %v4032 = vpop.f32.mrb[0].mxu0
        %v4033 = vadd.f32 %v3872, %v4032
        %v4034 = vpop.f32.mrb[0].mxu0
        %4035 = vmatprep.mubr.bf16.mxu0 0
        %4036 = vmatmul.mubr.bf16.gmra.mrb[0].mxu0 %v3775
        %v4037 = vpop.f32.mrb[0].mxu0
        %v4038 = vadd.f32 %v3877, %v4037
        %v4039 = vpop.f32.mrb[0].mxu0
        %v4040 = vpop.f32.mrb[0].mxu0
        %v4041 = vadd.f32 %v3880, %v4040
        %v4042 = vpop.f32.mrb[0].mxu0
        %4043 = vmatprep.mubr.bf16.mxu0 0
        %4044 = vmatmul.mubr.bf16.gmra.mrb[0].mxu0 %v3778
        %v4045 = vpop.f32.mrb[0].mxu0
        %v4046 = vadd.f32 %v3885, %v4045
        %v4047 = vpop.f32.mrb[0].mxu0
        %v4048 = vpop.f32.mrb[0].mxu0
        %v4049 = vadd.f32 %v3888, %v4048
        %v4050 = vpop.f32.mrb[0].mxu0
        %4051 = vmatprep.mubr.bf16.mxu0 0
        %4052 = vmatmul.mubr.bf16.gmra.mrb[0].mxu0 %v3781
        %v4053 = vpop.f32.mrb[0].mxu0
        %v4054 = vadd.f32 %v3893, %v4053
        %v4055 = vpop.f32.mrb[0].mxu0
        %v4056 = vpop.f32.mrb[0].mxu0
        %v4057 = vadd.f32 %v3896, %v4056
        %v4058 = vpop.f32.mrb[0].mxu0
        %4059 = vmatprep.mubr.bf16.mxu0 0
        %4060 = vmatmul.mubr.bf16.gmra.mrb[0].mxu0 %v3784
        %v4061 = vpop.f32.mrb[0].mxu0
        %v4062 = vadd.f32 %v3901, %v4061
        %v4063 = vpop.f32.mrb[0].mxu0
        %v4064 = vpop.f32.mrb[0].mxu0
        %v4065 = vadd.f32 %v3904, %v4064
        %v4066 = vpop.f32.mrb[0].mxu0
        %4067 = vmatprep.mubr.bf16.mxu0 0
        %4068 = vmatmul.mubr.bf16.gmra.mrb[0].mxu0 %v3787
        %v4069 = vpop.f32.mrb[0].mxu0
        %v4070 = vadd.f32 %v3909, %v4069
        %v4071 = vpop.f32.mrb[0].mxu0
        %v4072 = vpop.f32.mrb[0].mxu0
        %v4073 = vadd.f32 %v3912, %v4072
        %v4074 = vpop.f32.mrb[0].mxu0
        %4075 = vmatprep.mubr.bf16.mxu0 0
        %4076 = vmatmul.mubr.bf16.gmra.mrb[0].mxu0 %v3790
        %v4077 = vpop.f32.mrb[0].mxu0
        %v4078 = vadd.f32 %v3917, %v4077
        %v4079 = vpop.f32.mrb[0].mxu0
        %v4080 = vpop.f32.mrb[0].mxu0
        %v4081 = vadd.f32 %v3920, %v4080
        %v4082 = vpop.f32.mrb[0].mxu0
        %4083 = vmatprep.mubr.bf16.mxu0 0
        %4084 = vmatmul.mubr.bf16.gmra.mrb[0].mxu0 %v3793
        %v4085 = vpop.f32.mrb[0].mxu0
        %v4086 = vadd.f32 %v3925, %v4085
        %v4087 = vpop.f32.mrb[0].mxu0
        %v4088 = vpop.f32.mrb[0].mxu0
        %v4089 = vadd.f32 %v3928, %v4088
        %v4090 = vpop.f32.mrb[0].mxu0
        %4091 = vmatprep.mubr.bf16.mxu0 0
        %4092 = vmatmul.mubr.bf16.gmra.mrb[0].mxu0 %v3796
        %v4093 = vpop.f32.mrb[0].mxu0
        %v4094 = vadd.f32 %v3933, %v4093
        %v4095 = vpop.f32.mrb[0].mxu0
        %v4096 = vpop.f32.mrb[0].mxu0
        %v4097 = vadd.f32 %v3936, %v4096
        %v4098 = vpop.f32.mrb[0].mxu0
        %4099 = vmatprep.mubr.bf16.mxu0 0
        %4100 = vmatmul.mubr.bf16.gmra.mrb[0].mxu0 %v3799
        %v4101 = vpop.f32.mrb[0].mxu0
        %v4102 = vadd.f32 %v3941, %v4101
        %v4103 = vpop.f32.mrb[0].mxu0
        %v4104 = vpop.f32.mrb[0].mxu0
        %v4105 = vadd.f32 %v3944, %v4104
        %v4106 = vpop.f32.mrb[0].mxu0
        %4107 = vmatprep.mubr.bf16.mxu0 0
        %4108 = vmatmul.mubr.bf16.gmra.mrb[0].mxu0 %v3802
        %v4109 = vpop.f32.mrb[0].mxu0
        %v4110 = vadd.f32 %v3949, %v4109
        %v4111 = vpop.f32.mrb[0].mxu0
        %v4112 = vpop.f32.mrb[0].mxu0
        %v4113 = vadd.f32 %v3952, %v4112
        %v4114 = vpop.f32.mrb[0].mxu0
        %4115 = vmatprep.mubr.bf16.mxu0 0
        %4116 = vmatmul.mubr.bf16.gmra.mrb[0].mxu0 %v3805
        %v4117 = vpop.f32.mrb[0].mxu0
        %v4118 = vadd.f32 %v3957, %v4117
        %v4119 = vpop.f32.mrb[0].mxu0
        %v4120 = vpop.f32.mrb[0].mxu0
        %v4121 = vadd.f32 %v3960, %v4120
        %v4122 = vpop.f32.mrb[0].mxu0
        %4123 = vmatprep.mubr.bf16.mxu0 0
        %4124 = vmatmul.mubr.bf16.gmra.mrb[0].mxu0 %v3808
        %v4125 = vpop.f32.mrb[0].mxu0
        %v4126 = vadd.f32 %v3965, %v4125
        %v4127 = vpop.f32.mrb[0].mxu0
        %v4128 = vpop.f32.mrb[0].mxu0
        %v4129 = vadd.f32 %v3968, %v4128
        %v4130 = vpop.f32.mrb[0].mxu0
        %4131 = vdwg.mxu0
        %v4132 = vmax.f32 %v4006, 0.0
        %v4133 = vmax.f32 %v4009, 0.0
        %v4134 = vmax.f32 %v4014, 0.0
        %v4135 = vmax.f32 %v4017, 0.0
        %v4136 = vmax.f32 %v4022, 0.0
        %v4137 = vmax.f32 %v4025, 0.0
        %v4138 = vmax.f32 %v4030, 0.0
        %v4139 = vmax.f32 %v4033, 0.0
        %v4140 = vmax.f32 %v4038, 0.0
        %v4141 = vmax.f32 %v4041, 0.0
        %v4142 = vmax.f32 %v4046, 0.0
        %v4143 = vmax.f32 %v4049, 0.0
        %v4144 = vmax.f32 %v4054, 0.0
        %v4145 = vmax.f32 %v4057, 0.0
        %v4146 = vmax.f32 %v4062, 0.0
        %v4147 = vmax.f32 %v4065, 0.0
        %v4148 = vmax.f32 %v4070, 0.0
        %v4149 = vmax.f32 %v4073, 0.0
        %v4150 = vmax.f32 %v4078, 0.0
        %v4151 = vmax.f32 %v4081, 0.0
        %v4152 = vmax.f32 %v4086, 0.0
        %v4153 = vmax.f32 %v4089, 0.0
        %v4154 = vmax.f32 %v4094, 0.0
        %v4155 = vmax.f32 %v4097, 0.0
        %v4156 = vmax.f32 %v4102, 0.0
        %v4157 = vmax.f32 %v4105, 0.0
        %v4158 = vmax.f32 %v4110, 0.0
        %v4159 = vmax.f32 %v4113, 0.0
        %v4160 = vmax.f32 %v4118, 0.0
        %v4161 = vmax.f32 %v4121, 0.0
        %v4162 = vmax.f32 %v4126, 0.0
        %v4163 = vmax.f32 %v4129, 0.0
        %4164 = vst.msk [vmem:[#allocation3] sm:$0xf] %vm224, 0
        %4165 = vst.msk [vmem:[#allocation3 + $0x4] sm:$0xf] %vm224, 0
        %4166 = vst.msk [vmem:[#allocation3 + $0x8] sm:$0x1] %vm227, 0
        %4167 = vst.msk [vmem:[#allocation3 + $0xc] sm:$0xf] %vm224, 0
        %4168 = vst.msk [vmem:[#allocation3 + $0x10] sm:$0xf] %vm224, 0
        %4169 = vst.msk [vmem:[#allocation3 + $0x14] sm:$0x1] %vm227, 0
        %4170 = vst.msk [vmem:[#allocation3 + $0x18] sm:$0xf] %vm224, 0
        %4171 = vst.msk [vmem:[#allocation3 + $0x1c] sm:$0xf] %vm224, 0
        %4172 = vst.msk [vmem:[#allocation3 + $0x20] sm:$0x1] %vm227, 0
        %4173 = vst.msk [vmem:[#allocation3 + $0x24] sm:$0xf] %vm224, 0
        %4174 = vst.msk [vmem:[#allocation3 + $0x28] sm:$0xf] %vm224, 0
        %4175 = vst.msk [vmem:[#allocation3 + $0x2c] sm:$0x1] %vm227, 0
        %4176 = vst.msk [vmem:[#allocation3 + $0x30] sm:$0xf] %vm224, 0
        %4177 = vst.msk [vmem:[#allocation3 + $0x34] sm:$0xf] %vm224, 0
        %4178 = vst.msk [vmem:[#allocation3 + $0x38] sm:$0x1] %vm227, 0
        %4179 = vst.msk [vmem:[#allocation3 + $0x3c] sm:$0xf] %vm224, 0
        %4180 = vst.msk [vmem:[#allocation3 + $0x40] sm:$0xf] %vm224, 0
        %4181 = vst.msk [vmem:[#allocation3 + $0x44] sm:$0x1] %vm227, 0
        %4182 = vst.msk [vmem:[#allocation3 + $0x48] sm:$0xf] %vm224, 0
        %4183 = vst.msk [vmem:[#allocation3 + $0x4c] sm:$0xf] %vm224, 0
        %4184 = vst.msk [vmem:[#allocation3 + $0x50] sm:$0x1] %vm227, 0
        %4185 = vst.msk [vmem:[#allocation3 + $0x54] sm:$0xf] %vm224, 0
        %4186 = vst.msk [vmem:[#allocation3 + $0x58] sm:$0xf] %vm224, 0
        %4187 = vst.msk [vmem:[#allocation3 + $0x5c] sm:$0x1] %vm227, 0
        %4188 = vst.msk [vmem:[#allocation3 + $0x60] sm:$0xf] %vm224, 0
        %4189 = vst.msk [vmem:[#allocation3 + $0x64] sm:$0xf] %vm224, 0
        %4190 = vst.msk [vmem:[#allocation3 + $0x68] sm:$0x1] %vm227, 0
        %4191 = vst.msk [vmem:[#allocation3 + $0x6c] sm:$0xf] %vm224, 0
        %4192 = vst.msk [vmem:[#allocation3 + $0x70] sm:$0xf] %vm224, 0
        %4193 = vst.msk [vmem:[#allocation3 + $0x74] sm:$0x1] %vm227, 0
        %4194 = vst.msk [vmem:[#allocation3 + $0x78] sm:$0xf] %vm224, 0
        %4195 = vst.msk [vmem:[#allocation3 + $0x7c] sm:$0xf] %vm224, 0
        %4196 = vst.msk [vmem:[#allocation3 + $0x80] sm:$0x1] %vm227, 0
        %4197 = vst.msk [vmem:[#allocation3 + $0x84] sm:$0xf] %vm224, 0
        %4198 = vst.msk [vmem:[#allocation3 + $0x88] sm:$0xf] %vm224, 0
        %4199 = vst.msk [vmem:[#allocation3 + $0x8c] sm:$0x1] %vm227, 0
        %4200 = vst.msk [vmem:[#allocation3 + $0x90] sm:$0xf] %vm224, 0
        %4201 = vst.msk [vmem:[#allocation3 + $0x94] sm:$0xf] %vm224, 0
        %4202 = vst.msk [vmem:[#allocation3 + $0x98] sm:$0x1] %vm227, 0
        %4203 = vst.msk [vmem:[#allocation3 + $0x9c] sm:$0xf] %vm224, 0
        %4204 = vst.msk [vmem:[#allocation3 + $0xa0] sm:$0xf] %vm224, 0
        %4205 = vst.msk [vmem:[#allocation3 + $0xa4] sm:$0x1] %vm227, 0
        %4206 = vst.msk [vmem:[#allocation3 + $0xa8] sm:$0xf] %vm224, 0
        %4207 = vst.msk [vmem:[#allocation3 + $0xac] sm:$0xf] %vm224, 0
        %4208 = vst.msk [vmem:[#allocation3 + $0xb0] sm:$0x1] %vm227, 0
        %4209 = vst.msk [vmem:[#allocation3 + $0xb4] sm:$0xf] %vm224, 0
        %4210 = vst.msk [vmem:[#allocation3 + $0xb8] sm:$0xf] %vm224, 0
        %4211 = vst.msk [vmem:[#allocation3 + $0xbc] sm:$0x1] %vm227, 0
        %4212 = vst.msk [vmem:[#allocation3 + $0xc0] sm:$0xf] %vm224, 0
        %4213 = vst.msk [vmem:[#allocation3 + $0xc4] sm:$0xf] %vm224, 0
        %4214 = vst.msk [vmem:[#allocation3 + $0xc8] sm:$0x1] %vm227, 0
        %4215 = vst.msk [vmem:[#allocation3 + $0xcc] sm:$0xf] %vm224, 0
        %4216 = vst.msk [vmem:[#allocation3 + $0xd0] sm:$0xf] %vm224, 0
        %4217 = vst.msk [vmem:[#allocation3 + $0xd4] sm:$0x1] %vm227, 0
        %v4218 = vpack.c.bf16 %v4133, %v4132
        %v4219 = vpack.c.bf16 %v4135, %v4134
        %v4220 = vpack.c.bf16 %v4137, %v4136
        %v4221 = vpack.c.bf16 %v4139, %v4138
        %v4222 = vpack.c.bf16 %v4141, %v4140
        %v4223 = vpack.c.bf16 %v4143, %v4142
        %v4224 = vpack.c.bf16 %v4145, %v4144
        %v4225 = vpack.c.bf16 %v4147, %v4146
        %v4226 = vpack.c.bf16 %v4149, %v4148
        %v4227 = vpack.c.bf16 %v4151, %v4150
        %v4228 = vpack.c.bf16 %v4153, %v4152
        %v4229 = vpack.c.bf16 %v4155, %v4154
        %v4230 = vpack.c.bf16 %v4157, %v4156
        %v4231 = vpack.c.bf16 %v4159, %v4158
        %v4232 = vpack.c.bf16 %v4161, %v4160
        %v4233 = vpack.c.bf16 %v4163, %v4162
        %v4250 = vunpack.c.l.b16 %v4218
        %v4251 = vunpack.c.h.b16 %v4218
        %v4252 = vunpack.c.l.b16 %v4219
        %v4253 = vunpack.c.h.b16 %v4219
        %v4254 = vunpack.c.l.b16 %v4220
        %v4255 = vunpack.c.h.b16 %v4220
        %v4256 = vunpack.c.l.b16 %v4221
        %v4257 = vunpack.c.h.b16 %v4221
        %v4258 = vunpack.c.l.b16 %v4222
        %v4259 = vunpack.c.h.b16 %v4222
        %v4260 = vunpack.c.l.b16 %v4223
        %v4261 = vunpack.c.h.b16 %v4223
        %v4262 = vunpack.c.l.b16 %v4224
        %v4263 = vunpack.c.h.b16 %v4224
        %v4264 = vunpack.c.l.b16 %v4225
        %v4265 = vunpack.c.h.b16 %v4225
        %v4266 = vunpack.c.l.b16 %v4226
        %v4267 = vunpack.c.h.b16 %v4226
        %v4268 = vunpack.c.l.b16 %v4227
        %v4269 = vunpack.c.h.b16 %v4227
        %v4270 = vunpack.c.l.b16 %v4228
        %v4271 = vunpack.c.h.b16 %v4228
        %v4272 = vunpack.c.l.b16 %v4229
        %v4273 = vunpack.c.h.b16 %v4229
        %v4274 = vunpack.c.l.b16 %v4230
        %v4275 = vunpack.c.h.b16 %v4230
        %v4276 = vunpack.c.l.b16 %v4231
        %v4277 = vunpack.c.h.b16 %v4231
        %v4278 = vunpack.c.l.b16 %v4232
        %v4279 = vunpack.c.h.b16 %v4232
        %v4280 = vunpack.c.l.b16 %v4233
        %v4281 = vunpack.c.h.b16 %v4233
        %v4282 = vpack.c.b16 %v4250, %v4250
        %v4283 = vpack.c.b16 %v4251, %v4251
        %v4284 = vpack.c.b16 %v4252, %v4252
        %v4285 = vpack.c.b16 %v4253, %v4253
        %v4286 = vpack.c.b16 %v4254, %v4254
        %v4287 = vpack.c.b16 %v4255, %v4255
        %v4288 = vpack.c.b16 %v4256, %v4256
        %v4289 = vpack.c.b16 %v4257, %v4257
        %v4290 = vpack.c.b16 %v4258, %v4258
        %v4291 = vpack.c.b16 %v4259, %v4259
        %v4292 = vpack.c.b16 %v4260, %v4260
        %v4293 = vpack.c.b16 %v4261, %v4261
        %v4294 = vpack.c.b16 %v4262, %v4262
        %v4295 = vpack.c.b16 %v4263, %v4263
        %v4296 = vpack.c.b16 %v4264, %v4264
        %v4297 = vpack.c.b16 %v4265, %v4265
        %v4298 = vpack.c.b16 %v4266, %v4266
        %v4299 = vpack.c.b16 %v4267, %v4267
        %v4300 = vpack.c.b16 %v4268, %v4268
        %v4301 = vpack.c.b16 %v4269, %v4269
        %v4302 = vpack.c.b16 %v4270, %v4270
        %v4303 = vpack.c.b16 %v4271, %v4271
        %v4304 = vpack.c.b16 %v4272, %v4272
        %v4305 = vpack.c.b16 %v4273, %v4273
        %v4306 = vpack.c.b16 %v4274, %v4274
        %v4307 = vpack.c.b16 %v4275, %v4275
        %v4308 = vpack.c.b16 %v4276, %v4276
        %v4309 = vpack.c.b16 %v4277, %v4277
        %v4310 = vpack.c.b16 %v4278, %v4278
        %v4311 = vpack.c.b16 %v4279, %v4279
        %v4312 = vpack.c.b16 %v4280, %v4280
        %v4313 = vpack.c.b16 %v4281, %v4281
        %v4315 = vshrl.u32 %v4282, 16
        %v4317 = vrot.slane %v4315, 7
        %v4318 = vshll.u32 %v4282, 16
        %v4320 = vor.u32 %v4317, %v4318
        %v4321 = vrot.slane %v4317, 4
        %v4323 = vshrl.u32 %v4283, 16
        %v4325 = vrot.slane %v4323, 7
        %v4326 = vshll.u32 %v4283, 16
        %v4328 = vor.u32 %v4325, %v4326
        %v4329 = vsel %vm410, %v4321, %v4328
        %v4330 = vrot.slane %v4325, 4
        %v4332 = vshrl.u32 %v4284, 16
        %v4334 = vrot.slane %v4332, 7
        %v4335 = vshll.u32 %v4284, 16
        %v4337 = vor.u32 %v4334, %v4335
        %v4338 = vrot.slane %v4334, 4
        %v4340 = vshrl.u32 %v4285, 16
        %v4342 = vrot.slane %v4340, 7
        %v4343 = vshll.u32 %v4285, 16
        %v4345 = vor.u32 %v4342, %v4343
        %v4346 = vsel %vm410, %v4338, %v4345
        %v4347 = vrot.slane %v4342, 4
        %v4349 = vshrl.u32 %v4286, 16
        %v4351 = vrot.slane %v4349, 7
        %v4352 = vshll.u32 %v4286, 16
        %v4354 = vor.u32 %v4351, %v4352
        %v4355 = vrot.slane %v4351, 4
        %v4357 = vshrl.u32 %v4287, 16
        %v4359 = vrot.slane %v4357, 7
        %v4360 = vshll.u32 %v4287, 16
        %v4362 = vor.u32 %v4359, %v4360
        %v4363 = vsel %vm410, %v4355, %v4362
        %v4364 = vrot.slane %v4359, 4
        %v4366 = vshrl.u32 %v4288, 16
        %v4368 = vrot.slane %v4366, 7
        %v4369 = vshll.u32 %v4288, 16
        %v4371 = vor.u32 %v4368, %v4369
        %v4372 = vrot.slane %v4368, 4
        %v4374 = vshrl.u32 %v4289, 16
        %v4376 = vrot.slane %v4374, 7
        %v4377 = vshll.u32 %v4289, 16
        %v4379 = vor.u32 %v4376, %v4377
        %v4380 = vsel %vm410, %v4372, %v4379
        %v4381 = vrot.slane %v4376, 4
        %v4383 = vshrl.u32 %v4290, 16
        %v4385 = vrot.slane %v4383, 7
        %v4386 = vshll.u32 %v4290, 16
        %v4388 = vor.u32 %v4385, %v4386
        %v4389 = vrot.slane %v4385, 4
        %v4391 = vshrl.u32 %v4291, 16
        %v4393 = vrot.slane %v4391, 7
        %v4394 = vshll.u32 %v4291, 16
        %v4396 = vor.u32 %v4393, %v4394
        %v4397 = vsel %vm410, %v4389, %v4396
        %v4398 = vrot.slane %v4393, 4
        %v4400 = vshrl.u32 %v4292, 16
        %v4402 = vrot.slane %v4400, 7
        %v4403 = vshll.u32 %v4292, 16
        %v4405 = vor.u32 %v4402, %v4403
        %v4406 = vrot.slane %v4402, 4
        %v4408 = vshrl.u32 %v4293, 16
        %v4410 = vrot.slane %v4408, 7
        %v4411 = vshll.u32 %v4293, 16
        %v4413 = vor.u32 %v4410, %v4411
        %v4414 = vsel %vm410, %v4406, %v4413
        %v4415 = vrot.slane %v4410, 4
        %v4417 = vshrl.u32 %v4294, 16
        %v4419 = vrot.slane %v4417, 7
        %v4420 = vshll.u32 %v4294, 16
        %v4422 = vor.u32 %v4419, %v4420
        %v4423 = vrot.slane %v4419, 4
        %v4425 = vshrl.u32 %v4295, 16
        %v4427 = vrot.slane %v4425, 7
        %v4428 = vshll.u32 %v4295, 16
        %v4430 = vor.u32 %v4427, %v4428
        %v4431 = vsel %vm410, %v4423, %v4430
        %v4432 = vrot.slane %v4427, 4
        %v4434 = vshrl.u32 %v4296, 16
        %v4436 = vrot.slane %v4434, 7
        %v4437 = vshll.u32 %v4296, 16
        %v4439 = vor.u32 %v4436, %v4437
        %v4440 = vrot.slane %v4436, 4
        %v4442 = vshrl.u32 %v4297, 16
        %v4444 = vrot.slane %v4442, 7
        %v4445 = vshll.u32 %v4297, 16
        %v4447 = vor.u32 %v4444, %v4445
        %v4448 = vsel %vm410, %v4440, %v4447
        %v4449 = vrot.slane %v4444, 4
        %v4451 = vshrl.u32 %v4298, 16
        %v4453 = vrot.slane %v4451, 7
        %v4454 = vshll.u32 %v4298, 16
        %v4456 = vor.u32 %v4453, %v4454
        %v4457 = vrot.slane %v4453, 4
        %v4459 = vshrl.u32 %v4299, 16
        %v4461 = vrot.slane %v4459, 7
        %v4462 = vshll.u32 %v4299, 16
        %v4464 = vor.u32 %v4461, %v4462
        %v4465 = vsel %vm410, %v4457, %v4464
        %v4466 = vrot.slane %v4461, 4
        %v4468 = vshrl.u32 %v4300, 16
        %v4470 = vrot.slane %v4468, 7
        %v4471 = vshll.u32 %v4300, 16
        %v4473 = vor.u32 %v4470, %v4471
        %v4474 = vrot.slane %v4470, 4
        %v4476 = vshrl.u32 %v4301, 16
        %v4478 = vrot.slane %v4476, 7
        %v4479 = vshll.u32 %v4301, 16
        %v4481 = vor.u32 %v4478, %v4479
        %v4482 = vsel %vm410, %v4474, %v4481
        %v4483 = vrot.slane %v4478, 4
        %v4485 = vshrl.u32 %v4302, 16
        %v4487 = vrot.slane %v4485, 7
        %v4488 = vshll.u32 %v4302, 16
        %v4490 = vor.u32 %v4487, %v4488
        %v4491 = vrot.slane %v4487, 4
        %v4493 = vshrl.u32 %v4303, 16
        %v4495 = vrot.slane %v4493, 7
        %v4496 = vshll.u32 %v4303, 16
        %v4498 = vor.u32 %v4495, %v4496
        %v4499 = vsel %vm410, %v4491, %v4498
        %v4500 = vrot.slane %v4495, 4
        %v4502 = vshrl.u32 %v4304, 16
        %v4504 = vrot.slane %v4502, 7
        %v4505 = vshll.u32 %v4304, 16
        %v4507 = vor.u32 %v4504, %v4505
        %v4508 = vrot.slane %v4504, 4
        %v4510 = vshrl.u32 %v4305, 16
        %v4512 = vrot.slane %v4510, 7
        %v4513 = vshll.u32 %v4305, 16
        %v4515 = vor.u32 %v4512, %v4513
        %v4516 = vsel %vm410, %v4508, %v4515
        %v4517 = vrot.slane %v4512, 4
        %v4519 = vshrl.u32 %v4306, 16
        %v4521 = vrot.slane %v4519, 7
        %v4522 = vshll.u32 %v4306, 16
        %v4524 = vor.u32 %v4521, %v4522
        %v4525 = vrot.slane %v4521, 4
        %v4527 = vshrl.u32 %v4307, 16
        %v4529 = vrot.slane %v4527, 7
        %v4530 = vshll.u32 %v4307, 16
        %v4532 = vor.u32 %v4529, %v4530
        %v4533 = vsel %vm410, %v4525, %v4532
        %v4534 = vrot.slane %v4529, 4
        %v4536 = vshrl.u32 %v4308, 16
        %v4538 = vrot.slane %v4536, 7
        %v4539 = vshll.u32 %v4308, 16
        %v4541 = vor.u32 %v4538, %v4539
        %v4542 = vrot.slane %v4538, 4
        %v4544 = vshrl.u32 %v4309, 16
        %v4546 = vrot.slane %v4544, 7
        %v4547 = vshll.u32 %v4309, 16
        %v4549 = vor.u32 %v4546, %v4547
        %v4550 = vsel %vm410, %v4542, %v4549
        %v4551 = vrot.slane %v4546, 4
        %v4553 = vshrl.u32 %v4310, 16
        %v4555 = vrot.slane %v4553, 7
        %v4556 = vshll.u32 %v4310, 16
        %v4558 = vor.u32 %v4555, %v4556
        %v4559 = vrot.slane %v4555, 4
        %v4561 = vshrl.u32 %v4311, 16
        %v4563 = vrot.slane %v4561, 7
        %v4564 = vshll.u32 %v4311, 16
        %v4566 = vor.u32 %v4563, %v4564
        %v4567 = vsel %vm410, %v4559, %v4566
        %v4568 = vrot.slane %v4563, 4
        %v4570 = vshrl.u32 %v4312, 16
        %v4572 = vrot.slane %v4570, 7
        %v4573 = vshll.u32 %v4312, 16
        %v4575 = vor.u32 %v4572, %v4573
        %v4576 = vrot.slane %v4572, 4
        %v4578 = vshrl.u32 %v4313, 16
        %v4580 = vrot.slane %v4578, 7
        %v4581 = vshll.u32 %v4313, 16
        %v4583 = vor.u32 %v4580, %v4581
        %v4584 = vsel %vm410, %v4576, %v4583
        %v4585 = vrot.slane %v4580, 4
        %s4634 = scalar_lea.vmem [#allocation3], 12
        %v4635 = vld [vmem:[%s4634] sm:$0xf]
        %v4636 = vsel %vm734, %v4320, %v4635
        %4637 = vst [vmem:[%s4634] sm:$0xf] %v4636
        %4638 = vst.msk [vmem:[%s4634 + $0x4] sm:$0xf] %vm224, %v4329
        %v4639 = vld [vmem:[%s4634 + $0x8] sm:$0x1]
        %v4640 = vsel %vm740, %v4330, %v4639
        %4641 = vst [vmem:[%s4634 + $0x8] sm:$0x1] %v4640
        %v4642 = vld [vmem:[%s4634 + $0xc] sm:$0xf]
        %v4643 = vsel %vm734, %v4337, %v4642
        %4644 = vst [vmem:[%s4634 + $0xc] sm:$0xf] %v4643
        %4645 = vst.msk [vmem:[%s4634 + $0x10] sm:$0xf] %vm224, %v4346
        %v4646 = vld [vmem:[%s4634 + $0x14] sm:$0x1]
        %v4647 = vsel %vm740, %v4347, %v4646
        %4648 = vst [vmem:[%s4634 + $0x14] sm:$0x1] %v4647
        %v4649 = vld [vmem:[%s4634 + $0x18] sm:$0xf]
        %v4650 = vsel %vm734, %v4354, %v4649
        %4651 = vst [vmem:[%s4634 + $0x18] sm:$0xf] %v4650
        %4652 = vst.msk [vmem:[%s4634 + $0x1c] sm:$0xf] %vm224, %v4363
        %v4653 = vld [vmem:[%s4634 + $0x20] sm:$0x1]
        %v4654 = vsel %vm740, %v4364, %v4653
        %4655 = vst [vmem:[%s4634 + $0x20] sm:$0x1] %v4654
        %v4656 = vld [vmem:[%s4634 + $0x24] sm:$0xf]
        %v4657 = vsel %vm734, %v4371, %v4656
        %4658 = vst [vmem:[%s4634 + $0x24] sm:$0xf] %v4657
        %4659 = vst.msk [vmem:[%s4634 + $0x28] sm:$0xf] %vm224, %v4380
        %v4660 = vld [vmem:[%s4634 + $0x2c] sm:$0x1]
        %v4661 = vsel %vm740, %v4381, %v4660
        %4662 = vst [vmem:[%s4634 + $0x2c] sm:$0x1] %v4661
        %v4663 = vld [vmem:[%s4634 + $0x30] sm:$0xf]
        %v4664 = vsel %vm734, %v4388, %v4663
        %4665 = vst [vmem:[%s4634 + $0x30] sm:$0xf] %v4664
        %4666 = vst.msk [vmem:[%s4634 + $0x34] sm:$0xf] %vm224, %v4397
        %v4667 = vld [vmem:[%s4634 + $0x38] sm:$0x1]
        %v4668 = vsel %vm740, %v4398, %v4667
        %4669 = vst [vmem:[%s4634 + $0x38] sm:$0x1] %v4668
        %v4670 = vld [vmem:[%s4634 + $0x3c] sm:$0xf]
        %v4671 = vsel %vm734, %v4405, %v4670
        %4672 = vst [vmem:[%s4634 + $0x3c] sm:$0xf] %v4671
        %4673 = vst.msk [vmem:[%s4634 + $0x40] sm:$0xf] %vm224, %v4414
        %v4674 = vld [vmem:[%s4634 + $0x44] sm:$0x1]
        %v4675 = vsel %vm740, %v4415, %v4674
        %4676 = vst [vmem:[%s4634 + $0x44] sm:$0x1] %v4675
        %v4677 = vld [vmem:[%s4634 + $0x48] sm:$0xf]
        %v4678 = vsel %vm734, %v4422, %v4677
        %4679 = vst [vmem:[%s4634 + $0x48] sm:$0xf] %v4678
        %4680 = vst.msk [vmem:[%s4634 + $0x4c] sm:$0xf] %vm224, %v4431
        %v4681 = vld [vmem:[%s4634 + $0x50] sm:$0x1]
        %v4682 = vsel %vm740, %v4432, %v4681
        %4683 = vst [vmem:[%s4634 + $0x50] sm:$0x1] %v4682
        %v4684 = vld [vmem:[%s4634 + $0x54] sm:$0xf]
        %v4685 = vsel %vm734, %v4439, %v4684
        %4686 = vst [vmem:[%s4634 + $0x54] sm:$0xf] %v4685
        %4687 = vst.msk [vmem:[%s4634 + $0x58] sm:$0xf] %vm224, %v4448
        %v4688 = vld [vmem:[%s4634 + $0x5c] sm:$0x1]
        %v4689 = vsel %vm740, %v4449, %v4688
        %4690 = vst [vmem:[%s4634 + $0x5c] sm:$0x1] %v4689
        %v4691 = vld [vmem:[%s4634 + $0x60] sm:$0xf]
        %v4692 = vsel %vm734, %v4456, %v4691
        %4693 = vst [vmem:[%s4634 + $0x60] sm:$0xf] %v4692
        %4694 = vst.msk [vmem:[%s4634 + $0x64] sm:$0xf] %vm224, %v4465
        %v4695 = vld [vmem:[%s4634 + $0x68] sm:$0x1]
        %v4696 = vsel %vm740, %v4466, %v4695
        %4697 = vst [vmem:[%s4634 + $0x68] sm:$0x1] %v4696
        %v4698 = vld [vmem:[%s4634 + $0x6c] sm:$0xf]
        %v4699 = vsel %vm734, %v4473, %v4698
        %4700 = vst [vmem:[%s4634 + $0x6c] sm:$0xf] %v4699
        %4701 = vst.msk [vmem:[%s4634 + $0x70] sm:$0xf] %vm224, %v4482
        %v4702 = vld [vmem:[%s4634 + $0x74] sm:$0x1]
        %v4703 = vsel %vm740, %v4483, %v4702
        %4704 = vst [vmem:[%s4634 + $0x74] sm:$0x1] %v4703
        %v4705 = vld [vmem:[%s4634 + $0x78] sm:$0xf]
        %v4706 = vsel %vm734, %v4490, %v4705
        %4707 = vst [vmem:[%s4634 + $0x78] sm:$0xf] %v4706
        %4708 = vst.msk [vmem:[%s4634 + $0x7c] sm:$0xf] %vm224, %v4499
        %v4709 = vld [vmem:[%s4634 + $0x80] sm:$0x1]
        %v4710 = vsel %vm740, %v4500, %v4709
        %4711 = vst [vmem:[%s4634 + $0x80] sm:$0x1] %v4710
        %v4712 = vld [vmem:[%s4634 + $0x84] sm:$0xf]
        %v4713 = vsel %vm734, %v4507, %v4712
        %4714 = vst [vmem:[%s4634 + $0x84] sm:$0xf] %v4713
        %4715 = vst.msk [vmem:[%s4634 + $0x88] sm:$0xf] %vm224, %v4516
        %v4716 = vld [vmem:[%s4634 + $0x8c] sm:$0x1]
        %v4717 = vsel %vm740, %v4517, %v4716
        %4718 = vst [vmem:[%s4634 + $0x8c] sm:$0x1] %v4717
        %v4719 = vld [vmem:[%s4634 + $0x90] sm:$0xf]
        %v4720 = vsel %vm734, %v4524, %v4719
        %4721 = vst [vmem:[%s4634 + $0x90] sm:$0xf] %v4720
        %4722 = vst.msk [vmem:[%s4634 + $0x94] sm:$0xf] %vm224, %v4533
        %v4723 = vld [vmem:[%s4634 + $0x98] sm:$0x1]
        %v4724 = vsel %vm740, %v4534, %v4723
        %4725 = vst [vmem:[%s4634 + $0x98] sm:$0x1] %v4724
        %v4726 = vld [vmem:[%s4634 + $0x9c] sm:$0xf]
        %v4727 = vsel %vm734, %v4541, %v4726
        %4728 = vst [vmem:[%s4634 + $0x9c] sm:$0xf] %v4727
        %4729 = vst.msk [vmem:[%s4634 + $0xa0] sm:$0xf] %vm224, %v4550
        %v4730 = vld [vmem:[%s4634 + $0xa4] sm:$0x1]
        %v4731 = vsel %vm740, %v4551, %v4730
        %4732 = vst [vmem:[%s4634 + $0xa4] sm:$0x1] %v4731
        %v4733 = vld [vmem:[%s4634 + $0xa8] sm:$0xf]
        %v4734 = vsel %vm734, %v4558, %v4733
        %4735 = vst [vmem:[%s4634 + $0xa8] sm:$0xf] %v4734
        %4736 = vst.msk [vmem:[%s4634 + $0xac] sm:$0xf] %vm224, %v4567
        %v4737 = vld [vmem:[%s4634 + $0xb0] sm:$0x1]
        %v4738 = vsel %vm740, %v4568, %v4737
        %4739 = vst [vmem:[%s4634 + $0xb0] sm:$0x1] %v4738
        %v4740 = vld [vmem:[%s4634 + $0xb4] sm:$0xf]
        %v4741 = vsel %vm734, %v4575, %v4740
        %4742 = vst [vmem:[%s4634 + $0xb4] sm:$0xf] %v4741
        %4743 = vst.msk [vmem:[%s4634 + $0xb8] sm:$0xf] %vm224, %v4584
        %v4744 = vld [vmem:[%s4634 + $0xbc] sm:$0x1]
        %v4745 = vsel %vm740, %v4585, %v4744
        %4746 = vst [vmem:[%s4634 + $0xbc] sm:$0x1] %v4745
        %v4747 = vld [vmem:[#allocation3] sm:$0xf]
        %v4748 = vld [vmem:[#allocation3 + $0x4] sm:$0xf]
        %v4749 = vld [vmem:[#allocation3 + $0xc] sm:$0xf]
        %v4750 = vld [vmem:[#allocation3 + $0x10] sm:$0xf]
        %v4751 = vld [vmem:[#allocation3 + $0x18] sm:$0xf]
        %v4752 = vld [vmem:[#allocation3 + $0x1c] sm:$0xf]
        %v4753 = vld [vmem:[#allocation3 + $0x24] sm:$0xf]
        %v4754 = vld [vmem:[#allocation3 + $0x28] sm:$0xf]
        %v4755 = vld [vmem:[#allocation3 + $0x30] sm:$0xf]
        %v4756 = vld [vmem:[#allocation3 + $0x34] sm:$0xf]
        %v4757 = vld [vmem:[#allocation3 + $0x3c] sm:$0xf]
        %v4758 = vld [vmem:[#allocation3 + $0x40] sm:$0xf]
        %v4759 = vld [vmem:[#allocation3 + $0x48] sm:$0xf]
        %v4760 = vld [vmem:[#allocation3 + $0x4c] sm:$0xf]
        %v4761 = vld [vmem:[#allocation3 + $0x54] sm:$0xf]
        %v4762 = vld [vmem:[#allocation3 + $0x58] sm:$0xf]
        %v4763 = vld [vmem:[#allocation3 + $0x60] sm:$0xf]
        %v4764 = vld [vmem:[#allocation3 + $0x64] sm:$0xf]
        %v4765 = vld [vmem:[#allocation3 + $0x6c] sm:$0xf]
        %v4766 = vld [vmem:[#allocation3 + $0x70] sm:$0xf]
        %v4767 = vld [vmem:[#allocation3 + $0x78] sm:$0xf]
        %v4768 = vld [vmem:[#allocation3 + $0x7c] sm:$0xf]
        %v4769 = vld [vmem:[#allocation3 + $0x84] sm:$0xf]
        %v4770 = vld [vmem:[#allocation3 + $0x88] sm:$0xf]
        %v4771 = vld [vmem:[#allocation3 + $0x90] sm:$0xf]
        %v4772 = vld [vmem:[#allocation3 + $0x94] sm:$0xf]
        %v4773 = vld [vmem:[#allocation3 + $0x9c] sm:$0xf]
        %v4774 = vld [vmem:[#allocation3 + $0xa0] sm:$0xf]
        %v4775 = vld [vmem:[#allocation3 + $0xa8] sm:$0xf]
        %v4776 = vld [vmem:[#allocation3 + $0xac] sm:$0xf]
        %v4777 = vld [vmem:[#allocation3 + $0xb4] sm:$0xf]
        %v4778 = vld [vmem:[#allocation3 + $0xb8] sm:$0xf]
        %v4779 = vld [vmem:[#allocation3 + $0x8] sm:$0x1]
        %v4780 = vld [vmem:[#allocation3 + $0x14] sm:$0x1]
        %v4781 = vld [vmem:[#allocation3 + $0x20] sm:$0x1]
        %v4782 = vld [vmem:[#allocation3 + $0x2c] sm:$0x1]
        %v4783 = vld [vmem:[#allocation3 + $0x38] sm:$0x1]
        %v4784 = vld [vmem:[#allocation3 + $0x44] sm:$0x1]
        %v4785 = vld [vmem:[#allocation3 + $0x50] sm:$0x1]
        %v4786 = vld [vmem:[#allocation3 + $0x5c] sm:$0x1]
        %v4787 = vld [vmem:[#allocation3 + $0x68] sm:$0x1]
        %v4788 = vld [vmem:[#allocation3 + $0x74] sm:$0x1]
        %v4789 = vld [vmem:[#allocation3 + $0x80] sm:$0x1]
        %v4790 = vld [vmem:[#allocation3 + $0x8c] sm:$0x1]
        %v4791 = vld [vmem:[#allocation3 + $0x98] sm:$0x1]
        %v4792 = vld [vmem:[#allocation3 + $0xa4] sm:$0x1]
        %v4793 = vld [vmem:[#allocation3 + $0xb0] sm:$0x1]
        %v4794 = vld [vmem:[#allocation3 + $0xbc] sm:$0x1]
        %v4796 = vshrl.u32 %v4747, 16
        %v4798 = vrot.slane %v4796, 4
        %v4799 = vshll.u32 %v4747, 16
        %v4801 = vrot.slane %v4799, 5
        %v4802 = vor.u32 %v4798, %v4801
        %v4803 = vrot.slane %v4802, 4
        %v4805 = vshll.u32 %v4748, 16
        %v4807 = vrot.slane %v4805, 5
        %v4808 = vsel %vm899, %v4803, %v4807
        %v4809 = vshrl.u32 %v4748, 16
        %v4811 = vrot.slane %v4809, 4
        %v4812 = vor.u32 %v4811, %v4807
        %v4813 = vrot.slane %v4812, 4
        %v4815 = vshll.u32 %v4779, 16
        %v4817 = vrot.slane %v4815, 5
        %v4818 = vsel %vm899, %v4813, %v4817
        %v4820 = vshrl.u32 %v4749, 16
        %v4822 = vrot.slane %v4820, 4
        %v4823 = vshll.u32 %v4749, 16
        %v4825 = vrot.slane %v4823, 5
        %v4826 = vor.u32 %v4822, %v4825
        %v4827 = vrot.slane %v4826, 4
        %v4829 = vshll.u32 %v4750, 16
        %v4831 = vrot.slane %v4829, 5
        %v4832 = vsel %vm899, %v4827, %v4831
        %v4833 = vshrl.u32 %v4750, 16
        %v4835 = vrot.slane %v4833, 4
        %v4836 = vor.u32 %v4835, %v4831
        %v4837 = vrot.slane %v4836, 4
        %v4839 = vshll.u32 %v4780, 16
        %v4841 = vrot.slane %v4839, 5
        %v4842 = vsel %vm899, %v4837, %v4841
        %v4844 = vshrl.u32 %v4751, 16
        %v4846 = vrot.slane %v4844, 4
        %v4847 = vshll.u32 %v4751, 16
        %v4849 = vrot.slane %v4847, 5
        %v4850 = vor.u32 %v4846, %v4849
        %v4851 = vrot.slane %v4850, 4
        %v4853 = vshll.u32 %v4752, 16
        %v4855 = vrot.slane %v4853, 5
        %v4856 = vsel %vm899, %v4851, %v4855
        %v4857 = vshrl.u32 %v4752, 16
        %v4859 = vrot.slane %v4857, 4
        %v4860 = vor.u32 %v4859, %v4855
        %v4861 = vrot.slane %v4860, 4
        %v4863 = vshll.u32 %v4781, 16
        %v4865 = vrot.slane %v4863, 5
        %v4866 = vsel %vm899, %v4861, %v4865
        %v4868 = vshrl.u32 %v4753, 16
        %v4870 = vrot.slane %v4868, 4
        %v4871 = vshll.u32 %v4753, 16
        %v4873 = vrot.slane %v4871, 5
        %v4874 = vor.u32 %v4870, %v4873
        %v4875 = vrot.slane %v4874, 4
        %v4877 = vshll.u32 %v4754, 16
        %v4879 = vrot.slane %v4877, 5
        %v4880 = vsel %vm899, %v4875, %v4879
        %v4881 = vshrl.u32 %v4754, 16
        %v4883 = vrot.slane %v4881, 4
        %v4884 = vor.u32 %v4883, %v4879
        %v4885 = vrot.slane %v4884, 4
        %v4887 = vshll.u32 %v4782, 16
        %v4889 = vrot.slane %v4887, 5
        %v4890 = vsel %vm899, %v4885, %v4889
        %v4892 = vshrl.u32 %v4755, 16
        %v4894 = vrot.slane %v4892, 4
        %v4895 = vshll.u32 %v4755, 16
        %v4897 = vrot.slane %v4895, 5
        %v4898 = vor.u32 %v4894, %v4897
        %v4899 = vrot.slane %v4898, 4
        %v4901 = vshll.u32 %v4756, 16
        %v4903 = vrot.slane %v4901, 5
        %v4904 = vsel %vm899, %v4899, %v4903
        %v4905 = vshrl.u32 %v4756, 16
        %v4907 = vrot.slane %v4905, 4
        %v4908 = vor.u32 %v4907, %v4903
        %v4909 = vrot.slane %v4908, 4
        %v4911 = vshll.u32 %v4783, 16
        %v4913 = vrot.slane %v4911, 5
        %v4914 = vsel %vm899, %v4909, %v4913
        %v4916 = vshrl.u32 %v4757, 16
        %v4918 = vrot.slane %v4916, 4
        %v4919 = vshll.u32 %v4757, 16
        %v4921 = vrot.slane %v4919, 5
        %v4922 = vor.u32 %v4918, %v4921
        %v4923 = vrot.slane %v4922, 4
        %v4925 = vshll.u32 %v4758, 16
        %v4927 = vrot.slane %v4925, 5
        %v4928 = vsel %vm899, %v4923, %v4927
        %v4929 = vshrl.u32 %v4758, 16
        %v4931 = vrot.slane %v4929, 4
        %v4932 = vor.u32 %v4931, %v4927
        %v4933 = vrot.slane %v4932, 4
        %v4935 = vshll.u32 %v4784, 16
        %v4937 = vrot.slane %v4935, 5
        %v4938 = vsel %vm899, %v4933, %v4937
        %v4940 = vshrl.u32 %v4759, 16
        %v4942 = vrot.slane %v4940, 4
        %v4943 = vshll.u32 %v4759, 16
        %v4945 = vrot.slane %v4943, 5
        %v4946 = vor.u32 %v4942, %v4945
        %v4947 = vrot.slane %v4946, 4
        %v4949 = vshll.u32 %v4760, 16
        %v4951 = vrot.slane %v4949, 5
        %v4952 = vsel %vm899, %v4947, %v4951
        %v4953 = vshrl.u32 %v4760, 16
        %v4955 = vrot.slane %v4953, 4
        %v4956 = vor.u32 %v4955, %v4951
        %v4957 = vrot.slane %v4956, 4
        %v4959 = vshll.u32 %v4785, 16
        %v4961 = vrot.slane %v4959, 5
        %v4962 = vsel %vm899, %v4957, %v4961
        %v4964 = vshrl.u32 %v4761, 16
        %v4966 = vrot.slane %v4964, 4
        %v4967 = vshll.u32 %v4761, 16
        %v4969 = vrot.slane %v4967, 5
        %v4970 = vor.u32 %v4966, %v4969
        %v4971 = vrot.slane %v4970, 4
        %v4973 = vshll.u32 %v4762, 16
        %v4975 = vrot.slane %v4973, 5
        %v4976 = vsel %vm899, %v4971, %v4975
        %v4977 = vshrl.u32 %v4762, 16
        %v4979 = vrot.slane %v4977, 4
        %v4980 = vor.u32 %v4979, %v4975
        %v4981 = vrot.slane %v4980, 4
        %v4983 = vshll.u32 %v4786, 16
        %v4985 = vrot.slane %v4983, 5
        %v4986 = vsel %vm899, %v4981, %v4985
        %v4988 = vshrl.u32 %v4763, 16
        %v4990 = vrot.slane %v4988, 4
        %v4991 = vshll.u32 %v4763, 16
        %v4993 = vrot.slane %v4991, 5
        %v4994 = vor.u32 %v4990, %v4993
        %v4995 = vrot.slane %v4994, 4
        %v4997 = vshll.u32 %v4764, 16
        %v4999 = vrot.slane %v4997, 5
        %v5000 = vsel %vm899, %v4995, %v4999
        %v5001 = vshrl.u32 %v4764, 16
        %v5003 = vrot.slane %v5001, 4
        %v5004 = vor.u32 %v5003, %v4999
        %v5005 = vrot.slane %v5004, 4
        %v5007 = vshll.u32 %v4787, 16
        %v5009 = vrot.slane %v5007, 5
        %v5010 = vsel %vm899, %v5005, %v5009
        %v5012 = vshrl.u32 %v4765, 16
        %v5014 = vrot.slane %v5012, 4
        %v5015 = vshll.u32 %v4765, 16
        %v5017 = vrot.slane %v5015, 5
        %v5018 = vor.u32 %v5014, %v5017
        %v5019 = vrot.slane %v5018, 4
        %v5021 = vshll.u32 %v4766, 16
        %v5023 = vrot.slane %v5021, 5
        %v5024 = vsel %vm899, %v5019, %v5023
        %v5025 = vshrl.u32 %v4766, 16
        %v5027 = vrot.slane %v5025, 4
        %v5028 = vor.u32 %v5027, %v5023
        %v5029 = vrot.slane %v5028, 4
        %v5031 = vshll.u32 %v4788, 16
        %v5033 = vrot.slane %v5031, 5
        %v5034 = vsel %vm899, %v5029, %v5033
        %v5036 = vshrl.u32 %v4767, 16
        %v5038 = vrot.slane %v5036, 4
        %v5039 = vshll.u32 %v4767, 16
        %v5041 = vrot.slane %v5039, 5
        %v5042 = vor.u32 %v5038, %v5041
        %v5043 = vrot.slane %v5042, 4
        %v5045 = vshll.u32 %v4768, 16
        %v5047 = vrot.slane %v5045, 5
        %v5048 = vsel %vm899, %v5043, %v5047
        %v5049 = vshrl.u32 %v4768, 16
        %v5051 = vrot.slane %v5049, 4
        %v5052 = vor.u32 %v5051, %v5047
        %v5053 = vrot.slane %v5052, 4
        %v5055 = vshll.u32 %v4789, 16
        %v5057 = vrot.slane %v5055, 5
        %v5058 = vsel %vm899, %v5053, %v5057
        %v5060 = vshrl.u32 %v4769, 16
        %v5062 = vrot.slane %v5060, 4
        %v5063 = vshll.u32 %v4769, 16
        %v5065 = vrot.slane %v5063, 5
        %v5066 = vor.u32 %v5062, %v5065
        %v5067 = vrot.slane %v5066, 4
        %v5069 = vshll.u32 %v4770, 16
        %v5071 = vrot.slane %v5069, 5
        %v5072 = vsel %vm899, %v5067, %v5071
        %v5073 = vshrl.u32 %v4770, 16
        %v5075 = vrot.slane %v5073, 4
        %v5076 = vor.u32 %v5075, %v5071
        %v5077 = vrot.slane %v5076, 4
        %v5079 = vshll.u32 %v4790, 16
        %v5081 = vrot.slane %v5079, 5
        %v5082 = vsel %vm899, %v5077, %v5081
        %v5084 = vshrl.u32 %v4771, 16
        %v5086 = vrot.slane %v5084, 4
        %v5087 = vshll.u32 %v4771, 16
        %v5089 = vrot.slane %v5087, 5
        %v5090 = vor.u32 %v5086, %v5089
        %v5091 = vrot.slane %v5090, 4
        %v5093 = vshll.u32 %v4772, 16
        %v5095 = vrot.slane %v5093, 5
        %v5096 = vsel %vm899, %v5091, %v5095
        %v5097 = vshrl.u32 %v4772, 16
        %v5099 = vrot.slane %v5097, 4
        %v5100 = vor.u32 %v5099, %v5095
        %v5101 = vrot.slane %v5100, 4
        %v5103 = vshll.u32 %v4791, 16
        %v5105 = vrot.slane %v5103, 5
        %v5106 = vsel %vm899, %v5101, %v5105
        %v5108 = vshrl.u32 %v4773, 16
        %v5110 = vrot.slane %v5108, 4
        %v5111 = vshll.u32 %v4773, 16
        %v5113 = vrot.slane %v5111, 5
        %v5114 = vor.u32 %v5110, %v5113
        %v5115 = vrot.slane %v5114, 4
        %v5117 = vshll.u32 %v4774, 16
        %v5119 = vrot.slane %v5117, 5
        %v5120 = vsel %vm899, %v5115, %v5119
        %v5121 = vshrl.u32 %v4774, 16
        %v5123 = vrot.slane %v5121, 4
        %v5124 = vor.u32 %v5123, %v5119
        %v5125 = vrot.slane %v5124, 4
        %v5127 = vshll.u32 %v4792, 16
        %v5129 = vrot.slane %v5127, 5
        %v5130 = vsel %vm899, %v5125, %v5129
        %v5132 = vshrl.u32 %v4775, 16
        %v5134 = vrot.slane %v5132, 4
        %v5135 = vshll.u32 %v4775, 16
        %v5137 = vrot.slane %v5135, 5
        %v5138 = vor.u32 %v5134, %v5137
        %v5139 = vrot.slane %v5138, 4
        %v5141 = vshll.u32 %v4776, 16
        %v5143 = vrot.slane %v5141, 5
        %v5144 = vsel %vm899, %v5139, %v5143
        %v5145 = vshrl.u32 %v4776, 16
        %v5147 = vrot.slane %v5145, 4
        %v5148 = vor.u32 %v5147, %v5143
        %v5149 = vrot.slane %v5148, 4
        %v5151 = vshll.u32 %v4793, 16
        %v5153 = vrot.slane %v5151, 5
        %v5154 = vsel %vm899, %v5149, %v5153
        %v5156 = vshrl.u32 %v4777, 16
        %v5158 = vrot.slane %v5156, 4
        %v5159 = vshll.u32 %v4777, 16
        %v5161 = vrot.slane %v5159, 5
        %v5162 = vor.u32 %v5158, %v5161
        %v5163 = vrot.slane %v5162, 4
        %v5165 = vshll.u32 %v4778, 16
        %v5167 = vrot.slane %v5165, 5
        %v5168 = vsel %vm899, %v5163, %v5167
        %v5169 = vshrl.u32 %v4778, 16
        %v5171 = vrot.slane %v5169, 4
        %v5172 = vor.u32 %v5171, %v5167
        %v5173 = vrot.slane %v5172, 4
        %v5175 = vshll.u32 %v4794, 16
        %v5177 = vrot.slane %v5175, 5
        %v5178 = vsel %vm899, %v5173, %v5177
        %v5179 = vld [vmem:[#allocation3] sm:$0xe]
        %v5180 = vld [vmem:[#allocation3 + $0xc] sm:$0xe]
        %v5181 = vld [vmem:[#allocation3 + $0x18] sm:$0xe]
        %v5182 = vld [vmem:[#allocation3 + $0x24] sm:$0xe]
        %v5183 = vld [vmem:[#allocation3 + $0x30] sm:$0xe]
        %v5184 = vld [vmem:[#allocation3 + $0x3c] sm:$0xe]
        %v5185 = vld [vmem:[#allocation3 + $0x48] sm:$0xe]
        %v5186 = vld [vmem:[#allocation3 + $0x54] sm:$0xe]
        %v5187 = vld [vmem:[#allocation3 + $0x60] sm:$0xe]
        %v5188 = vld [vmem:[#allocation3 + $0x6c] sm:$0xe]
        %v5189 = vld [vmem:[#allocation3 + $0x78] sm:$0xe]
        %v5190 = vld [vmem:[#allocation3 + $0x84] sm:$0xe]
        %v5191 = vld [vmem:[#allocation3 + $0x90] sm:$0xe]
        %v5192 = vld [vmem:[#allocation3 + $0x9c] sm:$0xe]
        %v5193 = vld [vmem:[#allocation3 + $0xa8] sm:$0xe]
        %v5194 = vld [vmem:[#allocation3 + $0xb4] sm:$0xe]
        %v5243 = vrot.slane %v5179, 5
        %v5244 = vrot.slane %v5243, 4
        %v5245 = vrot.slane %v4748, 5
        %v5246 = vsel %vm1350, %v5244, %v5245
        %v5247 = vrot.slane %v5245, 4
        %v5248 = vrot.slane %v4779, 5
        %v5249 = vsel %vm1350, %v5247, %v5248
        %v5250 = vrot.slane %v5180, 5
        %v5251 = vrot.slane %v5250, 4
        %v5252 = vrot.slane %v4750, 5
        %v5253 = vsel %vm1350, %v5251, %v5252
        %v5254 = vrot.slane %v5252, 4
        %v5255 = vrot.slane %v4780, 5
        %v5256 = vsel %vm1350, %v5254, %v5255
        %v5257 = vrot.slane %v5181, 5
        %v5258 = vrot.slane %v5257, 4
        %v5259 = vrot.slane %v4752, 5
        %v5260 = vsel %vm1350, %v5258, %v5259
        %v5261 = vrot.slane %v5259, 4
        %v5262 = vrot.slane %v4781, 5
        %v5263 = vsel %vm1350, %v5261, %v5262
        %v5264 = vrot.slane %v5182, 5
        %v5265 = vrot.slane %v5264, 4
        %v5266 = vrot.slane %v4754, 5
        %v5267 = vsel %vm1350, %v5265, %v5266
        %v5268 = vrot.slane %v5266, 4
        %v5269 = vrot.slane %v4782, 5
        %v5270 = vsel %vm1350, %v5268, %v5269
        %v5271 = vrot.slane %v5183, 5
        %v5272 = vrot.slane %v5271, 4
        %v5273 = vrot.slane %v4756, 5
        %v5274 = vsel %vm1350, %v5272, %v5273
        %v5275 = vrot.slane %v5273, 4
        %v5276 = vrot.slane %v4783, 5
        %v5277 = vsel %vm1350, %v5275, %v5276
        %v5278 = vrot.slane %v5184, 5
        %v5279 = vrot.slane %v5278, 4
        %v5280 = vrot.slane %v4758, 5
        %v5281 = vsel %vm1350, %v5279, %v5280
        %v5282 = vrot.slane %v5280, 4
        %v5283 = vrot.slane %v4784, 5
        %v5284 = vsel %vm1350, %v5282, %v5283
        %v5285 = vrot.slane %v5185, 5
        %v5286 = vrot.slane %v5285, 4
        %v5287 = vrot.slane %v4760, 5
        %v5288 = vsel %vm1350, %v5286, %v5287
        %v5289 = vrot.slane %v5287, 4
        %v5290 = vrot.slane %v4785, 5
        %v5291 = vsel %vm1350, %v5289, %v5290
        %v5292 = vrot.slane %v5186, 5
        %v5293 = vrot.slane %v5292, 4
        %v5294 = vrot.slane %v4762, 5
        %v5295 = vsel %vm1350, %v5293, %v5294
        %v5296 = vrot.slane %v5294, 4
        %v5297 = vrot.slane %v4786, 5
        %v5298 = vsel %vm1350, %v5296, %v5297
        %v5299 = vrot.slane %v5187, 5
        %v5300 = vrot.slane %v5299, 4
        %v5301 = vrot.slane %v4764, 5
        %v5302 = vsel %vm1350, %v5300, %v5301
        %v5303 = vrot.slane %v5301, 4
        %v5304 = vrot.slane %v4787, 5
        %v5305 = vsel %vm1350, %v5303, %v5304
        %v5306 = vrot.slane %v5188, 5
        %v5307 = vrot.slane %v5306, 4
        %v5308 = vrot.slane %v4766, 5
        %v5309 = vsel %vm1350, %v5307, %v5308
        %v5310 = vrot.slane %v5308, 4
        %v5311 = vrot.slane %v4788, 5
        %v5312 = vsel %vm1350, %v5310, %v5311
        %v5313 = vrot.slane %v5189, 5
        %v5314 = vrot.slane %v5313, 4
        %v5315 = vrot.slane %v4768, 5
        %v5316 = vsel %vm1350, %v5314, %v5315
        %v5317 = vrot.slane %v5315, 4
        %v5318 = vrot.slane %v4789, 5
        %v5319 = vsel %vm1350, %v5317, %v5318
        %v5320 = vrot.slane %v5190, 5
        %v5321 = vrot.slane %v5320, 4
        %v5322 = vrot.slane %v4770, 5
        %v5323 = vsel %vm1350, %v5321, %v5322
        %v5324 = vrot.slane %v5322, 4
        %v5325 = vrot.slane %v4790, 5
        %v5326 = vsel %vm1350, %v5324, %v5325
        %v5327 = vrot.slane %v5191, 5
        %v5328 = vrot.slane %v5327, 4
        %v5329 = vrot.slane %v4772, 5
        %v5330 = vsel %vm1350, %v5328, %v5329
        %v5331 = vrot.slane %v5329, 4
        %v5332 = vrot.slane %v4791, 5
        %v5333 = vsel %vm1350, %v5331, %v5332
        %v5334 = vrot.slane %v5192, 5
        %v5335 = vrot.slane %v5334, 4
        %v5336 = vrot.slane %v4774, 5
        %v5337 = vsel %vm1350, %v5335, %v5336
        %v5338 = vrot.slane %v5336, 4
        %v5339 = vrot.slane %v4792, 5
        %v5340 = vsel %vm1350, %v5338, %v5339
        %v5341 = vrot.slane %v5193, 5
        %v5342 = vrot.slane %v5341, 4
        %v5343 = vrot.slane %v4776, 5
        %v5344 = vsel %vm1350, %v5342, %v5343
        %v5345 = vrot.slane %v5343, 4
        %v5346 = vrot.slane %v4793, 5
        %v5347 = vsel %vm1350, %v5345, %v5346
        %v5348 = vrot.slane %v5194, 5
        %v5349 = vrot.slane %v5348, 4
        %v5350 = vrot.slane %v4778, 5
        %v5351 = vsel %vm1350, %v5349, %v5350
        %v5352 = vrot.slane %v5350, 4
        %v5353 = vrot.slane %v4794, 5
        %v5354 = vsel %vm1350, %v5352, %v5353
        %v5355 = vld [vmem:[%s4634] sm:$0xf]
        %v5356 = vld [vmem:[%s4634 + $0x4] sm:$0xf]
        %v5357 = vld [vmem:[%s4634 + $0xc] sm:$0xf]
        %v5358 = vld [vmem:[%s4634 + $0x10] sm:$0xf]
        %v5359 = vld [vmem:[%s4634 + $0x18] sm:$0xf]
        %v5360 = vld [vmem:[%s4634 + $0x1c] sm:$0xf]
        %v5361 = vld [vmem:[%s4634 + $0x24] sm:$0xf]
        %v5362 = vld [vmem:[%s4634 + $0x28] sm:$0xf]
        %v5363 = vld [vmem:[%s4634 + $0x30] sm:$0xf]
        %v5364 = vld [vmem:[%s4634 + $0x34] sm:$0xf]
        %v5365 = vld [vmem:[%s4634 + $0x3c] sm:$0xf]
        %v5366 = vld [vmem:[%s4634 + $0x40] sm:$0xf]
        %v5367 = vld [vmem:[%s4634 + $0x48] sm:$0xf]
        %v5368 = vld [vmem:[%s4634 + $0x4c] sm:$0xf]
        %v5369 = vld [vmem:[%s4634 + $0x54] sm:$0xf]
        %v5370 = vld [vmem:[%s4634 + $0x58] sm:$0xf]
        %v5371 = vld [vmem:[%s4634 + $0x60] sm:$0xf]
        %v5372 = vld [vmem:[%s4634 + $0x64] sm:$0xf]
        %v5373 = vld [vmem:[%s4634 + $0x6c] sm:$0xf]
        %v5374 = vld [vmem:[%s4634 + $0x70] sm:$0xf]
        %v5375 = vld [vmem:[%s4634 + $0x78] sm:$0xf]
        %v5376 = vld [vmem:[%s4634 + $0x7c] sm:$0xf]
        %v5377 = vld [vmem:[%s4634 + $0x84] sm:$0xf]
        %v5378 = vld [vmem:[%s4634 + $0x88] sm:$0xf]
        %v5379 = vld [vmem:[%s4634 + $0x90] sm:$0xf]
        %v5380 = vld [vmem:[%s4634 + $0x94] sm:$0xf]
        %v5381 = vld [vmem:[%s4634 + $0x9c] sm:$0xf]
        %v5382 = vld [vmem:[%s4634 + $0xa0] sm:$0xf]
        %v5383 = vld [vmem:[%s4634 + $0xa8] sm:$0xf]
        %v5384 = vld [vmem:[%s4634 + $0xac] sm:$0xf]
        %v5385 = vld [vmem:[%s4634 + $0xb4] sm:$0xf]
        %v5386 = vld [vmem:[%s4634 + $0xb8] sm:$0xf]
        %v5387 = vld [vmem:[%s4634 + $0x8] sm:$0x1]
        %v5388 = vld [vmem:[%s4634 + $0x14] sm:$0x1]
        %v5389 = vld [vmem:[%s4634 + $0x20] sm:$0x1]
        %v5390 = vld [vmem:[%s4634 + $0x2c] sm:$0x1]
        %v5391 = vld [vmem:[%s4634 + $0x38] sm:$0x1]
        %v5392 = vld [vmem:[%s4634 + $0x44] sm:$0x1]
        %v5393 = vld [vmem:[%s4634 + $0x50] sm:$0x1]
        %v5394 = vld [vmem:[%s4634 + $0x5c] sm:$0x1]
        %v5395 = vld [vmem:[%s4634 + $0x68] sm:$0x1]
        %v5396 = vld [vmem:[%s4634 + $0x74] sm:$0x1]
        %v5397 = vld [vmem:[%s4634 + $0x80] sm:$0x1]
        %v5398 = vld [vmem:[%s4634 + $0x8c] sm:$0x1]
        %v5399 = vld [vmem:[%s4634 + $0x98] sm:$0x1]
        %v5400 = vld [vmem:[%s4634 + $0xa4] sm:$0x1]
        %v5401 = vld [vmem:[%s4634 + $0xb0] sm:$0x1]
        %v5402 = vld [vmem:[%s4634 + $0xbc] sm:$0x1]
        %v5404 = vshrl.u32 %v5355, 16
        %v5406 = vrot.slane %v5404, 4
        %v5407 = vshll.u32 %v5355, 16
        %v5409 = vrot.slane %v5407, 5
        %v5410 = vor.u32 %v5406, %v5409
        %v5411 = vrot.slane %v5410, 4
        %v5413 = vshll.u32 %v5356, 16
        %v5415 = vrot.slane %v5413, 5
        %v5416 = vsel %vm899, %v5411, %v5415
        %v5417 = vshrl.u32 %v5356, 16
        %v5419 = vrot.slane %v5417, 4
        %v5420 = vor.u32 %v5419, %v5415
        %v5421 = vrot.slane %v5420, 4
        %v5423 = vshll.u32 %v5387, 16
        %v5425 = vrot.slane %v5423, 5
        %v5426 = vsel %vm899, %v5421, %v5425
        %v5428 = vshrl.u32 %v5357, 16
        %v5430 = vrot.slane %v5428, 4
        %v5431 = vshll.u32 %v5357, 16
        %v5433 = vrot.slane %v5431, 5
        %v5434 = vor.u32 %v5430, %v5433
        %v5435 = vrot.slane %v5434, 4
        %v5437 = vshll.u32 %v5358, 16
        %v5439 = vrot.slane %v5437, 5
        %v5440 = vsel %vm899, %v5435, %v5439
        %v5441 = vshrl.u32 %v5358, 16
        %v5443 = vrot.slane %v5441, 4
        %v5444 = vor.u32 %v5443, %v5439
        %v5445 = vrot.slane %v5444, 4
        %v5447 = vshll.u32 %v5388, 16
        %v5449 = vrot.slane %v5447, 5
        %v5450 = vsel %vm899, %v5445, %v5449
        %v5452 = vshrl.u32 %v5359, 16
        %v5454 = vrot.slane %v5452, 4
        %v5455 = vshll.u32 %v5359, 16
        %v5457 = vrot.slane %v5455, 5
        %v5458 = vor.u32 %v5454, %v5457
        %v5459 = vrot.slane %v5458, 4
        %v5461 = vshll.u32 %v5360, 16
        %v5463 = vrot.slane %v5461, 5
        %v5464 = vsel %vm899, %v5459, %v5463
        %v5465 = vshrl.u32 %v5360, 16
        %v5467 = vrot.slane %v5465, 4
        %v5468 = vor.u32 %v5467, %v5463
        %v5469 = vrot.slane %v5468, 4
        %v5471 = vshll.u32 %v5389, 16
        %v5473 = vrot.slane %v5471, 5
        %v5474 = vsel %vm899, %v5469, %v5473
        %v5476 = vshrl.u32 %v5361, 16
        %v5478 = vrot.slane %v5476, 4
        %v5479 = vshll.u32 %v5361, 16
        %v5481 = vrot.slane %v5479, 5
        %v5482 = vor.u32 %v5478, %v5481
        %v5483 = vrot.slane %v5482, 4
        %v5485 = vshll.u32 %v5362, 16
        %v5487 = vrot.slane %v5485, 5
        %v5488 = vsel %vm899, %v5483, %v5487
        %v5489 = vshrl.u32 %v5362, 16
        %v5491 = vrot.slane %v5489, 4
        %v5492 = vor.u32 %v5491, %v5487
        %v5493 = vrot.slane %v5492, 4
        %v5495 = vshll.u32 %v5390, 16
        %v5497 = vrot.slane %v5495, 5
        %v5498 = vsel %vm899, %v5493, %v5497
        %v5500 = vshrl.u32 %v5363, 16
        %v5502 = vrot.slane %v5500, 4
        %v5503 = vshll.u32 %v5363, 16
        %v5505 = vrot.slane %v5503, 5
        %v5506 = vor.u32 %v5502, %v5505
        %v5507 = vrot.slane %v5506, 4
        %v5509 = vshll.u32 %v5364, 16
        %v5511 = vrot.slane %v5509, 5
        %v5512 = vsel %vm899, %v5507, %v5511
        %v5513 = vshrl.u32 %v5364, 16
        %v5515 = vrot.slane %v5513, 4
        %v5516 = vor.u32 %v5515, %v5511
        %v5517 = vrot.slane %v5516, 4
        %v5519 = vshll.u32 %v5391, 16
        %v5521 = vrot.slane %v5519, 5
        %v5522 = vsel %vm899, %v5517, %v5521
        %v5524 = vshrl.u32 %v5365, 16
        %v5526 = vrot.slane %v5524, 4
        %v5527 = vshll.u32 %v5365, 16
        %v5529 = vrot.slane %v5527, 5
        %v5530 = vor.u32 %v5526, %v5529
        %v5531 = vrot.slane %v5530, 4
        %v5533 = vshll.u32 %v5366, 16
        %v5535 = vrot.slane %v5533, 5
        %v5536 = vsel %vm899, %v5531, %v5535
        %v5537 = vshrl.u32 %v5366, 16
        %v5539 = vrot.slane %v5537, 4
        %v5540 = vor.u32 %v5539, %v5535
        %v5541 = vrot.slane %v5540, 4
        %v5543 = vshll.u32 %v5392, 16
        %v5545 = vrot.slane %v5543, 5
        %v5546 = vsel %vm899, %v5541, %v5545
        %v5548 = vshrl.u32 %v5367, 16
        %v5550 = vrot.slane %v5548, 4
        %v5551 = vshll.u32 %v5367, 16
        %v5553 = vrot.slane %v5551, 5
        %v5554 = vor.u32 %v5550, %v5553
        %v5555 = vrot.slane %v5554, 4
        %v5557 = vshll.u32 %v5368, 16
        %v5559 = vrot.slane %v5557, 5
        %v5560 = vsel %vm899, %v5555, %v5559
        %v5561 = vshrl.u32 %v5368, 16
        %v5563 = vrot.slane %v5561, 4
        %v5564 = vor.u32 %v5563, %v5559
        %v5565 = vrot.slane %v5564, 4
        %v5567 = vshll.u32 %v5393, 16
        %v5569 = vrot.slane %v5567, 5
        %v5570 = vsel %vm899, %v5565, %v5569
        %v5572 = vshrl.u32 %v5369, 16
        %v5574 = vrot.slane %v5572, 4
        %v5575 = vshll.u32 %v5369, 16
        %v5577 = vrot.slane %v5575, 5
        %v5578 = vor.u32 %v5574, %v5577
        %v5579 = vrot.slane %v5578, 4
        %v5581 = vshll.u32 %v5370, 16
        %v5583 = vrot.slane %v5581, 5
        %v5584 = vsel %vm899, %v5579, %v5583
        %v5585 = vshrl.u32 %v5370, 16
        %v5587 = vrot.slane %v5585, 4
        %v5588 = vor.u32 %v5587, %v5583
        %v5589 = vrot.slane %v5588, 4
        %v5591 = vshll.u32 %v5394, 16
        %v5593 = vrot.slane %v5591, 5
        %v5594 = vsel %vm899, %v5589, %v5593
        %v5596 = vshrl.u32 %v5371, 16
        %v5598 = vrot.slane %v5596, 4
        %v5599 = vshll.u32 %v5371, 16
        %v5601 = vrot.slane %v5599, 5
        %v5602 = vor.u32 %v5598, %v5601
        %v5603 = vrot.slane %v5602, 4
        %v5605 = vshll.u32 %v5372, 16
        %v5607 = vrot.slane %v5605, 5
        %v5608 = vsel %vm899, %v5603, %v5607
        %v5609 = vshrl.u32 %v5372, 16
        %v5611 = vrot.slane %v5609, 4
        %v5612 = vor.u32 %v5611, %v5607
        %v5613 = vrot.slane %v5612, 4
        %v5615 = vshll.u32 %v5395, 16
        %v5617 = vrot.slane %v5615, 5
        %v5618 = vsel %vm899, %v5613, %v5617
        %v5620 = vshrl.u32 %v5373, 16
        %v5622 = vrot.slane %v5620, 4
        %v5623 = vshll.u32 %v5373, 16
        %v5625 = vrot.slane %v5623, 5
        %v5626 = vor.u32 %v5622, %v5625
        %v5627 = vrot.slane %v5626, 4
        %v5629 = vshll.u32 %v5374, 16
        %v5631 = vrot.slane %v5629, 5
        %v5632 = vsel %vm899, %v5627, %v5631
        %v5633 = vshrl.u32 %v5374, 16
        %v5635 = vrot.slane %v5633, 4
        %v5636 = vor.u32 %v5635, %v5631
        %v5637 = vrot.slane %v5636, 4
        %v5639 = vshll.u32 %v5396, 16
        %v5641 = vrot.slane %v5639, 5
        %v5642 = vsel %vm899, %v5637, %v5641
        %v5644 = vshrl.u32 %v5375, 16
        %v5646 = vrot.slane %v5644, 4
        %v5647 = vshll.u32 %v5375, 16
        %v5649 = vrot.slane %v5647, 5
        %v5650 = vor.u32 %v5646, %v5649
        %v5651 = vrot.slane %v5650, 4
        %v5653 = vshll.u32 %v5376, 16
        %v5655 = vrot.slane %v5653, 5
        %v5656 = vsel %vm899, %v5651, %v5655
        %v5657 = vshrl.u32 %v5376, 16
        %v5659 = vrot.slane %v5657, 4
        %v5660 = vor.u32 %v5659, %v5655
        %v5661 = vrot.slane %v5660, 4
        %v5663 = vshll.u32 %v5397, 16
        %v5665 = vrot.slane %v5663, 5
        %v5666 = vsel %vm899, %v5661, %v5665
        %v5668 = vshrl.u32 %v5377, 16
        %v5670 = vrot.slane %v5668, 4
        %v5671 = vshll.u32 %v5377, 16
        %v5673 = vrot.slane %v5671, 5
        %v5674 = vor.u32 %v5670, %v5673
        %v5675 = vrot.slane %v5674, 4
        %v5677 = vshll.u32 %v5378, 16
        %v5679 = vrot.slane %v5677, 5
        %v5680 = vsel %vm899, %v5675, %v5679
        %v5681 = vshrl.u32 %v5378, 16
        %v5683 = vrot.slane %v5681, 4
        %v5684 = vor.u32 %v5683, %v5679
        %v5685 = vrot.slane %v5684, 4
        %v5687 = vshll.u32 %v5398, 16
        %v5689 = vrot.slane %v5687, 5
        %v5690 = vsel %vm899, %v5685, %v5689
        %v5692 = vshrl.u32 %v5379, 16
        %v5694 = vrot.slane %v5692, 4
        %v5695 = vshll.u32 %v5379, 16
        %v5697 = vrot.slane %v5695, 5
        %v5698 = vor.u32 %v5694, %v5697
        %v5699 = vrot.slane %v5698, 4
        %v5701 = vshll.u32 %v5380, 16
        %v5703 = vrot.slane %v5701, 5
        %v5704 = vsel %vm899, %v5699, %v5703
        %v5705 = vshrl.u32 %v5380, 16
        %v5707 = vrot.slane %v5705, 4
        %v5708 = vor.u32 %v5707, %v5703
        %v5709 = vrot.slane %v5708, 4
        %v5711 = vshll.u32 %v5399, 16
        %v5713 = vrot.slane %v5711, 5
        %v5714 = vsel %vm899, %v5709, %v5713
        %v5716 = vshrl.u32 %v5381, 16
        %v5718 = vrot.slane %v5716, 4
        %v5719 = vshll.u32 %v5381, 16
        %v5721 = vrot.slane %v5719, 5
        %v5722 = vor.u32 %v5718, %v5721
        %v5723 = vrot.slane %v5722, 4
        %v5725 = vshll.u32 %v5382, 16
        %v5727 = vrot.slane %v5725, 5
        %v5728 = vsel %vm899, %v5723, %v5727
        %v5729 = vshrl.u32 %v5382, 16
        %v5731 = vrot.slane %v5729, 4
        %v5732 = vor.u32 %v5731, %v5727
        %v5733 = vrot.slane %v5732, 4
        %v5735 = vshll.u32 %v5400, 16
        %v5737 = vrot.slane %v5735, 5
        %v5738 = vsel %vm899, %v5733, %v5737
        %v5740 = vshrl.u32 %v5383, 16
        %v5742 = vrot.slane %v5740, 4
        %v5743 = vshll.u32 %v5383, 16
        %v5745 = vrot.slane %v5743, 5
        %v5746 = vor.u32 %v5742, %v5745
        %v5747 = vrot.slane %v5746, 4
        %v5749 = vshll.u32 %v5384, 16
        %v5751 = vrot.slane %v5749, 5
        %v5752 = vsel %vm899, %v5747, %v5751
        %v5753 = vshrl.u32 %v5384, 16
        %v5755 = vrot.slane %v5753, 4
        %v5756 = vor.u32 %v5755, %v5751
        %v5757 = vrot.slane %v5756, 4
        %v5759 = vshll.u32 %v5401, 16
        %v5761 = vrot.slane %v5759, 5
        %v5762 = vsel %vm899, %v5757, %v5761
        %v5764 = vshrl.u32 %v5385, 16
        %v5766 = vrot.slane %v5764, 4
        %v5767 = vshll.u32 %v5385, 16
        %v5769 = vrot.slane %v5767, 5
        %v5770 = vor.u32 %v5766, %v5769
        %v5771 = vrot.slane %v5770, 4
        %v5773 = vshll.u32 %v5386, 16
        %v5775 = vrot.slane %v5773, 5
        %v5776 = vsel %vm899, %v5771, %v5775
        %v5777 = vshrl.u32 %v5386, 16
        %v5779 = vrot.slane %v5777, 4
        %v5780 = vor.u32 %v5779, %v5775
        %v5781 = vrot.slane %v5780, 4
        %v5783 = vshll.u32 %v5402, 16
        %v5785 = vrot.slane %v5783, 5
        %v5786 = vsel %vm899, %v5781, %v5785
        %v5787 = vld [vmem:[%s4634] sm:$0xe]
        %v5788 = vld [vmem:[%s4634 + $0xc] sm:$0xe]
        %v5789 = vld [vmem:[%s4634 + $0x18] sm:$0xe]
        %v5790 = vld [vmem:[%s4634 + $0x24] sm:$0xe]
        %v5791 = vld [vmem:[%s4634 + $0x30] sm:$0xe]
        %v5792 = vld [vmem:[%s4634 + $0x3c] sm:$0xe]
        %v5793 = vld [vmem:[%s4634 + $0x48] sm:$0xe]
        %v5794 = vld [vmem:[%s4634 + $0x54] sm:$0xe]
        %v5795 = vld [vmem:[%s4634 + $0x60] sm:$0xe]
        %v5796 = vld [vmem:[%s4634 + $0x6c] sm:$0xe]
        %v5797 = vld [vmem:[%s4634 + $0x78] sm:$0xe]
        %v5798 = vld [vmem:[%s4634 + $0x84] sm:$0xe]
        %v5799 = vld [vmem:[%s4634 + $0x90] sm:$0xe]
        %v5800 = vld [vmem:[%s4634 + $0x9c] sm:$0xe]
        %v5801 = vld [vmem:[%s4634 + $0xa8] sm:$0xe]
        %v5802 = vld [vmem:[%s4634 + $0xb4] sm:$0xe]
        %v5851 = vrot.slane %v5787, 5
        %v5852 = vrot.slane %v5851, 4
        %v5853 = vrot.slane %v5356, 5
        %v5854 = vsel %vm1350, %v5852, %v5853
        %v5855 = vrot.slane %v5853, 4
        %v5856 = vrot.slane %v5387, 5
        %v5857 = vsel %vm1350, %v5855, %v5856
        %v5858 = vrot.slane %v5788, 5
        %v5859 = vrot.slane %v5858, 4
        %v5860 = vrot.slane %v5358, 5
        %v5861 = vsel %vm1350, %v5859, %v5860
        %v5862 = vrot.slane %v5860, 4
        %v5863 = vrot.slane %v5388, 5
        %v5864 = vsel %vm1350, %v5862, %v5863
        %v5865 = vrot.slane %v5789, 5
        %v5866 = vrot.slane %v5865, 4
        %v5867 = vrot.slane %v5360, 5
        %v5868 = vsel %vm1350, %v5866, %v5867
        %v5869 = vrot.slane %v5867, 4
        %v5870 = vrot.slane %v5389, 5
        %v5871 = vsel %vm1350, %v5869, %v5870
        %v5872 = vrot.slane %v5790, 5
        %v5873 = vrot.slane %v5872, 4
        %v5874 = vrot.slane %v5362, 5
        %v5875 = vsel %vm1350, %v5873, %v5874
        %v5876 = vrot.slane %v5874, 4
        %v5877 = vrot.slane %v5390, 5
        %v5878 = vsel %vm1350, %v5876, %v5877
        %v5879 = vrot.slane %v5791, 5
        %v5880 = vrot.slane %v5879, 4
        %v5881 = vrot.slane %v5364, 5
        %v5882 = vsel %vm1350, %v5880, %v5881
        %v5883 = vrot.slane %v5881, 4
        %v5884 = vrot.slane %v5391, 5
        %v5885 = vsel %vm1350, %v5883, %v5884
        %v5886 = vrot.slane %v5792, 5
        %v5887 = vrot.slane %v5886, 4
        %v5888 = vrot.slane %v5366, 5
        %v5889 = vsel %vm1350, %v5887, %v5888
        %v5890 = vrot.slane %v5888, 4
        %v5891 = vrot.slane %v5392, 5
        %v5892 = vsel %vm1350, %v5890, %v5891
        %v5893 = vrot.slane %v5793, 5
        %v5894 = vrot.slane %v5893, 4
        %v5895 = vrot.slane %v5368, 5
        %v5896 = vsel %vm1350, %v5894, %v5895
        %v5897 = vrot.slane %v5895, 4
        %v5898 = vrot.slane %v5393, 5
        %v5899 = vsel %vm1350, %v5897, %v5898
        %v5900 = vrot.slane %v5794, 5
        %v5901 = vrot.slane %v5900, 4
        %v5902 = vrot.slane %v5370, 5
        %v5903 = vsel %vm1350, %v5901, %v5902
        %v5904 = vrot.slane %v5902, 4
        %v5905 = vrot.slane %v5394, 5
        %v5906 = vsel %vm1350, %v5904, %v5905
        %v5907 = vrot.slane %v5795, 5
        %v5908 = vrot.slane %v5907, 4
        %v5909 = vrot.slane %v5372, 5
        %v5910 = vsel %vm1350, %v5908, %v5909
        %v5911 = vrot.slane %v5909, 4
        %v5912 = vrot.slane %v5395, 5
        %v5913 = vsel %vm1350, %v5911, %v5912
        %v5914 = vrot.slane %v5796, 5
        %v5915 = vrot.slane %v5914, 4
        %v5916 = vrot.slane %v5374, 5
        %v5917 = vsel %vm1350, %v5915, %v5916
        %v5918 = vrot.slane %v5916, 4
        %v5919 = vrot.slane %v5396, 5
        %v5920 = vsel %vm1350, %v5918, %v5919
        %v5921 = vrot.slane %v5797, 5
        %v5922 = vrot.slane %v5921, 4
        %v5923 = vrot.slane %v5376, 5
        %v5924 = vsel %vm1350, %v5922, %v5923
        %v5925 = vrot.slane %v5923, 4
        %v5926 = vrot.slane %v5397, 5
        %v5927 = vsel %vm1350, %v5925, %v5926
        %v5928 = vrot.slane %v5798, 5
        %v5929 = vrot.slane %v5928, 4
        %v5930 = vrot.slane %v5378, 5
        %v5931 = vsel %vm1350, %v5929, %v5930
        %v5932 = vrot.slane %v5930, 4
        %v5933 = vrot.slane %v5398, 5
        %v5934 = vsel %vm1350, %v5932, %v5933
        %v5935 = vrot.slane %v5799, 5
        %v5936 = vrot.slane %v5935, 4
        %v5937 = vrot.slane %v5380, 5
        %v5938 = vsel %vm1350, %v5936, %v5937
        %v5939 = vrot.slane %v5937, 4
        %v5940 = vrot.slane %v5399, 5
        %v5941 = vsel %vm1350, %v5939, %v5940
        %v5942 = vrot.slane %v5800, 5
        %v5943 = vrot.slane %v5942, 4
        %v5944 = vrot.slane %v5382, 5
        %v5945 = vsel %vm1350, %v5943, %v5944
        %v5946 = vrot.slane %v5944, 4
        %v5947 = vrot.slane %v5400, 5
        %v5948 = vsel %vm1350, %v5946, %v5947
        %v5949 = vrot.slane %v5801, 5
        %v5950 = vrot.slane %v5949, 4
        %v5951 = vrot.slane %v5384, 5
        %v5952 = vsel %vm1350, %v5950, %v5951
        %v5953 = vrot.slane %v5951, 4
        %v5954 = vrot.slane %v5401, 5
        %v5955 = vsel %vm1350, %v5953, %v5954
        %v5956 = vrot.slane %v5802, 5
        %v5957 = vrot.slane %v5956, 4
        %v5958 = vrot.slane %v5386, 5
        %v5959 = vsel %vm1350, %v5957, %v5958
        %v5960 = vrot.slane %v5958, 4
        %v5961 = vrot.slane %v5402, 5
        %v5962 = vsel %vm1350, %v5960, %v5961
        %s5963 = scalar_lea.vmem [#allocation3], 24
        %v5964 = vld [vmem:[%s5963] sm:$0xf]
        %v5965 = vld [vmem:[%s5963 + $0x4] sm:$0xf]
        %v5966 = vld [vmem:[%s5963 + $0xc] sm:$0xf]
        %v5967 = vld [vmem:[%s5963 + $0x10] sm:$0xf]
        %v5968 = vld [vmem:[%s5963 + $0x18] sm:$0xf]
        %v5969 = vld [vmem:[%s5963 + $0x1c] sm:$0xf]
        %v5970 = vld [vmem:[%s5963 + $0x24] sm:$0xf]
        %v5971 = vld [vmem:[%s5963 + $0x28] sm:$0xf]
        %v5972 = vld [vmem:[%s5963 + $0x30] sm:$0xf]
        %v5973 = vld [vmem:[%s5963 + $0x34] sm:$0xf]
        %v5974 = vld [vmem:[%s5963 + $0x3c] sm:$0xf]
        %v5975 = vld [vmem:[%s5963 + $0x40] sm:$0xf]
        %v5976 = vld [vmem:[%s5963 + $0x48] sm:$0xf]
        %v5977 = vld [vmem:[%s5963 + $0x4c] sm:$0xf]
        %v5978 = vld [vmem:[%s5963 + $0x54] sm:$0xf]
        %v5979 = vld [vmem:[%s5963 + $0x58] sm:$0xf]
        %v5980 = vld [vmem:[%s5963 + $0x60] sm:$0xf]
        %v5981 = vld [vmem:[%s5963 + $0x64] sm:$0xf]
        %v5982 = vld [vmem:[%s5963 + $0x6c] sm:$0xf]
        %v5983 = vld [vmem:[%s5963 + $0x70] sm:$0xf]
        %v5984 = vld [vmem:[%s5963 + $0x78] sm:$0xf]
        %v5985 = vld [vmem:[%s5963 + $0x7c] sm:$0xf]
        %v5986 = vld [vmem:[%s5963 + $0x84] sm:$0xf]
        %v5987 = vld [vmem:[%s5963 + $0x88] sm:$0xf]
        %v5988 = vld [vmem:[%s5963 + $0x90] sm:$0xf]
        %v5989 = vld [vmem:[%s5963 + $0x94] sm:$0xf]
        %v5990 = vld [vmem:[%s5963 + $0x9c] sm:$0xf]
        %v5991 = vld [vmem:[%s5963 + $0xa0] sm:$0xf]
        %v5992 = vld [vmem:[%s5963 + $0xa8] sm:$0xf]
        %v5993 = vld [vmem:[%s5963 + $0xac] sm:$0xf]
        %v5994 = vld [vmem:[%s5963 + $0xb4] sm:$0xf]
        %v5995 = vld [vmem:[%s5963 + $0xb8] sm:$0xf]
        %v5996 = vld [vmem:[%s5963 + $0x8] sm:$0x1]
        %v5997 = vld [vmem:[%s5963 + $0x14] sm:$0x1]
        %v5998 = vld [vmem:[%s5963 + $0x20] sm:$0x1]
        %v5999 = vld [vmem:[%s5963 + $0x2c] sm:$0x1]
        %v6000 = vld [vmem:[%s5963 + $0x38] sm:$0x1]
        %v6001 = vld [vmem:[%s5963 + $0x44] sm:$0x1]
        %v6002 = vld [vmem:[%s5963 + $0x50] sm:$0x1]
        %v6003 = vld [vmem:[%s5963 + $0x5c] sm:$0x1]
        %v6004 = vld [vmem:[%s5963 + $0x68] sm:$0x1]
        %v6005 = vld [vmem:[%s5963 + $0x74] sm:$0x1]
        %v6006 = vld [vmem:[%s5963 + $0x80] sm:$0x1]
        %v6007 = vld [vmem:[%s5963 + $0x8c] sm:$0x1]
        %v6008 = vld [vmem:[%s5963 + $0x98] sm:$0x1]
        %v6009 = vld [vmem:[%s5963 + $0xa4] sm:$0x1]
        %v6010 = vld [vmem:[%s5963 + $0xb0] sm:$0x1]
        %v6011 = vld [vmem:[%s5963 + $0xbc] sm:$0x1]
        %v6013 = vshrl.u32 %v5964, 16
        %v6015 = vrot.slane %v6013, 4
        %v6016 = vshll.u32 %v5964, 16
        %v6018 = vrot.slane %v6016, 5
        %v6019 = vor.u32 %v6015, %v6018
        %v6020 = vrot.slane %v6019, 4
        %v6022 = vshll.u32 %v5965, 16
        %v6024 = vrot.slane %v6022, 5
        %v6025 = vsel %vm899, %v6020, %v6024
        %v6026 = vshrl.u32 %v5965, 16
        %v6028 = vrot.slane %v6026, 4
        %v6029 = vor.u32 %v6028, %v6024
        %v6030 = vrot.slane %v6029, 4
        %v6032 = vshll.u32 %v5996, 16
        %v6034 = vrot.slane %v6032, 5
        %v6035 = vsel %vm899, %v6030, %v6034
        %v6037 = vshrl.u32 %v5966, 16
        %v6039 = vrot.slane %v6037, 4
        %v6040 = vshll.u32 %v5966, 16
        %v6042 = vrot.slane %v6040, 5
        %v6043 = vor.u32 %v6039, %v6042
        %v6044 = vrot.slane %v6043, 4
        %v6046 = vshll.u32 %v5967, 16
        %v6048 = vrot.slane %v6046, 5
        %v6049 = vsel %vm899, %v6044, %v6048
        %v6050 = vshrl.u32 %v5967, 16
        %v6052 = vrot.slane %v6050, 4
        %v6053 = vor.u32 %v6052, %v6048
        %v6054 = vrot.slane %v6053, 4
        %v6056 = vshll.u32 %v5997, 16
        %v6058 = vrot.slane %v6056, 5
        %v6059 = vsel %vm899, %v6054, %v6058
        %v6061 = vshrl.u32 %v5968, 16
        %v6063 = vrot.slane %v6061, 4
        %v6064 = vshll.u32 %v5968, 16
        %v6066 = vrot.slane %v6064, 5
        %v6067 = vor.u32 %v6063, %v6066
        %v6068 = vrot.slane %v6067, 4
        %v6070 = vshll.u32 %v5969, 16
        %v6072 = vrot.slane %v6070, 5
        %v6073 = vsel %vm899, %v6068, %v6072
        %v6074 = vshrl.u32 %v5969, 16
        %v6076 = vrot.slane %v6074, 4
        %v6077 = vor.u32 %v6076, %v6072
        %v6078 = vrot.slane %v6077, 4
        %v6080 = vshll.u32 %v5998, 16
        %v6082 = vrot.slane %v6080, 5
        %v6083 = vsel %vm899, %v6078, %v6082
        %v6085 = vshrl.u32 %v5970, 16
        %v6087 = vrot.slane %v6085, 4
        %v6088 = vshll.u32 %v5970, 16
        %v6090 = vrot.slane %v6088, 5
        %v6091 = vor.u32 %v6087, %v6090
        %v6092 = vrot.slane %v6091, 4
        %v6094 = vshll.u32 %v5971, 16
        %v6096 = vrot.slane %v6094, 5
        %v6097 = vsel %vm899, %v6092, %v6096
        %v6098 = vshrl.u32 %v5971, 16
        %v6100 = vrot.slane %v6098, 4
        %v6101 = vor.u32 %v6100, %v6096
        %v6102 = vrot.slane %v6101, 4
        %v6104 = vshll.u32 %v5999, 16
        %v6106 = vrot.slane %v6104, 5
        %v6107 = vsel %vm899, %v6102, %v6106
        %v6109 = vshrl.u32 %v5972, 16
        %v6111 = vrot.slane %v6109, 4
        %v6112 = vshll.u32 %v5972, 16
        %v6114 = vrot.slane %v6112, 5
        %v6115 = vor.u32 %v6111, %v6114
        %v6116 = vrot.slane %v6115, 4
        %v6118 = vshll.u32 %v5973, 16
        %v6120 = vrot.slane %v6118, 5
        %v6121 = vsel %vm899, %v6116, %v6120
        %v6122 = vshrl.u32 %v5973, 16
        %v6124 = vrot.slane %v6122, 4
        %v6125 = vor.u32 %v6124, %v6120
        %v6126 = vrot.slane %v6125, 4
        %v6128 = vshll.u32 %v6000, 16
        %v6130 = vrot.slane %v6128, 5
        %v6131 = vsel %vm899, %v6126, %v6130
        %v6133 = vshrl.u32 %v5974, 16
        %v6135 = vrot.slane %v6133, 4
        %v6136 = vshll.u32 %v5974, 16
        %v6138 = vrot.slane %v6136, 5
        %v6139 = vor.u32 %v6135, %v6138
        %v6140 = vrot.slane %v6139, 4
        %v6142 = vshll.u32 %v5975, 16
        %v6144 = vrot.slane %v6142, 5
        %v6145 = vsel %vm899, %v6140, %v6144
        %v6146 = vshrl.u32 %v5975, 16
        %v6148 = vrot.slane %v6146, 4
        %v6149 = vor.u32 %v6148, %v6144
        %v6150 = vrot.slane %v6149, 4
        %v6152 = vshll.u32 %v6001, 16
        %v6154 = vrot.slane %v6152, 5
        %v6155 = vsel %vm899, %v6150, %v6154
        %v6157 = vshrl.u32 %v5976, 16
        %v6159 = vrot.slane %v6157, 4
        %v6160 = vshll.u32 %v5976, 16
        %v6162 = vrot.slane %v6160, 5
        %v6163 = vor.u32 %v6159, %v6162
        %v6164 = vrot.slane %v6163, 4
        %v6166 = vshll.u32 %v5977, 16
        %v6168 = vrot.slane %v6166, 5
        %v6169 = vsel %vm899, %v6164, %v6168
        %v6170 = vshrl.u32 %v5977, 16
        %v6172 = vrot.slane %v6170, 4
        %v6173 = vor.u32 %v6172, %v6168
        %v6174 = vrot.slane %v6173, 4
        %v6176 = vshll.u32 %v6002, 16
        %v6178 = vrot.slane %v6176, 5
        %v6179 = vsel %vm899, %v6174, %v6178
        %v6181 = vshrl.u32 %v5978, 16
        %v6183 = vrot.slane %v6181, 4
        %v6184 = vshll.u32 %v5978, 16
        %v6186 = vrot.slane %v6184, 5
        %v6187 = vor.u32 %v6183, %v6186
        %v6188 = vrot.slane %v6187, 4
        %v6190 = vshll.u32 %v5979, 16
        %v6192 = vrot.slane %v6190, 5
        %v6193 = vsel %vm899, %v6188, %v6192
        %v6194 = vshrl.u32 %v5979, 16
        %v6196 = vrot.slane %v6194, 4
        %v6197 = vor.u32 %v6196, %v6192
        %v6198 = vrot.slane %v6197, 4
        %v6200 = vshll.u32 %v6003, 16
        %v6202 = vrot.slane %v6200, 5
        %v6203 = vsel %vm899, %v6198, %v6202
        %v6205 = vshrl.u32 %v5980, 16
        %v6207 = vrot.slane %v6205, 4
        %v6208 = vshll.u32 %v5980, 16
        %v6210 = vrot.slane %v6208, 5
        %v6211 = vor.u32 %v6207, %v6210
        %v6212 = vrot.slane %v6211, 4
        %v6214 = vshll.u32 %v5981, 16
        %v6216 = vrot.slane %v6214, 5
        %v6217 = vsel %vm899, %v6212, %v6216
        %v6218 = vshrl.u32 %v5981, 16
        %v6220 = vrot.slane %v6218, 4
        %v6221 = vor.u32 %v6220, %v6216
        %v6222 = vrot.slane %v6221, 4
        %v6224 = vshll.u32 %v6004, 16
        %v6226 = vrot.slane %v6224, 5
        %v6227 = vsel %vm899, %v6222, %v6226
        %v6229 = vshrl.u32 %v5982, 16
        %v6231 = vrot.slane %v6229, 4
        %v6232 = vshll.u32 %v5982, 16
        %v6234 = vrot.slane %v6232, 5
        %v6235 = vor.u32 %v6231, %v6234
        %v6236 = vrot.slane %v6235, 4
        %v6238 = vshll.u32 %v5983, 16
        %v6240 = vrot.slane %v6238, 5
        %v6241 = vsel %vm899, %v6236, %v6240
        %v6242 = vshrl.u32 %v5983, 16
        %v6244 = vrot.slane %v6242, 4
        %v6245 = vor.u32 %v6244, %v6240
        %v6246 = vrot.slane %v6245, 4
        %v6248 = vshll.u32 %v6005, 16
        %v6250 = vrot.slane %v6248, 5
        %v6251 = vsel %vm899, %v6246, %v6250
        %v6253 = vshrl.u32 %v5984, 16
        %v6255 = vrot.slane %v6253, 4
        %v6256 = vshll.u32 %v5984, 16
        %v6258 = vrot.slane %v6256, 5
        %v6259 = vor.u32 %v6255, %v6258
        %v6260 = vrot.slane %v6259, 4
        %v6262 = vshll.u32 %v5985, 16
        %v6264 = vrot.slane %v6262, 5
        %v6265 = vsel %vm899, %v6260, %v6264
        %v6266 = vshrl.u32 %v5985, 16
        %v6268 = vrot.slane %v6266, 4
        %v6269 = vor.u32 %v6268, %v6264
        %v6270 = vrot.slane %v6269, 4
        %v6272 = vshll.u32 %v6006, 16
        %v6274 = vrot.slane %v6272, 5
        %v6275 = vsel %vm899, %v6270, %v6274
        %v6277 = vshrl.u32 %v5986, 16
        %v6279 = vrot.slane %v6277, 4
        %v6280 = vshll.u32 %v5986, 16
        %v6282 = vrot.slane %v6280, 5
        %v6283 = vor.u32 %v6279, %v6282
        %v6284 = vrot.slane %v6283, 4
        %v6286 = vshll.u32 %v5987, 16
        %v6288 = vrot.slane %v6286, 5
        %v6289 = vsel %vm899, %v6284, %v6288
        %v6290 = vshrl.u32 %v5987, 16
        %v6292 = vrot.slane %v6290, 4
        %v6293 = vor.u32 %v6292, %v6288
        %v6294 = vrot.slane %v6293, 4
        %v6296 = vshll.u32 %v6007, 16
        %v6298 = vrot.slane %v6296, 5
        %v6299 = vsel %vm899, %v6294, %v6298
        %v6301 = vshrl.u32 %v5988, 16
        %v6303 = vrot.slane %v6301, 4
        %v6304 = vshll.u32 %v5988, 16
        %v6306 = vrot.slane %v6304, 5
        %v6307 = vor.u32 %v6303, %v6306
        %v6308 = vrot.slane %v6307, 4
        %v6310 = vshll.u32 %v5989, 16
        %v6312 = vrot.slane %v6310, 5
        %v6313 = vsel %vm899, %v6308, %v6312
        %v6314 = vshrl.u32 %v5989, 16
        %v6316 = vrot.slane %v6314, 4
        %v6317 = vor.u32 %v6316, %v6312
        %v6318 = vrot.slane %v6317, 4
        %v6320 = vshll.u32 %v6008, 16
        %v6322 = vrot.slane %v6320, 5
        %v6323 = vsel %vm899, %v6318, %v6322
        %v6325 = vshrl.u32 %v5990, 16
        %v6327 = vrot.slane %v6325, 4
        %v6328 = vshll.u32 %v5990, 16
        %v6330 = vrot.slane %v6328, 5
        %v6331 = vor.u32 %v6327, %v6330
        %v6332 = vrot.slane %v6331, 4
        %v6334 = vshll.u32 %v5991, 16
        %v6336 = vrot.slane %v6334, 5
        %v6337 = vsel %vm899, %v6332, %v6336
        %v6338 = vshrl.u32 %v5991, 16
        %v6340 = vrot.slane %v6338, 4
        %v6341 = vor.u32 %v6340, %v6336
        %v6342 = vrot.slane %v6341, 4
        %v6344 = vshll.u32 %v6009, 16
        %v6346 = vrot.slane %v6344, 5
        %v6347 = vsel %vm899, %v6342, %v6346
        %v6349 = vshrl.u32 %v5992, 16
        %v6351 = vrot.slane %v6349, 4
        %v6352 = vshll.u32 %v5992, 16
        %v6354 = vrot.slane %v6352, 5
        %v6355 = vor.u32 %v6351, %v6354
        %v6356 = vrot.slane %v6355, 4
        %v6358 = vshll.u32 %v5993, 16
        %v6360 = vrot.slane %v6358, 5
        %v6361 = vsel %vm899, %v6356, %v6360
        %v6362 = vshrl.u32 %v5993, 16
        %v6364 = vrot.slane %v6362, 4
        %v6365 = vor.u32 %v6364, %v6360
        %v6366 = vrot.slane %v6365, 4
        %v6368 = vshll.u32 %v6010, 16
        %v6370 = vrot.slane %v6368, 5
        %v6371 = vsel %vm899, %v6366, %v6370
        %v6373 = vshrl.u32 %v5994, 16
        %v6375 = vrot.slane %v6373, 4
        %v6376 = vshll.u32 %v5994, 16
        %v6378 = vrot.slane %v6376, 5
        %v6379 = vor.u32 %v6375, %v6378
        %v6380 = vrot.slane %v6379, 4
        %v6382 = vshll.u32 %v5995, 16
        %v6384 = vrot.slane %v6382, 5
        %v6385 = vsel %vm899, %v6380, %v6384
        %v6386 = vshrl.u32 %v5995, 16
        %v6388 = vrot.slane %v6386, 4
        %v6389 = vor.u32 %v6388, %v6384
        %v6390 = vrot.slane %v6389, 4
        %v6392 = vshll.u32 %v6011, 16
        %v6394 = vrot.slane %v6392, 5
        %v6395 = vsel %vm899, %v6390, %v6394
        %v6396 = vld [vmem:[%s5963] sm:$0xe]
        %v6397 = vld [vmem:[%s5963 + $0xc] sm:$0xe]
        %v6398 = vld [vmem:[%s5963 + $0x18] sm:$0xe]
        %v6399 = vld [vmem:[%s5963 + $0x24] sm:$0xe]
        %v6400 = vld [vmem:[%s5963 + $0x30] sm:$0xe]
        %v6401 = vld [vmem:[%s5963 + $0x3c] sm:$0xe]
        %v6402 = vld [vmem:[%s5963 + $0x48] sm:$0xe]
        %v6403 = vld [vmem:[%s5963 + $0x54] sm:$0xe]
        %v6404 = vld [vmem:[%s5963 + $0x60] sm:$0xe]
        %v6405 = vld [vmem:[%s5963 + $0x6c] sm:$0xe]
        %v6406 = vld [vmem:[%s5963 + $0x78] sm:$0xe]
        %v6407 = vld [vmem:[%s5963 + $0x84] sm:$0xe]
        %v6408 = vld [vmem:[%s5963 + $0x90] sm:$0xe]
        %v6409 = vld [vmem:[%s5963 + $0x9c] sm:$0xe]
        %v6410 = vld [vmem:[%s5963 + $0xa8] sm:$0xe]
        %v6411 = vld [vmem:[%s5963 + $0xb4] sm:$0xe]
        %v6460 = vrot.slane %v6396, 5
        %v6461 = vrot.slane %v6460, 4
        %v6462 = vrot.slane %v5965, 5
        %v6463 = vsel %vm1350, %v6461, %v6462
        %v6464 = vrot.slane %v6462, 4
        %v6465 = vrot.slane %v5996, 5
        %v6466 = vsel %vm1350, %v6464, %v6465
        %v6467 = vrot.slane %v6397, 5
        %v6468 = vrot.slane %v6467, 4
        %v6469 = vrot.slane %v5967, 5
        %v6470 = vsel %vm1350, %v6468, %v6469
        %v6471 = vrot.slane %v6469, 4
        %v6472 = vrot.slane %v5997, 5
        %v6473 = vsel %vm1350, %v6471, %v6472
        %v6474 = vrot.slane %v6398, 5
        %v6475 = vrot.slane %v6474, 4
        %v6476 = vrot.slane %v5969, 5
        %v6477 = vsel %vm1350, %v6475, %v6476
        %v6478 = vrot.slane %v6476, 4
        %v6479 = vrot.slane %v5998, 5
        %v6480 = vsel %vm1350, %v6478, %v6479
        %v6481 = vrot.slane %v6399, 5
        %v6482 = vrot.slane %v6481, 4
        %v6483 = vrot.slane %v5971, 5
        %v6484 = vsel %vm1350, %v6482, %v6483
        %v6485 = vrot.slane %v6483, 4
        %v6486 = vrot.slane %v5999, 5
        %v6487 = vsel %vm1350, %v6485, %v6486
        %v6488 = vrot.slane %v6400, 5
        %v6489 = vrot.slane %v6488, 4
        %v6490 = vrot.slane %v5973, 5
        %v6491 = vsel %vm1350, %v6489, %v6490
        %v6492 = vrot.slane %v6490, 4
        %v6493 = vrot.slane %v6000, 5
        %v6494 = vsel %vm1350, %v6492, %v6493
        %v6495 = vrot.slane %v6401, 5
        %v6496 = vrot.slane %v6495, 4
        %v6497 = vrot.slane %v5975, 5
        %v6498 = vsel %vm1350, %v6496, %v6497
        %v6499 = vrot.slane %v6497, 4
        %v6500 = vrot.slane %v6001, 5
        %v6501 = vsel %vm1350, %v6499, %v6500
        %v6502 = vrot.slane %v6402, 5
        %v6503 = vrot.slane %v6502, 4
        %v6504 = vrot.slane %v5977, 5
        %v6505 = vsel %vm1350, %v6503, %v6504
        %v6506 = vrot.slane %v6504, 4
        %v6507 = vrot.slane %v6002, 5
        %v6508 = vsel %vm1350, %v6506, %v6507
        %v6509 = vrot.slane %v6403, 5
        %v6510 = vrot.slane %v6509, 4
        %v6511 = vrot.slane %v5979, 5
        %v6512 = vsel %vm1350, %v6510, %v6511
        %v6513 = vrot.slane %v6511, 4
        %v6514 = vrot.slane %v6003, 5
        %v6515 = vsel %vm1350, %v6513, %v6514
        %v6516 = vrot.slane %v6404, 5
        %v6517 = vrot.slane %v6516, 4
        %v6518 = vrot.slane %v5981, 5
        %v6519 = vsel %vm1350, %v6517, %v6518
        %v6520 = vrot.slane %v6518, 4
        %v6521 = vrot.slane %v6004, 5
        %v6522 = vsel %vm1350, %v6520, %v6521
        %v6523 = vrot.slane %v6405, 5
        %v6524 = vrot.slane %v6523, 4
        %v6525 = vrot.slane %v5983, 5
        %v6526 = vsel %vm1350, %v6524, %v6525
        %v6527 = vrot.slane %v6525, 4
        %v6528 = vrot.slane %v6005, 5
        %v6529 = vsel %vm1350, %v6527, %v6528
        %v6530 = vrot.slane %v6406, 5
        %v6531 = vrot.slane %v6530, 4
        %v6532 = vrot.slane %v5985, 5
        %v6533 = vsel %vm1350, %v6531, %v6532
        %v6534 = vrot.slane %v6532, 4
        %v6535 = vrot.slane %v6006, 5
        %v6536 = vsel %vm1350, %v6534, %v6535
        %v6537 = vrot.slane %v6407, 5
        %v6538 = vrot.slane %v6537, 4
        %v6539 = vrot.slane %v5987, 5
        %v6540 = vsel %vm1350, %v6538, %v6539
        %v6541 = vrot.slane %v6539, 4
        %v6542 = vrot.slane %v6007, 5
        %v6543 = vsel %vm1350, %v6541, %v6542
        %v6544 = vrot.slane %v6408, 5
        %v6545 = vrot.slane %v6544, 4
        %v6546 = vrot.slane %v5989, 5
        %v6547 = vsel %vm1350, %v6545, %v6546
        %v6548 = vrot.slane %v6546, 4
        %v6549 = vrot.slane %v6008, 5
        %v6550 = vsel %vm1350, %v6548, %v6549
        %v6551 = vrot.slane %v6409, 5
        %v6552 = vrot.slane %v6551, 4
        %v6553 = vrot.slane %v5991, 5
        %v6554 = vsel %vm1350, %v6552, %v6553
        %v6555 = vrot.slane %v6553, 4
        %v6556 = vrot.slane %v6009, 5
        %v6557 = vsel %vm1350, %v6555, %v6556
        %v6558 = vrot.slane %v6410, 5
        %v6559 = vrot.slane %v6558, 4
        %v6560 = vrot.slane %v5993, 5
        %v6561 = vsel %vm1350, %v6559, %v6560
        %v6562 = vrot.slane %v6560, 4
        %v6563 = vrot.slane %v6010, 5
        %v6564 = vsel %vm1350, %v6562, %v6563
        %v6565 = vrot.slane %v6411, 5
        %v6566 = vrot.slane %v6565, 4
        %v6567 = vrot.slane %v5995, 5
        %v6568 = vsel %vm1350, %v6566, %v6567
        %v6569 = vrot.slane %v6567, 4
        %v6570 = vrot.slane %v6011, 5
        %v6571 = vsel %vm1350, %v6569, %v6570
        %v6588 = vunpack.c.l.b16 %v4747
        %v6589 = vunpack.c.l.b16 %v4748
        %v6590 = vunpack.c.l.b16 %v4749
        %v6591 = vunpack.c.l.b16 %v4750
        %v6592 = vunpack.c.l.b16 %v4751
        %v6593 = vunpack.c.l.b16 %v4752
        %v6594 = vunpack.c.l.b16 %v4753
        %v6595 = vunpack.c.l.b16 %v4754
        %v6596 = vunpack.c.l.b16 %v4755
        %v6597 = vunpack.c.l.b16 %v4756
        %v6598 = vunpack.c.l.b16 %v4757
        %v6599 = vunpack.c.l.b16 %v4758
        %v6600 = vunpack.c.l.b16 %v4759
        %v6601 = vunpack.c.l.b16 %v4760
        %v6602 = vunpack.c.l.b16 %v4761
        %v6603 = vunpack.c.l.b16 %v4762
        %v6604 = vunpack.c.l.b16 %v4763
        %v6605 = vunpack.c.l.b16 %v4764
        %v6606 = vunpack.c.l.b16 %v4765
        %v6607 = vunpack.c.l.b16 %v4766
        %v6608 = vunpack.c.l.b16 %v4767
        %v6609 = vunpack.c.l.b16 %v4768
        %v6610 = vunpack.c.l.b16 %v4769
        %v6611 = vunpack.c.l.b16 %v4770
        %v6612 = vunpack.c.l.b16 %v4771
        %v6613 = vunpack.c.l.b16 %v4772
        %v6614 = vunpack.c.l.b16 %v4773
        %v6615 = vunpack.c.l.b16 %v4774
        %v6616 = vunpack.c.l.b16 %v4775
        %v6617 = vunpack.c.l.b16 %v4776
        %v6618 = vunpack.c.l.b16 %v4777
        %v6619 = vunpack.c.l.b16 %v4778
        %v6620 = vpack.c.b16 %v6589, %v6588
        %v6621 = vpack.c.b16 %v6591, %v6590
        %v6622 = vpack.c.b16 %v6593, %v6592
        %v6623 = vpack.c.b16 %v6595, %v6594
        %v6624 = vpack.c.b16 %v6597, %v6596
        %v6625 = vpack.c.b16 %v6599, %v6598
        %v6626 = vpack.c.b16 %v6601, %v6600
        %v6627 = vpack.c.b16 %v6603, %v6602
        %v6628 = vpack.c.b16 %v6605, %v6604
        %v6629 = vpack.c.b16 %v6607, %v6606
        %v6630 = vpack.c.b16 %v6609, %v6608
        %v6631 = vpack.c.b16 %v6611, %v6610
        %v6632 = vpack.c.b16 %v6613, %v6612
        %v6633 = vpack.c.b16 %v6615, %v6614
        %v6634 = vpack.c.b16 %v6617, %v6616
        %v6635 = vpack.c.b16 %v6619, %v6618
        %v6636 = vunpack.c.l.b16 %v4808
        %v6637 = vunpack.c.l.b16 %v4818
        %v6638 = vunpack.c.l.b16 %v4832
        %v6639 = vunpack.c.l.b16 %v4842
        %v6640 = vunpack.c.l.b16 %v4856
        %v6641 = vunpack.c.l.b16 %v4866
        %v6642 = vunpack.c.l.b16 %v4880
        %v6643 = vunpack.c.l.b16 %v4890
        %v6644 = vunpack.c.l.b16 %v4904
        %v6645 = vunpack.c.l.b16 %v4914
        %v6646 = vunpack.c.l.b16 %v4928
        %v6647 = vunpack.c.l.b16 %v4938
        %v6648 = vunpack.c.l.b16 %v4952
        %v6649 = vunpack.c.l.b16 %v4962
        %v6650 = vunpack.c.l.b16 %v4976
        %v6651 = vunpack.c.l.b16 %v4986
        %v6652 = vunpack.c.l.b16 %v5000
        %v6653 = vunpack.c.l.b16 %v5010
        %v6654 = vunpack.c.l.b16 %v5024
        %v6655 = vunpack.c.l.b16 %v5034
        %v6656 = vunpack.c.l.b16 %v5048
        %v6657 = vunpack.c.l.b16 %v5058
        %v6658 = vunpack.c.l.b16 %v5072
        %v6659 = vunpack.c.l.b16 %v5082
        %v6660 = vunpack.c.l.b16 %v5096
        %v6661 = vunpack.c.l.b16 %v5106
        %v6662 = vunpack.c.l.b16 %v5120
        %v6663 = vunpack.c.l.b16 %v5130
        %v6664 = vunpack.c.l.b16 %v5144
        %v6665 = vunpack.c.l.b16 %v5154
        %v6666 = vunpack.c.l.b16 %v5168
        %v6667 = vunpack.c.l.b16 %v5178
        %v6668 = vpack.c.b16 %v6637, %v6636
        %v6669 = vpack.c.b16 %v6639, %v6638
        %v6670 = vpack.c.b16 %v6641, %v6640
        %v6671 = vpack.c.b16 %v6643, %v6642
        %v6672 = vpack.c.b16 %v6645, %v6644
        %v6673 = vpack.c.b16 %v6647, %v6646
        %v6674 = vpack.c.b16 %v6649, %v6648
        %v6675 = vpack.c.b16 %v6651, %v6650
        %v6676 = vpack.c.b16 %v6653, %v6652
        %v6677 = vpack.c.b16 %v6655, %v6654
        %v6678 = vpack.c.b16 %v6657, %v6656
        %v6679 = vpack.c.b16 %v6659, %v6658
        %v6680 = vpack.c.b16 %v6661, %v6660
        %v6681 = vpack.c.b16 %v6663, %v6662
        %v6682 = vpack.c.b16 %v6665, %v6664
        %v6683 = vpack.c.b16 %v6667, %v6666
        %6684 = vrot.lane.b32.xlu0 %v6668, 32
        %v6685 = vpop.permute.xlu0 %6684
        %6686 = vrot.lane.b32.xlu0 %v6669, 32
        %v6687 = vpop.permute.xlu0 %6686
        %6688 = vrot.lane.b32.xlu0 %v6670, 32
        %v6689 = vpop.permute.xlu0 %6688
        %6690 = vrot.lane.b32.xlu0 %v6671, 32
        %v6691 = vpop.permute.xlu0 %6690
        %6692 = vrot.lane.b32.xlu0 %v6672, 32
        %v6693 = vpop.permute.xlu0 %6692
        %6694 = vrot.lane.b32.xlu0 %v6673, 32
        %v6695 = vpop.permute.xlu0 %6694
        %6696 = vrot.lane.b32.xlu0 %v6674, 32
        %v6697 = vpop.permute.xlu0 %6696
        %6698 = vrot.lane.b32.xlu0 %v6675, 32
        %v6699 = vpop.permute.xlu0 %6698
        %6700 = vrot.lane.b32.xlu0 %v6676, 32
        %v6701 = vpop.permute.xlu0 %6700
        %6702 = vrot.lane.b32.xlu0 %v6677, 32
        %v6703 = vpop.permute.xlu0 %6702
        %6704 = vrot.lane.b32.xlu0 %v6678, 32
        %v6705 = vpop.permute.xlu0 %6704
        %6706 = vrot.lane.b32.xlu0 %v6679, 32
        %v6707 = vpop.permute.xlu0 %6706
        %6708 = vrot.lane.b32.xlu0 %v6680, 32
        %v6709 = vpop.permute.xlu0 %6708
        %6710 = vrot.lane.b32.xlu0 %v6681, 32
        %v6711 = vpop.permute.xlu0 %6710
        %6712 = vrot.lane.b32.xlu0 %v6682, 32
        %v6713 = vpop.permute.xlu0 %6712
        %6714 = vrot.lane.b32.xlu0 %v6683, 32
        %v6715 = vpop.permute.xlu0 %6714
        %v6716 = vunpack.c.l.b16 %v5246
        %v6717 = vunpack.c.l.b16 %v5249
        %v6718 = vunpack.c.l.b16 %v5253
        %v6719 = vunpack.c.l.b16 %v5256
        %v6720 = vunpack.c.l.b16 %v5260
        %v6721 = vunpack.c.l.b16 %v5263
        %v6722 = vunpack.c.l.b16 %v5267
        %v6723 = vunpack.c.l.b16 %v5270
        %v6724 = vunpack.c.l.b16 %v5274
        %v6725 = vunpack.c.l.b16 %v5277
        %v6726 = vunpack.c.l.b16 %v5281
        %v6727 = vunpack.c.l.b16 %v5284
        %v6728 = vunpack.c.l.b16 %v5288
        %v6729 = vunpack.c.l.b16 %v5291
        %v6730 = vunpack.c.l.b16 %v5295
        %v6731 = vunpack.c.l.b16 %v5298
        %v6732 = vunpack.c.l.b16 %v5302
        %v6733 = vunpack.c.l.b16 %v5305
        %v6734 = vunpack.c.l.b16 %v5309
        %v6735 = vunpack.c.l.b16 %v5312
        %v6736 = vunpack.c.l.b16 %v5316
        %v6737 = vunpack.c.l.b16 %v5319
        %v6738 = vunpack.c.l.b16 %v5323
        %v6739 = vunpack.c.l.b16 %v5326
        %v6740 = vunpack.c.l.b16 %v5330
        %v6741 = vunpack.c.l.b16 %v5333
        %v6742 = vunpack.c.l.b16 %v5337
        %v6743 = vunpack.c.l.b16 %v5340
        %v6744 = vunpack.c.l.b16 %v5344
        %v6745 = vunpack.c.l.b16 %v5347
        %v6746 = vunpack.c.l.b16 %v5351
        %v6747 = vunpack.c.l.b16 %v5354
        %v6748 = vpack.c.b16 %v6717, %v6716
        %v6749 = vpack.c.b16 %v6719, %v6718
        %v6750 = vpack.c.b16 %v6721, %v6720
        %v6751 = vpack.c.b16 %v6723, %v6722
        %v6752 = vpack.c.b16 %v6725, %v6724
        %v6753 = vpack.c.b16 %v6727, %v6726
        %v6754 = vpack.c.b16 %v6729, %v6728
        %v6755 = vpack.c.b16 %v6731, %v6730
        %v6756 = vpack.c.b16 %v6733, %v6732
        %v6757 = vpack.c.b16 %v6735, %v6734
        %v6758 = vpack.c.b16 %v6737, %v6736
        %v6759 = vpack.c.b16 %v6739, %v6738
        %v6760 = vpack.c.b16 %v6741, %v6740
        %v6761 = vpack.c.b16 %v6743, %v6742
        %v6762 = vpack.c.b16 %v6745, %v6744
        %v6763 = vpack.c.b16 %v6747, %v6746
        %6764 = vrot.lane.b32.xlu0 %v6748, 64
        %v6765 = vpop.permute.xlu0 %6764
        %6766 = vrot.lane.b32.xlu0 %v6749, 64
        %v6767 = vpop.permute.xlu0 %6766
        %6768 = vrot.lane.b32.xlu0 %v6750, 64
        %v6769 = vpop.permute.xlu0 %6768
        %6770 = vrot.lane.b32.xlu0 %v6751, 64
        %v6771 = vpop.permute.xlu0 %6770
        %6772 = vrot.lane.b32.xlu0 %v6752, 64
        %v6773 = vpop.permute.xlu0 %6772
        %6774 = vrot.lane.b32.xlu0 %v6753, 64
        %v6775 = vpop.permute.xlu0 %6774
        %6776 = vrot.lane.b32.xlu0 %v6754, 64
        %v6777 = vpop.permute.xlu0 %6776
        %6778 = vrot.lane.b32.xlu0 %v6755, 64
        %v6779 = vpop.permute.xlu0 %6778
        %6780 = vrot.lane.b32.xlu0 %v6756, 64
        %v6781 = vpop.permute.xlu0 %6780
        %6782 = vrot.lane.b32.xlu0 %v6757, 64
        %v6783 = vpop.permute.xlu0 %6782
        %6784 = vrot.lane.b32.xlu0 %v6758, 64
        %v6785 = vpop.permute.xlu0 %6784
        %6786 = vrot.lane.b32.xlu0 %v6759, 64
        %v6787 = vpop.permute.xlu0 %6786
        %6788 = vrot.lane.b32.xlu0 %v6760, 64
        %v6789 = vpop.permute.xlu0 %6788
        %6790 = vrot.lane.b32.xlu0 %v6761, 64
        %v6791 = vpop.permute.xlu0 %6790
        %6792 = vrot.lane.b32.xlu0 %v6762, 64
        %v6793 = vpop.permute.xlu0 %6792
        %6794 = vrot.lane.b32.xlu0 %v6763, 64
        %v6795 = vpop.permute.xlu0 %6794
        %v6812 = vunpack.c.l.b16 %v5355
        %v6813 = vunpack.c.l.b16 %v5356
        %v6814 = vunpack.c.l.b16 %v5357
        %v6815 = vunpack.c.l.b16 %v5358
        %v6816 = vunpack.c.l.b16 %v5359
        %v6817 = vunpack.c.l.b16 %v5360
        %v6818 = vunpack.c.l.b16 %v5361
        %v6819 = vunpack.c.l.b16 %v5362
        %v6820 = vunpack.c.l.b16 %v5363
        %v6821 = vunpack.c.l.b16 %v5364
        %v6822 = vunpack.c.l.b16 %v5365
        %v6823 = vunpack.c.l.b16 %v5366
        %v6824 = vunpack.c.l.b16 %v5367
        %v6825 = vunpack.c.l.b16 %v5368
        %v6826 = vunpack.c.l.b16 %v5369
        %v6827 = vunpack.c.l.b16 %v5370
        %v6828 = vunpack.c.l.b16 %v5371
        %v6829 = vunpack.c.l.b16 %v5372
        %v6830 = vunpack.c.l.b16 %v5373
        %v6831 = vunpack.c.l.b16 %v5374
        %v6832 = vunpack.c.l.b16 %v5375
        %v6833 = vunpack.c.l.b16 %v5376
        %v6834 = vunpack.c.l.b16 %v5377
        %v6835 = vunpack.c.l.b16 %v5378
        %v6836 = vunpack.c.l.b16 %v5379
        %v6837 = vunpack.c.l.b16 %v5380
        %v6838 = vunpack.c.l.b16 %v5381
        %v6839 = vunpack.c.l.b16 %v5382
        %v6840 = vunpack.c.l.b16 %v5383
        %v6841 = vunpack.c.l.b16 %v5384
        %v6842 = vunpack.c.l.b16 %v5385
        %v6843 = vunpack.c.l.b16 %v5386
        %v6844 = vpack.c.b16 %v6813, %v6812
        %v6845 = vpack.c.b16 %v6815, %v6814
        %v6846 = vpack.c.b16 %v6817, %v6816
        %v6847 = vpack.c.b16 %v6819, %v6818
        %v6848 = vpack.c.b16 %v6821, %v6820
        %v6849 = vpack.c.b16 %v6823, %v6822
        %v6850 = vpack.c.b16 %v6825, %v6824
        %v6851 = vpack.c.b16 %v6827, %v6826
        %v6852 = vpack.c.b16 %v6829, %v6828
        %v6853 = vpack.c.b16 %v6831, %v6830
        %v6854 = vpack.c.b16 %v6833, %v6832
        %v6855 = vpack.c.b16 %v6835, %v6834
        %v6856 = vpack.c.b16 %v6837, %v6836
        %v6857 = vpack.c.b16 %v6839, %v6838
        %v6858 = vpack.c.b16 %v6841, %v6840
        %v6859 = vpack.c.b16 %v6843, %v6842
        %6860 = vrot.lane.b32.xlu0 %v6844, 96
        %v6861 = vpop.permute.xlu0 %6860
        %6862 = vrot.lane.b32.xlu0 %v6845, 96
        %v6863 = vpop.permute.xlu0 %6862
        %6864 = vrot.lane.b32.xlu0 %v6846, 96
        %v6865 = vpop.permute.xlu0 %6864
        %6866 = vrot.lane.b32.xlu0 %v6847, 96
        %v6867 = vpop.permute.xlu0 %6866
        %6868 = vrot.lane.b32.xlu0 %v6848, 96
        %v6869 = vpop.permute.xlu0 %6868
        %6870 = vrot.lane.b32.xlu0 %v6849, 96
        %v6871 = vpop.permute.xlu0 %6870
        %6872 = vrot.lane.b32.xlu0 %v6850, 96
        %v6873 = vpop.permute.xlu0 %6872
        %6874 = vrot.lane.b32.xlu0 %v6851, 96
        %v6875 = vpop.permute.xlu0 %6874
        %6876 = vrot.lane.b32.xlu0 %v6852, 96
        %v6877 = vpop.permute.xlu0 %6876
        %6878 = vrot.lane.b32.xlu0 %v6853, 96
        %v6879 = vpop.permute.xlu0 %6878
        %6880 = vrot.lane.b32.xlu0 %v6854, 96
        %v6881 = vpop.permute.xlu0 %6880
        %6882 = vrot.lane.b32.xlu0 %v6855, 96
        %v6883 = vpop.permute.xlu0 %6882
        %6884 = vrot.lane.b32.xlu0 %v6856, 96
        %v6885 = vpop.permute.xlu0 %6884
        %6886 = vrot.lane.b32.xlu0 %v6857, 96
        %v6887 = vpop.permute.xlu0 %6886
        %6888 = vrot.lane.b32.xlu0 %v6858, 96
        %v6889 = vpop.permute.xlu0 %6888
        %6890 = vrot.lane.b32.xlu0 %v6859, 96
        %v6891 = vpop.permute.xlu0 %6890
        %v6892 = vunpack.c.l.b16 %v5416
        %v6893 = vunpack.c.l.b16 %v5426
        %v6894 = vunpack.c.l.b16 %v5440
        %v6895 = vunpack.c.l.b16 %v5450
        %v6896 = vunpack.c.l.b16 %v5464
        %v6897 = vunpack.c.l.b16 %v5474
        %v6898 = vunpack.c.l.b16 %v5488
        %v6899 = vunpack.c.l.b16 %v5498
        %v6900 = vunpack.c.l.b16 %v5512
        %v6901 = vunpack.c.l.b16 %v5522
        %v6902 = vunpack.c.l.b16 %v5536
        %v6903 = vunpack.c.l.b16 %v5546
        %v6904 = vunpack.c.l.b16 %v5560
        %v6905 = vunpack.c.l.b16 %v5570
        %v6906 = vunpack.c.l.b16 %v5584
        %v6907 = vunpack.c.l.b16 %v5594
        %v6908 = vunpack.c.l.b16 %v5608
        %v6909 = vunpack.c.l.b16 %v5618
        %v6910 = vunpack.c.l.b16 %v5632
        %v6911 = vunpack.c.l.b16 %v5642
        %v6912 = vunpack.c.l.b16 %v5656
        %v6913 = vunpack.c.l.b16 %v5666
        %v6914 = vunpack.c.l.b16 %v5680
        %v6915 = vunpack.c.l.b16 %v5690
        %v6916 = vunpack.c.l.b16 %v5704
        %v6917 = vunpack.c.l.b16 %v5714
        %v6918 = vunpack.c.l.b16 %v5728
        %v6919 = vunpack.c.l.b16 %v5738
        %v6920 = vunpack.c.l.b16 %v5752
        %v6921 = vunpack.c.l.b16 %v5762
        %v6922 = vunpack.c.l.b16 %v5776
        %v6923 = vunpack.c.l.b16 %v5786
        %v6924 = vpack.c.b16 %v6893, %v6892
        %v6925 = vpack.c.b16 %v6895, %v6894
        %v6926 = vpack.c.b16 %v6897, %v6896
        %v6927 = vpack.c.b16 %v6899, %v6898
        %v6928 = vpack.c.b16 %v6901, %v6900
        %v6929 = vpack.c.b16 %v6903, %v6902
        %v6930 = vpack.c.b16 %v6905, %v6904
        %v6931 = vpack.c.b16 %v6907, %v6906
        %v6932 = vpack.c.b16 %v6909, %v6908
        %v6933 = vpack.c.b16 %v6911, %v6910
        %v6934 = vpack.c.b16 %v6913, %v6912
        %v6935 = vpack.c.b16 %v6915, %v6914
        %v6936 = vpack.c.b16 %v6917, %v6916
        %v6937 = vpack.c.b16 %v6919, %v6918
        %v6938 = vpack.c.b16 %v6921, %v6920
        %v6939 = vpack.c.b16 %v6923, %v6922
        %v6940 = vunpack.c.l.b16 %v5854
        %v6941 = vunpack.c.l.b16 %v5857
        %v6942 = vunpack.c.l.b16 %v5861
        %v6943 = vunpack.c.l.b16 %v5864
        %v6944 = vunpack.c.l.b16 %v5868
        %v6945 = vunpack.c.l.b16 %v5871
        %v6946 = vunpack.c.l.b16 %v5875
        %v6947 = vunpack.c.l.b16 %v5878
        %v6948 = vunpack.c.l.b16 %v5882
        %v6949 = vunpack.c.l.b16 %v5885
        %v6950 = vunpack.c.l.b16 %v5889
        %v6951 = vunpack.c.l.b16 %v5892
        %v6952 = vunpack.c.l.b16 %v5896
        %v6953 = vunpack.c.l.b16 %v5899
        %v6954 = vunpack.c.l.b16 %v5903
        %v6955 = vunpack.c.l.b16 %v5906
        %v6956 = vunpack.c.l.b16 %v5910
        %v6957 = vunpack.c.l.b16 %v5913
        %v6958 = vunpack.c.l.b16 %v5917
        %v6959 = vunpack.c.l.b16 %v5920
        %v6960 = vunpack.c.l.b16 %v5924
        %v6961 = vunpack.c.l.b16 %v5927
        %v6962 = vunpack.c.l.b16 %v5931
        %v6963 = vunpack.c.l.b16 %v5934
        %v6964 = vunpack.c.l.b16 %v5938
        %v6965 = vunpack.c.l.b16 %v5941
        %v6966 = vunpack.c.l.b16 %v5945
        %v6967 = vunpack.c.l.b16 %v5948
        %v6968 = vunpack.c.l.b16 %v5952
        %v6969 = vunpack.c.l.b16 %v5955
        %v6970 = vunpack.c.l.b16 %v5959
        %v6971 = vunpack.c.l.b16 %v5962
        %v6972 = vpack.c.b16 %v6941, %v6940
        %v6973 = vpack.c.b16 %v6943, %v6942
        %v6974 = vpack.c.b16 %v6945, %v6944
        %v6975 = vpack.c.b16 %v6947, %v6946
        %v6976 = vpack.c.b16 %v6949, %v6948
        %v6977 = vpack.c.b16 %v6951, %v6950
        %v6978 = vpack.c.b16 %v6953, %v6952
        %v6979 = vpack.c.b16 %v6955, %v6954
        %v6980 = vpack.c.b16 %v6957, %v6956
        %v6981 = vpack.c.b16 %v6959, %v6958
        %v6982 = vpack.c.b16 %v6961, %v6960
        %v6983 = vpack.c.b16 %v6963, %v6962
        %v6984 = vpack.c.b16 %v6965, %v6964
        %v6985 = vpack.c.b16 %v6967, %v6966
        %v6986 = vpack.c.b16 %v6969, %v6968
        %v6987 = vpack.c.b16 %v6971, %v6970
        %6988 = vrot.lane.b32.xlu0 %v6972, 32
        %v6989 = vpop.permute.xlu0 %6988
        %6990 = vrot.lane.b32.xlu0 %v6973, 32
        %v6991 = vpop.permute.xlu0 %6990
        %6992 = vrot.lane.b32.xlu0 %v6974, 32
        %v6993 = vpop.permute.xlu0 %6992
        %6994 = vrot.lane.b32.xlu0 %v6975, 32
        %v6995 = vpop.permute.xlu0 %6994
        %6996 = vrot.lane.b32.xlu0 %v6976, 32
        %v6997 = vpop.permute.xlu0 %6996
        %6998 = vrot.lane.b32.xlu0 %v6977, 32
        %v6999 = vpop.permute.xlu0 %6998
        %7000 = vrot.lane.b32.xlu0 %v6978, 32
        %v7001 = vpop.permute.xlu0 %7000
        %7002 = vrot.lane.b32.xlu0 %v6979, 32
        %v7003 = vpop.permute.xlu0 %7002
        %7004 = vrot.lane.b32.xlu0 %v6980, 32
        %v7005 = vpop.permute.xlu0 %7004
        %7006 = vrot.lane.b32.xlu0 %v6981, 32
        %v7007 = vpop.permute.xlu0 %7006
        %7008 = vrot.lane.b32.xlu0 %v6982, 32
        %v7009 = vpop.permute.xlu0 %7008
        %7010 = vrot.lane.b32.xlu0 %v6983, 32
        %v7011 = vpop.permute.xlu0 %7010
        %7012 = vrot.lane.b32.xlu0 %v6984, 32
        %v7013 = vpop.permute.xlu0 %7012
        %7014 = vrot.lane.b32.xlu0 %v6985, 32
        %v7015 = vpop.permute.xlu0 %7014
        %7016 = vrot.lane.b32.xlu0 %v6986, 32
        %v7017 = vpop.permute.xlu0 %7016
        %7018 = vrot.lane.b32.xlu0 %v6987, 32
        %v7019 = vpop.permute.xlu0 %7018
        %v7036 = vunpack.c.l.b16 %v5964
        %v7037 = vunpack.c.l.b16 %v5965
        %v7038 = vunpack.c.l.b16 %v5966
        %v7039 = vunpack.c.l.b16 %v5967
        %v7040 = vunpack.c.l.b16 %v5968
        %v7041 = vunpack.c.l.b16 %v5969
        %v7042 = vunpack.c.l.b16 %v5970
        %v7043 = vunpack.c.l.b16 %v5971
        %v7044 = vunpack.c.l.b16 %v5972
        %v7045 = vunpack.c.l.b16 %v5973
        %v7046 = vunpack.c.l.b16 %v5974
        %v7047 = vunpack.c.l.b16 %v5975
        %v7048 = vunpack.c.l.b16 %v5976
        %v7049 = vunpack.c.l.b16 %v5977
        %v7050 = vunpack.c.l.b16 %v5978
        %v7051 = vunpack.c.l.b16 %v5979
        %v7052 = vunpack.c.l.b16 %v5980
        %v7053 = vunpack.c.l.b16 %v5981
        %v7054 = vunpack.c.l.b16 %v5982
        %v7055 = vunpack.c.l.b16 %v5983
        %v7056 = vunpack.c.l.b16 %v5984
        %v7057 = vunpack.c.l.b16 %v5985
        %v7058 = vunpack.c.l.b16 %v5986
        %v7059 = vunpack.c.l.b16 %v5987
        %v7060 = vunpack.c.l.b16 %v5988
        %v7061 = vunpack.c.l.b16 %v5989
        %v7062 = vunpack.c.l.b16 %v5990
        %v7063 = vunpack.c.l.b16 %v5991
        %v7064 = vunpack.c.l.b16 %v5992
        %v7065 = vunpack.c.l.b16 %v5993
        %v7066 = vunpack.c.l.b16 %v5994
        %v7067 = vunpack.c.l.b16 %v5995
        %v7068 = vpack.c.b16 %v7037, %v7036
        %v7069 = vpack.c.b16 %v7039, %v7038
        %v7070 = vpack.c.b16 %v7041, %v7040
        %v7071 = vpack.c.b16 %v7043, %v7042
        %v7072 = vpack.c.b16 %v7045, %v7044
        %v7073 = vpack.c.b16 %v7047, %v7046
        %v7074 = vpack.c.b16 %v7049, %v7048
        %v7075 = vpack.c.b16 %v7051, %v7050
        %v7076 = vpack.c.b16 %v7053, %v7052
        %v7077 = vpack.c.b16 %v7055, %v7054
        %v7078 = vpack.c.b16 %v7057, %v7056
        %v7079 = vpack.c.b16 %v7059, %v7058
        %v7080 = vpack.c.b16 %v7061, %v7060
        %v7081 = vpack.c.b16 %v7063, %v7062
        %v7082 = vpack.c.b16 %v7065, %v7064
        %v7083 = vpack.c.b16 %v7067, %v7066
        %7084 = vrot.lane.b32.xlu0 %v7068, 64
        %v7085 = vpop.permute.xlu0 %7084
        %7086 = vrot.lane.b32.xlu0 %v7069, 64
        %v7087 = vpop.permute.xlu0 %7086
        %7088 = vrot.lane.b32.xlu0 %v7070, 64
        %v7089 = vpop.permute.xlu0 %7088
        %7090 = vrot.lane.b32.xlu0 %v7071, 64
        %v7091 = vpop.permute.xlu0 %7090
        %7092 = vrot.lane.b32.xlu0 %v7072, 64
        %v7093 = vpop.permute.xlu0 %7092
        %7094 = vrot.lane.b32.xlu0 %v7073, 64
        %v7095 = vpop.permute.xlu0 %7094
        %7096 = vrot.lane.b32.xlu0 %v7074, 64
        %v7097 = vpop.permute.xlu0 %7096
        %7098 = vrot.lane.b32.xlu0 %v7075, 64
        %v7099 = vpop.permute.xlu0 %7098
        %7100 = vrot.lane.b32.xlu0 %v7076, 64
        %v7101 = vpop.permute.xlu0 %7100
        %7102 = vrot.lane.b32.xlu0 %v7077, 64
        %v7103 = vpop.permute.xlu0 %7102
        %7104 = vrot.lane.b32.xlu0 %v7078, 64
        %v7105 = vpop.permute.xlu0 %7104
        %7106 = vrot.lane.b32.xlu0 %v7079, 64
        %v7107 = vpop.permute.xlu0 %7106
        %7108 = vrot.lane.b32.xlu0 %v7080, 64
        %v7109 = vpop.permute.xlu0 %7108
        %7110 = vrot.lane.b32.xlu0 %v7081, 64
        %v7111 = vpop.permute.xlu0 %7110
        %7112 = vrot.lane.b32.xlu0 %v7082, 64
        %v7113 = vpop.permute.xlu0 %7112
        %7114 = vrot.lane.b32.xlu0 %v7083, 64
        %v7115 = vpop.permute.xlu0 %7114
        %v7116 = vunpack.c.l.b16 %v6025
        %v7117 = vunpack.c.l.b16 %v6035
        %v7118 = vunpack.c.l.b16 %v6049
        %v7119 = vunpack.c.l.b16 %v6059
        %v7120 = vunpack.c.l.b16 %v6073
        %v7121 = vunpack.c.l.b16 %v6083
        %v7122 = vunpack.c.l.b16 %v6097
        %v7123 = vunpack.c.l.b16 %v6107
        %v7124 = vunpack.c.l.b16 %v6121
        %v7125 = vunpack.c.l.b16 %v6131
        %v7126 = vunpack.c.l.b16 %v6145
        %v7127 = vunpack.c.l.b16 %v6155
        %v7128 = vunpack.c.l.b16 %v6169
        %v7129 = vunpack.c.l.b16 %v6179
        %v7130 = vunpack.c.l.b16 %v6193
        %v7131 = vunpack.c.l.b16 %v6203
        %v7132 = vunpack.c.l.b16 %v6217
        %v7133 = vunpack.c.l.b16 %v6227
        %v7134 = vunpack.c.l.b16 %v6241
        %v7135 = vunpack.c.l.b16 %v6251
        %v7136 = vunpack.c.l.b16 %v6265
        %v7137 = vunpack.c.l.b16 %v6275
        %v7138 = vunpack.c.l.b16 %v6289
        %v7139 = vunpack.c.l.b16 %v6299
        %v7140 = vunpack.c.l.b16 %v6313
        %v7141 = vunpack.c.l.b16 %v6323
        %v7142 = vunpack.c.l.b16 %v6337
        %v7143 = vunpack.c.l.b16 %v6347
        %v7144 = vunpack.c.l.b16 %v6361
        %v7145 = vunpack.c.l.b16 %v6371
        %v7146 = vunpack.c.l.b16 %v6385
        %v7147 = vunpack.c.l.b16 %v6395
        %v7148 = vpack.c.b16 %v7117, %v7116
        %v7149 = vpack.c.b16 %v7119, %v7118
        %v7150 = vpack.c.b16 %v7121, %v7120
        %v7151 = vpack.c.b16 %v7123, %v7122
        %v7152 = vpack.c.b16 %v7125, %v7124
        %v7153 = vpack.c.b16 %v7127, %v7126
        %v7154 = vpack.c.b16 %v7129, %v7128
        %v7155 = vpack.c.b16 %v7131, %v7130
        %v7156 = vpack.c.b16 %v7133, %v7132
        %v7157 = vpack.c.b16 %v7135, %v7134
        %v7158 = vpack.c.b16 %v7137, %v7136
        %v7159 = vpack.c.b16 %v7139, %v7138
        %v7160 = vpack.c.b16 %v7141, %v7140
        %v7161 = vpack.c.b16 %v7143, %v7142
        %v7162 = vpack.c.b16 %v7145, %v7144
        %v7163 = vpack.c.b16 %v7147, %v7146
        %7164 = vrot.lane.b32.xlu0 %v7148, 96
        %v7165 = vpop.permute.xlu0 %7164
        %7166 = vrot.lane.b32.xlu0 %v7149, 96
        %v7167 = vpop.permute.xlu0 %7166
        %7168 = vrot.lane.b32.xlu0 %v7150, 96
        %v7169 = vpop.permute.xlu0 %7168
        %7170 = vrot.lane.b32.xlu0 %v7151, 96
        %v7171 = vpop.permute.xlu0 %7170
        %7172 = vrot.lane.b32.xlu0 %v7152, 96
        %v7173 = vpop.permute.xlu0 %7172
        %7174 = vrot.lane.b32.xlu0 %v7153, 96
        %v7175 = vpop.permute.xlu0 %7174
        %7176 = vrot.lane.b32.xlu0 %v7154, 96
        %v7177 = vpop.permute.xlu0 %7176
        %7178 = vrot.lane.b32.xlu0 %v7155, 96
        %v7179 = vpop.permute.xlu0 %7178
        %7180 = vrot.lane.b32.xlu0 %v7156, 96
        %v7181 = vpop.permute.xlu0 %7180
        %7182 = vrot.lane.b32.xlu0 %v7157, 96
        %v7183 = vpop.permute.xlu0 %7182
        %7184 = vrot.lane.b32.xlu0 %v7158, 96
        %v7185 = vpop.permute.xlu0 %7184
        %7186 = vrot.lane.b32.xlu0 %v7159, 96
        %v7187 = vpop.permute.xlu0 %7186
        %7188 = vrot.lane.b32.xlu0 %v7160, 96
        %v7189 = vpop.permute.xlu0 %7188
        %7190 = vrot.lane.b32.xlu0 %v7161, 96
        %v7191 = vpop.permute.xlu0 %7190
        %7192 = vrot.lane.b32.xlu0 %v7162, 96
        %v7193 = vpop.permute.xlu0 %7192
        %7194 = vrot.lane.b32.xlu0 %v7163, 96
        %v7195 = vpop.permute.xlu0 %7194
        %v7196 = vunpack.c.l.b16 %v6463
        %v7197 = vunpack.c.l.b16 %v6466
        %v7198 = vunpack.c.l.b16 %v6470
        %v7199 = vunpack.c.l.b16 %v6473
        %v7200 = vunpack.c.l.b16 %v6477
        %v7201 = vunpack.c.l.b16 %v6480
        %v7202 = vunpack.c.l.b16 %v6484
        %v7203 = vunpack.c.l.b16 %v6487
        %v7204 = vunpack.c.l.b16 %v6491
        %v7205 = vunpack.c.l.b16 %v6494
        %v7206 = vunpack.c.l.b16 %v6498
        %v7207 = vunpack.c.l.b16 %v6501
        %v7208 = vunpack.c.l.b16 %v6505
        %v7209 = vunpack.c.l.b16 %v6508
        %v7210 = vunpack.c.l.b16 %v6512
        %v7211 = vunpack.c.l.b16 %v6515
        %v7212 = vunpack.c.l.b16 %v6519
        %v7213 = vunpack.c.l.b16 %v6522
        %v7214 = vunpack.c.l.b16 %v6526
        %v7215 = vunpack.c.l.b16 %v6529
        %v7216 = vunpack.c.l.b16 %v6533
        %v7217 = vunpack.c.l.b16 %v6536
        %v7218 = vunpack.c.l.b16 %v6540
        %v7219 = vunpack.c.l.b16 %v6543
        %v7220 = vunpack.c.l.b16 %v6547
        %v7221 = vunpack.c.l.b16 %v6550
        %v7222 = vunpack.c.l.b16 %v6554
        %v7223 = vunpack.c.l.b16 %v6557
        %v7224 = vunpack.c.l.b16 %v6561
        %v7225 = vunpack.c.l.b16 %v6564
        %v7226 = vunpack.c.l.b16 %v6568
        %v7227 = vunpack.c.l.b16 %v6571
        %v7228 = vpack.c.b16 %v7197, %v7196
        %v7229 = vpack.c.b16 %v7199, %v7198
        %v7230 = vpack.c.b16 %v7201, %v7200
        %v7231 = vpack.c.b16 %v7203, %v7202
        %v7232 = vpack.c.b16 %v7205, %v7204
        %v7233 = vpack.c.b16 %v7207, %v7206
        %v7234 = vpack.c.b16 %v7209, %v7208
        %v7235 = vpack.c.b16 %v7211, %v7210
        %v7236 = vpack.c.b16 %v7213, %v7212
        %v7237 = vpack.c.b16 %v7215, %v7214
        %v7238 = vpack.c.b16 %v7217, %v7216
        %v7239 = vpack.c.b16 %v7219, %v7218
        %v7240 = vpack.c.b16 %v7221, %v7220
        %v7241 = vpack.c.b16 %v7223, %v7222
        %v7242 = vpack.c.b16 %v7225, %v7224
        %v7243 = vpack.c.b16 %v7227, %v7226
        %v7246 = vsel %vm3352, %v6620, %v6685
        %v7249 = vsel %vm3352, %v6621, %v6687
        %v7252 = vsel %vm3352, %v6622, %v6689
        %v7255 = vsel %vm3352, %v6623, %v6691
        %v7258 = vsel %vm3352, %v6624, %v6693
        %v7261 = vsel %vm3352, %v6625, %v6695
        %v7264 = vsel %vm3352, %v6626, %v6697
        %v7267 = vsel %vm3352, %v6627, %v6699
        %v7270 = vsel %vm3352, %v6628, %v6701
        %v7273 = vsel %vm3352, %v6629, %v6703
        %v7276 = vsel %vm3352, %v6630, %v6705
        %v7279 = vsel %vm3352, %v6631, %v6707
        %v7282 = vsel %vm3352, %v6632, %v6709
        %v7285 = vsel %vm3352, %v6633, %v6711
        %v7288 = vsel %vm3352, %v6634, %v6713
        %v7291 = vsel %vm3352, %v6635, %v6715
        %v7293 = vsel %vm3401, %v7246, %v6765
        %v7295 = vsel %vm3401, %v7249, %v6767
        %v7297 = vsel %vm3401, %v7252, %v6769
        %v7299 = vsel %vm3401, %v7255, %v6771
        %v7301 = vsel %vm3401, %v7258, %v6773
        %v7303 = vsel %vm3401, %v7261, %v6775
        %v7305 = vsel %vm3401, %v7264, %v6777
        %v7307 = vsel %vm3401, %v7267, %v6779
        %v7309 = vsel %vm3401, %v7270, %v6781
        %v7311 = vsel %vm3401, %v7273, %v6783
        %v7313 = vsel %vm3401, %v7276, %v6785
        %v7315 = vsel %vm3401, %v7279, %v6787
        %v7317 = vsel %vm3401, %v7282, %v6789
        %v7319 = vsel %vm3401, %v7285, %v6791
        %v7321 = vsel %vm3401, %v7288, %v6793
        %v7323 = vsel %vm3401, %v7291, %v6795
        %v7325 = vsel %vm3434, %v7293, %v6861
        %v7328 = vsel %vm3434, %v7295, %v6863
        %v7331 = vsel %vm3434, %v7297, %v6865
        %v7334 = vsel %vm3434, %v7299, %v6867
        %v7337 = vsel %vm3434, %v7301, %v6869
        %v7340 = vsel %vm3434, %v7303, %v6871
        %v7343 = vsel %vm3434, %v7305, %v6873
        %v7346 = vsel %vm3434, %v7307, %v6875
        %v7349 = vsel %vm3434, %v7309, %v6877
        %v7352 = vsel %vm3434, %v7311, %v6879
        %v7355 = vsel %vm3434, %v7313, %v6881
        %v7358 = vsel %vm3434, %v7315, %v6883
        %v7361 = vsel %vm3434, %v7317, %v6885
        %v7364 = vsel %vm3434, %v7319, %v6887
        %v7367 = vsel %vm3434, %v7321, %v6889
        %v7370 = vsel %vm3434, %v7323, %v6891
        %v7374 = vsel %vm3352, %v6924, %v6989
        %v7377 = vsel %vm3352, %v6925, %v6991
        %v7380 = vsel %vm3352, %v6926, %v6993
        %v7383 = vsel %vm3352, %v6927, %v6995
        %v7386 = vsel %vm3352, %v6928, %v6997
        %v7389 = vsel %vm3352, %v6929, %v6999
        %v7392 = vsel %vm3352, %v6930, %v7001
        %v7395 = vsel %vm3352, %v6931, %v7003
        %v7398 = vsel %vm3352, %v6932, %v7005
        %v7401 = vsel %vm3352, %v6933, %v7007
        %v7404 = vsel %vm3352, %v6934, %v7009
        %v7407 = vsel %vm3352, %v6935, %v7011
        %v7410 = vsel %vm3352, %v6936, %v7013
        %v7413 = vsel %vm3352, %v6937, %v7015
        %v7416 = vsel %vm3352, %v6938, %v7017
        %v7419 = vsel %vm3352, %v6939, %v7019
        %v7421 = vsel %vm3401, %v7374, %v7085
        %v7423 = vsel %vm3401, %v7377, %v7087
        %v7425 = vsel %vm3401, %v7380, %v7089
        %v7427 = vsel %vm3401, %v7383, %v7091
        %v7429 = vsel %vm3401, %v7386, %v7093
        %v7431 = vsel %vm3401, %v7389, %v7095
        %v7433 = vsel %vm3401, %v7392, %v7097
        %v7435 = vsel %vm3401, %v7395, %v7099
        %v7437 = vsel %vm3401, %v7398, %v7101
        %v7439 = vsel %vm3401, %v7401, %v7103
        %v7441 = vsel %vm3401, %v7404, %v7105
        %v7443 = vsel %vm3401, %v7407, %v7107
        %v7445 = vsel %vm3401, %v7410, %v7109
        %v7447 = vsel %vm3401, %v7413, %v7111
        %v7449 = vsel %vm3401, %v7416, %v7113
        %v7451 = vsel %vm3401, %v7419, %v7115
        %v7453 = vsel %vm3434, %v7421, %v7165
        %v7456 = vsel %vm3434, %v7423, %v7167
        %v7459 = vsel %vm3434, %v7425, %v7169
        %v7462 = vsel %vm3434, %v7427, %v7171
        %v7465 = vsel %vm3434, %v7429, %v7173
        %v7468 = vsel %vm3434, %v7431, %v7175
        %v7471 = vsel %vm3434, %v7433, %v7177
        %v7474 = vsel %vm3434, %v7435, %v7179
        %v7477 = vsel %vm3434, %v7437, %v7181
        %v7480 = vsel %vm3434, %v7439, %v7183
        %v7483 = vsel %vm3434, %v7441, %v7185
        %v7486 = vsel %vm3434, %v7443, %v7187
        %v7489 = vsel %vm3434, %v7445, %v7189
        %v7492 = vsel %vm3434, %v7447, %v7191
        %v7495 = vsel %vm3434, %v7449, %v7193
        %v7498 = vsel %vm3434, %v7451, %v7195
        %v7500 = vld [vmem:[%s3] sm:$0xf]
        %v7501 = vld [vmem:[%s3 + $0x4] sm:$0xf]
        %v7502 = vld [vmem:[%s3 + $0x8] sm:$0xf]
        %v7503 = vld [vmem:[%s3 + $0xc] sm:$0xf]
        %v7504 = vld [vmem:[%s3 + $0x10] sm:$0xf]
        %v7505 = vld [vmem:[%s3 + $0x14] sm:$0xf]
        %v7506 = vld [vmem:[%s3 + $0x18] sm:$0xf]
        %v7507 = vld [vmem:[%s3 + $0x1c] sm:$0xf]
        %v7508 = vld [vmem:[%s3 + $0x20] sm:$0xf]
        %v7509 = vld [vmem:[%s3 + $0x24] sm:$0xf]
        %v7510 = vld [vmem:[%s3 + $0x28] sm:$0xf]
        %v7511 = vld [vmem:[%s3 + $0x2c] sm:$0xf]
        %v7512 = vld [vmem:[%s3 + $0x30] sm:$0xf]
        %v7513 = vld [vmem:[%s3 + $0x34] sm:$0xf]
        %v7514 = vld [vmem:[%s3 + $0x38] sm:$0xf]
        %v7515 = vld [vmem:[%s3 + $0x3c] sm:$0xf]
        %v7516 = vld [vmem:[%s3 + $0x40] sm:$0xf]
        %v7517 = vld [vmem:[%s3 + $0x44] sm:$0xf]
        %v7518 = vld [vmem:[%s3 + $0x48] sm:$0xf]
        %v7519 = vld [vmem:[%s3 + $0x4c] sm:$0xf]
        %v7520 = vld [vmem:[%s3 + $0x50] sm:$0xf]
        %v7521 = vld [vmem:[%s3 + $0x54] sm:$0xf]
        %v7522 = vld [vmem:[%s3 + $0x58] sm:$0xf]
        %v7523 = vld [vmem:[%s3 + $0x5c] sm:$0xf]
        %v7524 = vld [vmem:[%s3 + $0x60] sm:$0xf]
        %v7525 = vld [vmem:[%s3 + $0x64] sm:$0xf]
        %v7526 = vld [vmem:[%s3 + $0x68] sm:$0xf]
        %v7527 = vld [vmem:[%s3 + $0x6c] sm:$0xf]
        %v7528 = vld [vmem:[%s3 + $0x70] sm:$0xf]
        %v7529 = vld [vmem:[%s3 + $0x74] sm:$0xf]
        %v7530 = vld [vmem:[%s3 + $0x78] sm:$0xf]
        %v7531 = vld [vmem:[%s3 + $0x7c] sm:$0xf]
        %v7532 = vld [vmem:[%s3 + $0x80] sm:$0xf]
        %v7533 = vld [vmem:[%s3 + $0x84] sm:$0xf]
        %v7534 = vld [vmem:[%s3 + $0x88] sm:$0xf]
        %v7535 = vld [vmem:[%s3 + $0x8c] sm:$0xf]
        %v7536 = vld [vmem:[%s4] sm:$0x1]
        %v7538 = vlaneseq
        %v7539 = vshrl.u32 %v7538, 7
        %v7540 = vsub.s32 0, %v7539
        %v7541 = vrot.slane %v7536, %v7540
        %v7579 = vunpack.c.l.b16 %v7500
        %v7580 = vunpack.c.l.b16 %v7501
        %v7581 = vunpack.c.l.b16 %v7502
        %v7582 = vunpack.c.l.b16 %v7503
        %v7583 = vunpack.c.l.b16 %v7504
        %v7584 = vunpack.c.l.b16 %v7505
        %v7585 = vunpack.c.l.b16 %v7506
        %v7586 = vunpack.c.l.b16 %v7507
        %v7587 = vunpack.c.l.b16 %v7508
        %v7588 = vunpack.c.l.b16 %v7509
        %v7589 = vunpack.c.l.b16 %v7510
        %v7590 = vunpack.c.l.b16 %v7511
        %v7591 = vunpack.c.l.b16 %v7512
        %v7592 = vunpack.c.l.b16 %v7513
        %v7593 = vunpack.c.l.b16 %v7514
        %v7594 = vunpack.c.l.b16 %v7515
        %v7595 = vunpack.c.l.b16 %v7516
        %v7596 = vunpack.c.l.b16 %v7517
        %v7597 = vunpack.c.l.b16 %v7518
        %v7598 = vunpack.c.l.b16 %v7519
        %v7599 = vunpack.c.l.b16 %v7520
        %v7600 = vunpack.c.l.b16 %v7521
        %v7601 = vunpack.c.l.b16 %v7522
        %v7602 = vunpack.c.l.b16 %v7523
        %v7603 = vunpack.c.l.b16 %v7524
        %v7604 = vunpack.c.l.b16 %v7525
        %v7605 = vunpack.c.l.b16 %v7526
        %v7606 = vunpack.c.l.b16 %v7527
        %v7607 = vunpack.c.l.b16 %v7528
        %v7608 = vunpack.c.l.b16 %v7529
        %v7609 = vunpack.c.l.b16 %v7530
        %v7610 = vunpack.c.l.b16 %v7531
        %v7611 = vunpack.c.l.b16 %v7532
        %v7612 = vunpack.c.l.b16 %v7533
        %v7613 = vunpack.c.l.b16 %v7534
        %v7614 = vunpack.c.l.b16 %v7535
        %v7615 = vpack.c.b16 %v7580, %v7579
        %v7616 = vpack.c.b16 %v7582, %v7581
        %v7617 = vpack.c.b16 %v7584, %v7583
        %v7618 = vpack.c.b16 %v7586, %v7585
        %v7619 = vpack.c.b16 %v7588, %v7587
        %v7620 = vpack.c.b16 %v7590, %v7589
        %v7621 = vpack.c.b16 %v7592, %v7591
        %v7622 = vpack.c.b16 %v7594, %v7593
        %v7623 = vpack.c.b16 %v7596, %v7595
        %v7624 = vpack.c.b16 %v7598, %v7597
        %v7625 = vpack.c.b16 %v7600, %v7599
        %v7626 = vpack.c.b16 %v7602, %v7601
        %v7627 = vpack.c.b16 %v7604, %v7603
        %v7628 = vpack.c.b16 %v7606, %v7605
        %v7629 = vpack.c.b16 %v7608, %v7607
        %v7630 = vpack.c.b16 %v7610, %v7609
        %v7631 = vpack.c.b16 %v7612, %v7611
        %v7632 = vpack.c.b16 %v7614, %v7613
        %v7652 = vsel %vm3352, %v7228, 0
        %v7655 = vsel %vm3352, %v7229, 0
        %v7658 = vsel %vm3352, %v7230, 0
        %v7661 = vsel %vm3352, %v7231, 0
        %v7664 = vsel %vm3352, %v7232, 0
        %v7667 = vsel %vm3352, %v7233, 0
        %v7670 = vsel %vm3352, %v7234, 0
        %v7673 = vsel %vm3352, %v7235, 0
        %v7676 = vsel %vm3352, %v7236, 0
        %v7679 = vsel %vm3352, %v7237, 0
        %v7682 = vsel %vm3352, %v7238, 0
        %v7685 = vsel %vm3352, %v7239, 0
        %v7688 = vsel %vm3352, %v7240, 0
        %v7691 = vsel %vm3352, %v7241, 0
        %v7694 = vsel %vm3352, %v7242, 0
        %v7697 = vsel %vm3352, %v7243, 0
        %7699 = vmatprep.subr.bf16.mxu0 0
        %7700 = vmatpush1.bf16.msra.mxu0 %v7615
        %7701 = vmatprep.subr.bf16.mxu0 0
        %7702 = vmatpush1.bf16.msra.mxu0 %v7616
        %7703 = vmatprep.subr.bf16.mxu0 0
        %7704 = vmatpush1.bf16.msra.mxu0 %v7617
        %7705 = vmatprep.subr.bf16.mxu0 0
        %7706 = vmatpush1.bf16.msra.mxu0 %v7618
        %7707 = vmatprep.subr.bf16.mxu0 0
        %7708 = vmatpush1.bf16.msra.mxu0 %v7619
        %7709 = vmatprep.subr.bf16.mxu0 0
        %7710 = vmatpush1.bf16.msra.mxu0 %v7620
        %7711 = vmatprep.subr.bf16.mxu0 0
        %7712 = vmatpush1.bf16.msra.mxu0 %v7621
        %7713 = vmatprep.subr.bf16.mxu0 0
        %7714 = vmatpush1.bf16.msra.mxu0 %v7622
        %7715 = vmatprep.subr.bf16.mxu0 0
        %7716 = vmatpush1.bf16.msra.mxu0 %v7623
        %7717 = vmatprep.subr.bf16.mxu0 0
        %7718 = vmatpush1.bf16.msra.mxu0 %v7624
        %7719 = vmatprep.subr.bf16.mxu0 0
        %7720 = vmatpush1.bf16.msra.mxu0 %v7625
        %7721 = vmatprep.subr.bf16.mxu0 0
        %7722 = vmatpush1.bf16.msra.mxu0 %v7626
        %7723 = vmatprep.subr.bf16.mxu0 0
        %7724 = vmatpush1.bf16.msra.mxu0 %v7627
        %7725 = vmatprep.subr.bf16.mxu0 0
        %7726 = vmatpush1.bf16.msra.mxu0 %v7628
        %7727 = vmatprep.subr.bf16.mxu0 0
        %7728 = vmatpush1.bf16.msra.mxu0 %v7629
        %7729 = vmatprep.subr.bf16.mxu0 0
        %7730 = vmatpush1.bf16.msra.mxu0 %v7630
        %7731 = vmatprep.mubr.bf16.mxu0 %v7453
        %7732 = vmatmul.mubr.bf16.gmra.mrb[0].mxu0 %v7325
        %v7733 = vpop.f32.mrb[0].mxu0
        %v7734 = vadd.f32 %v7541, %v7733
        %v7735 = vpop.f32.mrb[0].mxu0
        %v7736 = vpop.f32.mrb[0].mxu0
        %v7737 = vadd.f32 %v7541, %v7736
        %v7738 = vpop.f32.mrb[0].mxu0
        %7739 = vmatprep.mubr.bf16.mxu0 %v7456
        %7740 = vmatmul.mubr.bf16.gmra.mrb[0].mxu0 %v7328
        %v7741 = vpop.f32.mrb[0].mxu0
        %v7742 = vadd.f32 %v7541, %v7741
        %v7743 = vpop.f32.mrb[0].mxu0
        %v7744 = vpop.f32.mrb[0].mxu0
        %v7745 = vadd.f32 %v7541, %v7744
        %v7746 = vpop.f32.mrb[0].mxu0
        %7747 = vmatprep.mubr.bf16.mxu0 %v7459
        %7748 = vmatmul.mubr.bf16.gmra.mrb[0].mxu0 %v7331
        %v7749 = vpop.f32.mrb[0].mxu0
        %v7750 = vadd.f32 %v7541, %v7749
        %v7751 = vpop.f32.mrb[0].mxu0
        %v7752 = vpop.f32.mrb[0].mxu0
        %v7753 = vadd.f32 %v7541, %v7752
        %v7754 = vpop.f32.mrb[0].mxu0
        %7755 = vmatprep.mubr.bf16.mxu0 %v7462
        %7756 = vmatmul.mubr.bf16.gmra.mrb[0].mxu0 %v7334
        %v7757 = vpop.f32.mrb[0].mxu0
        %v7758 = vadd.f32 %v7541, %v7757
        %v7759 = vpop.f32.mrb[0].mxu0
        %v7760 = vpop.f32.mrb[0].mxu0
        %v7761 = vadd.f32 %v7541, %v7760
        %v7762 = vpop.f32.mrb[0].mxu0
        %7763 = vmatprep.mubr.bf16.mxu0 %v7465
        %7764 = vmatmul.mubr.bf16.gmra.mrb[0].mxu0 %v7337
        %v7765 = vpop.f32.mrb[0].mxu0
        %v7766 = vadd.f32 %v7541, %v7765
        %v7767 = vpop.f32.mrb[0].mxu0
        %v7768 = vpop.f32.mrb[0].mxu0
        %v7769 = vadd.f32 %v7541, %v7768
        %v7770 = vpop.f32.mrb[0].mxu0
        %7771 = vmatprep.mubr.bf16.mxu0 %v7468
        %7772 = vmatmul.mubr.bf16.gmra.mrb[0].mxu0 %v7340
        %v7773 = vpop.f32.mrb[0].mxu0
        %v7774 = vadd.f32 %v7541, %v7773
        %v7775 = vpop.f32.mrb[0].mxu0
        %v7776 = vpop.f32.mrb[0].mxu0
        %v7777 = vadd.f32 %v7541, %v7776
        %v7778 = vpop.f32.mrb[0].mxu0
        %7779 = vmatprep.mubr.bf16.mxu0 %v7471
        %7780 = vmatmul.mubr.bf16.gmra.mrb[0].mxu0 %v7343
        %v7781 = vpop.f32.mrb[0].mxu0
        %v7782 = vadd.f32 %v7541, %v7781
        %v7783 = vpop.f32.mrb[0].mxu0
        %v7784 = vpop.f32.mrb[0].mxu0
        %v7785 = vadd.f32 %v7541, %v7784
        %v7786 = vpop.f32.mrb[0].mxu0
        %7787 = vmatprep.mubr.bf16.mxu0 %v7474
        %7788 = vmatmul.mubr.bf16.gmra.mrb[0].mxu0 %v7346
        %v7789 = vpop.f32.mrb[0].mxu0
        %v7790 = vadd.f32 %v7541, %v7789
        %v7791 = vpop.f32.mrb[0].mxu0
        %v7792 = vpop.f32.mrb[0].mxu0
        %v7793 = vadd.f32 %v7541, %v7792
        %v7794 = vpop.f32.mrb[0].mxu0
        %7795 = vmatprep.mubr.bf16.mxu0 %v7477
        %7796 = vmatmul.mubr.bf16.gmra.mrb[0].mxu0 %v7349
        %v7797 = vpop.f32.mrb[0].mxu0
        %v7798 = vadd.f32 %v7541, %v7797
        %v7799 = vpop.f32.mrb[0].mxu0
        %v7800 = vpop.f32.mrb[0].mxu0
        %v7801 = vadd.f32 %v7541, %v7800
        %v7802 = vpop.f32.mrb[0].mxu0
        %7803 = vmatprep.mubr.bf16.mxu0 %v7480
        %7804 = vmatmul.mubr.bf16.gmra.mrb[0].mxu0 %v7352
        %v7805 = vpop.f32.mrb[0].mxu0
        %v7806 = vadd.f32 %v7541, %v7805
        %v7807 = vpop.f32.mrb[0].mxu0
        %v7808 = vpop.f32.mrb[0].mxu0
        %v7809 = vadd.f32 %v7541, %v7808
        %v7810 = vpop.f32.mrb[0].mxu0
        %7811 = vmatprep.mubr.bf16.mxu0 %v7483
        %7812 = vmatmul.mubr.bf16.gmra.mrb[0].mxu0 %v7355
        %v7813 = vpop.f32.mrb[0].mxu0
        %v7814 = vadd.f32 %v7541, %v7813
        %v7815 = vpop.f32.mrb[0].mxu0
        %v7816 = vpop.f32.mrb[0].mxu0
        %v7817 = vadd.f32 %v7541, %v7816
        %v7818 = vpop.f32.mrb[0].mxu0
        %7819 = vmatprep.mubr.bf16.mxu0 %v7486
        %7820 = vmatmul.mubr.bf16.gmra.mrb[0].mxu0 %v7358
        %v7821 = vpop.f32.mrb[0].mxu0
        %v7822 = vadd.f32 %v7541, %v7821
        %v7823 = vpop.f32.mrb[0].mxu0
        %v7824 = vpop.f32.mrb[0].mxu0
        %v7825 = vadd.f32 %v7541, %v7824
        %v7826 = vpop.f32.mrb[0].mxu0
        %7827 = vmatprep.mubr.bf16.mxu0 %v7489
        %7828 = vmatmul.mubr.bf16.gmra.mrb[0].mxu0 %v7361
        %v7829 = vpop.f32.mrb[0].mxu0
        %v7830 = vadd.f32 %v7541, %v7829
        %v7831 = vpop.f32.mrb[0].mxu0
        %v7832 = vpop.f32.mrb[0].mxu0
        %v7833 = vadd.f32 %v7541, %v7832
        %v7834 = vpop.f32.mrb[0].mxu0
        %7835 = vmatprep.mubr.bf16.mxu0 %v7492
        %7836 = vmatmul.mubr.bf16.gmra.mrb[0].mxu0 %v7364
        %v7837 = vpop.f32.mrb[0].mxu0
        %v7838 = vadd.f32 %v7541, %v7837
        %v7839 = vpop.f32.mrb[0].mxu0
        %v7840 = vpop.f32.mrb[0].mxu0
        %v7841 = vadd.f32 %v7541, %v7840
        %v7842 = vpop.f32.mrb[0].mxu0
        %7843 = vmatprep.mubr.bf16.mxu0 %v7495
        %7844 = vmatmul.mubr.bf16.gmra.mrb[0].mxu0 %v7367
        %v7845 = vpop.f32.mrb[0].mxu0
        %v7846 = vadd.f32 %v7541, %v7845
        %v7847 = vpop.f32.mrb[0].mxu0
        %v7848 = vpop.f32.mrb[0].mxu0
        %v7849 = vadd.f32 %v7541, %v7848
        %v7850 = vpop.f32.mrb[0].mxu0
        %7851 = vmatprep.mubr.bf16.mxu0 %v7498
        %7852 = vmatmul.mubr.bf16.gmra.mrb[0].mxu0 %v7370
        %v7853 = vpop.f32.mrb[0].mxu0
        %v7854 = vadd.f32 %v7541, %v7853
        %v7855 = vpop.f32.mrb[0].mxu0
        %v7856 = vpop.f32.mrb[0].mxu0
        %v7857 = vadd.f32 %v7541, %v7856
        %v7858 = vpop.f32.mrb[0].mxu0
        %7859 = vdwg.mxu0
        %7860 = vmatprep.subr.bf16.mxu0 0
        %7861 = vmatpush1.bf16.msra.mxu0 %v7631
        %7862 = vmatprep.subr.bf16.mxu0 0
        %7863 = vmatpush1.bf16.msra.mxu0 %v7632
        %7864 = vmatprep.subr.bf16.mxu0 0
        %7865 = vmatpush1.bf16.msra.mxu0 0
        %7866 = vmatprep.subr.bf16.mxu0 0
        %7867 = vmatpush1.bf16.msra.mxu0 0
        %7868 = vmatprep.subr.bf16.mxu0 0
        %7869 = vmatpush1.bf16.msra.mxu0 0
        %7870 = vmatprep.subr.bf16.mxu0 0
        %7871 = vmatpush1.bf16.msra.mxu0 0
        %7872 = vmatprep.subr.bf16.mxu0 0
        %7873 = vmatpush1.bf16.msra.mxu0 0
        %7874 = vmatprep.subr.bf16.mxu0 0
        %7875 = vmatpush1.bf16.msra.mxu0 0
        %7876 = vmatprep.subr.bf16.mxu0 0
        %7877 = vmatpush1.bf16.msra.mxu0 0
        %7878 = vmatprep.subr.bf16.mxu0 0
        %7879 = vmatpush1.bf16.msra.mxu0 0
        %7880 = vmatprep.subr.bf16.mxu0 0
        %7881 = vmatpush1.bf16.msra.mxu0 0
        %7882 = vmatprep.subr.bf16.mxu0 0
        %7883 = vmatpush1.bf16.msra.mxu0 0
        %7884 = vmatprep.subr.bf16.mxu0 0
        %7885 = vmatpush1.bf16.msra.mxu0 0
        %7886 = vmatprep.subr.bf16.mxu0 0
        %7887 = vmatpush1.bf16.msra.mxu0 0
        %7888 = vmatprep.subr.bf16.mxu0 0
        %7889 = vmatpush1.bf16.msra.mxu0 0
        %7890 = vmatprep.subr.bf16.mxu0 0
        %7891 = vmatpush1.bf16.msra.mxu0 0
        %7892 = vmatprep.mubr.bf16.mxu0 0
        %7893 = vmatmul.mubr.bf16.gmra.mrb[0].mxu0 %v7652
        %v7894 = vpop.f32.mrb[0].mxu0
        %v7895 = vadd.f32 %v7734, %v7894
        %v7896 = vpop.f32.mrb[0].mxu0
        %v7897 = vpop.f32.mrb[0].mxu0
        %v7898 = vadd.f32 %v7737, %v7897
        %v7899 = vpop.f32.mrb[0].mxu0
        %7900 = vmatprep.mubr.bf16.mxu0 0
        %7901 = vmatmul.mubr.bf16.gmra.mrb[0].mxu0 %v7655
        %v7902 = vpop.f32.mrb[0].mxu0
        %v7903 = vadd.f32 %v7742, %v7902
        %v7904 = vpop.f32.mrb[0].mxu0
        %v7905 = vpop.f32.mrb[0].mxu0
        %v7906 = vadd.f32 %v7745, %v7905
        %v7907 = vpop.f32.mrb[0].mxu0
        %7908 = vmatprep.mubr.bf16.mxu0 0
        %7909 = vmatmul.mubr.bf16.gmra.mrb[0].mxu0 %v7658
        %v7910 = vpop.f32.mrb[0].mxu0
        %v7911 = vadd.f32 %v7750, %v7910
        %v7912 = vpop.f32.mrb[0].mxu0
        %v7913 = vpop.f32.mrb[0].mxu0
        %v7914 = vadd.f32 %v7753, %v7913
        %v7915 = vpop.f32.mrb[0].mxu0
        %7916 = vmatprep.mubr.bf16.mxu0 0
        %7917 = vmatmul.mubr.bf16.gmra.mrb[0].mxu0 %v7661
        %v7918 = vpop.f32.mrb[0].mxu0
        %v7919 = vadd.f32 %v7758, %v7918
        %v7920 = vpop.f32.mrb[0].mxu0
        %v7921 = vpop.f32.mrb[0].mxu0
        %v7922 = vadd.f32 %v7761, %v7921
        %v7923 = vpop.f32.mrb[0].mxu0
        %7924 = vmatprep.mubr.bf16.mxu0 0
        %7925 = vmatmul.mubr.bf16.gmra.mrb[0].mxu0 %v7664
        %v7926 = vpop.f32.mrb[0].mxu0
        %v7927 = vadd.f32 %v7766, %v7926
        %v7928 = vpop.f32.mrb[0].mxu0
        %v7929 = vpop.f32.mrb[0].mxu0
        %v7930 = vadd.f32 %v7769, %v7929
        %v7931 = vpop.f32.mrb[0].mxu0
        %7932 = vmatprep.mubr.bf16.mxu0 0
        %7933 = vmatmul.mubr.bf16.gmra.mrb[0].mxu0 %v7667
        %v7934 = vpop.f32.mrb[0].mxu0
        %v7935 = vadd.f32 %v7774, %v7934
        %v7936 = vpop.f32.mrb[0].mxu0
        %v7937 = vpop.f32.mrb[0].mxu0
        %v7938 = vadd.f32 %v7777, %v7937
        %v7939 = vpop.f32.mrb[0].mxu0
        %7940 = vmatprep.mubr.bf16.mxu0 0
        %7941 = vmatmul.mubr.bf16.gmra.mrb[0].mxu0 %v7670
        %v7942 = vpop.f32.mrb[0].mxu0
        %v7943 = vadd.f32 %v7782, %v7942
        %v7944 = vpop.f32.mrb[0].mxu0
        %v7945 = vpop.f32.mrb[0].mxu0
        %v7946 = vadd.f32 %v7785, %v7945
        %v7947 = vpop.f32.mrb[0].mxu0
        %7948 = vmatprep.mubr.bf16.mxu0 0
        %7949 = vmatmul.mubr.bf16.gmra.mrb[0].mxu0 %v7673
        %v7950 = vpop.f32.mrb[0].mxu0
        %v7951 = vadd.f32 %v7790, %v7950
        %v7952 = vpop.f32.mrb[0].mxu0
        %v7953 = vpop.f32.mrb[0].mxu0
        %v7954 = vadd.f32 %v7793, %v7953
        %v7955 = vpop.f32.mrb[0].mxu0
        %7956 = vmatprep.mubr.bf16.mxu0 0
        %7957 = vmatmul.mubr.bf16.gmra.mrb[0].mxu0 %v7676
        %v7958 = vpop.f32.mrb[0].mxu0
        %v7959 = vadd.f32 %v7798, %v7958
        %v7960 = vpop.f32.mrb[0].mxu0
        %v7961 = vpop.f32.mrb[0].mxu0
        %v7962 = vadd.f32 %v7801, %v7961
        %v7963 = vpop.f32.mrb[0].mxu0
        %7964 = vmatprep.mubr.bf16.mxu0 0
        %7965 = vmatmul.mubr.bf16.gmra.mrb[0].mxu0 %v7679
        %v7966 = vpop.f32.mrb[0].mxu0
        %v7967 = vadd.f32 %v7806, %v7966
        %v7968 = vpop.f32.mrb[0].mxu0
        %v7969 = vpop.f32.mrb[0].mxu0
        %v7970 = vadd.f32 %v7809, %v7969
        %v7971 = vpop.f32.mrb[0].mxu0
        %7972 = vmatprep.mubr.bf16.mxu0 0
        %7973 = vmatmul.mubr.bf16.gmra.mrb[0].mxu0 %v7682
        %v7974 = vpop.f32.mrb[0].mxu0
        %v7975 = vadd.f32 %v7814, %v7974
        %v7976 = vpop.f32.mrb[0].mxu0
        %v7977 = vpop.f32.mrb[0].mxu0
        %v7978 = vadd.f32 %v7817, %v7977
        %v7979 = vpop.f32.mrb[0].mxu0
        %7980 = vmatprep.mubr.bf16.mxu0 0
        %7981 = vmatmul.mubr.bf16.gmra.mrb[0].mxu0 %v7685
        %v7982 = vpop.f32.mrb[0].mxu0
        %v7983 = vadd.f32 %v7822, %v7982
        %v7984 = vpop.f32.mrb[0].mxu0
        %v7985 = vpop.f32.mrb[0].mxu0
        %v7986 = vadd.f32 %v7825, %v7985
        %v7987 = vpop.f32.mrb[0].mxu0
        %7988 = vmatprep.mubr.bf16.mxu0 0
        %7989 = vmatmul.mubr.bf16.gmra.mrb[0].mxu0 %v7688
        %v7990 = vpop.f32.mrb[0].mxu0
        %v7991 = vadd.f32 %v7830, %v7990
        %v7992 = vpop.f32.mrb[0].mxu0
        %v7993 = vpop.f32.mrb[0].mxu0
        %v7994 = vadd.f32 %v7833, %v7993
        %v7995 = vpop.f32.mrb[0].mxu0
        %7996 = vmatprep.mubr.bf16.mxu0 0
        %7997 = vmatmul.mubr.bf16.gmra.mrb[0].mxu0 %v7691
        %v7998 = vpop.f32.mrb[0].mxu0
        %v7999 = vadd.f32 %v7838, %v7998
        %v8000 = vpop.f32.mrb[0].mxu0
        %v8001 = vpop.f32.mrb[0].mxu0
        %v8002 = vadd.f32 %v7841, %v8001
        %v8003 = vpop.f32.mrb[0].mxu0
        %8004 = vmatprep.mubr.bf16.mxu0 0
        %8005 = vmatmul.mubr.bf16.gmra.mrb[0].mxu0 %v7694
        %v8006 = vpop.f32.mrb[0].mxu0
        %v8007 = vadd.f32 %v7846, %v8006
        %v8008 = vpop.f32.mrb[0].mxu0
        %v8009 = vpop.f32.mrb[0].mxu0
        %v8010 = vadd.f32 %v7849, %v8009
        %v8011 = vpop.f32.mrb[0].mxu0
        %8012 = vmatprep.mubr.bf16.mxu0 0
        %8013 = vmatmul.mubr.bf16.gmra.mrb[0].mxu0 %v7697
        %v8014 = vpop.f32.mrb[0].mxu0
        %v8015 = vadd.f32 %v7854, %v8014
        %v8016 = vpop.f32.mrb[0].mxu0
        %v8017 = vpop.f32.mrb[0].mxu0
        %v8018 = vadd.f32 %v7857, %v8017
        %v8019 = vpop.f32.mrb[0].mxu0
        %8020 = vdwg.mxu0
        %v8021 = vld [vmem:[%s222] sm:$0xff]
        %v8022 = vld [vmem:[%s222 + $0x8] sm:$0xff]
        %v8023 = vld [vmem:[%s222 + $0x10] sm:$0xff]
        %v8024 = vld [vmem:[%s222 + $0x18] sm:$0xff]
        %v8025 = vld [vmem:[%s222 + $0x20] sm:$0xff]
        %v8026 = vld [vmem:[%s222 + $0x28] sm:$0xff]
        %v8027 = vld [vmem:[%s222 + $0x30] sm:$0xff]
        %v8028 = vld [vmem:[%s222 + $0x38] sm:$0xff]
        %v8029 = vld [vmem:[%s222 + $0x40] sm:$0xff]
        %v8030 = vld [vmem:[%s222 + $0x48] sm:$0xff]
        %v8031 = vld [vmem:[%s222 + $0x50] sm:$0xff]
        %v8032 = vld [vmem:[%s222 + $0x58] sm:$0xff]
        %v8033 = vld [vmem:[%s222 + $0x60] sm:$0xff]
        %v8034 = vld [vmem:[%s222 + $0x68] sm:$0xff]
        %v8035 = vld [vmem:[%s222 + $0x70] sm:$0xff]
        %v8036 = vld [vmem:[%s222 + $0x78] sm:$0xff]
        %v8037 = vld [vmem:[%s222 + $0x80] sm:$0xff]
        %v8038 = vld [vmem:[%s222 + $0x88] sm:$0xff]
        %v8039 = vld [vmem:[%s222 + $0x90] sm:$0xff]
        %v8040 = vld [vmem:[%s222 + $0x98] sm:$0xff]
        %v8041 = vld [vmem:[%s222 + $0xa0] sm:$0xff]
        %v8042 = vld [vmem:[%s222 + $0xa8] sm:$0xff]
        %v8043 = vld [vmem:[%s222 + $0xb0] sm:$0xff]
        %v8044 = vld [vmem:[%s222 + $0xb8] sm:$0xff]
        %v8045 = vld [vmem:[%s222 + $0xc0] sm:$0xff]
        %v8046 = vld [vmem:[%s222 + $0xc8] sm:$0xff]
        %v8047 = vld [vmem:[%s222 + $0xd0] sm:$0xff]
        %v8048 = vld [vmem:[%s222 + $0xd8] sm:$0xff]
        %v8049 = vld [vmem:[%s222 + $0xe0] sm:$0xff]
        %v8050 = vld [vmem:[%s222 + $0xe8] sm:$0xff]
        %v8051 = vld [vmem:[%s222 + $0xf0] sm:$0xff]
        %v8052 = vld [vmem:[%s222 + $0xf8] sm:$0xff]
        %v8053 = vadd.f32 %v7895, %v8021
        %v8054 = vadd.f32 %v7898, %v8022
        %v8055 = vadd.f32 %v7903, %v8023
        %v8056 = vadd.f32 %v7906, %v8024
        %v8057 = vadd.f32 %v7911, %v8025
        %v8058 = vadd.f32 %v7914, %v8026
        %v8059 = vadd.f32 %v7919, %v8027
        %v8060 = vadd.f32 %v7922, %v8028
        %v8061 = vadd.f32 %v7927, %v8029
        %v8062 = vadd.f32 %v7930, %v8030
        %v8063 = vadd.f32 %v7935, %v8031
        %v8064 = vadd.f32 %v7938, %v8032
        %v8065 = vadd.f32 %v7943, %v8033
        %v8066 = vadd.f32 %v7946, %v8034
        %v8067 = vadd.f32 %v7951, %v8035
        %v8068 = vadd.f32 %v7954, %v8036
        %v8069 = vadd.f32 %v7959, %v8037
        %v8070 = vadd.f32 %v7962, %v8038
        %v8071 = vadd.f32 %v7967, %v8039
        %v8072 = vadd.f32 %v7970, %v8040
        %v8073 = vadd.f32 %v7975, %v8041
        %v8074 = vadd.f32 %v7978, %v8042
        %v8075 = vadd.f32 %v7983, %v8043
        %v8076 = vadd.f32 %v7986, %v8044
        %v8077 = vadd.f32 %v7991, %v8045
        %v8078 = vadd.f32 %v7994, %v8046
        %v8079 = vadd.f32 %v7999, %v8047
        %v8080 = vadd.f32 %v8002, %v8048
        %v8081 = vadd.f32 %v8007, %v8049
        %v8082 = vadd.f32 %v8010, %v8050
        %v8083 = vadd.f32 %v8015, %v8051
        %v8084 = vadd.f32 %v8018, %v8052
        %8085 = vst.msk [vmem:[#allocation4] sm:$0xff] %vm3352, %v8053
        %8086 = vst.msk [vmem:[#allocation4 + $0x8] sm:$0xff] %vm3352, %v8054
        %8087 = vst.msk [vmem:[#allocation4 + $0x10] sm:$0xff] %vm3352, %v8055
        %8088 = vst.msk [vmem:[#allocation4 + $0x18] sm:$0xff] %vm3352, %v8056
        %8089 = vst.msk [vmem:[#allocation4 + $0x20] sm:$0xff] %vm3352, %v8057
        %8090 = vst.msk [vmem:[#allocation4 + $0x28] sm:$0xff] %vm3352, %v8058
        %8091 = vst.msk [vmem:[#allocation4 + $0x30] sm:$0xff] %vm3352, %v8059
        %8092 = vst.msk [vmem:[#allocation4 + $0x38] sm:$0xff] %vm3352, %v8060
        %8093 = vst.msk [vmem:[#allocation4 + $0x40] sm:$0xff] %vm3352, %v8061
        %8094 = vst.msk [vmem:[#allocation4 + $0x48] sm:$0xff] %vm3352, %v8062
        %8095 = vst.msk [vmem:[#allocation4 + $0x50] sm:$0xff] %vm3352, %v8063
        %8096 = vst.msk [vmem:[#allocation4 + $0x58] sm:$0xff] %vm3352, %v8064
        %8097 = vst.msk [vmem:[#allocation4 + $0x60] sm:$0xff] %vm3352, %v8065
        %8098 = vst.msk [vmem:[#allocation4 + $0x68] sm:$0xff] %vm3352, %v8066
        %8099 = vst.msk [vmem:[#allocation4 + $0x70] sm:$0xff] %vm3352, %v8067
        %8100 = vst.msk [vmem:[#allocation4 + $0x78] sm:$0xff] %vm3352, %v8068
        %8101 = vst.msk [vmem:[#allocation4 + $0x80] sm:$0xff] %vm3352, %v8069
        %8102 = vst.msk [vmem:[#allocation4 + $0x88] sm:$0xff] %vm3352, %v8070
        %8103 = vst.msk [vmem:[#allocation4 + $0x90] sm:$0xff] %vm3352, %v8071
        %8104 = vst.msk [vmem:[#allocation4 + $0x98] sm:$0xff] %vm3352, %v8072
        %8105 = vst.msk [vmem:[#allocation4 + $0xa0] sm:$0xff] %vm3352, %v8073
        %8106 = vst.msk [vmem:[#allocation4 + $0xa8] sm:$0xff] %vm3352, %v8074
        %8107 = vst.msk [vmem:[#allocation4 + $0xb0] sm:$0xff] %vm3352, %v8075
        %8108 = vst.msk [vmem:[#allocation4 + $0xb8] sm:$0xff] %vm3352, %v8076
        %8109 = vst.msk [vmem:[#allocation4 + $0xc0] sm:$0xff] %vm3352, %v8077
        %8110 = vst.msk [vmem:[#allocation4 + $0xc8] sm:$0xff] %vm3352, %v8078
        %8111 = vst.msk [vmem:[#allocation4 + $0xd0] sm:$0xff] %vm3352, %v8079
        %8112 = vst.msk [vmem:[#allocation4 + $0xd8] sm:$0xff] %vm3352, %v8080
        %8113 = vst.msk [vmem:[#allocation4 + $0xe0] sm:$0xff] %vm3352, %v8081
        %8114 = vst.msk [vmem:[#allocation4 + $0xe8] sm:$0xff] %vm3352, %v8082
        %8115 = vst.msk [vmem:[#allocation4 + $0xf0] sm:$0xff] %vm3352, %v8083
        %8116 = vst.msk [vmem:[#allocation4 + $0xf8] sm:$0xff] %vm3352, %v8084
        %v8117 = vld [vmem:[#allocation4] sm:$0xff]
        %v8118 = vld [vmem:[#allocation4 + $0x8] sm:$0xff]
        %v8119 = vld [vmem:[#allocation4 + $0x20] sm:$0xff]
        %v8120 = vld [vmem:[#allocation4 + $0x28] sm:$0xff]
        %v8121 = vld [vmem:[#allocation4 + $0x40] sm:$0xff]
        %v8122 = vld [vmem:[#allocation4 + $0x48] sm:$0xff]
        %v8123 = vld [vmem:[#allocation4 + $0x60] sm:$0xff]
        %v8124 = vld [vmem:[#allocation4 + $0x68] sm:$0xff]
        %v8125 = vld [vmem:[#allocation4 + $0x80] sm:$0xff]
        %v8126 = vld [vmem:[#allocation4 + $0x88] sm:$0xff]
        %v8127 = vld [vmem:[#allocation4 + $0xa0] sm:$0xff]
        %v8128 = vld [vmem:[#allocation4 + $0xa8] sm:$0xff]
        %v8129 = vld [vmem:[#allocation4 + $0xc0] sm:$0xff]
        %v8130 = vld [vmem:[#allocation4 + $0xc8] sm:$0xff]
        %v8131 = vld [vmem:[#allocation4 + $0xe0] sm:$0xff]
        %v8132 = vld [vmem:[#allocation4 + $0xe8] sm:$0xff]
        %s8133 = scalar_lea.vmem [#allocation4], 16
        %v8134 = vld [vmem:[%s8133] sm:$0xff]
        %v8135 = vld [vmem:[%s8133 + $0x8] sm:$0xff]
        %v8136 = vld [vmem:[%s8133 + $0x20] sm:$0xff]
        %v8137 = vld [vmem:[%s8133 + $0x28] sm:$0xff]
        %v8138 = vld [vmem:[%s8133 + $0x40] sm:$0xff]
        %v8139 = vld [vmem:[%s8133 + $0x48] sm:$0xff]
        %v8140 = vld [vmem:[%s8133 + $0x60] sm:$0xff]
        %v8141 = vld [vmem:[%s8133 + $0x68] sm:$0xff]
        %v8142 = vld [vmem:[%s8133 + $0x80] sm:$0xff]
        %v8143 = vld [vmem:[%s8133 + $0x88] sm:$0xff]
        %v8144 = vld [vmem:[%s8133 + $0xa0] sm:$0xff]
        %v8145 = vld [vmem:[%s8133 + $0xa8] sm:$0xff]
        %v8146 = vld [vmem:[%s8133 + $0xc0] sm:$0xff]
        %v8147 = vld [vmem:[%s8133 + $0xc8] sm:$0xff]
        %v8148 = vld [vmem:[%s8133 + $0xe0] sm:$0xff]
        %v8149 = vld [vmem:[%s8133 + $0xe8] sm:$0xff]
        %v8150 = vadd.f32 %v8117, %v8134
        %v8151 = vadd.f32 %v8118, %v8135
        %v8152 = vadd.f32 %v8119, %v8136
        %v8153 = vadd.f32 %v8120, %v8137
        %v8154 = vadd.f32 %v8121, %v8138
        %v8155 = vadd.f32 %v8122, %v8139
        %v8156 = vadd.f32 %v8123, %v8140
        %v8157 = vadd.f32 %v8124, %v8141
        %v8158 = vadd.f32 %v8125, %v8142
        %v8159 = vadd.f32 %v8126, %v8143
        %v8160 = vadd.f32 %v8127, %v8144
        %v8161 = vadd.f32 %v8128, %v8145
        %v8162 = vadd.f32 %v8129, %v8146
        %v8163 = vadd.f32 %v8130, %v8147
        %v8164 = vadd.f32 %v8131, %v8148
        %v8165 = vadd.f32 %v8132, %v8149
        %8166 = vst.msk [vmem:[#allocation5] sm:$0xff] %vm3352, %v8150
        %8167 = vst.msk [vmem:[#allocation5 + $0x8] sm:$0xff] %vm3352, %v8151
        %8168 = vst.msk [vmem:[#allocation5 + $0x10] sm:$0xff] %vm3352, %v8152
        %8169 = vst.msk [vmem:[#allocation5 + $0x18] sm:$0xff] %vm3352, %v8153
        %8170 = vst.msk [vmem:[#allocation5 + $0x20] sm:$0xff] %vm3352, %v8154
        %8171 = vst.msk [vmem:[#allocation5 + $0x28] sm:$0xff] %vm3352, %v8155
        %8172 = vst.msk [vmem:[#allocation5 + $0x30] sm:$0xff] %vm3352, %v8156
        %8173 = vst.msk [vmem:[#allocation5 + $0x38] sm:$0xff] %vm3352, %v8157
        %8174 = vst.msk [vmem:[#allocation5 + $0x40] sm:$0xff] %vm3352, %v8158
        %8175 = vst.msk [vmem:[#allocation5 + $0x48] sm:$0xff] %vm3352, %v8159
        %8176 = vst.msk [vmem:[#allocation5 + $0x50] sm:$0xff] %vm3352, %v8160
        %8177 = vst.msk [vmem:[#allocation5 + $0x58] sm:$0xff] %vm3352, %v8161
        %8178 = vst.msk [vmem:[#allocation5 + $0x60] sm:$0xff] %vm3352, %v8162
        %8179 = vst.msk [vmem:[#allocation5 + $0x68] sm:$0xff] %vm3352, %v8163
        %8180 = vst.msk [vmem:[#allocation5 + $0x70] sm:$0xff] %vm3352, %v8164
        %8181 = vst.msk [vmem:[#allocation5 + $0x78] sm:$0xff] %vm3352, %v8165
        %v8182 = vld [vmem:[#allocation5] ss:$2 sm:$0xff]
        %s8183 = scalar_lea.vmem [#allocation5], 16
        %v8184 = vld [vmem:[%s8183] ss:$2 sm:$0xff]
        %s8185 = scalar_lea.vmem [#allocation5], 32
        %v8186 = vld [vmem:[%s8185] ss:$2 sm:$0xff]
        %s8187 = scalar_lea.vmem [#allocation5], 48
        %v8188 = vld [vmem:[%s8187] ss:$2 sm:$0xff]
        %s8189 = scalar_lea.vmem [#allocation5], 64
        %v8190 = vld [vmem:[%s8189] ss:$2 sm:$0xff]
        %s8191 = scalar_lea.vmem [#allocation5], 80
        %v8192 = vld [vmem:[%s8191] ss:$2 sm:$0xff]
        %s8193 = scalar_lea.vmem [#allocation5], 96
        %v8194 = vld [vmem:[%s8193] ss:$2 sm:$0xff]
        %s8195 = scalar_lea.vmem [#allocation5], 112
        %v8196 = vld [vmem:[%s8195] ss:$2 sm:$0xff]
        %s8197 = scalar_lea.vmem [#allocation5], 1
        %v8198 = vld [vmem:[%s8197] ss:$2 sm:$0xff]
        %s8199 = scalar_lea.vmem [#allocation5], 17
        %v8200 = vld [vmem:[%s8199] ss:$2 sm:$0xff]
        %s8201 = scalar_lea.vmem [#allocation5], 33
        %v8202 = vld [vmem:[%s8201] ss:$2 sm:$0xff]
        %s8203 = scalar_lea.vmem [#allocation5], 49
        %v8204 = vld [vmem:[%s8203] ss:$2 sm:$0xff]
        %s8205 = scalar_lea.vmem [#allocation5], 65
        %v8206 = vld [vmem:[%s8205] ss:$2 sm:$0xff]
        %s8207 = scalar_lea.vmem [#allocation5], 81
        %v8208 = vld [vmem:[%s8207] ss:$2 sm:$0xff]
        %s8209 = scalar_lea.vmem [#allocation5], 97
        %v8210 = vld [vmem:[%s8209] ss:$2 sm:$0xff]
        %s8211 = scalar_lea.vmem [#allocation5], 113
        %v8212 = vld [vmem:[%s8211] ss:$2 sm:$0xff]
        %v8213 = vadd.f32 %v8182, %v8198
        %v8214 = vadd.f32 %v8184, %v8200
        %v8215 = vadd.f32 %v8186, %v8202
        %v8216 = vadd.f32 %v8188, %v8204
        %v8217 = vadd.f32 %v8190, %v8206
        %v8218 = vadd.f32 %v8192, %v8208
        %v8219 = vadd.f32 %v8194, %v8210
        %v8220 = vadd.f32 %v8196, %v8212
        %v8221 = vmul.f32 %v8213, 0.25
        %v8222 = vmul.f32 %v8214, 0.25
        %v8223 = vmul.f32 %v8215, 0.25
        %v8224 = vmul.f32 %v8216, 0.25
        %v8225 = vmul.f32 %v8217, 0.25
        %v8226 = vmul.f32 %v8218, 0.25
        %v8227 = vmul.f32 %v8219, 0.25
        %v8228 = vmul.f32 %v8220, 0.25
        %8229 = vst.msk [vmem:[%s217] sm:$0xff] %vm3352, %v8221
        %8230 = vst.msk [vmem:[%s217 + $0x8] sm:$0xff] %vm3352, %v8222
        %8231 = vst.msk [vmem:[%s217 + $0x10] sm:$0xff] %vm3352, %v8223
        %8232 = vst.msk [vmem:[%s217 + $0x18] sm:$0xff] %vm3352, %v8224
        %8233 = vst.msk [vmem:[%s217 + $0x20] sm:$0xff] %vm3352, %v8225
        %8234 = vst.msk [vmem:[%s217 + $0x28] sm:$0xff] %vm3352, %v8226
        %8235 = vst.msk [vmem:[%s217 + $0x30] sm:$0xff] %vm3352, %v8227
        %8236 = vst.msk [vmem:[%s217 + $0x38] sm:$0xff] %vm3352, %v8228
        %s8237 = sand.u32 %s137, 1
        %s8238 = scalar_lea.sflag [#allocation7], %s8237
        %s8239 = sand.u32 %s137, 1
        %s8240 = smul.addr %s8239, 64
        %s8241 = scalar_lea.vmem [#allocation6], %s8240
        // Predicated region
        $region41: #{residual_block_down.1} parent=39 // pred_check
          %p8242 = pneg %p147
        $region42: #{residual_block_down.1} parent=39 // pred_check_branch
          %8244 = sbr.rel (%p8242) target = $region44
        $region43: #{residual_block_down.1} parent=39 // pred_region
          %s8246 = ssub.s32 1024, 1024
          %8247 = vsyncadd %s8238, %s8246
          %s8248 = smul.addr %s19, 8
          %s8249 = smul.addr %s8248, 128
          %s8250 = scalar_lea.hbm %s5, %s8249
          %s8251 = sshll.u32 %s8241, 4
          %s8252 = int_to_ptr.vmem [resolvable:$true] %s8251
          %8257 = dma.vmem_to_hbm [thread:$0]  %s8252, 1024, %s8250, %s8238, 128, 128, 8
        $region44: #{residual_block_down.1} parent=39 // pred_fallthru
          _
      $region40: #{residual_block_down.1} parent=5 // pred_fallthru
        _
      %p8258 = scmp.le.s32.totalorder 2, %s14
      // Predicated region
      $region45: #{residual_block_down.1} parent=5 // pred_check
        %p8259 = pneg %p8258
      $region46: #{residual_block_down.1} parent=5 // pred_check_branch
        %8261 = sbr.rel (%p8259) target = $region48
      $region47: #{residual_block_down.1} parent=5 // pred_region
        %s8262 = ssub.s32 %s14, 2
        // Predicated region
        $region49: #{residual_block_down.1} parent=47 // pred_check
          %p8263 = pneg %p153
        $region50: #{residual_block_down.1} parent=47 // pred_check_branch
          %8265 = sbr.rel (%p8263) target = $region52
        $region51: #{residual_block_down.1} parent=47 // pred_region
          %s8266 = sand.u32 %s138, 1
          %s8267 = scalar_lea.sflag [#allocation7], %s8266
          %s8268 = sand.u32 %s138, 1
          %s8269 = smul.addr %s8268, 64
          %s8270 = scalar_lea.vmem [#allocation6], %s8269
          %8271 = dma.done %s8267, 1024
        $region52: #{residual_block_down.1} parent=47 // pred_fallthru
          _
      $region48: #{residual_block_down.1} parent=5 // pred_fallthru
        _
    $region6: #{residual_block_down.1} parent=1 // loop_footer
      %s18 = sadd.s32 1, %s14
    $region7: #{residual_block_down.1} parent=1 // loop_footer_branch
      %13 = sbr.rel target = $region3
    $region8: #{residual_block_down.1} parent=1 // loop_exit
      _
    %8272 = vsyncpa [#allocation7], 1
    %s8273 = scalar_lea.sflag [#allocation7], 1
    %8274 = vsyncpa %s8273, 1

</llo_original>
